<compile_context>
chip_gen: v5e
topology: v5e:2x2
jax: 0.10.0
libtpu: 0.0.40
codegen_flags: <defaults>
</compile_context>

<pallas_src>
import numpy as np
import jax
import jax.numpy as jnp
from jax.experimental import pallas as pl
from jax.experimental.pallas import tpu as pltpu


def _round_up(x, m):
    return (x + m - 1) // m * m


# ----------------------------- static net config ---------------------------- #
def make_net_config(obs_dim, H, W):
    # (Cin, Cout, k, stride, pad, relu); the two dueling heads are fused along Cout.
    raw = [
        (obs_dim, 16, 5, 1, 2, True),   # conv1
        (16, 16, 5, 1, 2, True),        # conv2
        (16, 16, 3, 3, 1, True),        # conv3
        (16, 16, 3, 3, 1, True),        # conv4
        (16, 32, 3, 3, 0, True),        # outA[0] || outV[0]   (16 + 16 channels)
        (32, 5, 1, 1, 0, False),        # outA[2] || outV[2]   (4 + 1 channels)
    ]
    cfgs = []
    h, w = H, W
    for cin, cout, k, s, p, relu in raw:
        ho = (h + 2 * p - k) // s + 1
        wo = (w + 2 * p - k) // s + 1
        cfgs.append(dict(cin=cin, cout=cout, k=k, s=s, p=p, relu=relu,
                         H=h, W=w, Ho=ho, Wo=wo,
                         Lin=_round_up(w * cin, 128),
                         Lout=_round_up(wo * cout, 128)))
        h, w = ho, wo
    for i, c in enumerate(cfgs):
        # producers write into a buffer that is already H-padded for the consumer
        c["out_hpad"] = cfgs[i + 1]["p"] if i + 1 < len(cfgs) else 0
        c["Hbuf_in"] = c["H"] + 2 * c["p"]
        c["Hbuf_out"] = c["Ho"] + 2 * c["out_hpad"]
    return cfgs


# ------------------------------- parameters --------------------------------- #
def init_params(key, obs_dim, act_dim):
    del act_dim  # reference module hard-codes 4 advantage channels

    def conv_param(k, cout, cin, ksz):
        k1, k2 = jax.random.split(k)
        fan_in = cin * ksz * ksz
        bound = 1.0 / (fan_in ** 0.5)
        w = jax.random.uniform(k1, (cout, cin, ksz, ksz), jnp.float32, -bound, bound)
        b = jax.random.uniform(k2, (cout,), jnp.float32, -bound, bound)
        return w, b

    keys = jax.random.split(key, 8)
    return {
        "conv1": conv_param(keys[0], 16, obs_dim, 5),
        "conv2": conv_param(keys[1], 16, 16, 5),
        "conv3": conv_param(keys[2], 16, 16, 3),
        "conv4": conv_param(keys[3], 16, 16, 3),
        "outA0": conv_param(keys[4], 16, 16, 3),
        "outA1": conv_param(keys[5], 4, 16, 1),
        "outV0": conv_param(keys[6], 16, 16, 3),
        "outV1": conv_param(keys[7], 1, 16, 1),
    }


def _pack_conv(w, b, cfg):
    """Bake the W-direction taps/stride/padding + lane padding into a block-Toeplitz
    matrix mapping a (kh*Lin,) row-patch to a (Lout,) output row.  Built once, host-side."""
    cout, cin, kh, kw = w.shape
    Lin, Lout = cfg["Lin"], cfg["Lout"]
    s, p, W_in, Wo = cfg["s"], cfg["p"], cfg["W"], cfg["Wo"]
    Wt = np.zeros((kh * Lin, Lout), np.float32)
    for i in range(kh):
        for wo in range(Wo):
            for j in range(kw):
                wi = s * wo - p + j
                if 0 <= wi < W_in:
                    r = i * Lin + wi * cin
                    c = wo * cout
                    Wt[r:r + cin, c:c + cout] = w[:, :, i, j].T
    Bt = np.zeros((1, Lout), np.float32)
    for wo in range(Wo):
        Bt[0, wo * cout:(wo + 1) * cout] = b
    return jnp.asarray(Wt, jnp.bfloat16), jnp.asarray(Bt, jnp.float32)


def prepare_params(params, cfgs):
    """Fuse the dueling heads and pre-pack every conv to (bf16 Toeplitz, f32 bias row)."""
    a0w, a0b = params["outA0"]
    v0w, v0b = params["outV0"]
    h0w = np.concatenate([np.asarray(a0w), np.asarray(v0w)], axis=0)   # (32,16,3,3)
    h0b = np.concatenate([np.asarray(a0b), np.asarray(v0b)], axis=0)   # (32,)

    a1w, a1b = params["outA1"]
    v1w, v1b = params["outV1"]
    h1w = np.zeros((5, 32, 1, 1), np.float32)                          # block-diagonal fuse
    h1w[:4, :16] = np.asarray(a1w)
    h1w[4:, 16:] = np.asarray(v1w)
    h1b = np.concatenate([np.asarray(a1b), np.asarray(v1b)], axis=0)   # (5,)

    raw = [params["conv1"], params["conv2"], params["conv3"], params["conv4"],
           (h0w, h0b), (h1w, h1b)]
    return [_pack_conv(np.asarray(w, np.float32), np.asarray(b, np.float32), cfg)
            for (w, b), cfg in zip(raw, cfgs)]


# --------------------------------- kernel ----------------------------------- #
def _layer(src_ref, w_ref, b_ref, dst_ref, cfg):
    k, s, Ho, ohp = cfg["k"], cfg["s"], cfg["Ho"], cfg["out_hpad"]

    if ohp > 0:  # zero the H-padding rows expected by the next layer
        dst_ref[0, :, :] = jnp.zeros(dst_ref.shape[1:], dst_ref.dtype)

    def compute(lhs):
        acc = jnp.dot(lhs, w_ref[...], preferred_element_type=jnp.float32)
        acc = acc + b_ref[...]
        if cfg["relu"]:
            acc = jnp.maximum(acc, 0.0)
        return acc.astype(dst_ref.dtype)

    if s == 1:
        # kh shifted row-slabs, lane-concatenated -> one (Ho, kh*Lin) @ (kh*Lin, Lout) matmul
        slabs = [src_ref[0, i:i + Ho, :].astype(jnp.bfloat16) for i in range(k)]
        lhs = slabs[0] if k == 1 else jnp.concatenate(slabs, axis=1)
        dst_ref[0, ohp:ohp + Ho, :] = compute(lhs)
    else:
        # strided conv: Ho <= 7 -> per-output-row patch gather + tiny matmul
        for ho in range(Ho):
            rows = [src_ref[0, s * ho + i:s * ho + i + 1, :].astype(jnp.bfloat16)
                    for i in range(k)]
            lhs = rows[0] if k == 1 else jnp.concatenate(rows, axis=1)
            dst_ref[0, ohp + ho:ohp + ho + 1, :] = compute(lhs)


def _make_net_kernel(cfgs):
    n = len(cfgs)

    def kernel(*refs):
        x_ref = refs[0]
        w_refs = refs[1:1 + n]
        b_refs = refs[1 + n:1 + 2 * n]
        o_ref = refs[1 + 2 * n]
        scratch = refs[2 + 2 * n:]
        bufs = (x_ref,) + tuple(scratch) + (o_ref,)
        for li, cfg in enumerate(cfgs):
            _layer(bufs[li], w_refs[li], b_refs[li], bufs[li + 1], cfg)

    return kernel


# -------------------------------- forward ----------------------------------- #
def make_forward(cfgs):
    c0, clast = cfgs[0], cfgs[-1]
    kernel = _make_net_kernel(cfgs)

    def forward(packed, x):
        N = x.shape[0]
        # one-time layout prep: NCHW -> row-flattened channels-last, H-padded, lane-padded
        xr = jnp.transpose(x, (0, 2, 3, 1)).reshape(N, c0["H"], c0["W"] * c0["cin"])
        xb = jnp.pad(xr, ((0, 0), (c0["p"], c0["p"]),
                          (0, c0["Lin"] - c0["W"] * c0["cin"])))

        ws = [p[0] for p in packed]
        bs = [p[1] for p in packed]

        in_specs = [pl.BlockSpec((1, c0["Hbuf_in"], c0["Lin"]), lambda i: (i, 0, 0))]
        in_specs += [pl.BlockSpec((c["k"] * c["Lin"], c["Lout"]), lambda i: (0, 0))
                     for c in cfgs]
        in_specs += [pl.BlockSpec((1, c["Lout"]), lambda i: (0, 0)) for c in cfgs]
        out_specs = pl.BlockSpec((1, clast["Hbuf_out"], clast["Lout"]),
                                 lambda i: (i, 0, 0))
        scratch = [pltpu.VMEM((1, c["Hbuf_out"], c["Lout"]), jnp.float32)
                   for c in cfgs[:-1]]

        out = pl.pallas_call(
            kernel,
            out_shape=jax.ShapeDtypeStruct(
                (N, clast["Hbuf_out"], clast["Lout"]), jnp.float32),
            grid=(N,),
            in_specs=in_specs,
            out_specs=out_specs,
            scratch_shapes=scratch,
            compiler_params=pltpu.CompilerParams(
                dimension_semantics=("parallel",)),
        )(xb, *ws, *bs)

        advantage = out[:, 0, 0:4]                       # A-head channels
        value = out[:, 0, 4:5]                           # V-head channel
        _Q = value + advantage - advantage.mean(-1, keepdims=True)  # dead, mirrors reference
        return advantage

    return jax.jit(forward)


# --------------------------- plain-JAX reference ----------------------------- #
def _conv_ref(x, w, b, stride, pad):
    y = jax.lax.conv_general_dilated(
        x, w, window_strides=(stride, stride),
        padding=((pad, pad), (pad, pad)),
        dimension_numbers=("NCHW", "OIHW", "NCHW"),
        precision=jax.lax.Precision.HIGHEST)
    return y + b[None, :, None, None]


def reference_forward(params, x):
    h = jax.nn.relu(_conv_ref(x, *params["conv1"], 1, 2))
    h = jax.nn.relu(_conv_ref(h, *params["conv2"], 1, 2))
    h = jax.nn.relu(_conv_ref(h, *params["conv3"], 3, 1))
    h = jax.nn.relu(_conv_ref(h, *params["conv4"], 3, 1))
    a = jax.nn.relu(_conv_ref(h, *params["outA0"], 3, 0))
    a = _conv_ref(a, *params["outA1"], 1, 0)
    return a[:, :, 0, 0]


if __name__ == "__main__":
    obs_dim, act_dim = 4, 4
    batch, spatial = 2, 21   # 21 -> 21 -> 21 -> 7 -> 3 -> 1 -> 1, so squeeze yields (N, 4)

    key = jax.random.PRNGKey(0)
    k_params, k_x = jax.random.split(key)
    params = init_params(k_params, obs_dim, act_dim)
    x = jax.random.normal(k_x, (batch, obs_dim, spatial, spatial), jnp.float32)

    cfgs = make_net_config(obs_dim, spatial, spatial)
    packed = prepare_params(params, cfgs)      # host-side, once: fuse heads + Toeplitz-pack
    forward = make_forward(cfgs)

    out = forward(packed, x)
    jax.block_until_ready(out)
    assert out.shape == (batch, 4) and out.dtype == jnp.float32

    # numerical sanity check vs. a plain-JAX f32 conv reference
    # (matmul operands go through bf16, so use a loose tolerance)
    ref = jax.jit(reference_forward)(params, x)
    err = float(jnp.max(jnp.abs(out - ref)))
    assert err < 5e-2, f"max abs error vs reference too large: {err}"

    print("KERNEL_OK")
</pallas_src>

<mosaic_0001>
module attributes {stable_mosaic.version = 11 : i64} {
  func.func @kernel(%arg0: i32, %arg1: memref<1x25x128xf32, #tpu.memory_space<vmem>>, %arg2: memref<640x384xbf16, #tpu.memory_space<vmem>>, %arg3: memref<1920x384xbf16, #tpu.memory_space<vmem>>, %arg4: memref<1152x128xbf16, #tpu.memory_space<vmem>>, %arg5: memref<384x128xbf16, #tpu.memory_space<vmem>>, %arg6: memref<384x128xbf16, #tpu.memory_space<vmem>>, %arg7: memref<128x128xbf16, #tpu.memory_space<vmem>>, %arg8: memref<1x384xf32, #tpu.memory_space<vmem>>, %arg9: memref<1x384xf32, #tpu.memory_space<vmem>>, %arg10: memref<1x128xf32, #tpu.memory_space<vmem>>, %arg11: memref<1x128xf32, #tpu.memory_space<vmem>>, %arg12: memref<1x128xf32, #tpu.memory_space<vmem>>, %arg13: memref<1x128xf32, #tpu.memory_space<vmem>>, %arg14: memref<1x1x128xf32, #tpu.memory_space<vmem>>, %arg15: memref<1x25x384xf32, #tpu.memory_space<vmem>>, %arg16: memref<1x23x384xf32, #tpu.memory_space<vmem>>, %arg17: memref<1x9x128xf32, #tpu.memory_space<vmem>>, %arg18: memref<1x3x128xf32, #tpu.memory_space<vmem>>, %arg19: memref<1x1x128xf32, #tpu.memory_space<vmem>>) attributes {dimension_semantics = [#tpu.dimension_semantics<parallel>], iteration_bounds = array<i64: 2>, scalar_prefetch = 0 : i64, scratch_operands = 5 : i64, tpu.core_type = #tpu.core_type<tc>, window_params = [{transform_indices = @transform_0, window_bounds = array<i64: 1, 25, 128>}, {pipeline_mode = #tpu.pipeline_mode<synchronous>, transform_indices = @transform_1, window_bounds = array<i64: 640, 384>}, {pipeline_mode = #tpu.pipeline_mode<synchronous>, transform_indices = @transform_2, window_bounds = array<i64: 1920, 384>}, {pipeline_mode = #tpu.pipeline_mode<synchronous>, transform_indices = @transform_3, window_bounds = array<i64: 1152, 128>}, {pipeline_mode = #tpu.pipeline_mode<synchronous>, transform_indices = @transform_4, window_bounds = array<i64: 384, 128>}, {pipeline_mode = #tpu.pipeline_mode<synchronous>, transform_indices = @transform_5, window_bounds = array<i64: 384, 128>}, {pipeline_mode = #tpu.pipeline_mode<synchronous>, transform_indices = @transform_6, window_bounds = array<i64: 128, 128>}, {pipeline_mode = #tpu.pipeline_mode<synchronous>, transform_indices = @transform_7, window_bounds = array<i64: 1, 384>}, {pipeline_mode = #tpu.pipeline_mode<synchronous>, transform_indices = @transform_8, window_bounds = array<i64: 1, 384>}, {pipeline_mode = #tpu.pipeline_mode<synchronous>, transform_indices = @transform_9, window_bounds = array<i64: 1, 128>}, {pipeline_mode = #tpu.pipeline_mode<synchronous>, transform_indices = @transform_10, window_bounds = array<i64: 1, 128>}, {pipeline_mode = #tpu.pipeline_mode<synchronous>, transform_indices = @transform_11, window_bounds = array<i64: 1, 128>}, {pipeline_mode = #tpu.pipeline_mode<synchronous>, transform_indices = @transform_12, window_bounds = array<i64: 1, 128>}, {transform_indices = @transform_13, window_bounds = array<i64: 1, 1, 128>}]} {
    %cst = arith.constant 0.000000e+00 : f32
    %0 = vector.broadcast %cst : f32 to vector<25x384xf32>
    %c0 = arith.constant 0 : index
    %c0_0 = arith.constant 0 : index
    %c0_1 = arith.constant 0 : index
    %1 = vector.load %arg15[%c0, %c0_0, %c0_1] : memref<1x25x384xf32, #tpu.memory_space<vmem>>, vector<1x25x384xf32>
    %2 = vector.shape_cast %1 : vector<1x25x384xf32> to vector<25x384xf32>
    %3 = vector.shape_cast %0 : vector<25x384xf32> to vector<1x25x384xf32>
    tpu.vector_store %arg15[%c0, %c0_0, %c0_1], %3 {strides = array<i32>} : memref<1x25x384xf32, #tpu.memory_space<vmem>>, vector<1x25x384xf32>,
    %c0_2 = arith.constant 0 : index
    %c0_3 = arith.constant 0 : index
    %c0_4 = arith.constant 0 : index
    %4 = vector.load %arg1[%c0_2, %c0_3, %c0_4] : memref<1x25x128xf32, #tpu.memory_space<vmem>>, vector<1x21x128xf32>
    %5 = vector.shape_cast %4 : vector<1x21x128xf32> to vector<21x128xf32>
    %6 = arith.truncf %5 : vector<21x128xf32> to vector<21x128xbf16>
    %c0_5 = arith.constant 0 : index
    %c1 = arith.constant 1 : index
    %c0_6 = arith.constant 0 : index
    %7 = vector.load %arg1[%c0_5, %c1, %c0_6] : memref<1x25x128xf32, #tpu.memory_space<vmem>>, vector<1x21x128xf32>
    %8 = vector.shape_cast %7 : vector<1x21x128xf32> to vector<21x128xf32>
    %9 = arith.truncf %8 : vector<21x128xf32> to vector<21x128xbf16>
    %c0_7 = arith.constant 0 : index
    %c2 = arith.constant 2 : index
    %c0_8 = arith.constant 0 : index
    %10 = vector.load %arg1[%c0_7, %c2, %c0_8] : memref<1x25x128xf32, #tpu.memory_space<vmem>>, vector<1x21x128xf32>
    %11 = vector.shape_cast %10 : vector<1x21x128xf32> to vector<21x128xf32>
    %12 = arith.truncf %11 : vector<21x128xf32> to vector<21x128xbf16>
    %c0_9 = arith.constant 0 : index
    %c3 = arith.constant 3 : index
    %c0_10 = arith.constant 0 : index
    %13 = vector.load %arg1[%c0_9, %c3, %c0_10] : memref<1x25x128xf32, #tpu.memory_space<vmem>>, vector<1x21x128xf32>
    %14 = vector.shape_cast %13 : vector<1x21x128xf32> to vector<21x128xf32>
    %15 = arith.truncf %14 : vector<21x128xf32> to vector<21x128xbf16>
    %c0_11 = arith.constant 0 : index
    %c4 = arith.constant 4 : index
    %c0_12 = arith.constant 0 : index
    %16 = vector.load %arg1[%c0_11, %c4, %c0_12] : memref<1x25x128xf32, #tpu.memory_space<vmem>>, vector<1x21x128xf32>
    %17 = vector.shape_cast %16 : vector<1x21x128xf32> to vector<21x128xf32>
    %18 = arith.truncf %17 : vector<21x128xf32> to vector<21x128xbf16>
    %19 = tpu.concatenate %6, %9, %12, %15, %18 in 1 : vector<21x128xbf16>, vector<21x128xbf16>, vector<21x128xbf16>, vector<21x128xbf16>, vector<21x128xbf16> -> vector<21x640xbf16>
    %c0_13 = arith.constant 0 : index
    %c0_14 = arith.constant 0 : index
    %20 = vector.load %arg2[%c0_13, %c0_14] : memref<640x384xbf16, #tpu.memory_space<vmem>>, vector<640x384xbf16>
    %cst_15 = arith.constant dense<0.000000e+00> : vector<21x384xf32>
    %21 = tpu.matmul %19, %20, %cst_15 {dimension_numbers = #tpu.dot_dimension_numbers<[1], [0], [0], [1], [0, 0, 1, 1], [], []>} : vector<21x640xbf16>, vector<640x384xbf16>, vector<21x384xf32> -> vector<21x384xf32>
    %c0_16 = arith.constant 0 : index
    %c0_17 = arith.constant 0 : index
    %22 = vector.load %arg8[%c0_16, %c0_17] : memref<1x384xf32, #tpu.memory_space<vmem>>, vector<1x384xf32>
    %23 = vector.broadcast %22 : vector<1x384xf32> to vector<21x384xf32>
    %24 = arith.addf %21, %23 : vector<21x384xf32>
    %cst_18 = arith.constant 0.000000e+00 : f32
    %25 = vector.broadcast %cst_18 : f32 to vector<21x384xf32>
    %26 = arith.maximumf %24, %25 : vector<21x384xf32>
    %c0_19 = arith.constant 0 : index
    %c2_20 = arith.constant 2 : index
    %c0_21 = arith.constant 0 : index
    %27 = vector.load %arg15[%c0_19, %c2_20, %c0_21] : memref<1x25x384xf32, #tpu.memory_space<vmem>>, vector<1x21x384xf32>
    %28 = vector.shape_cast %27 : vector<1x21x384xf32> to vector<21x384xf32>
    %29 = vector.shape_cast %26 : vector<21x384xf32> to vector<1x21x384xf32>
    tpu.vector_store %arg15[%c0_19, %c2_20, %c0_21], %29 {strides = array<i32>} : memref<1x25x384xf32, #tpu.memory_space<vmem>>, vector<1x21x384xf32>,
    %cst_22 = arith.constant 0.000000e+00 : f32
    %30 = vector.broadcast %cst_22 : f32 to vector<23x384xf32>
    %c0_23 = arith.constant 0 : index
    %c0_24 = arith.constant 0 : index
    %c0_25 = arith.constant 0 : index
    %31 = vector.load %arg16[%c0_23, %c0_24, %c0_25] : memref<1x23x384xf32, #tpu.memory_space<vmem>>, vector<1x23x384xf32>
    %32 = vector.shape_cast %31 : vector<1x23x384xf32> to vector<23x384xf32>
    %33 = vector.shape_cast %30 : vector<23x384xf32> to vector<1x23x384xf32>
    tpu.vector_store %arg16[%c0_23, %c0_24, %c0_25], %33 {strides = array<i32>} : memref<1x23x384xf32, #tpu.memory_space<vmem>>, vector<1x23x384xf32>,
    %c0_26 = arith.constant 0 : index
    %c0_27 = arith.constant 0 : index
    %c0_28 = arith.constant 0 : index
    %34 = vector.load %arg15[%c0_26, %c0_27, %c0_28] : memref<1x25x384xf32, #tpu.memory_space<vmem>>, vector<1x21x384xf32>
    %35 = vector.shape_cast %34 : vector<1x21x384xf32> to vector<21x384xf32>
    %36 = arith.truncf %35 : vector<21x384xf32> to vector<21x384xbf16>
    %c0_29 = arith.constant 0 : index
    %c1_30 = arith.constant 1 : index
    %c0_31 = arith.constant 0 : index
    %37 = vector.load %arg15[%c0_29, %c1_30, %c0_31] : memref<1x25x384xf32, #tpu.memory_space<vmem>>, vector<1x21x384xf32>
    %38 = vector.shape_cast %37 : vector<1x21x384xf32> to vector<21x384xf32>
    %39 = arith.truncf %38 : vector<21x384xf32> to vector<21x384xbf16>
    %c0_32 = arith.constant 0 : index
    %c2_33 = arith.constant 2 : index
    %c0_34 = arith.constant 0 : index
    %40 = vector.load %arg15[%c0_32, %c2_33, %c0_34] : memref<1x25x384xf32, #tpu.memory_space<vmem>>, vector<1x21x384xf32>
    %41 = vector.shape_cast %40 : vector<1x21x384xf32> to vector<21x384xf32>
    %42 = arith.truncf %41 : vector<21x384xf32> to vector<21x384xbf16>
    %c0_35 = arith.constant 0 : index
    %c3_36 = arith.constant 3 : index
    %c0_37 = arith.constant 0 : index
    %43 = vector.load %arg15[%c0_35, %c3_36, %c0_37] : memref<1x25x384xf32, #tpu.memory_space<vmem>>, vector<1x21x384xf32>
    %44 = vector.shape_cast %43 : vector<1x21x384xf32> to vector<21x384xf32>
    %45 = arith.truncf %44 : vector<21x384xf32> to vector<21x384xbf16>
    %c0_38 = arith.constant 0 : index
    %c4_39 = arith.constant 4 : index
    %c0_40 = arith.constant 0 : index
    %46 = vector.load %arg15[%c0_38, %c4_39, %c0_40] : memref<1x25x384xf32, #tpu.memory_space<vmem>>, vector<1x21x384xf32>
    %47 = vector.shape_cast %46 : vector<1x21x384xf32> to vector<21x384xf32>
    %48 = arith.truncf %47 : vector<21x384xf32> to vector<21x384xbf16>
    %49 = tpu.concatenate %36, %39, %42, %45, %48 in 1 : vector<21x384xbf16>, vector<21x384xbf16>, vector<21x384xbf16>, vector<21x384xbf16>, vector<21x384xbf16> -> vector<21x1920xbf16>
    %c0_41 = arith.constant 0 : index
    %c0_42 = arith.constant 0 : index
    %50 = vector.load %arg3[%c0_41, %c0_42] : memref<1920x384xbf16, #tpu.memory_space<vmem>>, vector<1920x384xbf16>
    %cst_43 = arith.constant dense<0.000000e+00> : vector<21x384xf32>
    %51 = tpu.matmul %49, %50, %cst_43 {dimension_numbers = #tpu.dot_dimension_numbers<[1], [0], [0], [1], [0, 0, 1, 1], [], []>} : vector<21x1920xbf16>, vector<1920x384xbf16>, vector<21x384xf32> -> vector<21x384xf32>
    %c0_44 = arith.constant 0 : index
    %c0_45 = arith.constant 0 : index
    %52 = vector.load %arg9[%c0_44, %c0_45] : memref<1x384xf32, #tpu.memory_space<vmem>>, vector<1x384xf32>
    %53 = vector.broadcast %52 : vector<1x384xf32> to vector<21x384xf32>
    %54 = arith.addf %51, %53 : vector<21x384xf32>
    %cst_46 = arith.constant 0.000000e+00 : f32
    %55 = vector.broadcast %cst_46 : f32 to vector<21x384xf32>
    %56 = arith.maximumf %54, %55 : vector<21x384xf32>
    %c0_47 = arith.constant 0 : index
    %c1_48 = arith.constant 1 : index
    %c0_49 = arith.constant 0 : index
    %57 = vector.load %arg16[%c0_47, %c1_48, %c0_49] : memref<1x23x384xf32, #tpu.memory_space<vmem>>, vector<1x21x384xf32>
    %58 = vector.shape_cast %57 : vector<1x21x384xf32> to vector<21x384xf32>
    %59 = vector.shape_cast %56 : vector<21x384xf32> to vector<1x21x384xf32>
    tpu.vector_store %arg16[%c0_47, %c1_48, %c0_49], %59 {strides = array<i32>} : memref<1x23x384xf32, #tpu.memory_space<vmem>>, vector<1x21x384xf32>,
    %cst_50 = arith.constant 0.000000e+00 : f32
    %60 = vector.broadcast %cst_50 : f32 to vector<9x128xf32>
    %c0_51 = arith.constant 0 : index
    %c0_52 = arith.constant 0 : index
    %c0_53 = arith.constant 0 : index
    %61 = vector.load %arg17[%c0_51, %c0_52, %c0_53] : memref<1x9x128xf32, #tpu.memory_space<vmem>>, vector<1x9x128xf32>
    %62 = vector.shape_cast %61 : vector<1x9x128xf32> to vector<9x128xf32>
    %63 = vector.shape_cast %60 : vector<9x128xf32> to vector<1x9x128xf32>
    tpu.vector_store %arg17[%c0_51, %c0_52, %c0_53], %63 {strides = array<i32>} : memref<1x9x128xf32, #tpu.memory_space<vmem>>, vector<1x9x128xf32>,
    %c0_54 = arith.constant 0 : index
    %c0_55 = arith.constant 0 : index
    %c0_56 = arith.constant 0 : index
    %64 = vector.load %arg16[%c0_54, %c0_55, %c0_56] : memref<1x23x384xf32, #tpu.memory_space<vmem>>, vector<1x1x384xf32>
    %65 = vector.shape_cast %64 : vector<1x1x384xf32> to vector<1x384xf32>
    %66 = arith.truncf %65 : vector<1x384xf32> to vector<1x384xbf16>
    %c0_57 = arith.constant 0 : index
    %c1_58 = arith.constant 1 : index
    %c0_59 = arith.constant 0 : index
    %67 = vector.load %arg16[%c0_57, %c1_58, %c0_59] : memref<1x23x384xf32, #tpu.memory_space<vmem>>, vector<1x1x384xf32>
    %68 = vector.shape_cast %67 : vector<1x1x384xf32> to vector<1x384xf32>
    %69 = arith.truncf %68 : vector<1x384xf32> to vector<1x384xbf16>
    %c0_60 = arith.constant 0 : index
    %c2_61 = arith.constant 2 : index
    %c0_62 = arith.constant 0 : index
    %70 = vector.load %arg16[%c0_60, %c2_61, %c0_62] : memref<1x23x384xf32, #tpu.memory_space<vmem>>, vector<1x1x384xf32>
    %71 = vector.shape_cast %70 : vector<1x1x384xf32> to vector<1x384xf32>
    %72 = arith.truncf %71 : vector<1x384xf32> to vector<1x384xbf16>
    %73 = tpu.concatenate %66, %69, %72 in 1 : vector<1x384xbf16>, vector<1x384xbf16>, vector<1x384xbf16> -> vector<1x1152xbf16>
    %c0_63 = arith.constant 0 : index
    %c0_64 = arith.constant 0 : index
    %74 = vector.load %arg4[%c0_63, %c0_64] : memref<1152x128xbf16, #tpu.memory_space<vmem>>, vector<1152x128xbf16>
    %cst_65 = arith.constant dense<0.000000e+00> : vector<1x128xf32>
    %75 = tpu.matmul %73, %74, %cst_65 {dimension_numbers = #tpu.dot_dimension_numbers<[1], [0], [0], [1], [0, 0, 1, 1], [], []>} : vector<1x1152xbf16>, vector<1152x128xbf16>, vector<1x128xf32> -> vector<1x128xf32>
    %c0_66 = arith.constant 0 : index
    %c0_67 = arith.constant 0 : index
    %76 = vector.load %arg10[%c0_66, %c0_67] : memref<1x128xf32, #tpu.memory_space<vmem>>, vector<1x128xf32>
    %77 = arith.addf %75, %76 : vector<1x128xf32>
    %cst_68 = arith.constant 0.000000e+00 : f32
    %78 = vector.broadcast %cst_68 : f32 to vector<1x128xf32>
    %79 = arith.maximumf %77, %78 : vector<1x128xf32>
    %c0_69 = arith.constant 0 : index
    %c1_70 = arith.constant 1 : index
    %c0_71 = arith.constant 0 : index
    %80 = vector.load %arg17[%c0_69, %c1_70, %c0_71] : memref<1x9x128xf32, #tpu.memory_space<vmem>>, vector<1x1x128xf32>
    %81 = vector.shape_cast %80 : vector<1x1x128xf32> to vector<1x128xf32>
    %82 = vector.shape_cast %79 : vector<1x128xf32> to vector<1x1x128xf32>
    tpu.vector_store %arg17[%c0_69, %c1_70, %c0_71], %82 {strides = array<i32>} : memref<1x9x128xf32, #tpu.memory_space<vmem>>, vector<1x1x128xf32>,
    %c0_72 = arith.constant 0 : index
    %c3_73 = arith.constant 3 : index
    %c0_74 = arith.constant 0 : index
    %83 = vector.load %arg16[%c0_72, %c3_73, %c0_74] : memref<1x23x384xf32, #tpu.memory_space<vmem>>, vector<1x1x384xf32>
    %84 = vector.shape_cast %83 : vector<1x1x384xf32> to vector<1x384xf32>
    %85 = arith.truncf %84 : vector<1x384xf32> to vector<1x384xbf16>
    %c0_75 = arith.constant 0 : index
    %c4_76 = arith.constant 4 : index
    %c0_77 = arith.constant 0 : index
    %86 = vector.load %arg16[%c0_75, %c4_76, %c0_77] : memref<1x23x384xf32, #tpu.memory_space<vmem>>, vector<1x1x384xf32>
    %87 = vector.shape_cast %86 : vector<1x1x384xf32> to vector<1x384xf32>
    %88 = arith.truncf %87 : vector<1x384xf32> to vector<1x384xbf16>
    %c0_78 = arith.constant 0 : index
    %c5 = arith.constant 5 : index
    %c0_79 = arith.constant 0 : index
    %89 = vector.load %arg16[%c0_78, %c5, %c0_79] : memref<1x23x384xf32, #tpu.memory_space<vmem>>, vector<1x1x384xf32>
    %90 = vector.shape_cast %89 : vector<1x1x384xf32> to vector<1x384xf32>
    %91 = arith.truncf %90 : vector<1x384xf32> to vector<1x384xbf16>
    %92 = tpu.concatenate %85, %88, %91 in 1 : vector<1x384xbf16>, vector<1x384xbf16>, vector<1x384xbf16> -> vector<1x1152xbf16>
    %c0_80 = arith.constant 0 : index
    %c0_81 = arith.constant 0 : index
    %93 = vector.load %arg4[%c0_80, %c0_81] : memref<1152x128xbf16, #tpu.memory_space<vmem>>, vector<1152x128xbf16>
    %cst_82 = arith.constant dense<0.000000e+00> : vector<1x128xf32>
    %94 = tpu.matmul %92, %93, %cst_82 {dimension_numbers = #tpu.dot_dimension_numbers<[1], [0], [0], [1], [0, 0, 1, 1], [], []>} : vector<1x1152xbf16>, vector<1152x128xbf16>, vector<1x128xf32> -> vector<1x128xf32>
    %c0_83 = arith.constant 0 : index
    %c0_84 = arith.constant 0 : index
    %95 = vector.load %arg10[%c0_83, %c0_84] : memref<1x128xf32, #tpu.memory_space<vmem>>, vector<1x128xf32>
    %96 = arith.addf %94, %95 : vector<1x128xf32>
    %cst_85 = arith.constant 0.000000e+00 : f32
    %97 = vector.broadcast %cst_85 : f32 to vector<1x128xf32>
    %98 = arith.maximumf %96, %97 : vector<1x128xf32>
    %c0_86 = arith.constant 0 : index
    %c2_87 = arith.constant 2 : index
    %c0_88 = arith.constant 0 : index
    %99 = vector.load %arg17[%c0_86, %c2_87, %c0_88] : memref<1x9x128xf32, #tpu.memory_space<vmem>>, vector<1x1x128xf32>
    %100 = vector.shape_cast %99 : vector<1x1x128xf32> to vector<1x128xf32>
    %101 = vector.shape_cast %98 : vector<1x128xf32> to vector<1x1x128xf32>
    tpu.vector_store %arg17[%c0_86, %c2_87, %c0_88], %101 {strides = array<i32>} : memref<1x9x128xf32, #tpu.memory_space<vmem>>, vector<1x1x128xf32>,
    %c0_89 = arith.constant 0 : index
    %c6 = arith.constant 6 : index
    %c0_90 = arith.constant 0 : index
    %102 = vector.load %arg16[%c0_89, %c6, %c0_90] : memref<1x23x384xf32, #tpu.memory_space<vmem>>, vector<1x1x384xf32>
    %103 = vector.shape_cast %102 : vector<1x1x384xf32> to vector<1x384xf32>
    %104 = arith.truncf %103 : vector<1x384xf32> to vector<1x384xbf16>
    %c0_91 = arith.constant 0 : index
    %c7 = arith.constant 7 : index
    %c0_92 = arith.constant 0 : index
    %105 = vector.load %arg16[%c0_91, %c7, %c0_92] : memref<1x23x384xf32, #tpu.memory_space<vmem>>, vector<1x1x384xf32>
    %106 = vector.shape_cast %105 : vector<1x1x384xf32> to vector<1x384xf32>
    %107 = arith.truncf %106 : vector<1x384xf32> to vector<1x384xbf16>
    %c0_93 = arith.constant 0 : index
    %c8 = arith.constant 8 : index
    %c0_94 = arith.constant 0 : index
    %108 = vector.load %arg16[%c0_93, %c8, %c0_94] : memref<1x23x384xf32, #tpu.memory_space<vmem>>, vector<1x1x384xf32>
    %109 = vector.shape_cast %108 : vector<1x1x384xf32> to vector<1x384xf32>
    %110 = arith.truncf %109 : vector<1x384xf32> to vector<1x384xbf16>
    %111 = tpu.concatenate %104, %107, %110 in 1 : vector<1x384xbf16>, vector<1x384xbf16>, vector<1x384xbf16> -> vector<1x1152xbf16>
    %c0_95 = arith.constant 0 : index
    %c0_96 = arith.constant 0 : index
    %112 = vector.load %arg4[%c0_95, %c0_96] : memref<1152x128xbf16, #tpu.memory_space<vmem>>, vector<1152x128xbf16>
    %cst_97 = arith.constant dense<0.000000e+00> : vector<1x128xf32>
    %113 = tpu.matmul %111, %112, %cst_97 {dimension_numbers = #tpu.dot_dimension_numbers<[1], [0], [0], [1], [0, 0, 1, 1], [], []>} : vector<1x1152xbf16>, vector<1152x128xbf16>, vector<1x128xf32> -> vector<1x128xf32>
    %c0_98 = arith.constant 0 : index
    %c0_99 = arith.constant 0 : index
    %114 = vector.load %arg10[%c0_98, %c0_99] : memref<1x128xf32, #tpu.memory_space<vmem>>, vector<1x128xf32>
    %115 = arith.addf %113, %114 : vector<1x128xf32>
    %cst_100 = arith.constant 0.000000e+00 : f32
    %116 = vector.broadcast %cst_100 : f32 to vector<1x128xf32>
    %117 = arith.maximumf %115, %116 : vector<1x128xf32>
    %c0_101 = arith.constant 0 : index
    %c3_102 = arith.constant 3 : index
    %c0_103 = arith.constant 0 : index
    %118 = vector.load %arg17[%c0_101, %c3_102, %c0_103] : memref<1x9x128xf32, #tpu.memory_space<vmem>>, vector<1x1x128xf32>
    %119 = vector.shape_cast %118 : vector<1x1x128xf32> to vector<1x128xf32>
    %120 = vector.shape_cast %117 : vector<1x128xf32> to vector<1x1x128xf32>
    tpu.vector_store %arg17[%c0_101, %c3_102, %c0_103], %120 {strides = array<i32>} : memref<1x9x128xf32, #tpu.memory_space<vmem>>, vector<1x1x128xf32>,
    %c0_104 = arith.constant 0 : index
    %c9 = arith.constant 9 : index
    %c0_105 = arith.constant 0 : index
    %121 = vector.load %arg16[%c0_104, %c9, %c0_105] : memref<1x23x384xf32, #tpu.memory_space<vmem>>, vector<1x1x384xf32>
    %122 = vector.shape_cast %121 : vector<1x1x384xf32> to vector<1x384xf32>
    %123 = arith.truncf %122 : vector<1x384xf32> to vector<1x384xbf16>
    %c0_106 = arith.constant 0 : index
    %c10 = arith.constant 10 : index
    %c0_107 = arith.constant 0 : index
    %124 = vector.load %arg16[%c0_106, %c10, %c0_107] : memref<1x23x384xf32, #tpu.memory_space<vmem>>, vector<1x1x384xf32>
    %125 = vector.shape_cast %124 : vector<1x1x384xf32> to vector<1x384xf32>
    %126 = arith.truncf %125 : vector<1x384xf32> to vector<1x384xbf16>
    %c0_108 = arith.constant 0 : index
    %c11 = arith.constant 11 : index
    %c0_109 = arith.constant 0 : index
    %127 = vector.load %arg16[%c0_108, %c11, %c0_109] : memref<1x23x384xf32, #tpu.memory_space<vmem>>, vector<1x1x384xf32>
    %128 = vector.shape_cast %127 : vector<1x1x384xf32> to vector<1x384xf32>
    %129 = arith.truncf %128 : vector<1x384xf32> to vector<1x384xbf16>
    %130 = tpu.concatenate %123, %126, %129 in 1 : vector<1x384xbf16>, vector<1x384xbf16>, vector<1x384xbf16> -> vector<1x1152xbf16>
    %c0_110 = arith.constant 0 : index
    %c0_111 = arith.constant 0 : index
    %131 = vector.load %arg4[%c0_110, %c0_111] : memref<1152x128xbf16, #tpu.memory_space<vmem>>, vector<1152x128xbf16>
    %cst_112 = arith.constant dense<0.000000e+00> : vector<1x128xf32>
    %132 = tpu.matmul %130, %131, %cst_112 {dimension_numbers = #tpu.dot_dimension_numbers<[1], [0], [0], [1], [0, 0, 1, 1], [], []>} : vector<1x1152xbf16>, vector<1152x128xbf16>, vector<1x128xf32> -> vector<1x128xf32>
    %c0_113 = arith.constant 0 : index
    %c0_114 = arith.constant 0 : index
    %133 = vector.load %arg10[%c0_113, %c0_114] : memref<1x128xf32, #tpu.memory_space<vmem>>, vector<1x128xf32>
    %134 = arith.addf %132, %133 : vector<1x128xf32>
    %cst_115 = arith.constant 0.000000e+00 : f32
    %135 = vector.broadcast %cst_115 : f32 to vector<1x128xf32>
    %136 = arith.maximumf %134, %135 : vector<1x128xf32>
    %c0_116 = arith.constant 0 : index
    %c4_117 = arith.constant 4 : index
    %c0_118 = arith.constant 0 : index
    %137 = vector.load %arg17[%c0_116, %c4_117, %c0_118] : memref<1x9x128xf32, #tpu.memory_space<vmem>>, vector<1x1x128xf32>
    %138 = vector.shape_cast %137 : vector<1x1x128xf32> to vector<1x128xf32>
    %139 = vector.shape_cast %136 : vector<1x128xf32> to vector<1x1x128xf32>
    tpu.vector_store %arg17[%c0_116, %c4_117, %c0_118], %139 {strides = array<i32>} : memref<1x9x128xf32, #tpu.memory_space<vmem>>, vector<1x1x128xf32>,
    %c0_119 = arith.constant 0 : index
    %c12 = arith.constant 12 : index
    %c0_120 = arith.constant 0 : index
    %140 = vector.load %arg16[%c0_119, %c12, %c0_120] : memref<1x23x384xf32, #tpu.memory_space<vmem>>, vector<1x1x384xf32>
    %141 = vector.shape_cast %140 : vector<1x1x384xf32> to vector<1x384xf32>
    %142 = arith.truncf %141 : vector<1x384xf32> to vector<1x384xbf16>
    %c0_121 = arith.constant 0 : index
    %c13 = arith.constant 13 : index
    %c0_122 = arith.constant 0 : index
    %143 = vector.load %arg16[%c0_121, %c13, %c0_122] : memref<1x23x384xf32, #tpu.memory_space<vmem>>, vector<1x1x384xf32>
    %144 = vector.shape_cast %143 : vector<1x1x384xf32> to vector<1x384xf32>
    %145 = arith.truncf %144 : vector<1x384xf32> to vector<1x384xbf16>
    %c0_123 = arith.constant 0 : index
    %c14 = arith.constant 14 : index
    %c0_124 = arith.constant 0 : index
    %146 = vector.load %arg16[%c0_123, %c14, %c0_124] : memref<1x23x384xf32, #tpu.memory_space<vmem>>, vector<1x1x384xf32>
    %147 = vector.shape_cast %146 : vector<1x1x384xf32> to vector<1x384xf32>
    %148 = arith.truncf %147 : vector<1x384xf32> to vector<1x384xbf16>
    %149 = tpu.concatenate %142, %145, %148 in 1 : vector<1x384xbf16>, vector<1x384xbf16>, vector<1x384xbf16> -> vector<1x1152xbf16>
    %c0_125 = arith.constant 0 : index
    %c0_126 = arith.constant 0 : index
    %150 = vector.load %arg4[%c0_125, %c0_126] : memref<1152x128xbf16, #tpu.memory_space<vmem>>, vector<1152x128xbf16>
    %cst_127 = arith.constant dense<0.000000e+00> : vector<1x128xf32>
    %151 = tpu.matmul %149, %150, %cst_127 {dimension_numbers = #tpu.dot_dimension_numbers<[1], [0], [0], [1], [0, 0, 1, 1], [], []>} : vector<1x1152xbf16>, vector<1152x128xbf16>, vector<1x128xf32> -> vector<1x128xf32>
    %c0_128 = arith.constant 0 : index
    %c0_129 = arith.constant 0 : index
    %152 = vector.load %arg10[%c0_128, %c0_129] : memref<1x128xf32, #tpu.memory_space<vmem>>, vector<1x128xf32>
    %153 = arith.addf %151, %152 : vector<1x128xf32>
    %cst_130 = arith.constant 0.000000e+00 : f32
    %154 = vector.broadcast %cst_130 : f32 to vector<1x128xf32>
    %155 = arith.maximumf %153, %154 : vector<1x128xf32>
    %c0_131 = arith.constant 0 : index
    %c5_132 = arith.constant 5 : index
    %c0_133 = arith.constant 0 : index
    %156 = vector.load %arg17[%c0_131, %c5_132, %c0_133] : memref<1x9x128xf32, #tpu.memory_space<vmem>>, vector<1x1x128xf32>
    %157 = vector.shape_cast %156 : vector<1x1x128xf32> to vector<1x128xf32>
    %158 = vector.shape_cast %155 : vector<1x128xf32> to vector<1x1x128xf32>
    tpu.vector_store %arg17[%c0_131, %c5_132, %c0_133], %158 {strides = array<i32>} : memref<1x9x128xf32, #tpu.memory_space<vmem>>, vector<1x1x128xf32>,
    %c0_134 = arith.constant 0 : index
    %c15 = arith.constant 15 : index
    %c0_135 = arith.constant 0 : index
    %159 = vector.load %arg16[%c0_134, %c15, %c0_135] : memref<1x23x384xf32, #tpu.memory_space<vmem>>, vector<1x1x384xf32>
    %160 = vector.shape_cast %159 : vector<1x1x384xf32> to vector<1x384xf32>
    %161 = arith.truncf %160 : vector<1x384xf32> to vector<1x384xbf16>
    %c0_136 = arith.constant 0 : index
    %c16 = arith.constant 16 : index
    %c0_137 = arith.constant 0 : index
    %162 = vector.load %arg16[%c0_136, %c16, %c0_137] : memref<1x23x384xf32, #tpu.memory_space<vmem>>, vector<1x1x384xf32>
    %163 = vector.shape_cast %162 : vector<1x1x384xf32> to vector<1x384xf32>
    %164 = arith.truncf %163 : vector<1x384xf32> to vector<1x384xbf16>
    %c0_138 = arith.constant 0 : index
    %c17 = arith.constant 17 : index
    %c0_139 = arith.constant 0 : index
    %165 = vector.load %arg16[%c0_138, %c17, %c0_139] : memref<1x23x384xf32, #tpu.memory_space<vmem>>, vector<1x1x384xf32>
    %166 = vector.shape_cast %165 : vector<1x1x384xf32> to vector<1x384xf32>
    %167 = arith.truncf %166 : vector<1x384xf32> to vector<1x384xbf16>
    %168 = tpu.concatenate %161, %164, %167 in 1 : vector<1x384xbf16>, vector<1x384xbf16>, vector<1x384xbf16> -> vector<1x1152xbf16>
    %c0_140 = arith.constant 0 : index
    %c0_141 = arith.constant 0 : index
    %169 = vector.load %arg4[%c0_140, %c0_141] : memref<1152x128xbf16, #tpu.memory_space<vmem>>, vector<1152x128xbf16>
    %cst_142 = arith.constant dense<0.000000e+00> : vector<1x128xf32>
    %170 = tpu.matmul %168, %169, %cst_142 {dimension_numbers = #tpu.dot_dimension_numbers<[1], [0], [0], [1], [0, 0, 1, 1], [], []>} : vector<1x1152xbf16>, vector<1152x128xbf16>, vector<1x128xf32> -> vector<1x128xf32>
    %c0_143 = arith.constant 0 : index
    %c0_144 = arith.constant 0 : index
    %171 = vector.load %arg10[%c0_143, %c0_144] : memref<1x128xf32, #tpu.memory_space<vmem>>, vector<1x128xf32>
    %172 = arith.addf %170, %171 : vector<1x128xf32>
    %cst_145 = arith.constant 0.000000e+00 : f32
    %173 = vector.broadcast %cst_145 : f32 to vector<1x128xf32>
    %174 = arith.maximumf %172, %173 : vector<1x128xf32>
    %c0_146 = arith.constant 0 : index
    %c6_147 = arith.constant 6 : index
    %c0_148 = arith.constant 0 : index
    %175 = vector.load %arg17[%c0_146, %c6_147, %c0_148] : memref<1x9x128xf32, #tpu.memory_space<vmem>>, vector<1x1x128xf32>
    %176 = vector.shape_cast %175 : vector<1x1x128xf32> to vector<1x128xf32>
    %177 = vector.shape_cast %174 : vector<1x128xf32> to vector<1x1x128xf32>
    tpu.vector_store %arg17[%c0_146, %c6_147, %c0_148], %177 {strides = array<i32>} : memref<1x9x128xf32, #tpu.memory_space<vmem>>, vector<1x1x128xf32>,
    %c0_149 = arith.constant 0 : index
    %c18 = arith.constant 18 : index
    %c0_150 = arith.constant 0 : index
    %178 = vector.load %arg16[%c0_149, %c18, %c0_150] : memref<1x23x384xf32, #tpu.memory_space<vmem>>, vector<1x1x384xf32>
    %179 = vector.shape_cast %178 : vector<1x1x384xf32> to vector<1x384xf32>
    %180 = arith.truncf %179 : vector<1x384xf32> to vector<1x384xbf16>
    %c0_151 = arith.constant 0 : index
    %c19 = arith.constant 19 : index
    %c0_152 = arith.constant 0 : index
    %181 = vector.load %arg16[%c0_151, %c19, %c0_152] : memref<1x23x384xf32, #tpu.memory_space<vmem>>, vector<1x1x384xf32>
    %182 = vector.shape_cast %181 : vector<1x1x384xf32> to vector<1x384xf32>
    %183 = arith.truncf %182 : vector<1x384xf32> to vector<1x384xbf16>
    %c0_153 = arith.constant 0 : index
    %c20 = arith.constant 20 : index
    %c0_154 = arith.constant 0 : index
    %184 = vector.load %arg16[%c0_153, %c20, %c0_154] : memref<1x23x384xf32, #tpu.memory_space<vmem>>, vector<1x1x384xf32>
    %185 = vector.shape_cast %184 : vector<1x1x384xf32> to vector<1x384xf32>
    %186 = arith.truncf %185 : vector<1x384xf32> to vector<1x384xbf16>
    %187 = tpu.concatenate %180, %183, %186 in 1 : vector<1x384xbf16>, vector<1x384xbf16>, vector<1x384xbf16> -> vector<1x1152xbf16>
    %c0_155 = arith.constant 0 : index
    %c0_156 = arith.constant 0 : index
    %188 = vector.load %arg4[%c0_155, %c0_156] : memref<1152x128xbf16, #tpu.memory_space<vmem>>, vector<1152x128xbf16>
    %cst_157 = arith.constant dense<0.000000e+00> : vector<1x128xf32>
    %189 = tpu.matmul %187, %188, %cst_157 {dimension_numbers = #tpu.dot_dimension_numbers<[1], [0], [0], [1], [0, 0, 1, 1], [], []>} : vector<1x1152xbf16>, vector<1152x128xbf16>, vector<1x128xf32> -> vector<1x128xf32>
    %c0_158 = arith.constant 0 : index
    %c0_159 = arith.constant 0 : index
    %190 = vector.load %arg10[%c0_158, %c0_159] : memref<1x128xf32, #tpu.memory_space<vmem>>, vector<1x128xf32>
    %191 = arith.addf %189, %190 : vector<1x128xf32>
    %cst_160 = arith.constant 0.000000e+00 : f32
    %192 = vector.broadcast %cst_160 : f32 to vector<1x128xf32>
    %193 = arith.maximumf %191, %192 : vector<1x128xf32>
    %c0_161 = arith.constant 0 : index
    %c7_162 = arith.constant 7 : index
    %c0_163 = arith.constant 0 : index
    %194 = vector.load %arg17[%c0_161, %c7_162, %c0_163] : memref<1x9x128xf32, #tpu.memory_space<vmem>>, vector<1x1x128xf32>
    %195 = vector.shape_cast %194 : vector<1x1x128xf32> to vector<1x128xf32>
    %196 = vector.shape_cast %193 : vector<1x128xf32> to vector<1x1x128xf32>
    tpu.vector_store %arg17[%c0_161, %c7_162, %c0_163], %196 {strides = array<i32>} : memref<1x9x128xf32, #tpu.memory_space<vmem>>, vector<1x1x128xf32>,
    %c0_164 = arith.constant 0 : index
    %c0_165 = arith.constant 0 : index
    %c0_166 = arith.constant 0 : index
    %197 = vector.load %arg17[%c0_164, %c0_165, %c0_166] : memref<1x9x128xf32, #tpu.memory_space<vmem>>, vector<1x1x128xf32>
    %198 = vector.shape_cast %197 : vector<1x1x128xf32> to vector<1x128xf32>
    %199 = arith.truncf %198 : vector<1x128xf32> to vector<1x128xbf16>
    %c0_167 = arith.constant 0 : index
    %c1_168 = arith.constant 1 : index
    %c0_169 = arith.constant 0 : index
    %200 = vector.load %arg17[%c0_167, %c1_168, %c0_169] : memref<1x9x128xf32, #tpu.memory_space<vmem>>, vector<1x1x128xf32>
    %201 = vector.shape_cast %200 : vector<1x1x128xf32> to vector<1x128xf32>
    %202 = arith.truncf %201 : vector<1x128xf32> to vector<1x128xbf16>
    %c0_170 = arith.constant 0 : index
    %c2_171 = arith.constant 2 : index
    %c0_172 = arith.constant 0 : index
    %203 = vector.load %arg17[%c0_170, %c2_171, %c0_172] : memref<1x9x128xf32, #tpu.memory_space<vmem>>, vector<1x1x128xf32>
    %204 = vector.shape_cast %203 : vector<1x1x128xf32> to vector<1x128xf32>
    %205 = arith.truncf %204 : vector<1x128xf32> to vector<1x128xbf16>
    %206 = tpu.concatenate %199, %202, %205 in 1 : vector<1x128xbf16>, vector<1x128xbf16>, vector<1x128xbf16> -> vector<1x384xbf16>
    %c0_173 = arith.constant 0 : index
    %c0_174 = arith.constant 0 : index
    %207 = vector.load %arg5[%c0_173, %c0_174] : memref<384x128xbf16, #tpu.memory_space<vmem>>, vector<384x128xbf16>
    %cst_175 = arith.constant dense<0.000000e+00> : vector<1x128xf32>
    %208 = tpu.matmul %206, %207, %cst_175 {dimension_numbers = #tpu.dot_dimension_numbers<[1], [0], [0], [1], [0, 0, 1, 1], [], []>} : vector<1x384xbf16>, vector<384x128xbf16>, vector<1x128xf32> -> vector<1x128xf32>
    %c0_176 = arith.constant 0 : index
    %c0_177 = arith.constant 0 : index
    %209 = vector.load %arg11[%c0_176, %c0_177] : memref<1x128xf32, #tpu.memory_space<vmem>>, vector<1x128xf32>
    %210 = arith.addf %208, %209 : vector<1x128xf32>
    %cst_178 = arith.constant 0.000000e+00 : f32
    %211 = vector.broadcast %cst_178 : f32 to vector<1x128xf32>
    %212 = arith.maximumf %210, %211 : vector<1x128xf32>
    %c0_179 = arith.constant 0 : index
    %c0_180 = arith.constant 0 : index
    %c0_181 = arith.constant 0 : index
    %213 = vector.load %arg18[%c0_179, %c0_180, %c0_181] : memref<1x3x128xf32, #tpu.memory_space<vmem>>, vector<1x1x128xf32>
    %214 = vector.shape_cast %213 : vector<1x1x128xf32> to vector<1x128xf32>
    %215 = vector.shape_cast %212 : vector<1x128xf32> to vector<1x1x128xf32>
    tpu.vector_store %arg18[%c0_179, %c0_180, %c0_181], %215 {strides = array<i32>} : memref<1x3x128xf32, #tpu.memory_space<vmem>>, vector<1x1x128xf32>,
    %c0_182 = arith.constant 0 : index
    %c3_183 = arith.constant 3 : index
    %c0_184 = arith.constant 0 : index
    %216 = vector.load %arg17[%c0_182, %c3_183, %c0_184] : memref<1x9x128xf32, #tpu.memory_space<vmem>>, vector<1x1x128xf32>
    %217 = vector.shape_cast %216 : vector<1x1x128xf32> to vector<1x128xf32>
    %218 = arith.truncf %217 : vector<1x128xf32> to vector<1x128xbf16>
    %c0_185 = arith.constant 0 : index
    %c4_186 = arith.constant 4 : index
    %c0_187 = arith.constant 0 : index
    %219 = vector.load %arg17[%c0_185, %c4_186, %c0_187] : memref<1x9x128xf32, #tpu.memory_space<vmem>>, vector<1x1x128xf32>
    %220 = vector.shape_cast %219 : vector<1x1x128xf32> to vector<1x128xf32>
    %221 = arith.truncf %220 : vector<1x128xf32> to vector<1x128xbf16>
    %c0_188 = arith.constant 0 : index
    %c5_189 = arith.constant 5 : index
    %c0_190 = arith.constant 0 : index
    %222 = vector.load %arg17[%c0_188, %c5_189, %c0_190] : memref<1x9x128xf32, #tpu.memory_space<vmem>>, vector<1x1x128xf32>
    %223 = vector.shape_cast %222 : vector<1x1x128xf32> to vector<1x128xf32>
    %224 = arith.truncf %223 : vector<1x128xf32> to vector<1x128xbf16>
    %225 = tpu.concatenate %218, %221, %224 in 1 : vector<1x128xbf16>, vector<1x128xbf16>, vector<1x128xbf16> -> vector<1x384xbf16>
    %c0_191 = arith.constant 0 : index
    %c0_192 = arith.constant 0 : index
    %226 = vector.load %arg5[%c0_191, %c0_192] : memref<384x128xbf16, #tpu.memory_space<vmem>>, vector<384x128xbf16>
    %cst_193 = arith.constant dense<0.000000e+00> : vector<1x128xf32>
    %227 = tpu.matmul %225, %226, %cst_193 {dimension_numbers = #tpu.dot_dimension_numbers<[1], [0], [0], [1], [0, 0, 1, 1], [], []>} : vector<1x384xbf16>, vector<384x128xbf16>, vector<1x128xf32> -> vector<1x128xf32>
    %c0_194 = arith.constant 0 : index
    %c0_195 = arith.constant 0 : index
    %228 = vector.load %arg11[%c0_194, %c0_195] : memref<1x128xf32, #tpu.memory_space<vmem>>, vector<1x128xf32>
    %229 = arith.addf %227, %228 : vector<1x128xf32>
    %cst_196 = arith.constant 0.000000e+00 : f32
    %230 = vector.broadcast %cst_196 : f32 to vector<1x128xf32>
    %231 = arith.maximumf %229, %230 : vector<1x128xf32>
    %c0_197 = arith.constant 0 : index
    %c1_198 = arith.constant 1 : index
    %c0_199 = arith.constant 0 : index
    %232 = vector.load %arg18[%c0_197, %c1_198, %c0_199] : memref<1x3x128xf32, #tpu.memory_space<vmem>>, vector<1x1x128xf32>
    %233 = vector.shape_cast %232 : vector<1x1x128xf32> to vector<1x128xf32>
    %234 = vector.shape_cast %231 : vector<1x128xf32> to vector<1x1x128xf32>
    tpu.vector_store %arg18[%c0_197, %c1_198, %c0_199], %234 {strides = array<i32>} : memref<1x3x128xf32, #tpu.memory_space<vmem>>, vector<1x1x128xf32>,
    %c0_200 = arith.constant 0 : index
    %c6_201 = arith.constant 6 : index
    %c0_202 = arith.constant 0 : index
    %235 = vector.load %arg17[%c0_200, %c6_201, %c0_202] : memref<1x9x128xf32, #tpu.memory_space<vmem>>, vector<1x1x128xf32>
    %236 = vector.shape_cast %235 : vector<1x1x128xf32> to vector<1x128xf32>
    %237 = arith.truncf %236 : vector<1x128xf32> to vector<1x128xbf16>
    %c0_203 = arith.constant 0 : index
    %c7_204 = arith.constant 7 : index
    %c0_205 = arith.constant 0 : index
    %238 = vector.load %arg17[%c0_203, %c7_204, %c0_205] : memref<1x9x128xf32, #tpu.memory_space<vmem>>, vector<1x1x128xf32>
    %239 = vector.shape_cast %238 : vector<1x1x128xf32> to vector<1x128xf32>
    %240 = arith.truncf %239 : vector<1x128xf32> to vector<1x128xbf16>
    %c0_206 = arith.constant 0 : index
    %c8_207 = arith.constant 8 : index
    %c0_208 = arith.constant 0 : index
    %241 = vector.load %arg17[%c0_206, %c8_207, %c0_208] : memref<1x9x128xf32, #tpu.memory_space<vmem>>, vector<1x1x128xf32>
    %242 = vector.shape_cast %241 : vector<1x1x128xf32> to vector<1x128xf32>
    %243 = arith.truncf %242 : vector<1x128xf32> to vector<1x128xbf16>
    %244 = tpu.concatenate %237, %240, %243 in 1 : vector<1x128xbf16>, vector<1x128xbf16>, vector<1x128xbf16> -> vector<1x384xbf16>
    %c0_209 = arith.constant 0 : index
    %c0_210 = arith.constant 0 : index
    %245 = vector.load %arg5[%c0_209, %c0_210] : memref<384x128xbf16, #tpu.memory_space<vmem>>, vector<384x128xbf16>
    %cst_211 = arith.constant dense<0.000000e+00> : vector<1x128xf32>
    %246 = tpu.matmul %244, %245, %cst_211 {dimension_numbers = #tpu.dot_dimension_numbers<[1], [0], [0], [1], [0, 0, 1, 1], [], []>} : vector<1x384xbf16>, vector<384x128xbf16>, vector<1x128xf32> -> vector<1x128xf32>
    %c0_212 = arith.constant 0 : index
    %c0_213 = arith.constant 0 : index
    %247 = vector.load %arg11[%c0_212, %c0_213] : memref<1x128xf32, #tpu.memory_space<vmem>>, vector<1x128xf32>
    %248 = arith.addf %246, %247 : vector<1x128xf32>
    %cst_214 = arith.constant 0.000000e+00 : f32
    %249 = vector.broadcast %cst_214 : f32 to vector<1x128xf32>
    %250 = arith.maximumf %248, %249 : vector<1x128xf32>
    %c0_215 = arith.constant 0 : index
    %c2_216 = arith.constant 2 : index
    %c0_217 = arith.constant 0 : index
    %251 = vector.load %arg18[%c0_215, %c2_216, %c0_217] : memref<1x3x128xf32, #tpu.memory_space<vmem>>, vector<1x1x128xf32>
    %252 = vector.shape_cast %251 : vector<1x1x128xf32> to vector<1x128xf32>
    %253 = vector.shape_cast %250 : vector<1x128xf32> to vector<1x1x128xf32>
    tpu.vector_store %arg18[%c0_215, %c2_216, %c0_217], %253 {strides = array<i32>} : memref<1x3x128xf32, #tpu.memory_space<vmem>>, vector<1x1x128xf32>,
    %c0_218 = arith.constant 0 : index
    %c0_219 = arith.constant 0 : index
    %c0_220 = arith.constant 0 : index
    %254 = vector.load %arg18[%c0_218, %c0_219, %c0_220] : memref<1x3x128xf32, #tpu.memory_space<vmem>>, vector<1x1x128xf32>
    %255 = vector.shape_cast %254 : vector<1x1x128xf32> to vector<1x128xf32>
    %256 = arith.truncf %255 : vector<1x128xf32> to vector<1x128xbf16>
    %c0_221 = arith.constant 0 : index
    %c1_222 = arith.constant 1 : index
    %c0_223 = arith.constant 0 : index
    %257 = vector.load %arg18[%c0_221, %c1_222, %c0_223] : memref<1x3x128xf32, #tpu.memory_space<vmem>>, vector<1x1x128xf32>
    %258 = vector.shape_cast %257 : vector<1x1x128xf32> to vector<1x128xf32>
    %259 = arith.truncf %258 : vector<1x128xf32> to vector<1x128xbf16>
    %c0_224 = arith.constant 0 : index
    %c2_225 = arith.constant 2 : index
    %c0_226 = arith.constant 0 : index
    %260 = vector.load %arg18[%c0_224, %c2_225, %c0_226] : memref<1x3x128xf32, #tpu.memory_space<vmem>>, vector<1x1x128xf32>
    %261 = vector.shape_cast %260 : vector<1x1x128xf32> to vector<1x128xf32>
    %262 = arith.truncf %261 : vector<1x128xf32> to vector<1x128xbf16>
    %263 = tpu.concatenate %256, %259, %262 in 1 : vector<1x128xbf16>, vector<1x128xbf16>, vector<1x128xbf16> -> vector<1x384xbf16>
    %c0_227 = arith.constant 0 : index
    %c0_228 = arith.constant 0 : index
    %264 = vector.load %arg6[%c0_227, %c0_228] : memref<384x128xbf16, #tpu.memory_space<vmem>>, vector<384x128xbf16>
    %cst_229 = arith.constant dense<0.000000e+00> : vector<1x128xf32>
    %265 = tpu.matmul %263, %264, %cst_229 {dimension_numbers = #tpu.dot_dimension_numbers<[1], [0], [0], [1], [0, 0, 1, 1], [], []>} : vector<1x384xbf16>, vector<384x128xbf16>, vector<1x128xf32> -> vector<1x128xf32>
    %c0_230 = arith.constant 0 : index
    %c0_231 = arith.constant 0 : index
    %266 = vector.load %arg12[%c0_230, %c0_231] : memref<1x128xf32, #tpu.memory_space<vmem>>, vector<1x128xf32>
    %267 = arith.addf %265, %266 : vector<1x128xf32>
    %cst_232 = arith.constant 0.000000e+00 : f32
    %268 = vector.broadcast %cst_232 : f32 to vector<1x128xf32>
    %269 = arith.maximumf %267, %268 : vector<1x128xf32>
    %c0_233 = arith.constant 0 : index
    %c0_234 = arith.constant 0 : index
    %c0_235 = arith.constant 0 : index
    %270 = vector.load %arg19[%c0_233, %c0_234, %c0_235] : memref<1x1x128xf32, #tpu.memory_space<vmem>>, vector<1x1x128xf32>
    %271 = vector.shape_cast %270 : vector<1x1x128xf32> to vector<1x128xf32>
    %272 = vector.shape_cast %269 : vector<1x128xf32> to vector<1x1x128xf32>
    tpu.vector_store %arg19[%c0_233, %c0_234, %c0_235], %272 {strides = array<i32>} : memref<1x1x128xf32, #tpu.memory_space<vmem>>, vector<1x1x128xf32>,
    %c0_236 = arith.constant 0 : index
    %c0_237 = arith.constant 0 : index
    %c0_238 = arith.constant 0 : index
    %273 = vector.load %arg19[%c0_236, %c0_237, %c0_238] : memref<1x1x128xf32, #tpu.memory_space<vmem>>, vector<1x1x128xf32>
    %274 = vector.shape_cast %273 : vector<1x1x128xf32> to vector<1x128xf32>
    %275 = arith.truncf %274 : vector<1x128xf32> to vector<1x128xbf16>
    %c0_239 = arith.constant 0 : index
    %c0_240 = arith.constant 0 : index
    %276 = vector.load %arg7[%c0_239, %c0_240] : memref<128x128xbf16, #tpu.memory_space<vmem>>, vector<128x128xbf16>
    %cst_241 = arith.constant dense<0.000000e+00> : vector<1x128xf32>
    %277 = tpu.matmul %275, %276, %cst_241 {dimension_numbers = #tpu.dot_dimension_numbers<[1], [0], [0], [1], [0, 0, 1, 1], [], []>} : vector<1x128xbf16>, vector<128x128xbf16>, vector<1x128xf32> -> vector<1x128xf32>
    %c0_242 = arith.constant 0 : index
    %c0_243 = arith.constant 0 : index
    %278 = vector.load %arg13[%c0_242, %c0_243] : memref<1x128xf32, #tpu.memory_space<vmem>>, vector<1x128xf32>
    %279 = arith.addf %277, %278 : vector<1x128xf32>
    %c0_244 = arith.constant 0 : index
    %c0_245 = arith.constant 0 : index
    %c0_246 = arith.constant 0 : index
    %280 = vector.load %arg14[%c0_244, %c0_245, %c0_246] : memref<1x1x128xf32, #tpu.memory_space<vmem>>, vector<1x1x128xf32>
    %281 = vector.shape_cast %280 : vector<1x1x128xf32> to vector<1x128xf32>
    %282 = vector.shape_cast %279 : vector<1x128xf32> to vector<1x1x128xf32>
    tpu.vector_store %arg14[%c0_244, %c0_245, %c0_246], %282 {strides = array<i32>} : memref<1x1x128xf32, #tpu.memory_space<vmem>>, vector<1x1x128xf32>,
    return
  }
  func.func @transform_0(%arg0: i32) -> (i32, i32, i32) {
    %c0_i32 = arith.constant 0 : i32
    %c0_i32_0 = arith.constant 0 : i32
    %c0_i32_1 = arith.constant 0 : i32
    return %arg0, %c0_i32, %c0_i32_0 : i32, i32, i32
  }
  func.func @transform_1(%arg0: i32) -> (i32, i32) {
    %c0_i32 = arith.constant 0 : i32
    %c0_i32_0 = arith.constant 0 : i32
    %c0_i32_1 = arith.constant 0 : i32
    return %c0_i32, %c0_i32_0 : i32, i32
  }
  func.func @transform_2(%arg0: i32) -> (i32, i32) {
    %c0_i32 = arith.constant 0 : i32
    %c0_i32_0 = arith.constant 0 : i32
    %c0_i32_1 = arith.constant 0 : i32
    return %c0_i32, %c0_i32_0 : i32, i32
  }
  func.func @transform_3(%arg0: i32) -> (i32, i32) {
    %c0_i32 = arith.constant 0 : i32
    %c0_i32_0 = arith.constant 0 : i32
    %c0_i32_1 = arith.constant 0 : i32
    return %c0_i32, %c0_i32_0 : i32, i32
  }
  func.func @transform_4(%arg0: i32) -> (i32, i32) {
    %c0_i32 = arith.constant 0 : i32
    %c0_i32_0 = arith.constant 0 : i32
    %c0_i32_1 = arith.constant 0 : i32
    return %c0_i32, %c0_i32_0 : i32, i32
  }
  func.func @transform_5(%arg0: i32) -> (i32, i32) {
    %c0_i32 = arith.constant 0 : i32
    %c0_i32_0 = arith.constant 0 : i32
    %c0_i32_1 = arith.constant 0 : i32
    return %c0_i32, %c0_i32_0 : i32, i32
  }
  func.func @transform_6(%arg0: i32) -> (i32, i32) {
    %c0_i32 = arith.constant 0 : i32
    %c0_i32_0 = arith.constant 0 : i32
    %c0_i32_1 = arith.constant 0 : i32
    return %c0_i32, %c0_i32_0 : i32, i32
  }
  func.func @transform_7(%arg0: i32) -> (i32, i32) {
    %c0_i32 = arith.constant 0 : i32
    %c0_i32_0 = arith.constant 0 : i32
    %c0_i32_1 = arith.constant 0 : i32
    return %c0_i32, %c0_i32_0 : i32, i32
  }
  func.func @transform_8(%arg0: i32) -> (i32, i32) {
    %c0_i32 = arith.constant 0 : i32
    %c0_i32_0 = arith.constant 0 : i32
    %c0_i32_1 = arith.constant 0 : i32
    return %c0_i32, %c0_i32_0 : i32, i32
  }
  func.func @transform_9(%arg0: i32) -> (i32, i32) {
    %c0_i32 = arith.constant 0 : i32
    %c0_i32_0 = arith.constant 0 : i32
    %c0_i32_1 = arith.constant 0 : i32
    return %c0_i32, %c0_i32_0 : i32, i32
  }
  func.func @transform_10(%arg0: i32) -> (i32, i32) {
    %c0_i32 = arith.constant 0 : i32
    %c0_i32_0 = arith.constant 0 : i32
    %c0_i32_1 = arith.constant 0 : i32
    return %c0_i32, %c0_i32_0 : i32, i32
  }
  func.func @transform_11(%arg0: i32) -> (i32, i32) {
    %c0_i32 = arith.constant 0 : i32
    %c0_i32_0 = arith.constant 0 : i32
    %c0_i32_1 = arith.constant 0 : i32
    return %c0_i32, %c0_i32_0 : i32, i32
  }
  func.func @transform_12(%arg0: i32) -> (i32, i32) {
    %c0_i32 = arith.constant 0 : i32
    %c0_i32_0 = arith.constant 0 : i32
    %c0_i32_1 = arith.constant 0 : i32
    return %c0_i32, %c0_i32_0 : i32, i32
  }
  func.func @transform_13(%arg0: i32) -> (i32, i32, i32) {
    %c0_i32 = arith.constant 0 : i32
    %c0_i32_0 = arith.constant 0 : i32
    %c0_i32_1 = arith.constant 0 : i32
    return %arg0, %c0_i32, %c0_i32_0 : i32, i32, i32
  }
}

</mosaic_0001>

<llo_original>
// kernel: forward.1
$region0: #{forward.1}
  #allocation0 [shape = 'u32[]', space=smem, size = 0x4, offset = 0x4, fixed_abs, tag = 'smem constant byte address 0x4 - core index']
  #allocation1 [shape = 'u32[72,128]{1,0:T(1,128)}', space=vmem, size = 0x9000, scoped, tag = 'internal scratch']
  #allocation2 [shape = 'f32[1,25,384]{2,1,0:T(8,128)}', space=vmem, size = 0xc000, scoped, tag = 'scratch operand']
  #allocation3 [shape = 'f32[1,23,384]{2,1,0:T(8,128)}', space=vmem, size = 0x9000, scoped, tag = 'scratch operand']
  #allocation4 [shape = 'f32[1,9,128]{2,1,0:T(8,128)}', space=vmem, size = 0x2000, scoped, tag = 'scratch operand']
  #allocation5 [shape = 'f32[1,3,128]{2,1,0:T(4,128)}', space=vmem, size = 0x800, scoped, tag = 'scratch operand']
  #allocation6 [shape = 'f32[1,1,128]{2,1,0:T(1,128)}', space=vmem, size = 0x200, scoped, tag = 'scratch operand']
  %s0 = inlined_call_operand.vmem [shape: f32[2,25,128], index: 0, kind: input, shape index: {}]
  %s1 = inlined_call_operand.hbm [shape: bf16[640,384], index: 1, kind: input, shape index: {}]
  %s2 = inlined_call_operand.hbm [shape: bf16[1920,384], index: 2, kind: input, shape index: {}]
  %s3 = inlined_call_operand.hbm [shape: bf16[1152,128], index: 3, kind: input, shape index: {}]
  %s4 = inlined_call_operand.hbm [shape: bf16[384,128], index: 4, kind: input, shape index: {}]
  %s5 = inlined_call_operand.hbm [shape: bf16[384,128], index: 5, kind: input, shape index: {}]
  %s6 = inlined_call_operand.hbm [shape: bf16[128,128], index: 6, kind: input, shape index: {}]
  %s7 = inlined_call_operand.hbm [shape: f32[1,384], index: 7, kind: input, shape index: {}]
  %s8 = inlined_call_operand.hbm [shape: f32[1,384], index: 8, kind: input, shape index: {}]
  %s9 = inlined_call_operand.hbm [shape: f32[1,128], index: 9, kind: input, shape index: {}]
  %s10 = inlined_call_operand.hbm [shape: f32[1,128], index: 10, kind: input, shape index: {}]
  %s11 = inlined_call_operand.hbm [shape: f32[1,128], index: 11, kind: input, shape index: {}]
  %s12 = inlined_call_operand.hbm [shape: f32[1,128], index: 12, kind: input, shape index: {}]
  %s13 = inlined_call_operand.hbm [shape: f32[2,1,128], index: 13, kind: output, shape index: {}]
  %s14 = sld [smem:[#allocation0]]
  $region133: #{forward.1} parent=0
    _
  %s16 = ssub.s32 1, %s14
  %s17 = scalar_select 0, %s16, %s14
  $region1: #{forward.1} parent=0
    #allocation7 [shape = 'u8[491520]{0}', space=vmem, size = 0x78000, scoped, tag = 'input window, operand 1, single buffered']
    #allocation8 [shape = 's32[2]{0}', space=sflag, size = 0x8, scoped, tag = 'scoped memory for forward.1']
    #allocation9 [shape = 's32[2]{0}', space=sflag, size = 0x8, scoped, tag = 'scoped memory for forward.1']
    #allocation10 [shape = 'u8[1474560]{0}', space=vmem, size = 0x168000, scoped, tag = 'input window, operand 2, single buffered']
    #allocation11 [shape = 's32[1]{0}', space=sflag, size = 0x4, scoped, tag = 'scoped memory for forward.1']
    #allocation12 [shape = 'u8[294912]{0}', space=vmem, size = 0x48000, scoped, tag = 'input window, operand 3, single buffered']
    #allocation13 [shape = 'u8[98304]{0}', space=vmem, size = 0x18000, scoped, tag = 'input window, operand 4, single buffered']
    #allocation14 [shape = 's32[1]{0}', space=sflag, size = 0x4, scoped, tag = 'scoped memory for forward.1']
    #allocation15 [shape = 'u8[98304]{0}', space=vmem, size = 0x18000, scoped, tag = 'input window, operand 5, single buffered']
    #allocation16 [shape = 'u8[32768]{0}', space=vmem, size = 0x8000, scoped, tag = 'input window, operand 6, single buffered']
    #allocation17 [shape = 's32[1]{0}', space=sflag, size = 0x4, scoped, tag = 'scoped memory for forward.1']
    #allocation18 [shape = 'u8[1536]{0}', space=vmem, size = 0x800, scoped, tag = 'input window, operand 7, single buffered']
    #allocation19 [shape = 'u8[1536]{0}', space=vmem, size = 0x800, scoped, tag = 'input window, operand 8, single buffered']
    #allocation20 [shape = 's32[1]{0}', space=sflag, size = 0x4, scoped, tag = 'scoped memory for forward.1']
    #allocation21 [shape = 'u8[512]{0}', space=vmem, size = 0x400, scoped, tag = 'input window, operand 9, single buffered']
    #allocation22 [shape = 'u8[512]{0}', space=vmem, size = 0x400, scoped, tag = 'input window, operand 10, single buffered']
    #allocation23 [shape = 's32[1]{0}', space=sflag, size = 0x4, scoped, tag = 'scoped memory for forward.1']
    #allocation24 [shape = 'u8[512]{0}', space=vmem, size = 0x400, scoped, tag = 'input window, operand 11, single buffered']
    #allocation25 [shape = 'u8[512]{0}', space=vmem, size = 0x400, scoped, tag = 'input window, operand 12, single buffered']
    #allocation26 [shape = 's32[1]{0}', space=sflag, size = 0x4, scoped, tag = 'scoped memory for forward.1']
    #allocation27 [shape = 'u8[1024]{0}', space=vmem, size = 0x400, scoped, tag = 'output window, operand 0']
    %18 = vsyncpa [#allocation8], 0
    %19 = vsyncpa [#allocation11], 0
    %20 = vsyncpa [#allocation14], 0
    %21 = vsyncpa [#allocation17], 0
    %22 = vsyncpa [#allocation20], 0
    %23 = vsyncpa [#allocation23], 0
    %24 = vsyncpa [#allocation26], 0
    %25 = vsyncpa [#allocation9], 0
    %s26 = scalar_lea.sflag [#allocation9], 1
    %27 = vsyncpa %s26, 0
    loop: start=0, step=1, limit=4
    $region2: #{forward.1} parent=1 // loop_pre_header
      _
    $region3: #{forward.1} parent=1 // loop_header
      %s29 = sphi 0, %s33
      %p30 = scmp.ge.s32.totalorder %s29, 4
      %s39 = sphi 0, %s41
      %s42 = sphi 0, %s39
      %s43 = sphi 0, %s42
      %s59 = sphi 0, %s43
      %s63 = sphi 0, %s63
      %s65 = sphi 0, %s63
      %s66 = sphi 0, %s65
      %s80 = sphi 0, %s66
      %s84 = sphi 0, %s84
      %s86 = sphi 0, %s84
      %s87 = sphi 0, %s86
      %s101 = sphi 0, %s87
      %s105 = sphi 0, %s105
      %s107 = sphi 0, %s105
      %s108 = sphi 0, %s107
      %s122 = sphi 0, %s108
      %s126 = sphi 0, %s126
      %s128 = sphi 0, %s126
      %s129 = sphi 0, %s128
      %s143 = sphi 0, %s129
      %s147 = sphi 0, %s147
      %s149 = sphi 0, %s147
      %s150 = sphi 0, %s149
      %s164 = sphi 0, %s150
      %s168 = sphi 0, %s168
      %s170 = sphi 0, %s168
      %s171 = sphi 0, %s170
      %s185 = sphi 0, %s171
      %s189 = sphi 0, %s189
      %s191 = sphi 0, %s189
      %s192 = sphi 0, %s191
      %s206 = sphi 0, %s192
      %s210 = sphi 0, %s210
      %s212 = sphi 0, %s210
      %s213 = sphi 0, %s212
      %s227 = sphi 0, %s213
      %s231 = sphi 0, %s231
      %s233 = sphi 0, %s231
      %s234 = sphi 0, %s233
      %s248 = sphi 0, %s234
      %s252 = sphi 0, %s252
      %s254 = sphi 0, %s252
      %s255 = sphi 0, %s254
      %s269 = sphi 0, %s255
      %s273 = sphi 0, %s273
      %s275 = sphi 0, %s273
      %s276 = sphi 0, %s275
      %s290 = sphi 0, %s276
      %s294 = sphi 0, %s294
      %s296 = sphi 0, %s294
      %s297 = sphi 0, %s296
      %s311 = sphi 0, %s297
      %s317 = sphi 0, %s319
      %s320 = sphi 0, %s317
      %s321 = sphi 0, %s320
      %s337 = sphi 0, %s321
    $region4: #{forward.1} parent=1 // loop_header_branch
      %32 = sbr.rel (%p30) target = $region8
    $region5: #{forward.1} parent=1 // loop_body
      %s34 = ssub.s32 %s29, 1
      %s35 = ssub.s32 %s29, 2
      %s36 = sadd.s32 %s29, 1
      %s37 = ssub.s32 %s29, %s36
      %p38 = scmp.eq.s32.totalorder %s37, 0
      %s40 = sadd.s32 %s39, 1
      %s41 = scalar_select %p38, %s39, %s40
      %p44 = pneg %p38
      %p45 = scmp.eq.s32.totalorder %s29, 1
      %p46 = por %p44, %p45
      %p47 = scmp.ne.s32.totalorder %s39, %s42
      %p48 = scmp.eq.s32.totalorder %s29, 0
      %p49 = por %p47, %p48
      %p50 = scmp.ne.s32.totalorder %s39, %s42
      %p51 = scmp.eq.s32.totalorder %s34, 1
      %p52 = por %p50, %p51
      %p53 = scmp.ne.s32.totalorder %s42, %s43
      %p54 = scmp.eq.s32.totalorder %s34, 0
      %p55 = por %p53, %p54
      %p56 = scmp.ne.s32.totalorder %s42, %s43
      %p57 = scmp.eq.s32.totalorder %s35, 1
      %p58 = por %p56, %p57
      %p60 = scmp.ne.s32.totalorder %s43, %s59
      %p61 = scmp.eq.s32.totalorder %s35, 0
      %p62 = por %p60, %p61
      %s64 = sadd.s32 %s63, 1
      %p67 = scmp.eq.s32.totalorder %s29, 1
      %p68 = scmp.ne.s32.totalorder %s63, %s65
      %p69 = scmp.eq.s32.totalorder %s29, 0
      %p70 = por %p68, %p69
      %p71 = scmp.ne.s32.totalorder %s63, %s65
      %p72 = scmp.eq.s32.totalorder %s34, 1
      %p73 = por %p71, %p72
      %p74 = scmp.ne.s32.totalorder %s65, %s66
      %p75 = scmp.eq.s32.totalorder %s34, 0
      %p76 = por %p74, %p75
      %p77 = scmp.ne.s32.totalorder %s65, %s66
      %p78 = scmp.eq.s32.totalorder %s35, 1
      %p79 = por %p77, %p78
      %p81 = scmp.ne.s32.totalorder %s66, %s80
      %p82 = scmp.eq.s32.totalorder %s35, 0
      %p83 = por %p81, %p82
      %s85 = sadd.s32 %s84, 1
      %p88 = scmp.eq.s32.totalorder %s29, 1
      %p89 = scmp.ne.s32.totalorder %s84, %s86
      %p90 = scmp.eq.s32.totalorder %s29, 0
      %p91 = por %p89, %p90
      %p92 = scmp.ne.s32.totalorder %s84, %s86
      %p93 = scmp.eq.s32.totalorder %s34, 1
      %p94 = por %p92, %p93
      %p95 = scmp.ne.s32.totalorder %s86, %s87
      %p96 = scmp.eq.s32.totalorder %s34, 0
      %p97 = por %p95, %p96
      %p98 = scmp.ne.s32.totalorder %s86, %s87
      %p99 = scmp.eq.s32.totalorder %s35, 1
      %p100 = por %p98, %p99
      %p102 = scmp.ne.s32.totalorder %s87, %s101
      %p103 = scmp.eq.s32.totalorder %s35, 0
      %p104 = por %p102, %p103
      %s106 = sadd.s32 %s105, 1
      %p109 = scmp.eq.s32.totalorder %s29, 1
      %p110 = scmp.ne.s32.totalorder %s105, %s107
      %p111 = scmp.eq.s32.totalorder %s29, 0
      %p112 = por %p110, %p111
      %p113 = scmp.ne.s32.totalorder %s105, %s107
      %p114 = scmp.eq.s32.totalorder %s34, 1
      %p115 = por %p113, %p114
      %p116 = scmp.ne.s32.totalorder %s107, %s108
      %p117 = scmp.eq.s32.totalorder %s34, 0
      %p118 = por %p116, %p117
      %p119 = scmp.ne.s32.totalorder %s107, %s108
      %p120 = scmp.eq.s32.totalorder %s35, 1
      %p121 = por %p119, %p120
      %p123 = scmp.ne.s32.totalorder %s108, %s122
      %p124 = scmp.eq.s32.totalorder %s35, 0
      %p125 = por %p123, %p124
      %s127 = sadd.s32 %s126, 1
      %p130 = scmp.eq.s32.totalorder %s29, 1
      %p131 = scmp.ne.s32.totalorder %s126, %s128
      %p132 = scmp.eq.s32.totalorder %s29, 0
      %p133 = por %p131, %p132
      %p134 = scmp.ne.s32.totalorder %s126, %s128
      %p135 = scmp.eq.s32.totalorder %s34, 1
      %p136 = por %p134, %p135
      %p137 = scmp.ne.s32.totalorder %s128, %s129
      %p138 = scmp.eq.s32.totalorder %s34, 0
      %p139 = por %p137, %p138
      %p140 = scmp.ne.s32.totalorder %s128, %s129
      %p141 = scmp.eq.s32.totalorder %s35, 1
      %p142 = por %p140, %p141
      %p144 = scmp.ne.s32.totalorder %s129, %s143
      %p145 = scmp.eq.s32.totalorder %s35, 0
      %p146 = por %p144, %p145
      %s148 = sadd.s32 %s147, 1
      %p151 = scmp.eq.s32.totalorder %s29, 1
      %p152 = scmp.ne.s32.totalorder %s147, %s149
      %p153 = scmp.eq.s32.totalorder %s29, 0
      %p154 = por %p152, %p153
      %p155 = scmp.ne.s32.totalorder %s147, %s149
      %p156 = scmp.eq.s32.totalorder %s34, 1
      %p157 = por %p155, %p156
      %p158 = scmp.ne.s32.totalorder %s149, %s150
      %p159 = scmp.eq.s32.totalorder %s34, 0
      %p160 = por %p158, %p159
      %p161 = scmp.ne.s32.totalorder %s149, %s150
      %p162 = scmp.eq.s32.totalorder %s35, 1
      %p163 = por %p161, %p162
      %p165 = scmp.ne.s32.totalorder %s150, %s164
      %p166 = scmp.eq.s32.totalorder %s35, 0
      %p167 = por %p165, %p166
      %s169 = sadd.s32 %s168, 1
      %p172 = scmp.eq.s32.totalorder %s29, 1
      %p173 = scmp.ne.s32.totalorder %s168, %s170
      %p174 = scmp.eq.s32.totalorder %s29, 0
      %p175 = por %p173, %p174
      %p176 = scmp.ne.s32.totalorder %s168, %s170
      %p177 = scmp.eq.s32.totalorder %s34, 1
      %p178 = por %p176, %p177
      %p179 = scmp.ne.s32.totalorder %s170, %s171
      %p180 = scmp.eq.s32.totalorder %s34, 0
      %p181 = por %p179, %p180
      %p182 = scmp.ne.s32.totalorder %s170, %s171
      %p183 = scmp.eq.s32.totalorder %s35, 1
      %p184 = por %p182, %p183
      %p186 = scmp.ne.s32.totalorder %s171, %s185
      %p187 = scmp.eq.s32.totalorder %s35, 0
      %p188 = por %p186, %p187
      %s190 = sadd.s32 %s189, 1
      %p193 = scmp.eq.s32.totalorder %s29, 1
      %p194 = scmp.ne.s32.totalorder %s189, %s191
      %p195 = scmp.eq.s32.totalorder %s29, 0
      %p196 = por %p194, %p195
      %p197 = scmp.ne.s32.totalorder %s189, %s191
      %p198 = scmp.eq.s32.totalorder %s34, 1
      %p199 = por %p197, %p198
      %p200 = scmp.ne.s32.totalorder %s191, %s192
      %p201 = scmp.eq.s32.totalorder %s34, 0
      %p202 = por %p200, %p201
      %p203 = scmp.ne.s32.totalorder %s191, %s192
      %p204 = scmp.eq.s32.totalorder %s35, 1
      %p205 = por %p203, %p204
      %p207 = scmp.ne.s32.totalorder %s192, %s206
      %p208 = scmp.eq.s32.totalorder %s35, 0
      %p209 = por %p207, %p208
      %s211 = sadd.s32 %s210, 1
      %p214 = scmp.eq.s32.totalorder %s29, 1
      %p215 = scmp.ne.s32.totalorder %s210, %s212
      %p216 = scmp.eq.s32.totalorder %s29, 0
      %p217 = por %p215, %p216
      %p218 = scmp.ne.s32.totalorder %s210, %s212
      %p219 = scmp.eq.s32.totalorder %s34, 1
      %p220 = por %p218, %p219
      %p221 = scmp.ne.s32.totalorder %s212, %s213
      %p222 = scmp.eq.s32.totalorder %s34, 0
      %p223 = por %p221, %p222
      %p224 = scmp.ne.s32.totalorder %s212, %s213
      %p225 = scmp.eq.s32.totalorder %s35, 1
      %p226 = por %p224, %p225
      %p228 = scmp.ne.s32.totalorder %s213, %s227
      %p229 = scmp.eq.s32.totalorder %s35, 0
      %p230 = por %p228, %p229
      %s232 = sadd.s32 %s231, 1
      %p235 = scmp.eq.s32.totalorder %s29, 1
      %p236 = scmp.ne.s32.totalorder %s231, %s233
      %p237 = scmp.eq.s32.totalorder %s29, 0
      %p238 = por %p236, %p237
      %p239 = scmp.ne.s32.totalorder %s231, %s233
      %p240 = scmp.eq.s32.totalorder %s34, 1
      %p241 = por %p239, %p240
      %p242 = scmp.ne.s32.totalorder %s233, %s234
      %p243 = scmp.eq.s32.totalorder %s34, 0
      %p244 = por %p242, %p243
      %p245 = scmp.ne.s32.totalorder %s233, %s234
      %p246 = scmp.eq.s32.totalorder %s35, 1
      %p247 = por %p245, %p246
      %p249 = scmp.ne.s32.totalorder %s234, %s248
      %p250 = scmp.eq.s32.totalorder %s35, 0
      %p251 = por %p249, %p250
      %s253 = sadd.s32 %s252, 1
      %p256 = scmp.eq.s32.totalorder %s29, 1
      %p257 = scmp.ne.s32.totalorder %s252, %s254
      %p258 = scmp.eq.s32.totalorder %s29, 0
      %p259 = por %p257, %p258
      %p260 = scmp.ne.s32.totalorder %s252, %s254
      %p261 = scmp.eq.s32.totalorder %s34, 1
      %p262 = por %p260, %p261
      %p263 = scmp.ne.s32.totalorder %s254, %s255
      %p264 = scmp.eq.s32.totalorder %s34, 0
      %p265 = por %p263, %p264
      %p266 = scmp.ne.s32.totalorder %s254, %s255
      %p267 = scmp.eq.s32.totalorder %s35, 1
      %p268 = por %p266, %p267
      %p270 = scmp.ne.s32.totalorder %s255, %s269
      %p271 = scmp.eq.s32.totalorder %s35, 0
      %p272 = por %p270, %p271
      %s274 = sadd.s32 %s273, 1
      %p277 = scmp.eq.s32.totalorder %s29, 1
      %p278 = scmp.ne.s32.totalorder %s273, %s275
      %p279 = scmp.eq.s32.totalorder %s29, 0
      %p280 = por %p278, %p279
      %p281 = scmp.ne.s32.totalorder %s273, %s275
      %p282 = scmp.eq.s32.totalorder %s34, 1
      %p283 = por %p281, %p282
      %p284 = scmp.ne.s32.totalorder %s275, %s276
      %p285 = scmp.eq.s32.totalorder %s34, 0
      %p286 = por %p284, %p285
      %p287 = scmp.ne.s32.totalorder %s275, %s276
      %p288 = scmp.eq.s32.totalorder %s35, 1
      %p289 = por %p287, %p288
      %p291 = scmp.ne.s32.totalorder %s276, %s290
      %p292 = scmp.eq.s32.totalorder %s35, 0
      %p293 = por %p291, %p292
      %s295 = sadd.s32 %s294, 1
      %p298 = scmp.eq.s32.totalorder %s29, 1
      %p299 = scmp.ne.s32.totalorder %s294, %s296
      %p300 = scmp.eq.s32.totalorder %s29, 0
      %p301 = por %p299, %p300
      %p302 = scmp.ne.s32.totalorder %s294, %s296
      %p303 = scmp.eq.s32.totalorder %s34, 1
      %p304 = por %p302, %p303
      %p305 = scmp.ne.s32.totalorder %s296, %s297
      %p306 = scmp.eq.s32.totalorder %s34, 0
      %p307 = por %p305, %p306
      %p308 = scmp.ne.s32.totalorder %s296, %s297
      %p309 = scmp.eq.s32.totalorder %s35, 1
      %p310 = por %p308, %p309
      %p312 = scmp.ne.s32.totalorder %s297, %s311
      %p313 = scmp.eq.s32.totalorder %s35, 0
      %p314 = por %p312, %p313
      %s315 = ssub.s32 %s29, %s36
      %p316 = scmp.eq.s32.totalorder %s315, 0
      %s318 = sadd.s32 %s317, 1
      %s319 = scalar_select %p316, %s317, %s318
      %p322 = pneg %p316
      %p323 = scmp.eq.s32.totalorder %s29, 1
      %p324 = por %p322, %p323
      %p325 = scmp.ne.s32.totalorder %s317, %s320
      %p326 = scmp.eq.s32.totalorder %s29, 0
      %p327 = por %p325, %p326
      %p328 = scmp.ne.s32.totalorder %s317, %s320
      %p329 = scmp.eq.s32.totalorder %s34, 1
      %p330 = por %p328, %p329
      %p331 = scmp.ne.s32.totalorder %s320, %s321
      %p332 = scmp.eq.s32.totalorder %s34, 0
      %p333 = por %p331, %p332
      %p334 = scmp.ne.s32.totalorder %s320, %s321
      %p335 = scmp.eq.s32.totalorder %s35, 1
      %p336 = por %p334, %p335
      %p338 = scmp.ne.s32.totalorder %s321, %s337
      %p339 = scmp.eq.s32.totalorder %s35, 0
      %p340 = por %p338, %p339
      %p341 = scmp.le.s32.totalorder 1, %s29
      %p342 = scmp.lt.s32.totalorder %s29, 3
      %p343 = pnand %p341, %p342
      %p344 = pneg %p343
      // Predicated region
      $region9: #{forward.1} parent=5 // pred_check
        _
      $region10: #{forward.1} parent=5 // pred_check_branch
        %346 = sbr.rel (%p343) target = $region12
      $region11: #{forward.1} parent=5 // pred_region
        %s347 = ssub.s32 %s29, 1
        // Predicated region
        $region13: #{forward.1} parent=11 // pred_check
          %p348 = pneg %p76
        $region14: #{forward.1} parent=11 // pred_check_branch
          %350 = sbr.rel (%p348) target = $region16
        $region15: #{forward.1} parent=11 // pred_region
          %352 = vsyncadd [#allocation8], 0
          %s353 = sshll.u32 %s1, 4
          %s354 = int_to_ptr.hbm [resolvable:$true] %s353
          %s355 = sshll.u32 [#allocation7], 4
          %s356 = int_to_ptr.vmem [resolvable:$true] %s355
          %361 = dma.hbm_to_vmem [thread:$0]  %s354, 15360, %s356, [#allocation8], 192, 192, 12
        $region16: #{forward.1} parent=11 // pred_fallthru
          _
        // Predicated region
        $region17: #{forward.1} parent=11 // pred_check
          %p362 = pneg %p97
        $region18: #{forward.1} parent=11 // pred_check_branch
          %364 = sbr.rel (%p362) target = $region20
        $region19: #{forward.1} parent=11 // pred_region
          %366 = vsyncadd [#allocation11], 0
          %s367 = sshll.u32 %s2, 4
          %s368 = int_to_ptr.hbm [resolvable:$true] %s367
          %s369 = sshll.u32 [#allocation10], 4
          %s370 = int_to_ptr.vmem [resolvable:$true] %s369
          %375 = dma.hbm_to_vmem [thread:$0]  %s368, 46080, %s370, [#allocation11], 192, 192, 12
        $region20: #{forward.1} parent=11 // pred_fallthru
          _
        // Predicated region
        $region21: #{forward.1} parent=11 // pred_check
          %p376 = pneg %p118
        $region22: #{forward.1} parent=11 // pred_check_branch
          %378 = sbr.rel (%p376) target = $region24
        $region23: #{forward.1} parent=11 // pred_region
          %380 = vsyncadd [#allocation11], 0
          %s381 = sshll.u32 %s3, 4
          %s382 = int_to_ptr.hbm [resolvable:$true] %s381
          %s383 = sshll.u32 [#allocation12], 4
          %s384 = int_to_ptr.vmem [resolvable:$true] %s383
          %389 = dma.hbm_to_vmem [thread:$0]  %s382, 9216, %s384, [#allocation11], 64, 64, 4
        $region24: #{forward.1} parent=11 // pred_fallthru
          _
        // Predicated region
        $region25: #{forward.1} parent=11 // pred_check
          %p390 = pneg %p139
        $region26: #{forward.1} parent=11 // pred_check_branch
          %392 = sbr.rel (%p390) target = $region28
        $region27: #{forward.1} parent=11 // pred_region
          %394 = vsyncadd [#allocation14], 0
          %s395 = sshll.u32 %s4, 4
          %s396 = int_to_ptr.hbm [resolvable:$true] %s395
          %s397 = sshll.u32 [#allocation13], 4
          %s398 = int_to_ptr.vmem [resolvable:$true] %s397
          %403 = dma.hbm_to_vmem [thread:$0]  %s396, 3072, %s398, [#allocation14], 64, 64, 4
        $region28: #{forward.1} parent=11 // pred_fallthru
          _
        // Predicated region
        $region29: #{forward.1} parent=11 // pred_check
          %p404 = pneg %p160
        $region30: #{forward.1} parent=11 // pred_check_branch
          %406 = sbr.rel (%p404) target = $region32
        $region31: #{forward.1} parent=11 // pred_region
          %408 = vsyncadd [#allocation14], 0
          %s409 = sshll.u32 %s5, 4
          %s410 = int_to_ptr.hbm [resolvable:$true] %s409
          %s411 = sshll.u32 [#allocation15], 4
          %s412 = int_to_ptr.vmem [resolvable:$true] %s411
          %417 = dma.hbm_to_vmem [thread:$0]  %s410, 3072, %s412, [#allocation14], 64, 64, 4
        $region32: #{forward.1} parent=11 // pred_fallthru
          _
        // Predicated region
        $region33: #{forward.1} parent=11 // pred_check
          %p418 = pneg %p181
        $region34: #{forward.1} parent=11 // pred_check_branch
          %420 = sbr.rel (%p418) target = $region36
        $region35: #{forward.1} parent=11 // pred_region
          %422 = vsyncadd [#allocation17], 0
          %s423 = sshll.u32 %s6, 4
          %s424 = int_to_ptr.hbm [resolvable:$true] %s423
          %s425 = sshll.u32 [#allocation16], 4
          %s426 = int_to_ptr.vmem [resolvable:$true] %s425
          %431 = dma.hbm_to_vmem [thread:$0]  %s424, 1024, %s426, [#allocation17], 64, 64, 4
        $region36: #{forward.1} parent=11 // pred_fallthru
          _
        // Predicated region
        $region37: #{forward.1} parent=11 // pred_check
          %p432 = pneg %p202
        $region38: #{forward.1} parent=11 // pred_check_branch
          %434 = sbr.rel (%p432) target = $region40
        $region39: #{forward.1} parent=11 // pred_region
          %436 = vsyncadd [#allocation17], 0
          %s438 = sshll.u32 %s7, 4
          %s439 = int_to_ptr.hbm [resolvable:$true] %s438
          %s440 = sshll.u32 [#allocation18], 4
          %s441 = int_to_ptr.vmem [resolvable:$true] %s440
          %443 = dma.hbm_to_vmem [thread:$0]  %s439, 48, %s441, [#allocation17]
        $region40: #{forward.1} parent=11 // pred_fallthru
          _
        // Predicated region
        $region41: #{forward.1} parent=11 // pred_check
          %p444 = pneg %p223
        $region42: #{forward.1} parent=11 // pred_check_branch
          %446 = sbr.rel (%p444) target = $region44
        $region43: #{forward.1} parent=11 // pred_region
          %448 = vsyncadd [#allocation20], 0
          %s450 = sshll.u32 %s8, 4
          %s451 = int_to_ptr.hbm [resolvable:$true] %s450
          %s452 = sshll.u32 [#allocation19], 4
          %s453 = int_to_ptr.vmem [resolvable:$true] %s452
          %455 = dma.hbm_to_vmem [thread:$0]  %s451, 48, %s453, [#allocation20]
        $region44: #{forward.1} parent=11 // pred_fallthru
          _
        // Predicated region
        $region45: #{forward.1} parent=11 // pred_check
          %p456 = pneg %p244
        $region46: #{forward.1} parent=11 // pred_check_branch
          %458 = sbr.rel (%p456) target = $region48
        $region47: #{forward.1} parent=11 // pred_region
          %460 = vsyncadd [#allocation20], 0
          %s462 = sshll.u32 %s9, 4
          %s463 = int_to_ptr.hbm [resolvable:$true] %s462
          %s464 = sshll.u32 [#allocation21], 4
          %s465 = int_to_ptr.vmem [resolvable:$true] %s464
          %467 = dma.hbm_to_vmem [thread:$0]  %s463, 16, %s465, [#allocation20]
        $region48: #{forward.1} parent=11 // pred_fallthru
          _
        // Predicated region
        $region49: #{forward.1} parent=11 // pred_check
          %p468 = pneg %p265
        $region50: #{forward.1} parent=11 // pred_check_branch
          %470 = sbr.rel (%p468) target = $region52
        $region51: #{forward.1} parent=11 // pred_region
          %472 = vsyncadd [#allocation23], 0
          %s474 = sshll.u32 %s10, 4
          %s475 = int_to_ptr.hbm [resolvable:$true] %s474
          %s476 = sshll.u32 [#allocation22], 4
          %s477 = int_to_ptr.vmem [resolvable:$true] %s476
          %479 = dma.hbm_to_vmem [thread:$0]  %s475, 16, %s477, [#allocation23]
        $region52: #{forward.1} parent=11 // pred_fallthru
          _
        // Predicated region
        $region53: #{forward.1} parent=11 // pred_check
          %p480 = pneg %p286
        $region54: #{forward.1} parent=11 // pred_check_branch
          %482 = sbr.rel (%p480) target = $region56
        $region55: #{forward.1} parent=11 // pred_region
          %484 = vsyncadd [#allocation23], 0
          %s486 = sshll.u32 %s11, 4
          %s487 = int_to_ptr.hbm [resolvable:$true] %s486
          %s488 = sshll.u32 [#allocation24], 4
          %s489 = int_to_ptr.vmem [resolvable:$true] %s488
          %491 = dma.hbm_to_vmem [thread:$0]  %s487, 16, %s489, [#allocation23]
        $region56: #{forward.1} parent=11 // pred_fallthru
          _
        // Predicated region
        $region57: #{forward.1} parent=11 // pred_check
          %p492 = pneg %p307
        $region58: #{forward.1} parent=11 // pred_check_branch
          %494 = sbr.rel (%p492) target = $region60
        $region59: #{forward.1} parent=11 // pred_region
          %496 = vsyncadd [#allocation26], 0
          %s498 = sshll.u32 %s12, 4
          %s499 = int_to_ptr.hbm [resolvable:$true] %s498
          %s500 = sshll.u32 [#allocation25], 4
          %s501 = int_to_ptr.vmem [resolvable:$true] %s500
          %503 = dma.hbm_to_vmem [thread:$0]  %s499, 16, %s501, [#allocation26]
        $region60: #{forward.1} parent=11 // pred_fallthru
          _
      $region12: #{forward.1} parent=5 // pred_fallthru
        _
      %p504 = scmp.lt.s32.totalorder %s29, 2
      // Predicated region
      $region61: #{forward.1} parent=5 // pred_check
        %p505 = pneg %p504
      $region62: #{forward.1} parent=5 // pred_check_branch
        %507 = sbr.rel (%p505) target = $region64
      $region63: #{forward.1} parent=5 // pred_region
        // Predicated region
        $region65: #{forward.1} parent=63 // pred_check
          %p508 = pneg %p49
        $region66: #{forward.1} parent=63 // pred_check_branch
          %510 = sbr.rel (%p508) target = $region68
        $region67: #{forward.1} parent=63 // pred_region
          %p511 = scmp.lt.s32.totalorder %s29, 1
          %s512 = scalar_select %p511, %s29, 1
          %s513 = smul.addr %s512, 4
          %s514 = smul.addr %s513, 8
          %s515 = scalar_lea.vmem %s0, %s514
        $region68: #{forward.1} parent=63 // pred_fallthru
          _
      $region64: #{forward.1} parent=5 // pred_fallthru
        _
      %p516 = scmp.le.s32.totalorder 1, %s29
      %p517 = scmp.lt.s32.totalorder %s29, 3
      %p518 = pnand %p516, %p517
      %p519 = pneg %p518
      // Predicated region
      $region69: #{forward.1} parent=5 // pred_check
        _
      $region70: #{forward.1} parent=5 // pred_check_branch
        %521 = sbr.rel (%p518) target = $region72
      $region71: #{forward.1} parent=5 // pred_region
        %s522 = ssub.s32 %s29, 1
        // Predicated region
        $region73: #{forward.1} parent=71 // pred_check
          %p523 = pneg %p76
        $region74: #{forward.1} parent=71 // pred_check_branch
          %525 = sbr.rel (%p523) target = $region76
        $region75: #{forward.1} parent=71 // pred_region
          %527 = dma.done [#allocation8], 15360
        $region76: #{forward.1} parent=71 // pred_fallthru
          _
        // Predicated region
        $region77: #{forward.1} parent=71 // pred_check
          %p528 = pneg %p97
        $region78: #{forward.1} parent=71 // pred_check_branch
          %530 = sbr.rel (%p528) target = $region80
        $region79: #{forward.1} parent=71 // pred_region
          %532 = dma.done [#allocation11], 46080
        $region80: #{forward.1} parent=71 // pred_fallthru
          _
        // Predicated region
        $region81: #{forward.1} parent=71 // pred_check
          %p533 = pneg %p118
        $region82: #{forward.1} parent=71 // pred_check_branch
          %535 = sbr.rel (%p533) target = $region84
        $region83: #{forward.1} parent=71 // pred_region
          %537 = dma.done [#allocation11], 9216
        $region84: #{forward.1} parent=71 // pred_fallthru
          _
        // Predicated region
        $region85: #{forward.1} parent=71 // pred_check
          %p538 = pneg %p139
        $region86: #{forward.1} parent=71 // pred_check_branch
          %540 = sbr.rel (%p538) target = $region88
        $region87: #{forward.1} parent=71 // pred_region
          %542 = dma.done [#allocation14], 3072
        $region88: #{forward.1} parent=71 // pred_fallthru
          _
        // Predicated region
        $region89: #{forward.1} parent=71 // pred_check
          %p543 = pneg %p160
        $region90: #{forward.1} parent=71 // pred_check_branch
          %545 = sbr.rel (%p543) target = $region92
        $region91: #{forward.1} parent=71 // pred_region
          %547 = dma.done [#allocation14], 3072
        $region92: #{forward.1} parent=71 // pred_fallthru
          _
        // Predicated region
        $region93: #{forward.1} parent=71 // pred_check
          %p548 = pneg %p181
        $region94: #{forward.1} parent=71 // pred_check_branch
          %550 = sbr.rel (%p548) target = $region96
        $region95: #{forward.1} parent=71 // pred_region
          %552 = dma.done [#allocation17], 1024
        $region96: #{forward.1} parent=71 // pred_fallthru
          _
        // Predicated region
        $region97: #{forward.1} parent=71 // pred_check
          %p553 = pneg %p202
        $region98: #{forward.1} parent=71 // pred_check_branch
          %555 = sbr.rel (%p553) target = $region100
        $region99: #{forward.1} parent=71 // pred_region
          %557 = dma.done [#allocation17], 48
        $region100: #{forward.1} parent=71 // pred_fallthru
          _
        // Predicated region
        $region101: #{forward.1} parent=71 // pred_check
          %p558 = pneg %p223
        $region102: #{forward.1} parent=71 // pred_check_branch
          %560 = sbr.rel (%p558) target = $region104
        $region103: #{forward.1} parent=71 // pred_region
          %562 = dma.done [#allocation20], 48
        $region104: #{forward.1} parent=71 // pred_fallthru
          _
        // Predicated region
        $region105: #{forward.1} parent=71 // pred_check
          %p563 = pneg %p244
        $region106: #{forward.1} parent=71 // pred_check_branch
          %565 = sbr.rel (%p563) target = $region108
        $region107: #{forward.1} parent=71 // pred_region
          %567 = dma.done [#allocation20], 16
        $region108: #{forward.1} parent=71 // pred_fallthru
          _
        // Predicated region
        $region109: #{forward.1} parent=71 // pred_check
          %p568 = pneg %p265
        $region110: #{forward.1} parent=71 // pred_check_branch
          %570 = sbr.rel (%p568) target = $region112
        $region111: #{forward.1} parent=71 // pred_region
          %572 = dma.done [#allocation23], 16
        $region112: #{forward.1} parent=71 // pred_fallthru
          _
        // Predicated region
        $region113: #{forward.1} parent=71 // pred_check
          %p573 = pneg %p286
        $region114: #{forward.1} parent=71 // pred_check_branch
          %575 = sbr.rel (%p573) target = $region116
        $region115: #{forward.1} parent=71 // pred_region
          %577 = dma.done [#allocation23], 16
        $region116: #{forward.1} parent=71 // pred_fallthru
          _
        // Predicated region
        $region117: #{forward.1} parent=71 // pred_check
          %p578 = pneg %p307
        $region118: #{forward.1} parent=71 // pred_check_branch
          %580 = sbr.rel (%p578) target = $region120
        $region119: #{forward.1} parent=71 // pred_region
          %582 = dma.done [#allocation26], 16
        $region120: #{forward.1} parent=71 // pred_fallthru
          _
        %p583 = scmp.lt.s32.totalorder %s34, 1
        %s584 = scalar_select %p583, %s34, 1
        %s585 = smul.addr %s584, 4
        %s586 = smul.addr %s585, 8
        %s587 = scalar_lea.vmem %s0, %s586
        %p588 = pneg %p55
        %p589 = pneg %p52
        %p590 = pneg %p76
        %p591 = pneg %p73
        %p592 = pneg %p97
        %p593 = pneg %p94
        %p594 = pneg %p118
        %p595 = pneg %p115
        %p596 = pneg %p139
        %p597 = pneg %p136
        %p598 = pneg %p160
        %p599 = pneg %p157
        %p600 = pneg %p181
        %p601 = pneg %p178
        %p602 = pneg %p202
        %p603 = pneg %p199
        %p604 = pneg %p223
        %p605 = pneg %p220
        %p606 = pneg %p244
        %p607 = pneg %p241
        %p608 = pneg %p265
        %p609 = pneg %p262
        %p610 = pneg %p286
        %p611 = pneg %p283
        %p612 = pneg %p307
        %p613 = pneg %p304
        %p614 = pneg %p333
        %p615 = pneg %p330
        %s616 = sand.u32 %s320, 1
        %s617 = scalar_lea.sflag [#allocation9], %s616
        %s618 = sand.u32 %s320, 1
        %s619 = scalar_lea.vmem [#allocation27], %s618
        %p620 = scmp.lt.s32.totalorder %s34, 1
        %s621 = scalar_select %p620, %s34, 1
        %s622 = smul.addr %s621, 4
        %s623 = smul.addr %s622, 8
        %s624 = scalar_lea.vmem %s0, %s623
        %625 = vst [vmem:[#allocation2] sm:$0xff] 0.0
        %626 = vst [vmem:[#allocation2 + $0x8] sm:$0xff] 0.0
        %627 = vst [vmem:[#allocation2 + $0x10] sm:$0xff] 0.0
        %628 = vst [vmem:[#allocation2 + $0x18] sm:$0xff] 0.0
        %629 = vst [vmem:[#allocation2 + $0x20] sm:$0xff] 0.0
        %630 = vst [vmem:[#allocation2 + $0x28] sm:$0xff] 0.0
        %631 = vst [vmem:[#allocation2 + $0x30] sm:$0xff] 0.0
        %632 = vst [vmem:[#allocation2 + $0x38] sm:$0xff] 0.0
        %633 = vst [vmem:[#allocation2 + $0x40] sm:$0xff] 0.0
        %634 = vst [vmem:[#allocation2 + $0x48] sm:$0x1] 0.0
        %635 = vst [vmem:[#allocation2 + $0x50] sm:$0x1] 0.0
        %636 = vst [vmem:[#allocation2 + $0x58] sm:$0x1] 0.0
        %v637 = vld [vmem:[%s624] sm:$0xff]
        %v638 = vld [vmem:[%s624 + $0x8] sm:$0xff]
        %v639 = vld [vmem:[%s624 + $0x10] sm:$0x1f]
        %v640 = vpack.c.bf16 %v637, %v637
        %v641 = vpack.c.bf16 %v638, %v638
        %v642 = vpack.c.bf16 %v639, %v639
        %v643 = vld [vmem:[%s624 + $0x1] sm:$0xff]
        %v644 = vld [vmem:[%s624 + $0x9] sm:$0xff]
        %v645 = vld [vmem:[%s624 + $0x11] sm:$0x1f]
        %v646 = vpack.c.bf16 %v643, %v643
        %v647 = vpack.c.bf16 %v644, %v644
        %v648 = vpack.c.bf16 %v645, %v645
        %v649 = vld [vmem:[%s624 + $0x2] sm:$0xff]
        %v650 = vld [vmem:[%s624 + $0xa] sm:$0xff]
        %v651 = vld [vmem:[%s624 + $0x12] sm:$0x1f]
        %v652 = vpack.c.bf16 %v649, %v649
        %v653 = vpack.c.bf16 %v650, %v650
        %v654 = vpack.c.bf16 %v651, %v651
        %v655 = vld [vmem:[%s624 + $0x3] sm:$0xff]
        %v656 = vld [vmem:[%s624 + $0xb] sm:$0xff]
        %v657 = vld [vmem:[%s624 + $0x13] sm:$0x1f]
        %v658 = vpack.c.bf16 %v655, %v655
        %v659 = vpack.c.bf16 %v656, %v656
        %v660 = vpack.c.bf16 %v657, %v657
        %v661 = vld [vmem:[%s624 + $0x4] sm:$0xff]
        %v662 = vld [vmem:[%s624 + $0xc] sm:$0xff]
        %v663 = vld [vmem:[%s624 + $0x14] sm:$0x1f]
        %v664 = vpack.c.bf16 %v661, %v661
        %v665 = vpack.c.bf16 %v662, %v662
        %v666 = vpack.c.bf16 %v663, %v663
        %v670 = vunpack.c.l.b16 %v640
        %v671 = vunpack.c.l.b16 %v641
        %v672 = vunpack.c.l.b16 %v642
        %v673 = vpack.c.b16 %v671, %v670
        %v674 = vpack.c.b16 %v672, %v672
        %v680 = vunpack.c.l.b16 %v646
        %v681 = vunpack.c.l.b16 %v647
        %v682 = vunpack.c.l.b16 %v648
        %v683 = vpack.c.b16 %v681, %v680
        %v684 = vpack.c.b16 %v682, %v682
        %v690 = vunpack.c.l.b16 %v652
        %v691 = vunpack.c.l.b16 %v653
        %v692 = vunpack.c.l.b16 %v654
        %v693 = vpack.c.b16 %v691, %v690
        %v694 = vpack.c.b16 %v692, %v692
        %v700 = vunpack.c.l.b16 %v658
        %v701 = vunpack.c.l.b16 %v659
        %v702 = vunpack.c.l.b16 %v660
        %v703 = vpack.c.b16 %v701, %v700
        %v704 = vpack.c.b16 %v702, %v702
        %v710 = vunpack.c.l.b16 %v664
        %v711 = vunpack.c.l.b16 %v665
        %v712 = vunpack.c.l.b16 %v666
        %v713 = vpack.c.b16 %v711, %v710
        %v714 = vpack.c.b16 %v712, %v712
        %v717 = vld [vmem:[#allocation7] sm:$0xff]
        %v718 = vld [vmem:[#allocation7 + $0x8] sm:$0xf]
        %v719 = vld [vmem:[#allocation7 + $0xc] sm:$0xff]
        %v720 = vld [vmem:[#allocation7 + $0x14] sm:$0xf]
        %v721 = vld [vmem:[#allocation7 + $0x18] sm:$0xff]
        %v722 = vld [vmem:[#allocation7 + $0x20] sm:$0xf]
        %v723 = vld [vmem:[#allocation7 + $0x24] sm:$0xff]
        %v724 = vld [vmem:[#allocation7 + $0x2c] sm:$0xf]
        %v725 = vld [vmem:[#allocation7 + $0x30] sm:$0xff]
        %v726 = vld [vmem:[#allocation7 + $0x38] sm:$0xf]
        %v727 = vld [vmem:[#allocation7 + $0x3c] sm:$0xff]
        %v728 = vld [vmem:[#allocation7 + $0x44] sm:$0xf]
        %v729 = vld [vmem:[#allocation7 + $0x48] sm:$0xff]
        %v730 = vld [vmem:[#allocation7 + $0x50] sm:$0xf]
        %v731 = vld [vmem:[#allocation7 + $0x54] sm:$0xff]
        %v732 = vld [vmem:[#allocation7 + $0x5c] sm:$0xf]
        %v733 = vld [vmem:[#allocation7 + $0x60] sm:$0xff]
        %v734 = vld [vmem:[#allocation7 + $0x68] sm:$0xf]
        %v735 = vld [vmem:[#allocation7 + $0x6c] sm:$0xff]
        %v736 = vld [vmem:[#allocation7 + $0x74] sm:$0xf]
        %v737 = vld [vmem:[#allocation7 + $0x78] sm:$0xff]
        %v738 = vld [vmem:[#allocation7 + $0x80] sm:$0xf]
        %v739 = vld [vmem:[#allocation7 + $0x84] sm:$0xff]
        %v740 = vld [vmem:[#allocation7 + $0x8c] sm:$0xf]
        %v741 = vld [vmem:[#allocation7 + $0x90] sm:$0xff]
        %v742 = vld [vmem:[#allocation7 + $0x98] sm:$0xf]
        %v743 = vld [vmem:[#allocation7 + $0x9c] sm:$0xff]
        %v744 = vld [vmem:[#allocation7 + $0xa4] sm:$0xf]
        %v745 = vld [vmem:[#allocation7 + $0xa8] sm:$0xff]
        %v746 = vld [vmem:[#allocation7 + $0xb0] sm:$0xf]
        %v747 = vld [vmem:[#allocation7 + $0xb4] sm:$0xff]
        %v748 = vld [vmem:[#allocation7 + $0xbc] sm:$0xf]
        %v749 = vld [vmem:[#allocation7 + $0xc0] sm:$0xff]
        %v750 = vld [vmem:[#allocation7 + $0xc8] sm:$0xf]
        %v751 = vld [vmem:[#allocation7 + $0xcc] sm:$0xff]
        %v752 = vld [vmem:[#allocation7 + $0xd4] sm:$0xf]
        %v753 = vld [vmem:[#allocation7 + $0xd8] sm:$0xff]
        %v754 = vld [vmem:[#allocation7 + $0xe0] sm:$0xf]
        %v755 = vld [vmem:[#allocation7 + $0xe4] sm:$0xff]
        %v756 = vld [vmem:[#allocation7 + $0xec] sm:$0xf]
        %v757 = vld [vmem:[#allocation7 + $0xf0] sm:$0xff]
        %v758 = vld [vmem:[#allocation7 + $0xf8] sm:$0xf]
        %v759 = vld [vmem:[#allocation7 + $0xfc] sm:$0xff]
        %v760 = vld [vmem:[#allocation7 + $0x104] sm:$0xf]
        %v761 = vld [vmem:[#allocation7 + $0x108] sm:$0xff]
        %v762 = vld [vmem:[#allocation7 + $0x110] sm:$0xf]
        %v763 = vld [vmem:[#allocation7 + $0x114] sm:$0xff]
        %v764 = vld [vmem:[#allocation7 + $0x11c] sm:$0xf]
        %v765 = vld [vmem:[#allocation7 + $0x120] sm:$0xff]
        %v766 = vld [vmem:[#allocation7 + $0x128] sm:$0xf]
        %v767 = vld [vmem:[#allocation7 + $0x12c] sm:$0xff]
        %v768 = vld [vmem:[#allocation7 + $0x134] sm:$0xf]
        %v769 = vld [vmem:[#allocation7 + $0x138] sm:$0xff]
        %v770 = vld [vmem:[#allocation7 + $0x140] sm:$0xf]
        %v771 = vld [vmem:[#allocation7 + $0x144] sm:$0xff]
        %v772 = vld [vmem:[#allocation7 + $0x14c] sm:$0xf]
        %v773 = vld [vmem:[#allocation7 + $0x150] sm:$0xff]
        %v774 = vld [vmem:[#allocation7 + $0x158] sm:$0xf]
        %v775 = vld [vmem:[#allocation7 + $0x15c] sm:$0xff]
        %v776 = vld [vmem:[#allocation7 + $0x164] sm:$0xf]
        %v777 = vld [vmem:[#allocation7 + $0x168] sm:$0xff]
        %v778 = vld [vmem:[#allocation7 + $0x170] sm:$0xf]
        %v779 = vld [vmem:[#allocation7 + $0x174] sm:$0xff]
        %v780 = vld [vmem:[#allocation7 + $0x17c] sm:$0xf]
        %v781 = vld [vmem:[#allocation7 + $0x180] sm:$0xff]
        %v782 = vld [vmem:[#allocation7 + $0x188] sm:$0xf]
        %v783 = vld [vmem:[#allocation7 + $0x18c] sm:$0xff]
        %v784 = vld [vmem:[#allocation7 + $0x194] sm:$0xf]
        %v785 = vld [vmem:[#allocation7 + $0x198] sm:$0xff]
        %v786 = vld [vmem:[#allocation7 + $0x1a0] sm:$0xf]
        %v787 = vld [vmem:[#allocation7 + $0x1a4] sm:$0xff]
        %v788 = vld [vmem:[#allocation7 + $0x1ac] sm:$0xf]
        %v789 = vld [vmem:[#allocation7 + $0x1b0] sm:$0xff]
        %v790 = vld [vmem:[#allocation7 + $0x1b8] sm:$0xf]
        %v791 = vld [vmem:[#allocation7 + $0x1bc] sm:$0xff]
        %v792 = vld [vmem:[#allocation7 + $0x1c4] sm:$0xf]
        %v793 = vld [vmem:[#allocation7 + $0x1c8] sm:$0xff]
        %v794 = vld [vmem:[#allocation7 + $0x1d0] sm:$0xf]
        %v795 = vld [vmem:[#allocation7 + $0x1d4] sm:$0xff]
        %v796 = vld [vmem:[#allocation7 + $0x1dc] sm:$0xf]
        %v797 = vld [vmem:[#allocation7 + $0x1e0] sm:$0xff]
        %v798 = vld [vmem:[#allocation7 + $0x1e8] sm:$0xf]
        %v799 = vld [vmem:[#allocation7 + $0x1ec] sm:$0xff]
        %v800 = vld [vmem:[#allocation7 + $0x1f4] sm:$0xf]
        %v801 = vld [vmem:[#allocation7 + $0x1f8] sm:$0xff]
        %v802 = vld [vmem:[#allocation7 + $0x200] sm:$0xf]
        %v803 = vld [vmem:[#allocation7 + $0x204] sm:$0xff]
        %v804 = vld [vmem:[#allocation7 + $0x20c] sm:$0xf]
        %v805 = vld [vmem:[#allocation7 + $0x210] sm:$0xff]
        %v806 = vld [vmem:[#allocation7 + $0x218] sm:$0xf]
        %v807 = vld [vmem:[#allocation7 + $0x21c] sm:$0xff]
        %v808 = vld [vmem:[#allocation7 + $0x224] sm:$0xf]
        %v809 = vld [vmem:[#allocation7 + $0x228] sm:$0xff]
        %v810 = vld [vmem:[#allocation7 + $0x230] sm:$0xf]
        %v811 = vld [vmem:[#allocation7 + $0x234] sm:$0xff]
        %v812 = vld [vmem:[#allocation7 + $0x23c] sm:$0xf]
        %v813 = vld [vmem:[#allocation7 + $0x240] sm:$0xff]
        %v814 = vld [vmem:[#allocation7 + $0x248] sm:$0xf]
        %v815 = vld [vmem:[#allocation7 + $0x24c] sm:$0xff]
        %v816 = vld [vmem:[#allocation7 + $0x254] sm:$0xf]
        %v817 = vld [vmem:[#allocation7 + $0x258] sm:$0xff]
        %v818 = vld [vmem:[#allocation7 + $0x260] sm:$0xf]
        %v819 = vld [vmem:[#allocation7 + $0x264] sm:$0xff]
        %v820 = vld [vmem:[#allocation7 + $0x26c] sm:$0xf]
        %v821 = vld [vmem:[#allocation7 + $0x270] sm:$0xff]
        %v822 = vld [vmem:[#allocation7 + $0x278] sm:$0xf]
        %v823 = vld [vmem:[#allocation7 + $0x27c] sm:$0xff]
        %v824 = vld [vmem:[#allocation7 + $0x284] sm:$0xf]
        %v825 = vld [vmem:[#allocation7 + $0x288] sm:$0xff]
        %v826 = vld [vmem:[#allocation7 + $0x290] sm:$0xf]
        %v827 = vld [vmem:[#allocation7 + $0x294] sm:$0xff]
        %v828 = vld [vmem:[#allocation7 + $0x29c] sm:$0xf]
        %v829 = vld [vmem:[#allocation7 + $0x2a0] sm:$0xff]
        %v830 = vld [vmem:[#allocation7 + $0x2a8] sm:$0xf]
        %v831 = vld [vmem:[#allocation7 + $0x2ac] sm:$0xff]
        %v832 = vld [vmem:[#allocation7 + $0x2b4] sm:$0xf]
        %v833 = vld [vmem:[#allocation7 + $0x2b8] sm:$0xff]
        %v834 = vld [vmem:[#allocation7 + $0x2c0] sm:$0xf]
        %v835 = vld [vmem:[#allocation7 + $0x2c4] sm:$0xff]
        %v836 = vld [vmem:[#allocation7 + $0x2cc] sm:$0xf]
        %v837 = vld [vmem:[#allocation7 + $0x2d0] sm:$0xff]
        %v838 = vld [vmem:[#allocation7 + $0x2d8] sm:$0xf]
        %v839 = vld [vmem:[#allocation7 + $0x2dc] sm:$0xff]
        %v840 = vld [vmem:[#allocation7 + $0x2e4] sm:$0xf]
        %v841 = vld [vmem:[#allocation7 + $0x2e8] sm:$0xff]
        %v842 = vld [vmem:[#allocation7 + $0x2f0] sm:$0xf]
        %v843 = vld [vmem:[#allocation7 + $0x2f4] sm:$0xff]
        %v844 = vld [vmem:[#allocation7 + $0x2fc] sm:$0xf]
        %v845 = vld [vmem:[#allocation7 + $0x300] sm:$0xff]
        %v846 = vld [vmem:[#allocation7 + $0x308] sm:$0xf]
        %v847 = vld [vmem:[#allocation7 + $0x30c] sm:$0xff]
        %v848 = vld [vmem:[#allocation7 + $0x314] sm:$0xf]
        %v849 = vld [vmem:[#allocation7 + $0x318] sm:$0xff]
        %v850 = vld [vmem:[#allocation7 + $0x320] sm:$0xf]
        %v851 = vld [vmem:[#allocation7 + $0x324] sm:$0xff]
        %v852 = vld [vmem:[#allocation7 + $0x32c] sm:$0xf]
        %v853 = vld [vmem:[#allocation7 + $0x330] sm:$0xff]
        %v854 = vld [vmem:[#allocation7 + $0x338] sm:$0xf]
        %v855 = vld [vmem:[#allocation7 + $0x33c] sm:$0xff]
        %v856 = vld [vmem:[#allocation7 + $0x344] sm:$0xf]
        %v857 = vld [vmem:[#allocation7 + $0x348] sm:$0xff]
        %v858 = vld [vmem:[#allocation7 + $0x350] sm:$0xf]
        %v859 = vld [vmem:[#allocation7 + $0x354] sm:$0xff]
        %v860 = vld [vmem:[#allocation7 + $0x35c] sm:$0xf]
        %v861 = vld [vmem:[#allocation7 + $0x360] sm:$0xff]
        %v862 = vld [vmem:[#allocation7 + $0x368] sm:$0xf]
        %v863 = vld [vmem:[#allocation7 + $0x36c] sm:$0xff]
        %v864 = vld [vmem:[#allocation7 + $0x374] sm:$0xf]
        %v865 = vld [vmem:[#allocation7 + $0x378] sm:$0xff]
        %v866 = vld [vmem:[#allocation7 + $0x380] sm:$0xf]
        %v867 = vld [vmem:[#allocation7 + $0x384] sm:$0xff]
        %v868 = vld [vmem:[#allocation7 + $0x38c] sm:$0xf]
        %v869 = vld [vmem:[#allocation7 + $0x390] sm:$0xff]
        %v870 = vld [vmem:[#allocation7 + $0x398] sm:$0xf]
        %v871 = vld [vmem:[#allocation7 + $0x39c] sm:$0xff]
        %v872 = vld [vmem:[#allocation7 + $0x3a4] sm:$0xf]
        %v873 = vld [vmem:[#allocation7 + $0x3a8] sm:$0xff]
        %v874 = vld [vmem:[#allocation7 + $0x3b0] sm:$0xf]
        %v875 = vld [vmem:[#allocation7 + $0x3b4] sm:$0xff]
        %v876 = vld [vmem:[#allocation7 + $0x3bc] sm:$0xf]
        %v877 = vld [vmem:[#allocation18] sm:$0x7]
        %v879 = vperm.slane %v877, 0
        %v880 = vperm.slane %v877, 1
        %v881 = vperm.slane %v877, 2
        %v1045 = vunpack.c.l.b16 %v717
        %v1046 = vunpack.c.h.b16 %v717
        %v1047 = vunpack.c.l.b16 %v718
        %v1048 = vunpack.c.l.b16 %v719
        %v1049 = vunpack.c.h.b16 %v719
        %v1050 = vunpack.c.l.b16 %v720
        %v1051 = vunpack.c.l.b16 %v721
        %v1052 = vunpack.c.h.b16 %v721
        %v1053 = vunpack.c.l.b16 %v722
        %v1054 = vunpack.c.l.b16 %v723
        %v1055 = vunpack.c.h.b16 %v723
        %v1056 = vunpack.c.l.b16 %v724
        %v1057 = vunpack.c.l.b16 %v725
        %v1058 = vunpack.c.h.b16 %v725
        %v1059 = vunpack.c.l.b16 %v726
        %v1060 = vunpack.c.l.b16 %v727
        %v1061 = vunpack.c.h.b16 %v727
        %v1062 = vunpack.c.l.b16 %v728
        %v1063 = vunpack.c.l.b16 %v729
        %v1064 = vunpack.c.h.b16 %v729
        %v1065 = vunpack.c.l.b16 %v730
        %v1066 = vunpack.c.l.b16 %v731
        %v1067 = vunpack.c.h.b16 %v731
        %v1068 = vunpack.c.l.b16 %v732
        %v1069 = vunpack.c.l.b16 %v733
        %v1070 = vunpack.c.h.b16 %v733
        %v1071 = vunpack.c.l.b16 %v734
        %v1072 = vunpack.c.l.b16 %v735
        %v1073 = vunpack.c.h.b16 %v735
        %v1074 = vunpack.c.l.b16 %v736
        %v1075 = vunpack.c.l.b16 %v737
        %v1076 = vunpack.c.h.b16 %v737
        %v1077 = vunpack.c.l.b16 %v738
        %v1078 = vunpack.c.l.b16 %v739
        %v1079 = vunpack.c.h.b16 %v739
        %v1080 = vunpack.c.l.b16 %v740
        %v1081 = vunpack.c.l.b16 %v741
        %v1082 = vunpack.c.h.b16 %v741
        %v1083 = vunpack.c.l.b16 %v742
        %v1084 = vunpack.c.l.b16 %v743
        %v1085 = vunpack.c.h.b16 %v743
        %v1086 = vunpack.c.l.b16 %v744
        %v1087 = vunpack.c.l.b16 %v745
        %v1088 = vunpack.c.h.b16 %v745
        %v1089 = vunpack.c.l.b16 %v746
        %v1090 = vunpack.c.l.b16 %v747
        %v1091 = vunpack.c.h.b16 %v747
        %v1092 = vunpack.c.l.b16 %v748
        %v1093 = vunpack.c.l.b16 %v749
        %v1094 = vunpack.c.h.b16 %v749
        %v1095 = vunpack.c.l.b16 %v750
        %v1096 = vunpack.c.l.b16 %v751
        %v1097 = vunpack.c.h.b16 %v751
        %v1098 = vunpack.c.l.b16 %v752
        %v1099 = vunpack.c.l.b16 %v753
        %v1100 = vunpack.c.h.b16 %v753
        %v1101 = vunpack.c.l.b16 %v754
        %v1102 = vunpack.c.l.b16 %v755
        %v1103 = vunpack.c.h.b16 %v755
        %v1104 = vunpack.c.l.b16 %v756
        %v1105 = vunpack.c.l.b16 %v757
        %v1106 = vunpack.c.h.b16 %v757
        %v1107 = vunpack.c.l.b16 %v758
        %v1108 = vunpack.c.l.b16 %v759
        %v1109 = vunpack.c.h.b16 %v759
        %v1110 = vunpack.c.l.b16 %v760
        %v1111 = vunpack.c.l.b16 %v761
        %v1112 = vunpack.c.h.b16 %v761
        %v1113 = vunpack.c.l.b16 %v762
        %v1114 = vunpack.c.l.b16 %v763
        %v1115 = vunpack.c.h.b16 %v763
        %v1116 = vunpack.c.l.b16 %v764
        %v1117 = vunpack.c.l.b16 %v765
        %v1118 = vunpack.c.h.b16 %v765
        %v1119 = vunpack.c.l.b16 %v766
        %v1120 = vunpack.c.l.b16 %v767
        %v1121 = vunpack.c.h.b16 %v767
        %v1122 = vunpack.c.l.b16 %v768
        %v1123 = vunpack.c.l.b16 %v769
        %v1124 = vunpack.c.h.b16 %v769
        %v1125 = vunpack.c.l.b16 %v770
        %v1126 = vunpack.c.l.b16 %v771
        %v1127 = vunpack.c.h.b16 %v771
        %v1128 = vunpack.c.l.b16 %v772
        %v1129 = vunpack.c.l.b16 %v773
        %v1130 = vunpack.c.h.b16 %v773
        %v1131 = vunpack.c.l.b16 %v774
        %v1132 = vunpack.c.l.b16 %v775
        %v1133 = vunpack.c.h.b16 %v775
        %v1134 = vunpack.c.l.b16 %v776
        %v1135 = vunpack.c.l.b16 %v777
        %v1136 = vunpack.c.h.b16 %v777
        %v1137 = vunpack.c.l.b16 %v778
        %v1138 = vunpack.c.l.b16 %v779
        %v1139 = vunpack.c.h.b16 %v779
        %v1140 = vunpack.c.l.b16 %v780
        %v1141 = vunpack.c.l.b16 %v781
        %v1142 = vunpack.c.h.b16 %v781
        %v1143 = vunpack.c.l.b16 %v782
        %v1144 = vunpack.c.l.b16 %v783
        %v1145 = vunpack.c.h.b16 %v783
        %v1146 = vunpack.c.l.b16 %v784
        %v1147 = vunpack.c.l.b16 %v785
        %v1148 = vunpack.c.h.b16 %v785
        %v1149 = vunpack.c.l.b16 %v786
        %v1150 = vunpack.c.l.b16 %v787
        %v1151 = vunpack.c.h.b16 %v787
        %v1152 = vunpack.c.l.b16 %v788
        %v1153 = vunpack.c.l.b16 %v789
        %v1154 = vunpack.c.h.b16 %v789
        %v1155 = vunpack.c.l.b16 %v790
        %v1156 = vunpack.c.l.b16 %v791
        %v1157 = vunpack.c.h.b16 %v791
        %v1158 = vunpack.c.l.b16 %v792
        %v1159 = vunpack.c.l.b16 %v793
        %v1160 = vunpack.c.h.b16 %v793
        %v1161 = vunpack.c.l.b16 %v794
        %v1162 = vunpack.c.l.b16 %v795
        %v1163 = vunpack.c.h.b16 %v795
        %v1164 = vunpack.c.l.b16 %v796
        %v1165 = vunpack.c.l.b16 %v797
        %v1166 = vunpack.c.h.b16 %v797
        %v1167 = vunpack.c.l.b16 %v798
        %v1168 = vunpack.c.l.b16 %v799
        %v1169 = vunpack.c.h.b16 %v799
        %v1170 = vunpack.c.l.b16 %v800
        %v1171 = vunpack.c.l.b16 %v801
        %v1172 = vunpack.c.h.b16 %v801
        %v1173 = vunpack.c.l.b16 %v802
        %v1174 = vunpack.c.l.b16 %v803
        %v1175 = vunpack.c.h.b16 %v803
        %v1176 = vunpack.c.l.b16 %v804
        %v1177 = vunpack.c.l.b16 %v805
        %v1178 = vunpack.c.h.b16 %v805
        %v1179 = vunpack.c.l.b16 %v806
        %v1180 = vunpack.c.l.b16 %v807
        %v1181 = vunpack.c.h.b16 %v807
        %v1182 = vunpack.c.l.b16 %v808
        %v1183 = vunpack.c.l.b16 %v809
        %v1184 = vunpack.c.h.b16 %v809
        %v1185 = vunpack.c.l.b16 %v810
        %v1186 = vunpack.c.l.b16 %v811
        %v1187 = vunpack.c.h.b16 %v811
        %v1188 = vunpack.c.l.b16 %v812
        %v1189 = vunpack.c.l.b16 %v813
        %v1190 = vunpack.c.h.b16 %v813
        %v1191 = vunpack.c.l.b16 %v814
        %v1192 = vunpack.c.l.b16 %v815
        %v1193 = vunpack.c.h.b16 %v815
        %v1194 = vunpack.c.l.b16 %v816
        %v1195 = vunpack.c.l.b16 %v817
        %v1196 = vunpack.c.h.b16 %v817
        %v1197 = vunpack.c.l.b16 %v818
        %v1198 = vunpack.c.l.b16 %v819
        %v1199 = vunpack.c.h.b16 %v819
        %v1200 = vunpack.c.l.b16 %v820
        %v1201 = vunpack.c.l.b16 %v821
        %v1202 = vunpack.c.h.b16 %v821
        %v1203 = vunpack.c.l.b16 %v822
        %v1204 = vunpack.c.l.b16 %v823
        %v1205 = vunpack.c.h.b16 %v823
        %v1206 = vunpack.c.l.b16 %v824
        %v1207 = vunpack.c.l.b16 %v825
        %v1208 = vunpack.c.h.b16 %v825
        %v1209 = vunpack.c.l.b16 %v826
        %v1210 = vunpack.c.l.b16 %v827
        %v1211 = vunpack.c.h.b16 %v827
        %v1212 = vunpack.c.l.b16 %v828
        %v1213 = vunpack.c.l.b16 %v829
        %v1214 = vunpack.c.h.b16 %v829
        %v1215 = vunpack.c.l.b16 %v830
        %v1216 = vunpack.c.l.b16 %v831
        %v1217 = vunpack.c.h.b16 %v831
        %v1218 = vunpack.c.l.b16 %v832
        %v1219 = vunpack.c.l.b16 %v833
        %v1220 = vunpack.c.h.b16 %v833
        %v1221 = vunpack.c.l.b16 %v834
        %v1222 = vunpack.c.l.b16 %v835
        %v1223 = vunpack.c.h.b16 %v835
        %v1224 = vunpack.c.l.b16 %v836
        %v1225 = vunpack.c.l.b16 %v837
        %v1226 = vunpack.c.h.b16 %v837
        %v1227 = vunpack.c.l.b16 %v838
        %v1228 = vunpack.c.l.b16 %v839
        %v1229 = vunpack.c.h.b16 %v839
        %v1230 = vunpack.c.l.b16 %v840
        %v1231 = vunpack.c.l.b16 %v841
        %v1232 = vunpack.c.h.b16 %v841
        %v1233 = vunpack.c.l.b16 %v842
        %v1234 = vunpack.c.l.b16 %v843
        %v1235 = vunpack.c.h.b16 %v843
        %v1236 = vunpack.c.l.b16 %v844
        %v1237 = vunpack.c.l.b16 %v845
        %v1238 = vunpack.c.h.b16 %v845
        %v1239 = vunpack.c.l.b16 %v846
        %v1240 = vunpack.c.l.b16 %v847
        %v1241 = vunpack.c.h.b16 %v847
        %v1242 = vunpack.c.l.b16 %v848
        %v1243 = vunpack.c.l.b16 %v849
        %v1244 = vunpack.c.h.b16 %v849
        %v1245 = vunpack.c.l.b16 %v850
        %v1246 = vunpack.c.l.b16 %v851
        %v1247 = vunpack.c.h.b16 %v851
        %v1248 = vunpack.c.l.b16 %v852
        %v1249 = vunpack.c.l.b16 %v853
        %v1250 = vunpack.c.h.b16 %v853
        %v1251 = vunpack.c.l.b16 %v854
        %v1252 = vunpack.c.l.b16 %v855
        %v1253 = vunpack.c.h.b16 %v855
        %v1254 = vunpack.c.l.b16 %v856
        %v1255 = vunpack.c.l.b16 %v857
        %v1256 = vunpack.c.h.b16 %v857
        %v1257 = vunpack.c.l.b16 %v858
        %v1258 = vunpack.c.l.b16 %v859
        %v1259 = vunpack.c.h.b16 %v859
        %v1260 = vunpack.c.l.b16 %v860
        %v1261 = vunpack.c.l.b16 %v861
        %v1262 = vunpack.c.h.b16 %v861
        %v1263 = vunpack.c.l.b16 %v862
        %v1264 = vunpack.c.l.b16 %v863
        %v1265 = vunpack.c.h.b16 %v863
        %v1266 = vunpack.c.l.b16 %v864
        %v1267 = vunpack.c.l.b16 %v865
        %v1268 = vunpack.c.h.b16 %v865
        %v1269 = vunpack.c.l.b16 %v866
        %v1270 = vunpack.c.l.b16 %v867
        %v1271 = vunpack.c.h.b16 %v867
        %v1272 = vunpack.c.l.b16 %v868
        %v1273 = vunpack.c.l.b16 %v869
        %v1274 = vunpack.c.h.b16 %v869
        %v1275 = vunpack.c.l.b16 %v870
        %v1276 = vunpack.c.l.b16 %v871
        %v1277 = vunpack.c.h.b16 %v871
        %v1278 = vunpack.c.l.b16 %v872
        %v1279 = vunpack.c.l.b16 %v873
        %v1280 = vunpack.c.h.b16 %v873
        %v1281 = vunpack.c.l.b16 %v874
        %v1282 = vunpack.c.l.b16 %v875
        %v1283 = vunpack.c.h.b16 %v875
        %v1284 = vunpack.c.l.b16 %v876
        %v1285 = vpack.c.b16 %v1048, %v1045
        %v1286 = vpack.c.b16 %v1049, %v1046
        %v1287 = vpack.c.b16 %v1050, %v1047
        %v1288 = vpack.c.b16 %v1054, %v1051
        %v1289 = vpack.c.b16 %v1055, %v1052
        %v1290 = vpack.c.b16 %v1056, %v1053
        %v1291 = vpack.c.b16 %v1060, %v1057
        %v1292 = vpack.c.b16 %v1061, %v1058
        %v1293 = vpack.c.b16 %v1062, %v1059
        %v1294 = vpack.c.b16 %v1066, %v1063
        %v1295 = vpack.c.b16 %v1067, %v1064
        %v1296 = vpack.c.b16 %v1068, %v1065
        %v1297 = vpack.c.b16 %v1072, %v1069
        %v1298 = vpack.c.b16 %v1073, %v1070
        %v1299 = vpack.c.b16 %v1074, %v1071
        %v1300 = vpack.c.b16 %v1078, %v1075
        %v1301 = vpack.c.b16 %v1079, %v1076
        %v1302 = vpack.c.b16 %v1080, %v1077
        %v1303 = vpack.c.b16 %v1084, %v1081
        %v1304 = vpack.c.b16 %v1085, %v1082
        %v1305 = vpack.c.b16 %v1086, %v1083
        %v1306 = vpack.c.b16 %v1090, %v1087
        %v1307 = vpack.c.b16 %v1091, %v1088
        %v1308 = vpack.c.b16 %v1092, %v1089
        %v1309 = vpack.c.b16 %v1096, %v1093
        %v1310 = vpack.c.b16 %v1097, %v1094
        %v1311 = vpack.c.b16 %v1098, %v1095
        %v1312 = vpack.c.b16 %v1102, %v1099
        %v1313 = vpack.c.b16 %v1103, %v1100
        %v1314 = vpack.c.b16 %v1104, %v1101
        %v1315 = vpack.c.b16 %v1108, %v1105
        %v1316 = vpack.c.b16 %v1109, %v1106
        %v1317 = vpack.c.b16 %v1110, %v1107
        %v1318 = vpack.c.b16 %v1114, %v1111
        %v1319 = vpack.c.b16 %v1115, %v1112
        %v1320 = vpack.c.b16 %v1116, %v1113
        %v1321 = vpack.c.b16 %v1120, %v1117
        %v1322 = vpack.c.b16 %v1121, %v1118
        %v1323 = vpack.c.b16 %v1122, %v1119
        %v1324 = vpack.c.b16 %v1126, %v1123
        %v1325 = vpack.c.b16 %v1127, %v1124
        %v1326 = vpack.c.b16 %v1128, %v1125
        %v1327 = vpack.c.b16 %v1132, %v1129
        %v1328 = vpack.c.b16 %v1133, %v1130
        %v1329 = vpack.c.b16 %v1134, %v1131
        %v1330 = vpack.c.b16 %v1138, %v1135
        %v1331 = vpack.c.b16 %v1139, %v1136
        %v1332 = vpack.c.b16 %v1140, %v1137
        %v1333 = vpack.c.b16 %v1144, %v1141
        %v1334 = vpack.c.b16 %v1145, %v1142
        %v1335 = vpack.c.b16 %v1146, %v1143
        %v1336 = vpack.c.b16 %v1150, %v1147
        %v1337 = vpack.c.b16 %v1151, %v1148
        %v1338 = vpack.c.b16 %v1152, %v1149
        %v1339 = vpack.c.b16 %v1156, %v1153
        %v1340 = vpack.c.b16 %v1157, %v1154
        %v1341 = vpack.c.b16 %v1158, %v1155
        %v1342 = vpack.c.b16 %v1162, %v1159
        %v1343 = vpack.c.b16 %v1163, %v1160
        %v1344 = vpack.c.b16 %v1164, %v1161
        %v1345 = vpack.c.b16 %v1168, %v1165
        %v1346 = vpack.c.b16 %v1169, %v1166
        %v1347 = vpack.c.b16 %v1170, %v1167
        %v1348 = vpack.c.b16 %v1174, %v1171
        %v1349 = vpack.c.b16 %v1175, %v1172
        %v1350 = vpack.c.b16 %v1176, %v1173
        %v1351 = vpack.c.b16 %v1180, %v1177
        %v1352 = vpack.c.b16 %v1181, %v1178
        %v1353 = vpack.c.b16 %v1182, %v1179
        %v1354 = vpack.c.b16 %v1186, %v1183
        %v1355 = vpack.c.b16 %v1187, %v1184
        %v1356 = vpack.c.b16 %v1188, %v1185
        %v1357 = vpack.c.b16 %v1192, %v1189
        %v1358 = vpack.c.b16 %v1193, %v1190
        %v1359 = vpack.c.b16 %v1194, %v1191
        %v1360 = vpack.c.b16 %v1198, %v1195
        %v1361 = vpack.c.b16 %v1199, %v1196
        %v1362 = vpack.c.b16 %v1200, %v1197
        %v1363 = vpack.c.b16 %v1204, %v1201
        %v1364 = vpack.c.b16 %v1205, %v1202
        %v1365 = vpack.c.b16 %v1206, %v1203
        %v1366 = vpack.c.b16 %v1210, %v1207
        %v1367 = vpack.c.b16 %v1211, %v1208
        %v1368 = vpack.c.b16 %v1212, %v1209
        %v1369 = vpack.c.b16 %v1216, %v1213
        %v1370 = vpack.c.b16 %v1217, %v1214
        %v1371 = vpack.c.b16 %v1218, %v1215
        %v1372 = vpack.c.b16 %v1222, %v1219
        %v1373 = vpack.c.b16 %v1223, %v1220
        %v1374 = vpack.c.b16 %v1224, %v1221
        %v1375 = vpack.c.b16 %v1228, %v1225
        %v1376 = vpack.c.b16 %v1229, %v1226
        %v1377 = vpack.c.b16 %v1230, %v1227
        %v1378 = vpack.c.b16 %v1234, %v1231
        %v1379 = vpack.c.b16 %v1235, %v1232
        %v1380 = vpack.c.b16 %v1236, %v1233
        %v1381 = vpack.c.b16 %v1240, %v1237
        %v1382 = vpack.c.b16 %v1241, %v1238
        %v1383 = vpack.c.b16 %v1242, %v1239
        %v1384 = vpack.c.b16 %v1246, %v1243
        %v1385 = vpack.c.b16 %v1247, %v1244
        %v1386 = vpack.c.b16 %v1248, %v1245
        %v1387 = vpack.c.b16 %v1252, %v1249
        %v1388 = vpack.c.b16 %v1253, %v1250
        %v1389 = vpack.c.b16 %v1254, %v1251
        %v1390 = vpack.c.b16 %v1258, %v1255
        %v1391 = vpack.c.b16 %v1259, %v1256
        %v1392 = vpack.c.b16 %v1260, %v1257
        %v1393 = vpack.c.b16 %v1264, %v1261
        %v1394 = vpack.c.b16 %v1265, %v1262
        %v1395 = vpack.c.b16 %v1266, %v1263
        %v1396 = vpack.c.b16 %v1270, %v1267
        %v1397 = vpack.c.b16 %v1271, %v1268
        %v1398 = vpack.c.b16 %v1272, %v1269
        %v1399 = vpack.c.b16 %v1276, %v1273
        %v1400 = vpack.c.b16 %v1277, %v1274
        %v1401 = vpack.c.b16 %v1278, %v1275
        %v1402 = vpack.c.b16 %v1282, %v1279
        %v1403 = vpack.c.b16 %v1283, %v1280
        %v1404 = vpack.c.b16 %v1284, %v1281
        %1525 = vmatpush.bf16.msra.mxu0 %v1306
        %1526 = vmatpush.bf16.msra.mxu0 %v1303
        %1527 = vmatpush.bf16.msra.mxu0 %v1300
        %1528 = vmatpush.bf16.msra.mxu0 %v1297
        %1529 = vmatpush.bf16.msra.mxu0 %v1294
        %1530 = vmatpush.bf16.msra.mxu0 %v1291
        %1531 = vmatpush.bf16.msra.mxu0 %v1288
        %1532 = vmatpush.bf16.msra.mxu0 %v1285
        %1533 = vmatmul.bf16.gmra.mxu0 %v673
        %v1534 = vpop.f32.mrf.mxu0
        %v1535 = vadd.f32 %v879, %v1534
        %v1536 = vpop.f32.mrf.mxu0
        %v1537 = vadd.f32 %v879, %v1536
        %1538 = vmatmul.bf16.gmra.mxu0 %v674
        %v1539 = vpop.f32.mrf.mxu0
        %v1540 = vadd.f32 %v879, %v1539
        %v1541 = vpop.f32.mrf.mxu0
        %1542 = vdwg.mxu0
        %1543 = vmatpush.bf16.msra.mxu0 %v1330
        %1544 = vmatpush.bf16.msra.mxu0 %v1327
        %1545 = vmatpush.bf16.msra.mxu0 %v1324
        %1546 = vmatpush.bf16.msra.mxu0 %v1321
        %1547 = vmatpush.bf16.msra.mxu0 %v1318
        %1548 = vmatpush.bf16.msra.mxu0 %v1315
        %1549 = vmatpush.bf16.msra.mxu0 %v1312
        %1550 = vmatpush.bf16.msra.mxu0 %v1309
        %1551 = vmatmul.bf16.gmra.mxu0 %v683
        %v1552 = vpop.f32.mrf.mxu0
        %v1553 = vadd.f32 %v1535, %v1552
        %v1554 = vpop.f32.mrf.mxu0
        %v1555 = vadd.f32 %v1537, %v1554
        %1556 = vmatmul.bf16.gmra.mxu0 %v684
        %v1557 = vpop.f32.mrf.mxu0
        %v1558 = vadd.f32 %v1540, %v1557
        %v1559 = vpop.f32.mrf.mxu0
        %1560 = vdwg.mxu0
        %1561 = vmatpush.bf16.msra.mxu0 %v1354
        %1562 = vmatpush.bf16.msra.mxu0 %v1351
        %1563 = vmatpush.bf16.msra.mxu0 %v1348
        %1564 = vmatpush.bf16.msra.mxu0 %v1345
        %1565 = vmatpush.bf16.msra.mxu0 %v1342
        %1566 = vmatpush.bf16.msra.mxu0 %v1339
        %1567 = vmatpush.bf16.msra.mxu0 %v1336
        %1568 = vmatpush.bf16.msra.mxu0 %v1333
        %1569 = vmatmul.bf16.gmra.mxu0 %v693
        %v1570 = vpop.f32.mrf.mxu0
        %v1571 = vadd.f32 %v1553, %v1570
        %v1572 = vpop.f32.mrf.mxu0
        %v1573 = vadd.f32 %v1555, %v1572
        %1574 = vmatmul.bf16.gmra.mxu0 %v694
        %v1575 = vpop.f32.mrf.mxu0
        %v1576 = vadd.f32 %v1558, %v1575
        %v1577 = vpop.f32.mrf.mxu0
        %1578 = vdwg.mxu0
        %1579 = vmatpush.bf16.msra.mxu0 %v1378
        %1580 = vmatpush.bf16.msra.mxu0 %v1375
        %1581 = vmatpush.bf16.msra.mxu0 %v1372
        %1582 = vmatpush.bf16.msra.mxu0 %v1369
        %1583 = vmatpush.bf16.msra.mxu0 %v1366
        %1584 = vmatpush.bf16.msra.mxu0 %v1363
        %1585 = vmatpush.bf16.msra.mxu0 %v1360
        %1586 = vmatpush.bf16.msra.mxu0 %v1357
        %1587 = vmatmul.bf16.gmra.mxu0 %v703
        %v1588 = vpop.f32.mrf.mxu0
        %v1589 = vadd.f32 %v1571, %v1588
        %v1590 = vpop.f32.mrf.mxu0
        %v1591 = vadd.f32 %v1573, %v1590
        %1592 = vmatmul.bf16.gmra.mxu0 %v704
        %v1593 = vpop.f32.mrf.mxu0
        %v1594 = vadd.f32 %v1576, %v1593
        %v1595 = vpop.f32.mrf.mxu0
        %1596 = vdwg.mxu0
        %1597 = vmatpush.bf16.msra.mxu0 %v1402
        %1598 = vmatpush.bf16.msra.mxu0 %v1399
        %1599 = vmatpush.bf16.msra.mxu0 %v1396
        %1600 = vmatpush.bf16.msra.mxu0 %v1393
        %1601 = vmatpush.bf16.msra.mxu0 %v1390
        %1602 = vmatpush.bf16.msra.mxu0 %v1387
        %1603 = vmatpush.bf16.msra.mxu0 %v1384
        %1604 = vmatpush.bf16.msra.mxu0 %v1381
        %1605 = vmatmul.bf16.gmra.mxu0 %v713
        %v1606 = vpop.f32.mrf.mxu0
        %v1607 = vadd.f32 %v1589, %v1606
        %v1608 = vpop.f32.mrf.mxu0
        %v1609 = vadd.f32 %v1591, %v1608
        %1610 = vmatmul.bf16.gmra.mxu0 %v714
        %v1611 = vpop.f32.mrf.mxu0
        %v1612 = vadd.f32 %v1594, %v1611
        %v1613 = vpop.f32.mrf.mxu0
        %1614 = vdwg.mxu0
        %1615 = vmatpush.bf16.msra.mxu0 %v1307
        %1616 = vmatpush.bf16.msra.mxu0 %v1304
        %1617 = vmatpush.bf16.msra.mxu0 %v1301
        %1618 = vmatpush.bf16.msra.mxu0 %v1298
        %1619 = vmatpush.bf16.msra.mxu0 %v1295
        %1620 = vmatpush.bf16.msra.mxu0 %v1292
        %1621 = vmatpush.bf16.msra.mxu0 %v1289
        %1622 = vmatpush.bf16.msra.mxu0 %v1286
        %1623 = vmatmul.bf16.gmra.mxu0 %v673
        %v1624 = vpop.f32.mrf.mxu0
        %v1625 = vadd.f32 %v880, %v1624
        %v1626 = vpop.f32.mrf.mxu0
        %v1627 = vadd.f32 %v880, %v1626
        %1628 = vmatmul.bf16.gmra.mxu0 %v674
        %v1629 = vpop.f32.mrf.mxu0
        %v1630 = vadd.f32 %v880, %v1629
        %v1631 = vpop.f32.mrf.mxu0
        %1632 = vdwg.mxu0
        %1633 = vmatpush.bf16.msra.mxu0 %v1331
        %1634 = vmatpush.bf16.msra.mxu0 %v1328
        %1635 = vmatpush.bf16.msra.mxu0 %v1325
        %1636 = vmatpush.bf16.msra.mxu0 %v1322
        %1637 = vmatpush.bf16.msra.mxu0 %v1319
        %1638 = vmatpush.bf16.msra.mxu0 %v1316
        %1639 = vmatpush.bf16.msra.mxu0 %v1313
        %1640 = vmatpush.bf16.msra.mxu0 %v1310
        %1641 = vmatmul.bf16.gmra.mxu0 %v683
        %v1642 = vpop.f32.mrf.mxu0
        %v1643 = vadd.f32 %v1625, %v1642
        %v1644 = vpop.f32.mrf.mxu0
        %v1645 = vadd.f32 %v1627, %v1644
        %1646 = vmatmul.bf16.gmra.mxu0 %v684
        %v1647 = vpop.f32.mrf.mxu0
        %v1648 = vadd.f32 %v1630, %v1647
        %v1649 = vpop.f32.mrf.mxu0
        %1650 = vdwg.mxu0
        %1651 = vmatpush.bf16.msra.mxu0 %v1355
        %1652 = vmatpush.bf16.msra.mxu0 %v1352
        %1653 = vmatpush.bf16.msra.mxu0 %v1349
        %1654 = vmatpush.bf16.msra.mxu0 %v1346
        %1655 = vmatpush.bf16.msra.mxu0 %v1343
        %1656 = vmatpush.bf16.msra.mxu0 %v1340
        %1657 = vmatpush.bf16.msra.mxu0 %v1337
        %1658 = vmatpush.bf16.msra.mxu0 %v1334
        %1659 = vmatmul.bf16.gmra.mxu0 %v693
        %v1660 = vpop.f32.mrf.mxu0
        %v1661 = vadd.f32 %v1643, %v1660
        %v1662 = vpop.f32.mrf.mxu0
        %v1663 = vadd.f32 %v1645, %v1662
        %1664 = vmatmul.bf16.gmra.mxu0 %v694
        %v1665 = vpop.f32.mrf.mxu0
        %v1666 = vadd.f32 %v1648, %v1665
        %v1667 = vpop.f32.mrf.mxu0
        %1668 = vdwg.mxu0
        %1669 = vmatpush.bf16.msra.mxu0 %v1379
        %1670 = vmatpush.bf16.msra.mxu0 %v1376
        %1671 = vmatpush.bf16.msra.mxu0 %v1373
        %1672 = vmatpush.bf16.msra.mxu0 %v1370
        %1673 = vmatpush.bf16.msra.mxu0 %v1367
        %1674 = vmatpush.bf16.msra.mxu0 %v1364
        %1675 = vmatpush.bf16.msra.mxu0 %v1361
        %1676 = vmatpush.bf16.msra.mxu0 %v1358
        %1677 = vmatmul.bf16.gmra.mxu0 %v703
        %v1678 = vpop.f32.mrf.mxu0
        %v1679 = vadd.f32 %v1661, %v1678
        %v1680 = vpop.f32.mrf.mxu0
        %v1681 = vadd.f32 %v1663, %v1680
        %1682 = vmatmul.bf16.gmra.mxu0 %v704
        %v1683 = vpop.f32.mrf.mxu0
        %v1684 = vadd.f32 %v1666, %v1683
        %v1685 = vpop.f32.mrf.mxu0
        %1686 = vdwg.mxu0
        %1687 = vmatpush.bf16.msra.mxu0 %v1403
        %1688 = vmatpush.bf16.msra.mxu0 %v1400
        %1689 = vmatpush.bf16.msra.mxu0 %v1397
        %1690 = vmatpush.bf16.msra.mxu0 %v1394
        %1691 = vmatpush.bf16.msra.mxu0 %v1391
        %1692 = vmatpush.bf16.msra.mxu0 %v1388
        %1693 = vmatpush.bf16.msra.mxu0 %v1385
        %1694 = vmatpush.bf16.msra.mxu0 %v1382
        %1695 = vmatmul.bf16.gmra.mxu0 %v713
        %v1696 = vpop.f32.mrf.mxu0
        %v1697 = vadd.f32 %v1679, %v1696
        %v1698 = vpop.f32.mrf.mxu0
        %v1699 = vadd.f32 %v1681, %v1698
        %1700 = vmatmul.bf16.gmra.mxu0 %v714
        %v1701 = vpop.f32.mrf.mxu0
        %v1702 = vadd.f32 %v1684, %v1701
        %v1703 = vpop.f32.mrf.mxu0
        %1704 = vdwg.mxu0
        %1705 = vmatpush.bf16.msra.mxu0 %v1308
        %1706 = vmatpush.bf16.msra.mxu0 %v1305
        %1707 = vmatpush.bf16.msra.mxu0 %v1302
        %1708 = vmatpush.bf16.msra.mxu0 %v1299
        %1709 = vmatpush.bf16.msra.mxu0 %v1296
        %1710 = vmatpush.bf16.msra.mxu0 %v1293
        %1711 = vmatpush.bf16.msra.mxu0 %v1290
        %1712 = vmatpush.bf16.msra.mxu0 %v1287
        %1713 = vmatmul.bf16.gmra.mxu0 %v673
        %v1714 = vpop.f32.mrf.mxu0
        %v1715 = vadd.f32 %v881, %v1714
        %v1716 = vpop.f32.mrf.mxu0
        %v1717 = vadd.f32 %v881, %v1716
        %1718 = vmatmul.bf16.gmra.mxu0 %v674
        %v1719 = vpop.f32.mrf.mxu0
        %v1720 = vadd.f32 %v881, %v1719
        %v1721 = vpop.f32.mrf.mxu0
        %1722 = vdwg.mxu0
        %1723 = vmatpush.bf16.msra.mxu0 %v1332
        %1724 = vmatpush.bf16.msra.mxu0 %v1329
        %1725 = vmatpush.bf16.msra.mxu0 %v1326
        %1726 = vmatpush.bf16.msra.mxu0 %v1323
        %1727 = vmatpush.bf16.msra.mxu0 %v1320
        %1728 = vmatpush.bf16.msra.mxu0 %v1317
        %1729 = vmatpush.bf16.msra.mxu0 %v1314
        %1730 = vmatpush.bf16.msra.mxu0 %v1311
        %1731 = vmatmul.bf16.gmra.mxu0 %v683
        %v1732 = vpop.f32.mrf.mxu0
        %v1733 = vadd.f32 %v1715, %v1732
        %v1734 = vpop.f32.mrf.mxu0
        %v1735 = vadd.f32 %v1717, %v1734
        %1736 = vmatmul.bf16.gmra.mxu0 %v684
        %v1737 = vpop.f32.mrf.mxu0
        %v1738 = vadd.f32 %v1720, %v1737
        %v1739 = vpop.f32.mrf.mxu0
        %1740 = vdwg.mxu0
        %1741 = vmatpush.bf16.msra.mxu0 %v1356
        %1742 = vmatpush.bf16.msra.mxu0 %v1353
        %1743 = vmatpush.bf16.msra.mxu0 %v1350
        %1744 = vmatpush.bf16.msra.mxu0 %v1347
        %1745 = vmatpush.bf16.msra.mxu0 %v1344
        %1746 = vmatpush.bf16.msra.mxu0 %v1341
        %1747 = vmatpush.bf16.msra.mxu0 %v1338
        %1748 = vmatpush.bf16.msra.mxu0 %v1335
        %1749 = vmatmul.bf16.gmra.mxu0 %v693
        %v1750 = vpop.f32.mrf.mxu0
        %v1751 = vadd.f32 %v1733, %v1750
        %v1752 = vpop.f32.mrf.mxu0
        %v1753 = vadd.f32 %v1735, %v1752
        %1754 = vmatmul.bf16.gmra.mxu0 %v694
        %v1755 = vpop.f32.mrf.mxu0
        %v1756 = vadd.f32 %v1738, %v1755
        %v1757 = vpop.f32.mrf.mxu0
        %1758 = vdwg.mxu0
        %1759 = vmatpush.bf16.msra.mxu0 %v1380
        %1760 = vmatpush.bf16.msra.mxu0 %v1377
        %1761 = vmatpush.bf16.msra.mxu0 %v1374
        %1762 = vmatpush.bf16.msra.mxu0 %v1371
        %1763 = vmatpush.bf16.msra.mxu0 %v1368
        %1764 = vmatpush.bf16.msra.mxu0 %v1365
        %1765 = vmatpush.bf16.msra.mxu0 %v1362
        %1766 = vmatpush.bf16.msra.mxu0 %v1359
        %1767 = vmatmul.bf16.gmra.mxu0 %v703
        %v1768 = vpop.f32.mrf.mxu0
        %v1769 = vadd.f32 %v1751, %v1768
        %v1770 = vpop.f32.mrf.mxu0
        %v1771 = vadd.f32 %v1753, %v1770
        %1772 = vmatmul.bf16.gmra.mxu0 %v704
        %v1773 = vpop.f32.mrf.mxu0
        %v1774 = vadd.f32 %v1756, %v1773
        %v1775 = vpop.f32.mrf.mxu0
        %1776 = vdwg.mxu0
        %1777 = vmatpush.bf16.msra.mxu0 %v1404
        %1778 = vmatpush.bf16.msra.mxu0 %v1401
        %1779 = vmatpush.bf16.msra.mxu0 %v1398
        %1780 = vmatpush.bf16.msra.mxu0 %v1395
        %1781 = vmatpush.bf16.msra.mxu0 %v1392
        %1782 = vmatpush.bf16.msra.mxu0 %v1389
        %1783 = vmatpush.bf16.msra.mxu0 %v1386
        %1784 = vmatpush.bf16.msra.mxu0 %v1383
        %1785 = vmatmul.bf16.gmra.mxu0 %v713
        %v1786 = vpop.f32.mrf.mxu0
        %v1787 = vadd.f32 %v1769, %v1786
        %v1788 = vpop.f32.mrf.mxu0
        %v1789 = vadd.f32 %v1771, %v1788
        %1790 = vmatmul.bf16.gmra.mxu0 %v714
        %v1791 = vpop.f32.mrf.mxu0
        %v1792 = vadd.f32 %v1774, %v1791
        %v1793 = vpop.f32.mrf.mxu0
        %1794 = vdwg.mxu0
        %v1795 = vmax.f32 %v1607, 0.0
        %v1796 = vmax.f32 %v1697, 0.0
        %v1797 = vmax.f32 %v1787, 0.0
        %v1798 = vmax.f32 %v1609, 0.0
        %v1799 = vmax.f32 %v1699, 0.0
        %v1800 = vmax.f32 %v1789, 0.0
        %v1801 = vmax.f32 %v1612, 0.0
        %v1802 = vmax.f32 %v1702, 0.0
        %v1803 = vmax.f32 %v1792, 0.0
        %vm1813 = vcmask 1041408
        %v1814 = vrot.slane %v1795, 6
        %v1815 = vrot.slane %v1796, 6
        %v1816 = vrot.slane %v1797, 6
        %v1817 = vrot.slane %v1798, 6
        %v1818 = vsel %vm1813, %v1814, %v1817
        %v1819 = vrot.slane %v1799, 6
        %v1820 = vsel %vm1813, %v1815, %v1819
        %v1821 = vrot.slane %v1800, 6
        %v1822 = vsel %vm1813, %v1816, %v1821
        %v1823 = vrot.slane %v1801, 6
        %v1824 = vsel %vm1813, %v1817, %v1823
        %v1825 = vrot.slane %v1802, 6
        %v1826 = vsel %vm1813, %v1819, %v1825
        %v1827 = vrot.slane %v1803, 6
        %v1828 = vsel %vm1813, %v1821, %v1827
        %1838 = vst [vmem:[#allocation2] sm:$0xfc] %v1814
        %1839 = vst [vmem:[#allocation2 + $0x8] sm:$0xfc] %v1815
        %1840 = vst [vmem:[#allocation2 + $0x10] sm:$0xfc] %v1816
        %1841 = vst [vmem:[#allocation2 + $0x18] sm:$0xff] %v1818
        %1842 = vst [vmem:[#allocation2 + $0x20] sm:$0xff] %v1820
        %1843 = vst [vmem:[#allocation2 + $0x28] sm:$0xff] %v1822
        %1844 = vst [vmem:[#allocation2 + $0x30] sm:$0x7f] %v1824
        %1845 = vst [vmem:[#allocation2 + $0x38] sm:$0x7f] %v1826
        %1846 = vst [vmem:[#allocation2 + $0x40] sm:$0x7f] %v1828
        %1847 = vst [vmem:[#allocation3] sm:$0xff] 0.0
        %1848 = vst [vmem:[#allocation3 + $0x8] sm:$0xff] 0.0
        %1849 = vst [vmem:[#allocation3 + $0x10] sm:$0xff] 0.0
        %1850 = vst [vmem:[#allocation3 + $0x18] sm:$0xff] 0.0
        %1851 = vst [vmem:[#allocation3 + $0x20] sm:$0xff] 0.0
        %1852 = vst [vmem:[#allocation3 + $0x28] sm:$0xff] 0.0
        %1853 = vst [vmem:[#allocation3 + $0x30] sm:$0x7f] 0.0
        %1854 = vst [vmem:[#allocation3 + $0x38] sm:$0x7f] 0.0
        %1855 = vst [vmem:[#allocation3 + $0x40] sm:$0x7f] 0.0
        %v1856 = vld [vmem:[#allocation2] sm:$0xff]
        %v1857 = vld [vmem:[#allocation2 + $0x8] sm:$0xff]
        %v1858 = vld [vmem:[#allocation2 + $0x10] sm:$0xff]
        %v1859 = vld [vmem:[#allocation2 + $0x18] sm:$0xff]
        %v1860 = vld [vmem:[#allocation2 + $0x20] sm:$0xff]
        %v1861 = vld [vmem:[#allocation2 + $0x28] sm:$0xff]
        %v1862 = vld [vmem:[#allocation2 + $0x30] sm:$0x1f]
        %v1863 = vld [vmem:[#allocation2 + $0x38] sm:$0x1f]
        %v1864 = vld [vmem:[#allocation2 + $0x40] sm:$0x1f]
        %v1865 = vpack.c.bf16 %v1857, %v1856
        %v1866 = vpack.c.bf16 %v1858, %v1858
        %v1867 = vpack.c.bf16 %v1860, %v1859
        %v1868 = vpack.c.bf16 %v1861, %v1861
        %v1869 = vpack.c.bf16 %v1863, %v1862
        %v1870 = vpack.c.bf16 %v1864, %v1864
        %v1871 = vld [vmem:[#allocation2] sm:$0xfe]
        %v1872 = vld [vmem:[#allocation2 + $0x8] sm:$0xfe]
        %v1873 = vld [vmem:[#allocation2 + $0x10] sm:$0xfe]
        %v1874 = vld [vmem:[#allocation2 + $0x30] sm:$0x3f]
        %v1875 = vld [vmem:[#allocation2 + $0x38] sm:$0x3f]
        %v1876 = vld [vmem:[#allocation2 + $0x40] sm:$0x3f]
        %v1877 = vpack.c.bf16 %v1872, %v1871
        %v1878 = vpack.c.bf16 %v1873, %v1873
        %v1879 = vpack.c.bf16 %v1875, %v1874
        %v1880 = vpack.c.bf16 %v1876, %v1876
        %v1881 = vld [vmem:[#allocation2] sm:$0xfc]
        %v1882 = vld [vmem:[#allocation2 + $0x8] sm:$0xfc]
        %v1883 = vld [vmem:[#allocation2 + $0x10] sm:$0xfc]
        %v1884 = vld [vmem:[#allocation2 + $0x30] sm:$0x7f]
        %v1885 = vld [vmem:[#allocation2 + $0x38] sm:$0x7f]
        %v1886 = vld [vmem:[#allocation2 + $0x40] sm:$0x7f]
        %v1887 = vpack.c.bf16 %v1882, %v1881
        %v1888 = vpack.c.bf16 %v1883, %v1883
        %v1889 = vpack.c.bf16 %v1885, %v1884
        %v1890 = vpack.c.bf16 %v1886, %v1886
        %v1891 = vld [vmem:[#allocation2] sm:$0xf8]
        %v1892 = vld [vmem:[#allocation2 + $0x8] sm:$0xf8]
        %v1893 = vld [vmem:[#allocation2 + $0x10] sm:$0xf8]
        %v1894 = vld [vmem:[#allocation2 + $0x30] sm:$0xff]
        %v1895 = vld [vmem:[#allocation2 + $0x38] sm:$0xff]
        %v1896 = vld [vmem:[#allocation2 + $0x40] sm:$0xff]
        %v1897 = vpack.c.bf16 %v1892, %v1891
        %v1898 = vpack.c.bf16 %v1893, %v1893
        %v1899 = vpack.c.bf16 %v1895, %v1894
        %v1900 = vpack.c.bf16 %v1896, %v1896
        %v1901 = vld [vmem:[#allocation2] sm:$0xf0]
        %v1902 = vld [vmem:[#allocation2 + $0x8] sm:$0xf0]
        %v1903 = vld [vmem:[#allocation2 + $0x10] sm:$0xf0]
        %v1904 = vld [vmem:[#allocation2 + $0x48] sm:$0x1]
        %v1905 = vld [vmem:[#allocation2 + $0x50] sm:$0x1]
        %v1906 = vld [vmem:[#allocation2 + $0x58] sm:$0x1]
        %v1907 = vpack.c.bf16 %v1902, %v1901
        %v1908 = vpack.c.bf16 %v1903, %v1903
        %v1909 = vpack.c.bf16 %v1905, %v1904
        %v1910 = vpack.c.bf16 %v1906, %v1906
        %v1917 = vunpack.c.l.b16 %v1865
        %v1918 = vunpack.c.h.b16 %v1865
        %v1919 = vunpack.c.l.b16 %v1866
        %v1920 = vunpack.c.l.b16 %v1867
        %v1921 = vunpack.c.h.b16 %v1867
        %v1922 = vunpack.c.l.b16 %v1868
        %v1923 = vunpack.c.l.b16 %v1869
        %v1924 = vunpack.c.h.b16 %v1869
        %v1925 = vunpack.c.l.b16 %v1870
        %v1926 = vpack.c.b16 %v1920, %v1917
        %v1927 = vpack.c.b16 %v1921, %v1918
        %v1928 = vpack.c.b16 %v1922, %v1919
        %v1929 = vpack.c.b16 %v1923, %v1923
        %v1930 = vpack.c.b16 %v1924, %v1924
        %v1931 = vpack.c.b16 %v1925, %v1925
        %v1942 = vunpack.c.l.b16 %v1877
        %v1943 = vunpack.c.h.b16 %v1877
        %v1944 = vunpack.c.l.b16 %v1878
        %v1945 = vunpack.c.l.b16 %v1879
        %v1946 = vunpack.c.h.b16 %v1879
        %v1947 = vunpack.c.l.b16 %v1880
        %v1948 = vpack.c.b16 %v1920, %v1942
        %v1949 = vpack.c.b16 %v1921, %v1943
        %v1950 = vpack.c.b16 %v1922, %v1944
        %v1951 = vpack.c.b16 %v1945, %v1945
        %v1952 = vpack.c.b16 %v1946, %v1946
        %v1953 = vpack.c.b16 %v1947, %v1947
        %vm1954 = vsmask.f32 7424
        %v1956 = vshrl.u32 %v1948, 16
        %v1958 = vshll.u32 %v1948, 16
        %v1960 = vrot.slane %v1958, 1
        %v1961 = vor.u32 %v1956, %v1960
        %v1963 = vshll.u32 %v1951, 16
        %v1965 = vrot.slane %v1963, 1
        %v1966 = vsel %vm1954, %v1961, %v1965
        %v1968 = vshrl.u32 %v1949, 16
        %v1970 = vshll.u32 %v1949, 16
        %v1972 = vrot.slane %v1970, 1
        %v1973 = vor.u32 %v1968, %v1972
        %v1975 = vshll.u32 %v1952, 16
        %v1977 = vrot.slane %v1975, 1
        %v1978 = vsel %vm1954, %v1973, %v1977
        %v1980 = vshrl.u32 %v1950, 16
        %v1982 = vshll.u32 %v1950, 16
        %v1984 = vrot.slane %v1982, 1
        %v1985 = vor.u32 %v1980, %v1984
        %v1987 = vshll.u32 %v1953, 16
        %v1989 = vrot.slane %v1987, 1
        %v1990 = vsel %vm1954, %v1985, %v1989
        %v1991 = vshrl.u32 %v1951, 16
        %v1993 = vor.u32 %v1991, %v1965
        %v1994 = vshrl.u32 %v1952, 16
        %v1996 = vor.u32 %v1994, %v1977
        %v1997 = vshrl.u32 %v1953, 16
        %v1999 = vor.u32 %v1997, %v1989
        %v2010 = vunpack.c.l.b16 %v1887
        %v2011 = vunpack.c.h.b16 %v1887
        %v2012 = vunpack.c.l.b16 %v1888
        %v2013 = vunpack.c.l.b16 %v1889
        %v2014 = vunpack.c.h.b16 %v1889
        %v2015 = vunpack.c.l.b16 %v1890
        %v2016 = vpack.c.b16 %v1920, %v2010
        %v2017 = vpack.c.b16 %v1921, %v2011
        %v2018 = vpack.c.b16 %v1922, %v2012
        %v2019 = vpack.c.b16 %v2013, %v2013
        %v2020 = vpack.c.b16 %v2014, %v2014
        %v2021 = vpack.c.b16 %v2015, %v2015
        %vm2022 = vcmask 1046528
        %v2023 = vrot.slane %v2016, 1
        %v2024 = vrot.slane %v2019, 1
        %v2025 = vsel %vm2022, %v2023, %v2024
        %v2026 = vrot.slane %v2017, 1
        %v2027 = vrot.slane %v2020, 1
        %v2028 = vsel %vm2022, %v2026, %v2027
        %v2029 = vrot.slane %v2018, 1
        %v2030 = vrot.slane %v2021, 1
        %v2031 = vsel %vm2022, %v2029, %v2030
        %v2042 = vunpack.c.l.b16 %v1897
        %v2043 = vunpack.c.h.b16 %v1897
        %v2044 = vunpack.c.l.b16 %v1898
        %v2045 = vunpack.c.l.b16 %v1899
        %v2046 = vunpack.c.h.b16 %v1899
        %v2047 = vunpack.c.l.b16 %v1900
        %v2048 = vpack.c.b16 %v1920, %v2042
        %v2049 = vpack.c.b16 %v1921, %v2043
        %v2050 = vpack.c.b16 %v1922, %v2044
        %v2051 = vpack.c.b16 %v2045, %v2045
        %v2052 = vpack.c.b16 %v2046, %v2046
        %v2053 = vpack.c.b16 %v2047, %v2047
        %vm2054 = vsmask.f32 6400
        %v2056 = vshrl.u32 %v2048, 16
        %v2058 = vrot.slane %v2056, 1
        %v2059 = vshll.u32 %v2048, 16
        %v2061 = vrot.slane %v2059, 2
        %v2062 = vor.u32 %v2058, %v2061
        %v2064 = vshrl.u32 %v2051, 16
        %v2066 = vrot.slane %v2064, 1
        %v2067 = vshll.u32 %v2051, 16
        %v2069 = vrot.slane %v2067, 2
        %v2070 = vor.u32 %v2066, %v2069
        %v2071 = vsel %vm2054, %v2062, %v2070
        %v2073 = vshrl.u32 %v2049, 16
        %v2075 = vrot.slane %v2073, 1
        %v2076 = vshll.u32 %v2049, 16
        %v2078 = vrot.slane %v2076, 2
        %v2079 = vor.u32 %v2075, %v2078
        %v2081 = vshrl.u32 %v2052, 16
        %v2083 = vrot.slane %v2081, 1
        %v2084 = vshll.u32 %v2052, 16
        %v2086 = vrot.slane %v2084, 2
        %v2087 = vor.u32 %v2083, %v2086
        %v2088 = vsel %vm2054, %v2079, %v2087
        %v2090 = vshrl.u32 %v2050, 16
        %v2092 = vrot.slane %v2090, 1
        %v2093 = vshll.u32 %v2050, 16
        %v2095 = vrot.slane %v2093, 2
        %v2096 = vor.u32 %v2092, %v2095
        %v2098 = vshrl.u32 %v2053, 16
        %v2100 = vrot.slane %v2098, 1
        %v2101 = vshll.u32 %v2053, 16
        %v2103 = vrot.slane %v2101, 2
        %v2104 = vor.u32 %v2100, %v2103
        %v2105 = vsel %vm2054, %v2096, %v2104
        %v2116 = vunpack.c.l.b16 %v1907
        %v2117 = vunpack.c.h.b16 %v1907
        %v2118 = vunpack.c.l.b16 %v1908
        %v2119 = vunpack.c.l.b16 %v1909
        %v2120 = vunpack.c.h.b16 %v1909
        %v2121 = vunpack.c.l.b16 %v1910
        %v2122 = vpack.c.b16 %v1920, %v2116
        %v2123 = vpack.c.b16 %v1921, %v2117
        %v2124 = vpack.c.b16 %v1922, %v2118
        %v2125 = vpack.c.b16 %v2119, %v2045
        %v2126 = vpack.c.b16 %v2120, %v2046
        %v2127 = vpack.c.b16 %v2121, %v2047
        %vm2128 = vcmask 1045504
        %v2129 = vrot.slane %v2122, 2
        %v2130 = vrot.slane %v2125, 2
        %v2131 = vsel %vm2128, %v2129, %v2130
        %v2132 = vrot.slane %v2123, 2
        %v2133 = vrot.slane %v2126, 2
        %v2134 = vsel %vm2128, %v2132, %v2133
        %v2135 = vrot.slane %v2124, 2
        %v2136 = vrot.slane %v2127, 2
        %v2137 = vsel %vm2128, %v2135, %v2136
        %v2144 = vld [vmem:[#allocation10] sm:$0xff]
        %v2145 = vld [vmem:[#allocation10 + $0x8] sm:$0xf]
        %v2146 = vld [vmem:[#allocation10 + $0xc] sm:$0xff]
        %v2147 = vld [vmem:[#allocation10 + $0x14] sm:$0xf]
        %v2148 = vld [vmem:[#allocation10 + $0x18] sm:$0xff]
        %v2149 = vld [vmem:[#allocation10 + $0x20] sm:$0xf]
        %v2150 = vld [vmem:[#allocation10 + $0x24] sm:$0xff]
        %v2151 = vld [vmem:[#allocation10 + $0x2c] sm:$0xf]
        %v2152 = vld [vmem:[#allocation10 + $0x30] sm:$0xff]
        %v2153 = vld [vmem:[#allocation10 + $0x38] sm:$0xf]
        %v2154 = vld [vmem:[#allocation10 + $0x3c] sm:$0xff]
        %v2155 = vld [vmem:[#allocation10 + $0x44] sm:$0xf]
        %v2156 = vld [vmem:[#allocation10 + $0x48] sm:$0xff]
        %v2157 = vld [vmem:[#allocation10 + $0x50] sm:$0xf]
        %v2158 = vld [vmem:[#allocation10 + $0x54] sm:$0xff]
        %v2159 = vld [vmem:[#allocation10 + $0x5c] sm:$0xf]
        %v2160 = vld [vmem:[#allocation10 + $0x60] sm:$0xff]
        %v2161 = vld [vmem:[#allocation10 + $0x68] sm:$0xf]
        %v2162 = vld [vmem:[#allocation10 + $0x6c] sm:$0xff]
        %v2163 = vld [vmem:[#allocation10 + $0x74] sm:$0xf]
        %v2164 = vld [vmem:[#allocation10 + $0x78] sm:$0xff]
        %v2165 = vld [vmem:[#allocation10 + $0x80] sm:$0xf]
        %v2166 = vld [vmem:[#allocation10 + $0x84] sm:$0xff]
        %v2167 = vld [vmem:[#allocation10 + $0x8c] sm:$0xf]
        %v2168 = vld [vmem:[#allocation10 + $0x90] sm:$0xff]
        %v2169 = vld [vmem:[#allocation10 + $0x98] sm:$0xf]
        %v2170 = vld [vmem:[#allocation10 + $0x9c] sm:$0xff]
        %v2171 = vld [vmem:[#allocation10 + $0xa4] sm:$0xf]
        %v2172 = vld [vmem:[#allocation10 + $0xa8] sm:$0xff]
        %v2173 = vld [vmem:[#allocation10 + $0xb0] sm:$0xf]
        %v2174 = vld [vmem:[#allocation10 + $0xb4] sm:$0xff]
        %v2175 = vld [vmem:[#allocation10 + $0xbc] sm:$0xf]
        %v2176 = vld [vmem:[#allocation10 + $0xc0] sm:$0xff]
        %v2177 = vld [vmem:[#allocation10 + $0xc8] sm:$0xf]
        %v2178 = vld [vmem:[#allocation10 + $0xcc] sm:$0xff]
        %v2179 = vld [vmem:[#allocation10 + $0xd4] sm:$0xf]
        %v2180 = vld [vmem:[#allocation10 + $0xd8] sm:$0xff]
        %v2181 = vld [vmem:[#allocation10 + $0xe0] sm:$0xf]
        %v2182 = vld [vmem:[#allocation10 + $0xe4] sm:$0xff]
        %v2183 = vld [vmem:[#allocation10 + $0xec] sm:$0xf]
        %v2184 = vld [vmem:[#allocation10 + $0xf0] sm:$0xff]
        %v2185 = vld [vmem:[#allocation10 + $0xf8] sm:$0xf]
        %v2186 = vld [vmem:[#allocation10 + $0xfc] sm:$0xff]
        %v2187 = vld [vmem:[#allocation10 + $0x104] sm:$0xf]
        %v2188 = vld [vmem:[#allocation10 + $0x108] sm:$0xff]
        %v2189 = vld [vmem:[#allocation10 + $0x110] sm:$0xf]
        %v2190 = vld [vmem:[#allocation10 + $0x114] sm:$0xff]
        %v2191 = vld [vmem:[#allocation10 + $0x11c] sm:$0xf]
        %v2192 = vld [vmem:[#allocation10 + $0x120] sm:$0xff]
        %v2193 = vld [vmem:[#allocation10 + $0x128] sm:$0xf]
        %v2194 = vld [vmem:[#allocation10 + $0x12c] sm:$0xff]
        %v2195 = vld [vmem:[#allocation10 + $0x134] sm:$0xf]
        %v2196 = vld [vmem:[#allocation10 + $0x138] sm:$0xff]
        %v2197 = vld [vmem:[#allocation10 + $0x140] sm:$0xf]
        %v2198 = vld [vmem:[#allocation10 + $0x144] sm:$0xff]
        %v2199 = vld [vmem:[#allocation10 + $0x14c] sm:$0xf]
        %v2200 = vld [vmem:[#allocation10 + $0x150] sm:$0xff]
        %v2201 = vld [vmem:[#allocation10 + $0x158] sm:$0xf]
        %v2202 = vld [vmem:[#allocation10 + $0x15c] sm:$0xff]
        %v2203 = vld [vmem:[#allocation10 + $0x164] sm:$0xf]
        %v2204 = vld [vmem:[#allocation10 + $0x168] sm:$0xff]
        %v2205 = vld [vmem:[#allocation10 + $0x170] sm:$0xf]
        %v2206 = vld [vmem:[#allocation10 + $0x174] sm:$0xff]
        %v2207 = vld [vmem:[#allocation10 + $0x17c] sm:$0xf]
        %v2208 = vld [vmem:[#allocation10 + $0x180] sm:$0xff]
        %v2209 = vld [vmem:[#allocation10 + $0x188] sm:$0xf]
        %v2210 = vld [vmem:[#allocation10 + $0x18c] sm:$0xff]
        %v2211 = vld [vmem:[#allocation10 + $0x194] sm:$0xf]
        %v2212 = vld [vmem:[#allocation10 + $0x198] sm:$0xff]
        %v2213 = vld [vmem:[#allocation10 + $0x1a0] sm:$0xf]
        %v2214 = vld [vmem:[#allocation10 + $0x1a4] sm:$0xff]
        %v2215 = vld [vmem:[#allocation10 + $0x1ac] sm:$0xf]
        %v2216 = vld [vmem:[#allocation10 + $0x1b0] sm:$0xff]
        %v2217 = vld [vmem:[#allocation10 + $0x1b8] sm:$0xf]
        %v2218 = vld [vmem:[#allocation10 + $0x1bc] sm:$0xff]
        %v2219 = vld [vmem:[#allocation10 + $0x1c4] sm:$0xf]
        %v2220 = vld [vmem:[#allocation10 + $0x1c8] sm:$0xff]
        %v2221 = vld [vmem:[#allocation10 + $0x1d0] sm:$0xf]
        %v2222 = vld [vmem:[#allocation10 + $0x1d4] sm:$0xff]
        %v2223 = vld [vmem:[#allocation10 + $0x1dc] sm:$0xf]
        %v2224 = vld [vmem:[#allocation10 + $0x1e0] sm:$0xff]
        %v2225 = vld [vmem:[#allocation10 + $0x1e8] sm:$0xf]
        %v2226 = vld [vmem:[#allocation10 + $0x1ec] sm:$0xff]
        %v2227 = vld [vmem:[#allocation10 + $0x1f4] sm:$0xf]
        %v2228 = vld [vmem:[#allocation10 + $0x1f8] sm:$0xff]
        %v2229 = vld [vmem:[#allocation10 + $0x200] sm:$0xf]
        %v2230 = vld [vmem:[#allocation10 + $0x204] sm:$0xff]
        %v2231 = vld [vmem:[#allocation10 + $0x20c] sm:$0xf]
        %v2232 = vld [vmem:[#allocation10 + $0x210] sm:$0xff]
        %v2233 = vld [vmem:[#allocation10 + $0x218] sm:$0xf]
        %v2234 = vld [vmem:[#allocation10 + $0x21c] sm:$0xff]
        %v2235 = vld [vmem:[#allocation10 + $0x224] sm:$0xf]
        %v2236 = vld [vmem:[#allocation10 + $0x228] sm:$0xff]
        %v2237 = vld [vmem:[#allocation10 + $0x230] sm:$0xf]
        %v2238 = vld [vmem:[#allocation10 + $0x234] sm:$0xff]
        %v2239 = vld [vmem:[#allocation10 + $0x23c] sm:$0xf]
        %v2240 = vld [vmem:[#allocation10 + $0x240] sm:$0xff]
        %v2241 = vld [vmem:[#allocation10 + $0x248] sm:$0xf]
        %v2242 = vld [vmem:[#allocation10 + $0x24c] sm:$0xff]
        %v2243 = vld [vmem:[#allocation10 + $0x254] sm:$0xf]
        %v2244 = vld [vmem:[#allocation10 + $0x258] sm:$0xff]
        %v2245 = vld [vmem:[#allocation10 + $0x260] sm:$0xf]
        %v2246 = vld [vmem:[#allocation10 + $0x264] sm:$0xff]
        %v2247 = vld [vmem:[#allocation10 + $0x26c] sm:$0xf]
        %v2248 = vld [vmem:[#allocation10 + $0x270] sm:$0xff]
        %v2249 = vld [vmem:[#allocation10 + $0x278] sm:$0xf]
        %v2250 = vld [vmem:[#allocation10 + $0x27c] sm:$0xff]
        %v2251 = vld [vmem:[#allocation10 + $0x284] sm:$0xf]
        %v2252 = vld [vmem:[#allocation10 + $0x288] sm:$0xff]
        %v2253 = vld [vmem:[#allocation10 + $0x290] sm:$0xf]
        %v2254 = vld [vmem:[#allocation10 + $0x294] sm:$0xff]
        %v2255 = vld [vmem:[#allocation10 + $0x29c] sm:$0xf]
        %v2256 = vld [vmem:[#allocation10 + $0x2a0] sm:$0xff]
        %v2257 = vld [vmem:[#allocation10 + $0x2a8] sm:$0xf]
        %v2258 = vld [vmem:[#allocation10 + $0x2ac] sm:$0xff]
        %v2259 = vld [vmem:[#allocation10 + $0x2b4] sm:$0xf]
        %v2260 = vld [vmem:[#allocation10 + $0x2b8] sm:$0xff]
        %v2261 = vld [vmem:[#allocation10 + $0x2c0] sm:$0xf]
        %v2262 = vld [vmem:[#allocation10 + $0x2c4] sm:$0xff]
        %v2263 = vld [vmem:[#allocation10 + $0x2cc] sm:$0xf]
        %v2264 = vld [vmem:[#allocation10 + $0x2d0] sm:$0xff]
        %v2265 = vld [vmem:[#allocation10 + $0x2d8] sm:$0xf]
        %v2266 = vld [vmem:[#allocation10 + $0x2dc] sm:$0xff]
        %v2267 = vld [vmem:[#allocation10 + $0x2e4] sm:$0xf]
        %v2268 = vld [vmem:[#allocation10 + $0x2e8] sm:$0xff]
        %v2269 = vld [vmem:[#allocation10 + $0x2f0] sm:$0xf]
        %v2270 = vld [vmem:[#allocation10 + $0x2f4] sm:$0xff]
        %v2271 = vld [vmem:[#allocation10 + $0x2fc] sm:$0xf]
        %v2272 = vld [vmem:[#allocation10 + $0x300] sm:$0xff]
        %v2273 = vld [vmem:[#allocation10 + $0x308] sm:$0xf]
        %v2274 = vld [vmem:[#allocation10 + $0x30c] sm:$0xff]
        %v2275 = vld [vmem:[#allocation10 + $0x314] sm:$0xf]
        %v2276 = vld [vmem:[#allocation10 + $0x318] sm:$0xff]
        %v2277 = vld [vmem:[#allocation10 + $0x320] sm:$0xf]
        %v2278 = vld [vmem:[#allocation10 + $0x324] sm:$0xff]
        %v2279 = vld [vmem:[#allocation10 + $0x32c] sm:$0xf]
        %v2280 = vld [vmem:[#allocation10 + $0x330] sm:$0xff]
        %v2281 = vld [vmem:[#allocation10 + $0x338] sm:$0xf]
        %v2282 = vld [vmem:[#allocation10 + $0x33c] sm:$0xff]
        %v2283 = vld [vmem:[#allocation10 + $0x344] sm:$0xf]
        %v2284 = vld [vmem:[#allocation10 + $0x348] sm:$0xff]
        %v2285 = vld [vmem:[#allocation10 + $0x350] sm:$0xf]
        %v2286 = vld [vmem:[#allocation10 + $0x354] sm:$0xff]
        %v2287 = vld [vmem:[#allocation10 + $0x35c] sm:$0xf]
        %v2288 = vld [vmem:[#allocation10 + $0x360] sm:$0xff]
        %v2289 = vld [vmem:[#allocation10 + $0x368] sm:$0xf]
        %v2290 = vld [vmem:[#allocation10 + $0x36c] sm:$0xff]
        %v2291 = vld [vmem:[#allocation10 + $0x374] sm:$0xf]
        %v2292 = vld [vmem:[#allocation10 + $0x378] sm:$0xff]
        %v2293 = vld [vmem:[#allocation10 + $0x380] sm:$0xf]
        %v2294 = vld [vmem:[#allocation10 + $0x384] sm:$0xff]
        %v2295 = vld [vmem:[#allocation10 + $0x38c] sm:$0xf]
        %v2296 = vld [vmem:[#allocation10 + $0x390] sm:$0xff]
        %v2297 = vld [vmem:[#allocation10 + $0x398] sm:$0xf]
        %v2298 = vld [vmem:[#allocation10 + $0x39c] sm:$0xff]
        %v2299 = vld [vmem:[#allocation10 + $0x3a4] sm:$0xf]
        %v2300 = vld [vmem:[#allocation10 + $0x3a8] sm:$0xff]
        %v2301 = vld [vmem:[#allocation10 + $0x3b0] sm:$0xf]
        %v2302 = vld [vmem:[#allocation10 + $0x3b4] sm:$0xff]
        %v2303 = vld [vmem:[#allocation10 + $0x3bc] sm:$0xf]
        %v2304 = vld [vmem:[#allocation10 + $0x3c0] sm:$0xff]
        %v2305 = vld [vmem:[#allocation10 + $0x3c8] sm:$0xf]
        %v2306 = vld [vmem:[#allocation10 + $0x3cc] sm:$0xff]
        %v2307 = vld [vmem:[#allocation10 + $0x3d4] sm:$0xf]
        %v2308 = vld [vmem:[#allocation10 + $0x3d8] sm:$0xff]
        %v2309 = vld [vmem:[#allocation10 + $0x3e0] sm:$0xf]
        %v2310 = vld [vmem:[#allocation10 + $0x3e4] sm:$0xff]
        %v2311 = vld [vmem:[#allocation10 + $0x3ec] sm:$0xf]
        %v2312 = vld [vmem:[#allocation10 + $0x3f0] sm:$0xff]
        %v2313 = vld [vmem:[#allocation10 + $0x3f8] sm:$0xf]
        %v2314 = vld [vmem:[#allocation10 + $0x3fc] sm:$0xff]
        %v2315 = vld [vmem:[#allocation10 + $0x404] sm:$0xf]
        %v2316 = vld [vmem:[#allocation10 + $0x408] sm:$0xff]
        %v2317 = vld [vmem:[#allocation10 + $0x410] sm:$0xf]
        %v2318 = vld [vmem:[#allocation10 + $0x414] sm:$0xff]
        %v2319 = vld [vmem:[#allocation10 + $0x41c] sm:$0xf]
        %v2320 = vld [vmem:[#allocation10 + $0x420] sm:$0xff]
        %v2321 = vld [vmem:[#allocation10 + $0x428] sm:$0xf]
        %v2322 = vld [vmem:[#allocation10 + $0x42c] sm:$0xff]
        %v2323 = vld [vmem:[#allocation10 + $0x434] sm:$0xf]
        %v2324 = vld [vmem:[#allocation10 + $0x438] sm:$0xff]
        %v2325 = vld [vmem:[#allocation10 + $0x440] sm:$0xf]
        %v2326 = vld [vmem:[#allocation10 + $0x444] sm:$0xff]
        %v2327 = vld [vmem:[#allocation10 + $0x44c] sm:$0xf]
        %v2328 = vld [vmem:[#allocation10 + $0x450] sm:$0xff]
        %v2329 = vld [vmem:[#allocation10 + $0x458] sm:$0xf]
        %v2330 = vld [vmem:[#allocation10 + $0x45c] sm:$0xff]
        %v2331 = vld [vmem:[#allocation10 + $0x464] sm:$0xf]
        %v2332 = vld [vmem:[#allocation10 + $0x468] sm:$0xff]
        %v2333 = vld [vmem:[#allocation10 + $0x470] sm:$0xf]
        %v2334 = vld [vmem:[#allocation10 + $0x474] sm:$0xff]
        %v2335 = vld [vmem:[#allocation10 + $0x47c] sm:$0xf]
        %v2336 = vld [vmem:[#allocation10 + $0x480] sm:$0xff]
        %v2337 = vld [vmem:[#allocation10 + $0x488] sm:$0xf]
        %v2338 = vld [vmem:[#allocation10 + $0x48c] sm:$0xff]
        %v2339 = vld [vmem:[#allocation10 + $0x494] sm:$0xf]
        %v2340 = vld [vmem:[#allocation10 + $0x498] sm:$0xff]
        %v2341 = vld [vmem:[#allocation10 + $0x4a0] sm:$0xf]
        %v2342 = vld [vmem:[#allocation10 + $0x4a4] sm:$0xff]
        %v2343 = vld [vmem:[#allocation10 + $0x4ac] sm:$0xf]
        %v2344 = vld [vmem:[#allocation10 + $0x4b0] sm:$0xff]
        %v2345 = vld [vmem:[#allocation10 + $0x4b8] sm:$0xf]
        %v2346 = vld [vmem:[#allocation10 + $0x4bc] sm:$0xff]
        %v2347 = vld [vmem:[#allocation10 + $0x4c4] sm:$0xf]
        %v2348 = vld [vmem:[#allocation10 + $0x4c8] sm:$0xff]
        %v2349 = vld [vmem:[#allocation10 + $0x4d0] sm:$0xf]
        %v2350 = vld [vmem:[#allocation10 + $0x4d4] sm:$0xff]
        %v2351 = vld [vmem:[#allocation10 + $0x4dc] sm:$0xf]
        %v2352 = vld [vmem:[#allocation10 + $0x4e0] sm:$0xff]
        %v2353 = vld [vmem:[#allocation10 + $0x4e8] sm:$0xf]
        %v2354 = vld [vmem:[#allocation10 + $0x4ec] sm:$0xff]
        %v2355 = vld [vmem:[#allocation10 + $0x4f4] sm:$0xf]
        %v2356 = vld [vmem:[#allocation10 + $0x4f8] sm:$0xff]
        %v2357 = vld [vmem:[#allocation10 + $0x500] sm:$0xf]
        %v2358 = vld [vmem:[#allocation10 + $0x504] sm:$0xff]
        %v2359 = vld [vmem:[#allocation10 + $0x50c] sm:$0xf]
        %v2360 = vld [vmem:[#allocation10 + $0x510] sm:$0xff]
        %v2361 = vld [vmem:[#allocation10 + $0x518] sm:$0xf]
        %v2362 = vld [vmem:[#allocation10 + $0x51c] sm:$0xff]
        %v2363 = vld [vmem:[#allocation10 + $0x524] sm:$0xf]
        %v2364 = vld [vmem:[#allocation10 + $0x528] sm:$0xff]
        %v2365 = vld [vmem:[#allocation10 + $0x530] sm:$0xf]
        %v2366 = vld [vmem:[#allocation10 + $0x534] sm:$0xff]
        %v2367 = vld [vmem:[#allocation10 + $0x53c] sm:$0xf]
        %v2368 = vld [vmem:[#allocation10 + $0x540] sm:$0xff]
        %v2369 = vld [vmem:[#allocation10 + $0x548] sm:$0xf]
        %v2370 = vld [vmem:[#allocation10 + $0x54c] sm:$0xff]
        %v2371 = vld [vmem:[#allocation10 + $0x554] sm:$0xf]
        %v2372 = vld [vmem:[#allocation10 + $0x558] sm:$0xff]
        %v2373 = vld [vmem:[#allocation10 + $0x560] sm:$0xf]
        %v2374 = vld [vmem:[#allocation10 + $0x564] sm:$0xff]
        %v2375 = vld [vmem:[#allocation10 + $0x56c] sm:$0xf]
        %v2376 = vld [vmem:[#allocation10 + $0x570] sm:$0xff]
        %v2377 = vld [vmem:[#allocation10 + $0x578] sm:$0xf]
        %v2378 = vld [vmem:[#allocation10 + $0x57c] sm:$0xff]
        %v2379 = vld [vmem:[#allocation10 + $0x584] sm:$0xf]
        %v2380 = vld [vmem:[#allocation10 + $0x588] sm:$0xff]
        %v2381 = vld [vmem:[#allocation10 + $0x590] sm:$0xf]
        %v2382 = vld [vmem:[#allocation10 + $0x594] sm:$0xff]
        %v2383 = vld [vmem:[#allocation10 + $0x59c] sm:$0xf]
        %v2384 = vld [vmem:[#allocation10 + $0x5a0] sm:$0xff]
        %v2385 = vld [vmem:[#allocation10 + $0x5a8] sm:$0xf]
        %v2386 = vld [vmem:[#allocation10 + $0x5ac] sm:$0xff]
        %v2387 = vld [vmem:[#allocation10 + $0x5b4] sm:$0xf]
        %v2388 = vld [vmem:[#allocation10 + $0x5b8] sm:$0xff]
        %v2389 = vld [vmem:[#allocation10 + $0x5c0] sm:$0xf]
        %v2390 = vld [vmem:[#allocation10 + $0x5c4] sm:$0xff]
        %v2391 = vld [vmem:[#allocation10 + $0x5cc] sm:$0xf]
        %v2392 = vld [vmem:[#allocation10 + $0x5d0] sm:$0xff]
        %v2393 = vld [vmem:[#allocation10 + $0x5d8] sm:$0xf]
        %v2394 = vld [vmem:[#allocation10 + $0x5dc] sm:$0xff]
        %v2395 = vld [vmem:[#allocation10 + $0x5e4] sm:$0xf]
        %v2396 = vld [vmem:[#allocation10 + $0x5e8] sm:$0xff]
        %v2397 = vld [vmem:[#allocation10 + $0x5f0] sm:$0xf]
        %v2398 = vld [vmem:[#allocation10 + $0x5f4] sm:$0xff]
        %v2399 = vld [vmem:[#allocation10 + $0x5fc] sm:$0xf]
        %v2400 = vld [vmem:[#allocation10 + $0x600] sm:$0xff]
        %v2401 = vld [vmem:[#allocation10 + $0x608] sm:$0xf]
        %v2402 = vld [vmem:[#allocation10 + $0x60c] sm:$0xff]
        %v2403 = vld [vmem:[#allocation10 + $0x614] sm:$0xf]
        %v2404 = vld [vmem:[#allocation10 + $0x618] sm:$0xff]
        %v2405 = vld [vmem:[#allocation10 + $0x620] sm:$0xf]
        %v2406 = vld [vmem:[#allocation10 + $0x624] sm:$0xff]
        %v2407 = vld [vmem:[#allocation10 + $0x62c] sm:$0xf]
        %v2408 = vld [vmem:[#allocation10 + $0x630] sm:$0xff]
        %v2409 = vld [vmem:[#allocation10 + $0x638] sm:$0xf]
        %v2410 = vld [vmem:[#allocation10 + $0x63c] sm:$0xff]
        %v2411 = vld [vmem:[#allocation10 + $0x644] sm:$0xf]
        %v2412 = vld [vmem:[#allocation10 + $0x648] sm:$0xff]
        %v2413 = vld [vmem:[#allocation10 + $0x650] sm:$0xf]
        %v2414 = vld [vmem:[#allocation10 + $0x654] sm:$0xff]
        %v2415 = vld [vmem:[#allocation10 + $0x65c] sm:$0xf]
        %v2416 = vld [vmem:[#allocation10 + $0x660] sm:$0xff]
        %v2417 = vld [vmem:[#allocation10 + $0x668] sm:$0xf]
        %v2418 = vld [vmem:[#allocation10 + $0x66c] sm:$0xff]
        %v2419 = vld [vmem:[#allocation10 + $0x674] sm:$0xf]
        %v2420 = vld [vmem:[#allocation10 + $0x678] sm:$0xff]
        %v2421 = vld [vmem:[#allocation10 + $0x680] sm:$0xf]
        %v2422 = vld [vmem:[#allocation10 + $0x684] sm:$0xff]
        %v2423 = vld [vmem:[#allocation10 + $0x68c] sm:$0xf]
        %v2424 = vld [vmem:[#allocation10 + $0x690] sm:$0xff]
        %v2425 = vld [vmem:[#allocation10 + $0x698] sm:$0xf]
        %v2426 = vld [vmem:[#allocation10 + $0x69c] sm:$0xff]
        %v2427 = vld [vmem:[#allocation10 + $0x6a4] sm:$0xf]
        %v2428 = vld [vmem:[#allocation10 + $0x6a8] sm:$0xff]
        %v2429 = vld [vmem:[#allocation10 + $0x6b0] sm:$0xf]
        %v2430 = vld [vmem:[#allocation10 + $0x6b4] sm:$0xff]
        %v2431 = vld [vmem:[#allocation10 + $0x6bc] sm:$0xf]
        %v2432 = vld [vmem:[#allocation10 + $0x6c0] sm:$0xff]
        %v2433 = vld [vmem:[#allocation10 + $0x6c8] sm:$0xf]
        %v2434 = vld [vmem:[#allocation10 + $0x6cc] sm:$0xff]
        %v2435 = vld [vmem:[#allocation10 + $0x6d4] sm:$0xf]
        %v2436 = vld [vmem:[#allocation10 + $0x6d8] sm:$0xff]
        %v2437 = vld [vmem:[#allocation10 + $0x6e0] sm:$0xf]
        %v2438 = vld [vmem:[#allocation10 + $0x6e4] sm:$0xff]
        %v2439 = vld [vmem:[#allocation10 + $0x6ec] sm:$0xf]
        %v2440 = vld [vmem:[#allocation10 + $0x6f0] sm:$0xff]
        %v2441 = vld [vmem:[#allocation10 + $0x6f8] sm:$0xf]
        %v2442 = vld [vmem:[#allocation10 + $0x6fc] sm:$0xff]
        %v2443 = vld [vmem:[#allocation10 + $0x704] sm:$0xf]
        %v2444 = vld [vmem:[#allocation10 + $0x708] sm:$0xff]
        %v2445 = vld [vmem:[#allocation10 + $0x710] sm:$0xf]
        %v2446 = vld [vmem:[#allocation10 + $0x714] sm:$0xff]
        %v2447 = vld [vmem:[#allocation10 + $0x71c] sm:$0xf]
        %v2448 = vld [vmem:[#allocation10 + $0x720] sm:$0xff]
        %v2449 = vld [vmem:[#allocation10 + $0x728] sm:$0xf]
        %v2450 = vld [vmem:[#allocation10 + $0x72c] sm:$0xff]
        %v2451 = vld [vmem:[#allocation10 + $0x734] sm:$0xf]
        %v2452 = vld [vmem:[#allocation10 + $0x738] sm:$0xff]
        %v2453 = vld [vmem:[#allocation10 + $0x740] sm:$0xf]
        %v2454 = vld [vmem:[#allocation10 + $0x744] sm:$0xff]
        %v2455 = vld [vmem:[#allocation10 + $0x74c] sm:$0xf]
        %v2456 = vld [vmem:[#allocation10 + $0x750] sm:$0xff]
        %v2457 = vld [vmem:[#allocation10 + $0x758] sm:$0xf]
        %v2458 = vld [vmem:[#allocation10 + $0x75c] sm:$0xff]
        %v2459 = vld [vmem:[#allocation10 + $0x764] sm:$0xf]
        %v2460 = vld [vmem:[#allocation10 + $0x768] sm:$0xff]
        %v2461 = vld [vmem:[#allocation10 + $0x770] sm:$0xf]
        %v2462 = vld [vmem:[#allocation10 + $0x774] sm:$0xff]
        %v2463 = vld [vmem:[#allocation10 + $0x77c] sm:$0xf]
        %v2464 = vld [vmem:[#allocation10 + $0x780] sm:$0xff]
        %v2465 = vld [vmem:[#allocation10 + $0x788] sm:$0xf]
        %v2466 = vld [vmem:[#allocation10 + $0x78c] sm:$0xff]
        %v2467 = vld [vmem:[#allocation10 + $0x794] sm:$0xf]
        %v2468 = vld [vmem:[#allocation10 + $0x798] sm:$0xff]
        %v2469 = vld [vmem:[#allocation10 + $0x7a0] sm:$0xf]
        %v2470 = vld [vmem:[#allocation10 + $0x7a4] sm:$0xff]
        %v2471 = vld [vmem:[#allocation10 + $0x7ac] sm:$0xf]
        %v2472 = vld [vmem:[#allocation10 + $0x7b0] sm:$0xff]
        %v2473 = vld [vmem:[#allocation10 + $0x7b8] sm:$0xf]
        %v2474 = vld [vmem:[#allocation10 + $0x7bc] sm:$0xff]
        %v2475 = vld [vmem:[#allocation10 + $0x7c4] sm:$0xf]
        %v2476 = vld [vmem:[#allocation10 + $0x7c8] sm:$0xff]
        %v2477 = vld [vmem:[#allocation10 + $0x7d0] sm:$0xf]
        %v2478 = vld [vmem:[#allocation10 + $0x7d4] sm:$0xff]
        %v2479 = vld [vmem:[#allocation10 + $0x7dc] sm:$0xf]
        %v2480 = vld [vmem:[#allocation10 + $0x7e0] sm:$0xff]
        %v2481 = vld [vmem:[#allocation10 + $0x7e8] sm:$0xf]
        %v2482 = vld [vmem:[#allocation10 + $0x7ec] sm:$0xff]
        %v2483 = vld [vmem:[#allocation10 + $0x7f4] sm:$0xf]
        %v2484 = vld [vmem:[#allocation10 + $0x7f8] sm:$0xff]
        %v2485 = vld [vmem:[#allocation10 + $0x800] sm:$0xf]
        %v2486 = vld [vmem:[#allocation10 + $0x804] sm:$0xff]
        %v2487 = vld [vmem:[#allocation10 + $0x80c] sm:$0xf]
        %v2488 = vld [vmem:[#allocation10 + $0x810] sm:$0xff]
        %v2489 = vld [vmem:[#allocation10 + $0x818] sm:$0xf]
        %v2490 = vld [vmem:[#allocation10 + $0x81c] sm:$0xff]
        %v2491 = vld [vmem:[#allocation10 + $0x824] sm:$0xf]
        %v2492 = vld [vmem:[#allocation10 + $0x828] sm:$0xff]
        %v2493 = vld [vmem:[#allocation10 + $0x830] sm:$0xf]
        %v2494 = vld [vmem:[#allocation10 + $0x834] sm:$0xff]
        %v2495 = vld [vmem:[#allocation10 + $0x83c] sm:$0xf]
        %v2496 = vld [vmem:[#allocation10 + $0x840] sm:$0xff]
        %v2497 = vld [vmem:[#allocation10 + $0x848] sm:$0xf]
        %v2498 = vld [vmem:[#allocation10 + $0x84c] sm:$0xff]
        %v2499 = vld [vmem:[#allocation10 + $0x854] sm:$0xf]
        %v2500 = vld [vmem:[#allocation10 + $0x858] sm:$0xff]
        %v2501 = vld [vmem:[#allocation10 + $0x860] sm:$0xf]
        %v2502 = vld [vmem:[#allocation10 + $0x864] sm:$0xff]
        %v2503 = vld [vmem:[#allocation10 + $0x86c] sm:$0xf]
        %v2504 = vld [vmem:[#allocation10 + $0x870] sm:$0xff]
        %v2505 = vld [vmem:[#allocation10 + $0x878] sm:$0xf]
        %v2506 = vld [vmem:[#allocation10 + $0x87c] sm:$0xff]
        %v2507 = vld [vmem:[#allocation10 + $0x884] sm:$0xf]
        %v2508 = vld [vmem:[#allocation10 + $0x888] sm:$0xff]
        %v2509 = vld [vmem:[#allocation10 + $0x890] sm:$0xf]
        %v2510 = vld [vmem:[#allocation10 + $0x894] sm:$0xff]
        %v2511 = vld [vmem:[#allocation10 + $0x89c] sm:$0xf]
        %v2512 = vld [vmem:[#allocation10 + $0x8a0] sm:$0xff]
        %v2513 = vld [vmem:[#allocation10 + $0x8a8] sm:$0xf]
        %v2514 = vld [vmem:[#allocation10 + $0x8ac] sm:$0xff]
        %v2515 = vld [vmem:[#allocation10 + $0x8b4] sm:$0xf]
        %v2516 = vld [vmem:[#allocation10 + $0x8b8] sm:$0xff]
        %v2517 = vld [vmem:[#allocation10 + $0x8c0] sm:$0xf]
        %v2518 = vld [vmem:[#allocation10 + $0x8c4] sm:$0xff]
        %v2519 = vld [vmem:[#allocation10 + $0x8cc] sm:$0xf]
        %v2520 = vld [vmem:[#allocation10 + $0x8d0] sm:$0xff]
        %v2521 = vld [vmem:[#allocation10 + $0x8d8] sm:$0xf]
        %v2522 = vld [vmem:[#allocation10 + $0x8dc] sm:$0xff]
        %v2523 = vld [vmem:[#allocation10 + $0x8e4] sm:$0xf]
        %v2524 = vld [vmem:[#allocation10 + $0x8e8] sm:$0xff]
        %v2525 = vld [vmem:[#allocation10 + $0x8f0] sm:$0xf]
        %v2526 = vld [vmem:[#allocation10 + $0x8f4] sm:$0xff]
        %v2527 = vld [vmem:[#allocation10 + $0x8fc] sm:$0xf]
        %v2528 = vld [vmem:[#allocation10 + $0x900] sm:$0xff]
        %v2529 = vld [vmem:[#allocation10 + $0x908] sm:$0xf]
        %v2530 = vld [vmem:[#allocation10 + $0x90c] sm:$0xff]
        %v2531 = vld [vmem:[#allocation10 + $0x914] sm:$0xf]
        %v2532 = vld [vmem:[#allocation10 + $0x918] sm:$0xff]
        %v2533 = vld [vmem:[#allocation10 + $0x920] sm:$0xf]
        %v2534 = vld [vmem:[#allocation10 + $0x924] sm:$0xff]
        %v2535 = vld [vmem:[#allocation10 + $0x92c] sm:$0xf]
        %v2536 = vld [vmem:[#allocation10 + $0x930] sm:$0xff]
        %v2537 = vld [vmem:[#allocation10 + $0x938] sm:$0xf]
        %v2538 = vld [vmem:[#allocation10 + $0x93c] sm:$0xff]
        %v2539 = vld [vmem:[#allocation10 + $0x944] sm:$0xf]
        %v2540 = vld [vmem:[#allocation10 + $0x948] sm:$0xff]
        %v2541 = vld [vmem:[#allocation10 + $0x950] sm:$0xf]
        %v2542 = vld [vmem:[#allocation10 + $0x954] sm:$0xff]
        %v2543 = vld [vmem:[#allocation10 + $0x95c] sm:$0xf]
        %v2544 = vld [vmem:[#allocation10 + $0x960] sm:$0xff]
        %v2545 = vld [vmem:[#allocation10 + $0x968] sm:$0xf]
        %v2546 = vld [vmem:[#allocation10 + $0x96c] sm:$0xff]
        %v2547 = vld [vmem:[#allocation10 + $0x974] sm:$0xf]
        %v2548 = vld [vmem:[#allocation10 + $0x978] sm:$0xff]
        %v2549 = vld [vmem:[#allocation10 + $0x980] sm:$0xf]
        %v2550 = vld [vmem:[#allocation10 + $0x984] sm:$0xff]
        %v2551 = vld [vmem:[#allocation10 + $0x98c] sm:$0xf]
        %v2552 = vld [vmem:[#allocation10 + $0x990] sm:$0xff]
        %v2553 = vld [vmem:[#allocation10 + $0x998] sm:$0xf]
        %v2554 = vld [vmem:[#allocation10 + $0x99c] sm:$0xff]
        %v2555 = vld [vmem:[#allocation10 + $0x9a4] sm:$0xf]
        %v2556 = vld [vmem:[#allocation10 + $0x9a8] sm:$0xff]
        %v2557 = vld [vmem:[#allocation10 + $0x9b0] sm:$0xf]
        %v2558 = vld [vmem:[#allocation10 + $0x9b4] sm:$0xff]
        %v2559 = vld [vmem:[#allocation10 + $0x9bc] sm:$0xf]
        %v2560 = vld [vmem:[#allocation10 + $0x9c0] sm:$0xff]
        %v2561 = vld [vmem:[#allocation10 + $0x9c8] sm:$0xf]
        %v2562 = vld [vmem:[#allocation10 + $0x9cc] sm:$0xff]
        %v2563 = vld [vmem:[#allocation10 + $0x9d4] sm:$0xf]
        %v2564 = vld [vmem:[#allocation10 + $0x9d8] sm:$0xff]
        %v2565 = vld [vmem:[#allocation10 + $0x9e0] sm:$0xf]
        %v2566 = vld [vmem:[#allocation10 + $0x9e4] sm:$0xff]
        %v2567 = vld [vmem:[#allocation10 + $0x9ec] sm:$0xf]
        %v2568 = vld [vmem:[#allocation10 + $0x9f0] sm:$0xff]
        %v2569 = vld [vmem:[#allocation10 + $0x9f8] sm:$0xf]
        %v2570 = vld [vmem:[#allocation10 + $0x9fc] sm:$0xff]
        %v2571 = vld [vmem:[#allocation10 + $0xa04] sm:$0xf]
        %v2572 = vld [vmem:[#allocation10 + $0xa08] sm:$0xff]
        %v2573 = vld [vmem:[#allocation10 + $0xa10] sm:$0xf]
        %v2574 = vld [vmem:[#allocation10 + $0xa14] sm:$0xff]
        %v2575 = vld [vmem:[#allocation10 + $0xa1c] sm:$0xf]
        %v2576 = vld [vmem:[#allocation10 + $0xa20] sm:$0xff]
        %v2577 = vld [vmem:[#allocation10 + $0xa28] sm:$0xf]
        %v2578 = vld [vmem:[#allocation10 + $0xa2c] sm:$0xff]
        %v2579 = vld [vmem:[#allocation10 + $0xa34] sm:$0xf]
        %v2580 = vld [vmem:[#allocation10 + $0xa38] sm:$0xff]
        %v2581 = vld [vmem:[#allocation10 + $0xa40] sm:$0xf]
        %v2582 = vld [vmem:[#allocation10 + $0xa44] sm:$0xff]
        %v2583 = vld [vmem:[#allocation10 + $0xa4c] sm:$0xf]
        %v2584 = vld [vmem:[#allocation10 + $0xa50] sm:$0xff]
        %v2585 = vld [vmem:[#allocation10 + $0xa58] sm:$0xf]
        %v2586 = vld [vmem:[#allocation10 + $0xa5c] sm:$0xff]
        %v2587 = vld [vmem:[#allocation10 + $0xa64] sm:$0xf]
        %v2588 = vld [vmem:[#allocation10 + $0xa68] sm:$0xff]
        %v2589 = vld [vmem:[#allocation10 + $0xa70] sm:$0xf]
        %v2590 = vld [vmem:[#allocation10 + $0xa74] sm:$0xff]
        %v2591 = vld [vmem:[#allocation10 + $0xa7c] sm:$0xf]
        %v2592 = vld [vmem:[#allocation10 + $0xa80] sm:$0xff]
        %v2593 = vld [vmem:[#allocation10 + $0xa88] sm:$0xf]
        %v2594 = vld [vmem:[#allocation10 + $0xa8c] sm:$0xff]
        %v2595 = vld [vmem:[#allocation10 + $0xa94] sm:$0xf]
        %v2596 = vld [vmem:[#allocation10 + $0xa98] sm:$0xff]
        %v2597 = vld [vmem:[#allocation10 + $0xaa0] sm:$0xf]
        %v2598 = vld [vmem:[#allocation10 + $0xaa4] sm:$0xff]
        %v2599 = vld [vmem:[#allocation10 + $0xaac] sm:$0xf]
        %v2600 = vld [vmem:[#allocation10 + $0xab0] sm:$0xff]
        %v2601 = vld [vmem:[#allocation10 + $0xab8] sm:$0xf]
        %v2602 = vld [vmem:[#allocation10 + $0xabc] sm:$0xff]
        %v2603 = vld [vmem:[#allocation10 + $0xac4] sm:$0xf]
        %v2604 = vld [vmem:[#allocation10 + $0xac8] sm:$0xff]
        %v2605 = vld [vmem:[#allocation10 + $0xad0] sm:$0xf]
        %v2606 = vld [vmem:[#allocation10 + $0xad4] sm:$0xff]
        %v2607 = vld [vmem:[#allocation10 + $0xadc] sm:$0xf]
        %v2608 = vld [vmem:[#allocation10 + $0xae0] sm:$0xff]
        %v2609 = vld [vmem:[#allocation10 + $0xae8] sm:$0xf]
        %v2610 = vld [vmem:[#allocation10 + $0xaec] sm:$0xff]
        %v2611 = vld [vmem:[#allocation10 + $0xaf4] sm:$0xf]
        %v2612 = vld [vmem:[#allocation10 + $0xaf8] sm:$0xff]
        %v2613 = vld [vmem:[#allocation10 + $0xb00] sm:$0xf]
        %v2614 = vld [vmem:[#allocation10 + $0xb04] sm:$0xff]
        %v2615 = vld [vmem:[#allocation10 + $0xb0c] sm:$0xf]
        %v2616 = vld [vmem:[#allocation10 + $0xb10] sm:$0xff]
        %v2617 = vld [vmem:[#allocation10 + $0xb18] sm:$0xf]
        %v2618 = vld [vmem:[#allocation10 + $0xb1c] sm:$0xff]
        %v2619 = vld [vmem:[#allocation10 + $0xb24] sm:$0xf]
        %v2620 = vld [vmem:[#allocation10 + $0xb28] sm:$0xff]
        %v2621 = vld [vmem:[#allocation10 + $0xb30] sm:$0xf]
        %v2622 = vld [vmem:[#allocation10 + $0xb34] sm:$0xff]
        %v2623 = vld [vmem:[#allocation10 + $0xb3c] sm:$0xf]
        %v2624 = vld [vmem:[#allocation19] sm:$0x7]
        %v2626 = vperm.slane %v2624, 0
        %v2627 = vperm.slane %v2624, 1
        %v2628 = vperm.slane %v2624, 2
        %v3112 = vunpack.c.l.b16 %v2144
        %v3113 = vunpack.c.h.b16 %v2144
        %v3114 = vunpack.c.l.b16 %v2145
        %v3115 = vunpack.c.l.b16 %v2146
        %v3116 = vunpack.c.h.b16 %v2146
        %v3117 = vunpack.c.l.b16 %v2147
        %v3118 = vunpack.c.l.b16 %v2148
        %v3119 = vunpack.c.h.b16 %v2148
        %v3120 = vunpack.c.l.b16 %v2149
        %v3121 = vunpack.c.l.b16 %v2150
        %v3122 = vunpack.c.h.b16 %v2150
        %v3123 = vunpack.c.l.b16 %v2151
        %v3124 = vunpack.c.l.b16 %v2152
        %v3125 = vunpack.c.h.b16 %v2152
        %v3126 = vunpack.c.l.b16 %v2153
        %v3127 = vunpack.c.l.b16 %v2154
        %v3128 = vunpack.c.h.b16 %v2154
        %v3129 = vunpack.c.l.b16 %v2155
        %v3130 = vunpack.c.l.b16 %v2156
        %v3131 = vunpack.c.h.b16 %v2156
        %v3132 = vunpack.c.l.b16 %v2157
        %v3133 = vunpack.c.l.b16 %v2158
        %v3134 = vunpack.c.h.b16 %v2158
        %v3135 = vunpack.c.l.b16 %v2159
        %v3136 = vunpack.c.l.b16 %v2160
        %v3137 = vunpack.c.h.b16 %v2160
        %v3138 = vunpack.c.l.b16 %v2161
        %v3139 = vunpack.c.l.b16 %v2162
        %v3140 = vunpack.c.h.b16 %v2162
        %v3141 = vunpack.c.l.b16 %v2163
        %v3142 = vunpack.c.l.b16 %v2164
        %v3143 = vunpack.c.h.b16 %v2164
        %v3144 = vunpack.c.l.b16 %v2165
        %v3145 = vunpack.c.l.b16 %v2166
        %v3146 = vunpack.c.h.b16 %v2166
        %v3147 = vunpack.c.l.b16 %v2167
        %v3148 = vunpack.c.l.b16 %v2168
        %v3149 = vunpack.c.h.b16 %v2168
        %v3150 = vunpack.c.l.b16 %v2169
        %v3151 = vunpack.c.l.b16 %v2170
        %v3152 = vunpack.c.h.b16 %v2170
        %v3153 = vunpack.c.l.b16 %v2171
        %v3154 = vunpack.c.l.b16 %v2172
        %v3155 = vunpack.c.h.b16 %v2172
        %v3156 = vunpack.c.l.b16 %v2173
        %v3157 = vunpack.c.l.b16 %v2174
        %v3158 = vunpack.c.h.b16 %v2174
        %v3159 = vunpack.c.l.b16 %v2175
        %v3160 = vunpack.c.l.b16 %v2176
        %v3161 = vunpack.c.h.b16 %v2176
        %v3162 = vunpack.c.l.b16 %v2177
        %v3163 = vunpack.c.l.b16 %v2178
        %v3164 = vunpack.c.h.b16 %v2178
        %v3165 = vunpack.c.l.b16 %v2179
        %v3166 = vunpack.c.l.b16 %v2180
        %v3167 = vunpack.c.h.b16 %v2180
        %v3168 = vunpack.c.l.b16 %v2181
        %v3169 = vunpack.c.l.b16 %v2182
        %v3170 = vunpack.c.h.b16 %v2182
        %v3171 = vunpack.c.l.b16 %v2183
        %v3172 = vunpack.c.l.b16 %v2184
        %v3173 = vunpack.c.h.b16 %v2184
        %v3174 = vunpack.c.l.b16 %v2185
        %v3175 = vunpack.c.l.b16 %v2186
        %v3176 = vunpack.c.h.b16 %v2186
        %v3177 = vunpack.c.l.b16 %v2187
        %v3178 = vunpack.c.l.b16 %v2188
        %v3179 = vunpack.c.h.b16 %v2188
        %v3180 = vunpack.c.l.b16 %v2189
        %v3181 = vunpack.c.l.b16 %v2190
        %v3182 = vunpack.c.h.b16 %v2190
        %v3183 = vunpack.c.l.b16 %v2191
        %v3184 = vunpack.c.l.b16 %v2192
        %v3185 = vunpack.c.h.b16 %v2192
        %v3186 = vunpack.c.l.b16 %v2193
        %v3187 = vunpack.c.l.b16 %v2194
        %v3188 = vunpack.c.h.b16 %v2194
        %v3189 = vunpack.c.l.b16 %v2195
        %v3190 = vunpack.c.l.b16 %v2196
        %v3191 = vunpack.c.h.b16 %v2196
        %v3192 = vunpack.c.l.b16 %v2197
        %v3193 = vunpack.c.l.b16 %v2198
        %v3194 = vunpack.c.h.b16 %v2198
        %v3195 = vunpack.c.l.b16 %v2199
        %v3196 = vunpack.c.l.b16 %v2200
        %v3197 = vunpack.c.h.b16 %v2200
        %v3198 = vunpack.c.l.b16 %v2201
        %v3199 = vunpack.c.l.b16 %v2202
        %v3200 = vunpack.c.h.b16 %v2202
        %v3201 = vunpack.c.l.b16 %v2203
        %v3202 = vunpack.c.l.b16 %v2204
        %v3203 = vunpack.c.h.b16 %v2204
        %v3204 = vunpack.c.l.b16 %v2205
        %v3205 = vunpack.c.l.b16 %v2206
        %v3206 = vunpack.c.h.b16 %v2206
        %v3207 = vunpack.c.l.b16 %v2207
        %v3208 = vunpack.c.l.b16 %v2208
        %v3209 = vunpack.c.h.b16 %v2208
        %v3210 = vunpack.c.l.b16 %v2209
        %v3211 = vunpack.c.l.b16 %v2210
        %v3212 = vunpack.c.h.b16 %v2210
        %v3213 = vunpack.c.l.b16 %v2211
        %v3214 = vunpack.c.l.b16 %v2212
        %v3215 = vunpack.c.h.b16 %v2212
        %v3216 = vunpack.c.l.b16 %v2213
        %v3217 = vunpack.c.l.b16 %v2214
        %v3218 = vunpack.c.h.b16 %v2214
        %v3219 = vunpack.c.l.b16 %v2215
        %v3220 = vunpack.c.l.b16 %v2216
        %v3221 = vunpack.c.h.b16 %v2216
        %v3222 = vunpack.c.l.b16 %v2217
        %v3223 = vunpack.c.l.b16 %v2218
        %v3224 = vunpack.c.h.b16 %v2218
        %v3225 = vunpack.c.l.b16 %v2219
        %v3226 = vunpack.c.l.b16 %v2220
        %v3227 = vunpack.c.h.b16 %v2220
        %v3228 = vunpack.c.l.b16 %v2221
        %v3229 = vunpack.c.l.b16 %v2222
        %v3230 = vunpack.c.h.b16 %v2222
        %v3231 = vunpack.c.l.b16 %v2223
        %v3232 = vunpack.c.l.b16 %v2224
        %v3233 = vunpack.c.h.b16 %v2224
        %v3234 = vunpack.c.l.b16 %v2225
        %v3235 = vunpack.c.l.b16 %v2226
        %v3236 = vunpack.c.h.b16 %v2226
        %v3237 = vunpack.c.l.b16 %v2227
        %v3238 = vunpack.c.l.b16 %v2228
        %v3239 = vunpack.c.h.b16 %v2228
        %v3240 = vunpack.c.l.b16 %v2229
        %v3241 = vunpack.c.l.b16 %v2230
        %v3242 = vunpack.c.h.b16 %v2230
        %v3243 = vunpack.c.l.b16 %v2231
        %v3244 = vunpack.c.l.b16 %v2232
        %v3245 = vunpack.c.h.b16 %v2232
        %v3246 = vunpack.c.l.b16 %v2233
        %v3247 = vunpack.c.l.b16 %v2234
        %v3248 = vunpack.c.h.b16 %v2234
        %v3249 = vunpack.c.l.b16 %v2235
        %v3250 = vunpack.c.l.b16 %v2236
        %v3251 = vunpack.c.h.b16 %v2236
        %v3252 = vunpack.c.l.b16 %v2237
        %v3253 = vunpack.c.l.b16 %v2238
        %v3254 = vunpack.c.h.b16 %v2238
        %v3255 = vunpack.c.l.b16 %v2239
        %v3256 = vunpack.c.l.b16 %v2240
        %v3257 = vunpack.c.h.b16 %v2240
        %v3258 = vunpack.c.l.b16 %v2241
        %v3259 = vunpack.c.l.b16 %v2242
        %v3260 = vunpack.c.h.b16 %v2242
        %v3261 = vunpack.c.l.b16 %v2243
        %v3262 = vunpack.c.l.b16 %v2244
        %v3263 = vunpack.c.h.b16 %v2244
        %v3264 = vunpack.c.l.b16 %v2245
        %v3265 = vunpack.c.l.b16 %v2246
        %v3266 = vunpack.c.h.b16 %v2246
        %v3267 = vunpack.c.l.b16 %v2247
        %v3268 = vunpack.c.l.b16 %v2248
        %v3269 = vunpack.c.h.b16 %v2248
        %v3270 = vunpack.c.l.b16 %v2249
        %v3271 = vunpack.c.l.b16 %v2250
        %v3272 = vunpack.c.h.b16 %v2250
        %v3273 = vunpack.c.l.b16 %v2251
        %v3274 = vunpack.c.l.b16 %v2252
        %v3275 = vunpack.c.h.b16 %v2252
        %v3276 = vunpack.c.l.b16 %v2253
        %v3277 = vunpack.c.l.b16 %v2254
        %v3278 = vunpack.c.h.b16 %v2254
        %v3279 = vunpack.c.l.b16 %v2255
        %v3280 = vunpack.c.l.b16 %v2256
        %v3281 = vunpack.c.h.b16 %v2256
        %v3282 = vunpack.c.l.b16 %v2257
        %v3283 = vunpack.c.l.b16 %v2258
        %v3284 = vunpack.c.h.b16 %v2258
        %v3285 = vunpack.c.l.b16 %v2259
        %v3286 = vunpack.c.l.b16 %v2260
        %v3287 = vunpack.c.h.b16 %v2260
        %v3288 = vunpack.c.l.b16 %v2261
        %v3289 = vunpack.c.l.b16 %v2262
        %v3290 = vunpack.c.h.b16 %v2262
        %v3291 = vunpack.c.l.b16 %v2263
        %v3292 = vunpack.c.l.b16 %v2264
        %v3293 = vunpack.c.h.b16 %v2264
        %v3294 = vunpack.c.l.b16 %v2265
        %v3295 = vunpack.c.l.b16 %v2266
        %v3296 = vunpack.c.h.b16 %v2266
        %v3297 = vunpack.c.l.b16 %v2267
        %v3298 = vunpack.c.l.b16 %v2268
        %v3299 = vunpack.c.h.b16 %v2268
        %v3300 = vunpack.c.l.b16 %v2269
        %v3301 = vunpack.c.l.b16 %v2270
        %v3302 = vunpack.c.h.b16 %v2270
        %v3303 = vunpack.c.l.b16 %v2271
        %v3304 = vunpack.c.l.b16 %v2272
        %v3305 = vunpack.c.h.b16 %v2272
        %v3306 = vunpack.c.l.b16 %v2273
        %v3307 = vunpack.c.l.b16 %v2274
        %v3308 = vunpack.c.h.b16 %v2274
        %v3309 = vunpack.c.l.b16 %v2275
        %v3310 = vunpack.c.l.b16 %v2276
        %v3311 = vunpack.c.h.b16 %v2276
        %v3312 = vunpack.c.l.b16 %v2277
        %v3313 = vunpack.c.l.b16 %v2278
        %v3314 = vunpack.c.h.b16 %v2278
        %v3315 = vunpack.c.l.b16 %v2279
        %v3316 = vunpack.c.l.b16 %v2280
        %v3317 = vunpack.c.h.b16 %v2280
        %v3318 = vunpack.c.l.b16 %v2281
        %v3319 = vunpack.c.l.b16 %v2282
        %v3320 = vunpack.c.h.b16 %v2282
        %v3321 = vunpack.c.l.b16 %v2283
        %v3322 = vunpack.c.l.b16 %v2284
        %v3323 = vunpack.c.h.b16 %v2284
        %v3324 = vunpack.c.l.b16 %v2285
        %v3325 = vunpack.c.l.b16 %v2286
        %v3326 = vunpack.c.h.b16 %v2286
        %v3327 = vunpack.c.l.b16 %v2287
        %v3328 = vunpack.c.l.b16 %v2288
        %v3329 = vunpack.c.h.b16 %v2288
        %v3330 = vunpack.c.l.b16 %v2289
        %v3331 = vunpack.c.l.b16 %v2290
        %v3332 = vunpack.c.h.b16 %v2290
        %v3333 = vunpack.c.l.b16 %v2291
        %v3334 = vunpack.c.l.b16 %v2292
        %v3335 = vunpack.c.h.b16 %v2292
        %v3336 = vunpack.c.l.b16 %v2293
        %v3337 = vunpack.c.l.b16 %v2294
        %v3338 = vunpack.c.h.b16 %v2294
        %v3339 = vunpack.c.l.b16 %v2295
        %v3340 = vunpack.c.l.b16 %v2296
        %v3341 = vunpack.c.h.b16 %v2296
        %v3342 = vunpack.c.l.b16 %v2297
        %v3343 = vunpack.c.l.b16 %v2298
        %v3344 = vunpack.c.h.b16 %v2298
        %v3345 = vunpack.c.l.b16 %v2299
        %v3346 = vunpack.c.l.b16 %v2300
        %v3347 = vunpack.c.h.b16 %v2300
        %v3348 = vunpack.c.l.b16 %v2301
        %v3349 = vunpack.c.l.b16 %v2302
        %v3350 = vunpack.c.h.b16 %v2302
        %v3351 = vunpack.c.l.b16 %v2303
        %v3352 = vunpack.c.l.b16 %v2304
        %v3353 = vunpack.c.h.b16 %v2304
        %v3354 = vunpack.c.l.b16 %v2305
        %v3355 = vunpack.c.l.b16 %v2306
        %v3356 = vunpack.c.h.b16 %v2306
        %v3357 = vunpack.c.l.b16 %v2307
        %v3358 = vunpack.c.l.b16 %v2308
        %v3359 = vunpack.c.h.b16 %v2308
        %v3360 = vunpack.c.l.b16 %v2309
        %v3361 = vunpack.c.l.b16 %v2310
        %v3362 = vunpack.c.h.b16 %v2310
        %v3363 = vunpack.c.l.b16 %v2311
        %v3364 = vunpack.c.l.b16 %v2312
        %v3365 = vunpack.c.h.b16 %v2312
        %v3366 = vunpack.c.l.b16 %v2313
        %v3367 = vunpack.c.l.b16 %v2314
        %v3368 = vunpack.c.h.b16 %v2314
        %v3369 = vunpack.c.l.b16 %v2315
        %v3370 = vunpack.c.l.b16 %v2316
        %v3371 = vunpack.c.h.b16 %v2316
        %v3372 = vunpack.c.l.b16 %v2317
        %v3373 = vunpack.c.l.b16 %v2318
        %v3374 = vunpack.c.h.b16 %v2318
        %v3375 = vunpack.c.l.b16 %v2319
        %v3376 = vunpack.c.l.b16 %v2320
        %v3377 = vunpack.c.h.b16 %v2320
        %v3378 = vunpack.c.l.b16 %v2321
        %v3379 = vunpack.c.l.b16 %v2322
        %v3380 = vunpack.c.h.b16 %v2322
        %v3381 = vunpack.c.l.b16 %v2323
        %v3382 = vunpack.c.l.b16 %v2324
        %v3383 = vunpack.c.h.b16 %v2324
        %v3384 = vunpack.c.l.b16 %v2325
        %v3385 = vunpack.c.l.b16 %v2326
        %v3386 = vunpack.c.h.b16 %v2326
        %v3387 = vunpack.c.l.b16 %v2327
        %v3388 = vunpack.c.l.b16 %v2328
        %v3389 = vunpack.c.h.b16 %v2328
        %v3390 = vunpack.c.l.b16 %v2329
        %v3391 = vunpack.c.l.b16 %v2330
        %v3392 = vunpack.c.h.b16 %v2330
        %v3393 = vunpack.c.l.b16 %v2331
        %v3394 = vunpack.c.l.b16 %v2332
        %v3395 = vunpack.c.h.b16 %v2332
        %v3396 = vunpack.c.l.b16 %v2333
        %v3397 = vunpack.c.l.b16 %v2334
        %v3398 = vunpack.c.h.b16 %v2334
        %v3399 = vunpack.c.l.b16 %v2335
        %v3400 = vunpack.c.l.b16 %v2336
        %v3401 = vunpack.c.h.b16 %v2336
        %v3402 = vunpack.c.l.b16 %v2337
        %v3403 = vunpack.c.l.b16 %v2338
        %v3404 = vunpack.c.h.b16 %v2338
        %v3405 = vunpack.c.l.b16 %v2339
        %v3406 = vunpack.c.l.b16 %v2340
        %v3407 = vunpack.c.h.b16 %v2340
        %v3408 = vunpack.c.l.b16 %v2341
        %v3409 = vunpack.c.l.b16 %v2342
        %v3410 = vunpack.c.h.b16 %v2342
        %v3411 = vunpack.c.l.b16 %v2343
        %v3412 = vunpack.c.l.b16 %v2344
        %v3413 = vunpack.c.h.b16 %v2344
        %v3414 = vunpack.c.l.b16 %v2345
        %v3415 = vunpack.c.l.b16 %v2346
        %v3416 = vunpack.c.h.b16 %v2346
        %v3417 = vunpack.c.l.b16 %v2347
        %v3418 = vunpack.c.l.b16 %v2348
        %v3419 = vunpack.c.h.b16 %v2348
        %v3420 = vunpack.c.l.b16 %v2349
        %v3421 = vunpack.c.l.b16 %v2350
        %v3422 = vunpack.c.h.b16 %v2350
        %v3423 = vunpack.c.l.b16 %v2351
        %v3424 = vunpack.c.l.b16 %v2352
        %v3425 = vunpack.c.h.b16 %v2352
        %v3426 = vunpack.c.l.b16 %v2353
        %v3427 = vunpack.c.l.b16 %v2354
        %v3428 = vunpack.c.h.b16 %v2354
        %v3429 = vunpack.c.l.b16 %v2355
        %v3430 = vunpack.c.l.b16 %v2356
        %v3431 = vunpack.c.h.b16 %v2356
        %v3432 = vunpack.c.l.b16 %v2357
        %v3433 = vunpack.c.l.b16 %v2358
        %v3434 = vunpack.c.h.b16 %v2358
        %v3435 = vunpack.c.l.b16 %v2359
        %v3436 = vunpack.c.l.b16 %v2360
        %v3437 = vunpack.c.h.b16 %v2360
        %v3438 = vunpack.c.l.b16 %v2361
        %v3439 = vunpack.c.l.b16 %v2362
        %v3440 = vunpack.c.h.b16 %v2362
        %v3441 = vunpack.c.l.b16 %v2363
        %v3442 = vunpack.c.l.b16 %v2364
        %v3443 = vunpack.c.h.b16 %v2364
        %v3444 = vunpack.c.l.b16 %v2365
        %v3445 = vunpack.c.l.b16 %v2366
        %v3446 = vunpack.c.h.b16 %v2366
        %v3447 = vunpack.c.l.b16 %v2367
        %v3448 = vunpack.c.l.b16 %v2368
        %v3449 = vunpack.c.h.b16 %v2368
        %v3450 = vunpack.c.l.b16 %v2369
        %v3451 = vunpack.c.l.b16 %v2370
        %v3452 = vunpack.c.h.b16 %v2370
        %v3453 = vunpack.c.l.b16 %v2371
        %v3454 = vunpack.c.l.b16 %v2372
        %v3455 = vunpack.c.h.b16 %v2372
        %v3456 = vunpack.c.l.b16 %v2373
        %v3457 = vunpack.c.l.b16 %v2374
        %v3458 = vunpack.c.h.b16 %v2374
        %v3459 = vunpack.c.l.b16 %v2375
        %v3460 = vunpack.c.l.b16 %v2376
        %v3461 = vunpack.c.h.b16 %v2376
        %v3462 = vunpack.c.l.b16 %v2377
        %v3463 = vunpack.c.l.b16 %v2378
        %v3464 = vunpack.c.h.b16 %v2378
        %v3465 = vunpack.c.l.b16 %v2379
        %v3466 = vunpack.c.l.b16 %v2380
        %v3467 = vunpack.c.h.b16 %v2380
        %v3468 = vunpack.c.l.b16 %v2381
        %v3469 = vunpack.c.l.b16 %v2382
        %v3470 = vunpack.c.h.b16 %v2382
        %v3471 = vunpack.c.l.b16 %v2383
        %v3472 = vunpack.c.l.b16 %v2384
        %v3473 = vunpack.c.h.b16 %v2384
        %v3474 = vunpack.c.l.b16 %v2385
        %v3475 = vunpack.c.l.b16 %v2386
        %v3476 = vunpack.c.h.b16 %v2386
        %v3477 = vunpack.c.l.b16 %v2387
        %v3478 = vunpack.c.l.b16 %v2388
        %v3479 = vunpack.c.h.b16 %v2388
        %v3480 = vunpack.c.l.b16 %v2389
        %v3481 = vunpack.c.l.b16 %v2390
        %v3482 = vunpack.c.h.b16 %v2390
        %v3483 = vunpack.c.l.b16 %v2391
        %v3484 = vunpack.c.l.b16 %v2392
        %v3485 = vunpack.c.h.b16 %v2392
        %v3486 = vunpack.c.l.b16 %v2393
        %v3487 = vunpack.c.l.b16 %v2394
        %v3488 = vunpack.c.h.b16 %v2394
        %v3489 = vunpack.c.l.b16 %v2395
        %v3490 = vunpack.c.l.b16 %v2396
        %v3491 = vunpack.c.h.b16 %v2396
        %v3492 = vunpack.c.l.b16 %v2397
        %v3493 = vunpack.c.l.b16 %v2398
        %v3494 = vunpack.c.h.b16 %v2398
        %v3495 = vunpack.c.l.b16 %v2399
        %v3496 = vunpack.c.l.b16 %v2400
        %v3497 = vunpack.c.h.b16 %v2400
        %v3498 = vunpack.c.l.b16 %v2401
        %v3499 = vunpack.c.l.b16 %v2402
        %v3500 = vunpack.c.h.b16 %v2402
        %v3501 = vunpack.c.l.b16 %v2403
        %v3502 = vunpack.c.l.b16 %v2404
        %v3503 = vunpack.c.h.b16 %v2404
        %v3504 = vunpack.c.l.b16 %v2405
        %v3505 = vunpack.c.l.b16 %v2406
        %v3506 = vunpack.c.h.b16 %v2406
        %v3507 = vunpack.c.l.b16 %v2407
        %v3508 = vunpack.c.l.b16 %v2408
        %v3509 = vunpack.c.h.b16 %v2408
        %v3510 = vunpack.c.l.b16 %v2409
        %v3511 = vunpack.c.l.b16 %v2410
        %v3512 = vunpack.c.h.b16 %v2410
        %v3513 = vunpack.c.l.b16 %v2411
        %v3514 = vunpack.c.l.b16 %v2412
        %v3515 = vunpack.c.h.b16 %v2412
        %v3516 = vunpack.c.l.b16 %v2413
        %v3517 = vunpack.c.l.b16 %v2414
        %v3518 = vunpack.c.h.b16 %v2414
        %v3519 = vunpack.c.l.b16 %v2415
        %v3520 = vunpack.c.l.b16 %v2416
        %v3521 = vunpack.c.h.b16 %v2416
        %v3522 = vunpack.c.l.b16 %v2417
        %v3523 = vunpack.c.l.b16 %v2418
        %v3524 = vunpack.c.h.b16 %v2418
        %v3525 = vunpack.c.l.b16 %v2419
        %v3526 = vunpack.c.l.b16 %v2420
        %v3527 = vunpack.c.h.b16 %v2420
        %v3528 = vunpack.c.l.b16 %v2421
        %v3529 = vunpack.c.l.b16 %v2422
        %v3530 = vunpack.c.h.b16 %v2422
        %v3531 = vunpack.c.l.b16 %v2423
        %v3532 = vunpack.c.l.b16 %v2424
        %v3533 = vunpack.c.h.b16 %v2424
        %v3534 = vunpack.c.l.b16 %v2425
        %v3535 = vunpack.c.l.b16 %v2426
        %v3536 = vunpack.c.h.b16 %v2426
        %v3537 = vunpack.c.l.b16 %v2427
        %v3538 = vunpack.c.l.b16 %v2428
        %v3539 = vunpack.c.h.b16 %v2428
        %v3540 = vunpack.c.l.b16 %v2429
        %v3541 = vunpack.c.l.b16 %v2430
        %v3542 = vunpack.c.h.b16 %v2430
        %v3543 = vunpack.c.l.b16 %v2431
        %v3544 = vunpack.c.l.b16 %v2432
        %v3545 = vunpack.c.h.b16 %v2432
        %v3546 = vunpack.c.l.b16 %v2433
        %v3547 = vunpack.c.l.b16 %v2434
        %v3548 = vunpack.c.h.b16 %v2434
        %v3549 = vunpack.c.l.b16 %v2435
        %v3550 = vunpack.c.l.b16 %v2436
        %v3551 = vunpack.c.h.b16 %v2436
        %v3552 = vunpack.c.l.b16 %v2437
        %v3553 = vunpack.c.l.b16 %v2438
        %v3554 = vunpack.c.h.b16 %v2438
        %v3555 = vunpack.c.l.b16 %v2439
        %v3556 = vunpack.c.l.b16 %v2440
        %v3557 = vunpack.c.h.b16 %v2440
        %v3558 = vunpack.c.l.b16 %v2441
        %v3559 = vunpack.c.l.b16 %v2442
        %v3560 = vunpack.c.h.b16 %v2442
        %v3561 = vunpack.c.l.b16 %v2443
        %v3562 = vunpack.c.l.b16 %v2444
        %v3563 = vunpack.c.h.b16 %v2444
        %v3564 = vunpack.c.l.b16 %v2445
        %v3565 = vunpack.c.l.b16 %v2446
        %v3566 = vunpack.c.h.b16 %v2446
        %v3567 = vunpack.c.l.b16 %v2447
        %v3568 = vunpack.c.l.b16 %v2448
        %v3569 = vunpack.c.h.b16 %v2448
        %v3570 = vunpack.c.l.b16 %v2449
        %v3571 = vunpack.c.l.b16 %v2450
        %v3572 = vunpack.c.h.b16 %v2450
        %v3573 = vunpack.c.l.b16 %v2451
        %v3574 = vunpack.c.l.b16 %v2452
        %v3575 = vunpack.c.h.b16 %v2452
        %v3576 = vunpack.c.l.b16 %v2453
        %v3577 = vunpack.c.l.b16 %v2454
        %v3578 = vunpack.c.h.b16 %v2454
        %v3579 = vunpack.c.l.b16 %v2455
        %v3580 = vunpack.c.l.b16 %v2456
        %v3581 = vunpack.c.h.b16 %v2456
        %v3582 = vunpack.c.l.b16 %v2457
        %v3583 = vunpack.c.l.b16 %v2458
        %v3584 = vunpack.c.h.b16 %v2458
        %v3585 = vunpack.c.l.b16 %v2459
        %v3586 = vunpack.c.l.b16 %v2460
        %v3587 = vunpack.c.h.b16 %v2460
        %v3588 = vunpack.c.l.b16 %v2461
        %v3589 = vunpack.c.l.b16 %v2462
        %v3590 = vunpack.c.h.b16 %v2462
        %v3591 = vunpack.c.l.b16 %v2463
        %v3592 = vunpack.c.l.b16 %v2464
        %v3593 = vunpack.c.h.b16 %v2464
        %v3594 = vunpack.c.l.b16 %v2465
        %v3595 = vunpack.c.l.b16 %v2466
        %v3596 = vunpack.c.h.b16 %v2466
        %v3597 = vunpack.c.l.b16 %v2467
        %v3598 = vunpack.c.l.b16 %v2468
        %v3599 = vunpack.c.h.b16 %v2468
        %v3600 = vunpack.c.l.b16 %v2469
        %v3601 = vunpack.c.l.b16 %v2470
        %v3602 = vunpack.c.h.b16 %v2470
        %v3603 = vunpack.c.l.b16 %v2471
        %v3604 = vunpack.c.l.b16 %v2472
        %v3605 = vunpack.c.h.b16 %v2472
        %v3606 = vunpack.c.l.b16 %v2473
        %v3607 = vunpack.c.l.b16 %v2474
        %v3608 = vunpack.c.h.b16 %v2474
        %v3609 = vunpack.c.l.b16 %v2475
        %v3610 = vunpack.c.l.b16 %v2476
        %v3611 = vunpack.c.h.b16 %v2476
        %v3612 = vunpack.c.l.b16 %v2477
        %v3613 = vunpack.c.l.b16 %v2478
        %v3614 = vunpack.c.h.b16 %v2478
        %v3615 = vunpack.c.l.b16 %v2479
        %v3616 = vunpack.c.l.b16 %v2480
        %v3617 = vunpack.c.h.b16 %v2480
        %v3618 = vunpack.c.l.b16 %v2481
        %v3619 = vunpack.c.l.b16 %v2482
        %v3620 = vunpack.c.h.b16 %v2482
        %v3621 = vunpack.c.l.b16 %v2483
        %v3622 = vunpack.c.l.b16 %v2484
        %v3623 = vunpack.c.h.b16 %v2484
        %v3624 = vunpack.c.l.b16 %v2485
        %v3625 = vunpack.c.l.b16 %v2486
        %v3626 = vunpack.c.h.b16 %v2486
        %v3627 = vunpack.c.l.b16 %v2487
        %v3628 = vunpack.c.l.b16 %v2488
        %v3629 = vunpack.c.h.b16 %v2488
        %v3630 = vunpack.c.l.b16 %v2489
        %v3631 = vunpack.c.l.b16 %v2490
        %v3632 = vunpack.c.h.b16 %v2490
        %v3633 = vunpack.c.l.b16 %v2491
        %v3634 = vunpack.c.l.b16 %v2492
        %v3635 = vunpack.c.h.b16 %v2492
        %v3636 = vunpack.c.l.b16 %v2493
        %v3637 = vunpack.c.l.b16 %v2494
        %v3638 = vunpack.c.h.b16 %v2494
        %v3639 = vunpack.c.l.b16 %v2495
        %v3640 = vunpack.c.l.b16 %v2496
        %v3641 = vunpack.c.h.b16 %v2496
        %v3642 = vunpack.c.l.b16 %v2497
        %v3643 = vunpack.c.l.b16 %v2498
        %v3644 = vunpack.c.h.b16 %v2498
        %v3645 = vunpack.c.l.b16 %v2499
        %v3646 = vunpack.c.l.b16 %v2500
        %v3647 = vunpack.c.h.b16 %v2500
        %v3648 = vunpack.c.l.b16 %v2501
        %v3649 = vunpack.c.l.b16 %v2502
        %v3650 = vunpack.c.h.b16 %v2502
        %v3651 = vunpack.c.l.b16 %v2503
        %v3652 = vunpack.c.l.b16 %v2504
        %v3653 = vunpack.c.h.b16 %v2504
        %v3654 = vunpack.c.l.b16 %v2505
        %v3655 = vunpack.c.l.b16 %v2506
        %v3656 = vunpack.c.h.b16 %v2506
        %v3657 = vunpack.c.l.b16 %v2507
        %v3658 = vunpack.c.l.b16 %v2508
        %v3659 = vunpack.c.h.b16 %v2508
        %v3660 = vunpack.c.l.b16 %v2509
        %v3661 = vunpack.c.l.b16 %v2510
        %v3662 = vunpack.c.h.b16 %v2510
        %v3663 = vunpack.c.l.b16 %v2511
        %v3664 = vunpack.c.l.b16 %v2512
        %v3665 = vunpack.c.h.b16 %v2512
        %v3666 = vunpack.c.l.b16 %v2513
        %v3667 = vunpack.c.l.b16 %v2514
        %v3668 = vunpack.c.h.b16 %v2514
        %v3669 = vunpack.c.l.b16 %v2515
        %v3670 = vunpack.c.l.b16 %v2516
        %v3671 = vunpack.c.h.b16 %v2516
        %v3672 = vunpack.c.l.b16 %v2517
        %v3673 = vunpack.c.l.b16 %v2518
        %v3674 = vunpack.c.h.b16 %v2518
        %v3675 = vunpack.c.l.b16 %v2519
        %v3676 = vunpack.c.l.b16 %v2520
        %v3677 = vunpack.c.h.b16 %v2520
        %v3678 = vunpack.c.l.b16 %v2521
        %v3679 = vunpack.c.l.b16 %v2522
        %v3680 = vunpack.c.h.b16 %v2522
        %v3681 = vunpack.c.l.b16 %v2523
        %v3682 = vunpack.c.l.b16 %v2524
        %v3683 = vunpack.c.h.b16 %v2524
        %v3684 = vunpack.c.l.b16 %v2525
        %v3685 = vunpack.c.l.b16 %v2526
        %v3686 = vunpack.c.h.b16 %v2526
        %v3687 = vunpack.c.l.b16 %v2527
        %v3688 = vunpack.c.l.b16 %v2528
        %v3689 = vunpack.c.h.b16 %v2528
        %v3690 = vunpack.c.l.b16 %v2529
        %v3691 = vunpack.c.l.b16 %v2530
        %v3692 = vunpack.c.h.b16 %v2530
        %v3693 = vunpack.c.l.b16 %v2531
        %v3694 = vunpack.c.l.b16 %v2532
        %v3695 = vunpack.c.h.b16 %v2532
        %v3696 = vunpack.c.l.b16 %v2533
        %v3697 = vunpack.c.l.b16 %v2534
        %v3698 = vunpack.c.h.b16 %v2534
        %v3699 = vunpack.c.l.b16 %v2535
        %v3700 = vunpack.c.l.b16 %v2536
        %v3701 = vunpack.c.h.b16 %v2536
        %v3702 = vunpack.c.l.b16 %v2537
        %v3703 = vunpack.c.l.b16 %v2538
        %v3704 = vunpack.c.h.b16 %v2538
        %v3705 = vunpack.c.l.b16 %v2539
        %v3706 = vunpack.c.l.b16 %v2540
        %v3707 = vunpack.c.h.b16 %v2540
        %v3708 = vunpack.c.l.b16 %v2541
        %v3709 = vunpack.c.l.b16 %v2542
        %v3710 = vunpack.c.h.b16 %v2542
        %v3711 = vunpack.c.l.b16 %v2543
        %v3712 = vunpack.c.l.b16 %v2544
        %v3713 = vunpack.c.h.b16 %v2544
        %v3714 = vunpack.c.l.b16 %v2545
        %v3715 = vunpack.c.l.b16 %v2546
        %v3716 = vunpack.c.h.b16 %v2546
        %v3717 = vunpack.c.l.b16 %v2547
        %v3718 = vunpack.c.l.b16 %v2548
        %v3719 = vunpack.c.h.b16 %v2548
        %v3720 = vunpack.c.l.b16 %v2549
        %v3721 = vunpack.c.l.b16 %v2550
        %v3722 = vunpack.c.h.b16 %v2550
        %v3723 = vunpack.c.l.b16 %v2551
        %v3724 = vunpack.c.l.b16 %v2552
        %v3725 = vunpack.c.h.b16 %v2552
        %v3726 = vunpack.c.l.b16 %v2553
        %v3727 = vunpack.c.l.b16 %v2554
        %v3728 = vunpack.c.h.b16 %v2554
        %v3729 = vunpack.c.l.b16 %v2555
        %v3730 = vunpack.c.l.b16 %v2556
        %v3731 = vunpack.c.h.b16 %v2556
        %v3732 = vunpack.c.l.b16 %v2557
        %v3733 = vunpack.c.l.b16 %v2558
        %v3734 = vunpack.c.h.b16 %v2558
        %v3735 = vunpack.c.l.b16 %v2559
        %v3736 = vunpack.c.l.b16 %v2560
        %v3737 = vunpack.c.h.b16 %v2560
        %v3738 = vunpack.c.l.b16 %v2561
        %v3739 = vunpack.c.l.b16 %v2562
        %v3740 = vunpack.c.h.b16 %v2562
        %v3741 = vunpack.c.l.b16 %v2563
        %v3742 = vunpack.c.l.b16 %v2564
        %v3743 = vunpack.c.h.b16 %v2564
        %v3744 = vunpack.c.l.b16 %v2565
        %v3745 = vunpack.c.l.b16 %v2566
        %v3746 = vunpack.c.h.b16 %v2566
        %v3747 = vunpack.c.l.b16 %v2567
        %v3748 = vunpack.c.l.b16 %v2568
        %v3749 = vunpack.c.h.b16 %v2568
        %v3750 = vunpack.c.l.b16 %v2569
        %v3751 = vunpack.c.l.b16 %v2570
        %v3752 = vunpack.c.h.b16 %v2570
        %v3753 = vunpack.c.l.b16 %v2571
        %v3754 = vunpack.c.l.b16 %v2572
        %v3755 = vunpack.c.h.b16 %v2572
        %v3756 = vunpack.c.l.b16 %v2573
        %v3757 = vunpack.c.l.b16 %v2574
        %v3758 = vunpack.c.h.b16 %v2574
        %v3759 = vunpack.c.l.b16 %v2575
        %v3760 = vunpack.c.l.b16 %v2576
        %v3761 = vunpack.c.h.b16 %v2576
        %v3762 = vunpack.c.l.b16 %v2577
        %v3763 = vunpack.c.l.b16 %v2578
        %v3764 = vunpack.c.h.b16 %v2578
        %v3765 = vunpack.c.l.b16 %v2579
        %v3766 = vunpack.c.l.b16 %v2580
        %v3767 = vunpack.c.h.b16 %v2580
        %v3768 = vunpack.c.l.b16 %v2581
        %v3769 = vunpack.c.l.b16 %v2582
        %v3770 = vunpack.c.h.b16 %v2582
        %v3771 = vunpack.c.l.b16 %v2583
        %v3772 = vunpack.c.l.b16 %v2584
        %v3773 = vunpack.c.h.b16 %v2584
        %v3774 = vunpack.c.l.b16 %v2585
        %v3775 = vunpack.c.l.b16 %v2586
        %v3776 = vunpack.c.h.b16 %v2586
        %v3777 = vunpack.c.l.b16 %v2587
        %v3778 = vunpack.c.l.b16 %v2588
        %v3779 = vunpack.c.h.b16 %v2588
        %v3780 = vunpack.c.l.b16 %v2589
        %v3781 = vunpack.c.l.b16 %v2590
        %v3782 = vunpack.c.h.b16 %v2590
        %v3783 = vunpack.c.l.b16 %v2591
        %v3784 = vunpack.c.l.b16 %v2592
        %v3785 = vunpack.c.h.b16 %v2592
        %v3786 = vunpack.c.l.b16 %v2593
        %v3787 = vunpack.c.l.b16 %v2594
        %v3788 = vunpack.c.h.b16 %v2594
        %v3789 = vunpack.c.l.b16 %v2595
        %v3790 = vunpack.c.l.b16 %v2596
        %v3791 = vunpack.c.h.b16 %v2596
        %v3792 = vunpack.c.l.b16 %v2597
        %v3793 = vunpack.c.l.b16 %v2598
        %v3794 = vunpack.c.h.b16 %v2598
        %v3795 = vunpack.c.l.b16 %v2599
        %v3796 = vunpack.c.l.b16 %v2600
        %v3797 = vunpack.c.h.b16 %v2600
        %v3798 = vunpack.c.l.b16 %v2601
        %v3799 = vunpack.c.l.b16 %v2602
        %v3800 = vunpack.c.h.b16 %v2602
        %v3801 = vunpack.c.l.b16 %v2603
        %v3802 = vunpack.c.l.b16 %v2604
        %v3803 = vunpack.c.h.b16 %v2604
        %v3804 = vunpack.c.l.b16 %v2605
        %v3805 = vunpack.c.l.b16 %v2606
        %v3806 = vunpack.c.h.b16 %v2606
        %v3807 = vunpack.c.l.b16 %v2607
        %v3808 = vunpack.c.l.b16 %v2608
        %v3809 = vunpack.c.h.b16 %v2608
        %v3810 = vunpack.c.l.b16 %v2609
        %v3811 = vunpack.c.l.b16 %v2610
        %v3812 = vunpack.c.h.b16 %v2610
        %v3813 = vunpack.c.l.b16 %v2611
        %v3814 = vunpack.c.l.b16 %v2612
        %v3815 = vunpack.c.h.b16 %v2612
        %v3816 = vunpack.c.l.b16 %v2613
        %v3817 = vunpack.c.l.b16 %v2614
        %v3818 = vunpack.c.h.b16 %v2614
        %v3819 = vunpack.c.l.b16 %v2615
        %v3820 = vunpack.c.l.b16 %v2616
        %v3821 = vunpack.c.h.b16 %v2616
        %v3822 = vunpack.c.l.b16 %v2617
        %v3823 = vunpack.c.l.b16 %v2618
        %v3824 = vunpack.c.h.b16 %v2618
        %v3825 = vunpack.c.l.b16 %v2619
        %v3826 = vunpack.c.l.b16 %v2620
        %v3827 = vunpack.c.h.b16 %v2620
        %v3828 = vunpack.c.l.b16 %v2621
        %v3829 = vunpack.c.l.b16 %v2622
        %v3830 = vunpack.c.h.b16 %v2622
        %v3831 = vunpack.c.l.b16 %v2623
        %v3832 = vpack.c.b16 %v3115, %v3112
        %v3833 = vpack.c.b16 %v3116, %v3113
        %v3834 = vpack.c.b16 %v3117, %v3114
        %v3835 = vpack.c.b16 %v3121, %v3118
        %v3836 = vpack.c.b16 %v3122, %v3119
        %v3837 = vpack.c.b16 %v3123, %v3120
        %v3838 = vpack.c.b16 %v3127, %v3124
        %v3839 = vpack.c.b16 %v3128, %v3125
        %v3840 = vpack.c.b16 %v3129, %v3126
        %v3841 = vpack.c.b16 %v3133, %v3130
        %v3842 = vpack.c.b16 %v3134, %v3131
        %v3843 = vpack.c.b16 %v3135, %v3132
        %v3844 = vpack.c.b16 %v3139, %v3136
        %v3845 = vpack.c.b16 %v3140, %v3137
        %v3846 = vpack.c.b16 %v3141, %v3138
        %v3847 = vpack.c.b16 %v3145, %v3142
        %v3848 = vpack.c.b16 %v3146, %v3143
        %v3849 = vpack.c.b16 %v3147, %v3144
        %v3850 = vpack.c.b16 %v3151, %v3148
        %v3851 = vpack.c.b16 %v3152, %v3149
        %v3852 = vpack.c.b16 %v3153, %v3150
        %v3853 = vpack.c.b16 %v3157, %v3154
        %v3854 = vpack.c.b16 %v3158, %v3155
        %v3855 = vpack.c.b16 %v3159, %v3156
        %v3856 = vpack.c.b16 %v3163, %v3160
        %v3857 = vpack.c.b16 %v3164, %v3161
        %v3858 = vpack.c.b16 %v3165, %v3162
        %v3859 = vpack.c.b16 %v3169, %v3166
        %v3860 = vpack.c.b16 %v3170, %v3167
        %v3861 = vpack.c.b16 %v3171, %v3168
        %v3862 = vpack.c.b16 %v3175, %v3172
        %v3863 = vpack.c.b16 %v3176, %v3173
        %v3864 = vpack.c.b16 %v3177, %v3174
        %v3865 = vpack.c.b16 %v3181, %v3178
        %v3866 = vpack.c.b16 %v3182, %v3179
        %v3867 = vpack.c.b16 %v3183, %v3180
        %v3868 = vpack.c.b16 %v3187, %v3184
        %v3869 = vpack.c.b16 %v3188, %v3185
        %v3870 = vpack.c.b16 %v3189, %v3186
        %v3871 = vpack.c.b16 %v3193, %v3190
        %v3872 = vpack.c.b16 %v3194, %v3191
        %v3873 = vpack.c.b16 %v3195, %v3192
        %v3874 = vpack.c.b16 %v3199, %v3196
        %v3875 = vpack.c.b16 %v3200, %v3197
        %v3876 = vpack.c.b16 %v3201, %v3198
        %v3877 = vpack.c.b16 %v3205, %v3202
        %v3878 = vpack.c.b16 %v3206, %v3203
        %v3879 = vpack.c.b16 %v3207, %v3204
        %v3880 = vpack.c.b16 %v3211, %v3208
        %v3881 = vpack.c.b16 %v3212, %v3209
        %v3882 = vpack.c.b16 %v3213, %v3210
        %v3883 = vpack.c.b16 %v3217, %v3214
        %v3884 = vpack.c.b16 %v3218, %v3215
        %v3885 = vpack.c.b16 %v3219, %v3216
        %v3886 = vpack.c.b16 %v3223, %v3220
        %v3887 = vpack.c.b16 %v3224, %v3221
        %v3888 = vpack.c.b16 %v3225, %v3222
        %v3889 = vpack.c.b16 %v3229, %v3226
        %v3890 = vpack.c.b16 %v3230, %v3227
        %v3891 = vpack.c.b16 %v3231, %v3228
        %v3892 = vpack.c.b16 %v3235, %v3232
        %v3893 = vpack.c.b16 %v3236, %v3233
        %v3894 = vpack.c.b16 %v3237, %v3234
        %v3895 = vpack.c.b16 %v3241, %v3238
        %v3896 = vpack.c.b16 %v3242, %v3239
        %v3897 = vpack.c.b16 %v3243, %v3240
        %v3898 = vpack.c.b16 %v3247, %v3244
        %v3899 = vpack.c.b16 %v3248, %v3245
        %v3900 = vpack.c.b16 %v3249, %v3246
        %v3901 = vpack.c.b16 %v3253, %v3250
        %v3902 = vpack.c.b16 %v3254, %v3251
        %v3903 = vpack.c.b16 %v3255, %v3252
        %v3904 = vpack.c.b16 %v3259, %v3256
        %v3905 = vpack.c.b16 %v3260, %v3257
        %v3906 = vpack.c.b16 %v3261, %v3258
        %v3907 = vpack.c.b16 %v3265, %v3262
        %v3908 = vpack.c.b16 %v3266, %v3263
        %v3909 = vpack.c.b16 %v3267, %v3264
        %v3910 = vpack.c.b16 %v3271, %v3268
        %v3911 = vpack.c.b16 %v3272, %v3269
        %v3912 = vpack.c.b16 %v3273, %v3270
        %v3913 = vpack.c.b16 %v3277, %v3274
        %v3914 = vpack.c.b16 %v3278, %v3275
        %v3915 = vpack.c.b16 %v3279, %v3276
        %v3916 = vpack.c.b16 %v3283, %v3280
        %v3917 = vpack.c.b16 %v3284, %v3281
        %v3918 = vpack.c.b16 %v3285, %v3282
        %v3919 = vpack.c.b16 %v3289, %v3286
        %v3920 = vpack.c.b16 %v3290, %v3287
        %v3921 = vpack.c.b16 %v3291, %v3288
        %v3922 = vpack.c.b16 %v3295, %v3292
        %v3923 = vpack.c.b16 %v3296, %v3293
        %v3924 = vpack.c.b16 %v3297, %v3294
        %v3925 = vpack.c.b16 %v3301, %v3298
        %v3926 = vpack.c.b16 %v3302, %v3299
        %v3927 = vpack.c.b16 %v3303, %v3300
        %v3928 = vpack.c.b16 %v3307, %v3304
        %v3929 = vpack.c.b16 %v3308, %v3305
        %v3930 = vpack.c.b16 %v3309, %v3306
        %v3931 = vpack.c.b16 %v3313, %v3310
        %v3932 = vpack.c.b16 %v3314, %v3311
        %v3933 = vpack.c.b16 %v3315, %v3312
        %v3934 = vpack.c.b16 %v3319, %v3316
        %v3935 = vpack.c.b16 %v3320, %v3317
        %v3936 = vpack.c.b16 %v3321, %v3318
        %v3937 = vpack.c.b16 %v3325, %v3322
        %v3938 = vpack.c.b16 %v3326, %v3323
        %v3939 = vpack.c.b16 %v3327, %v3324
        %v3940 = vpack.c.b16 %v3331, %v3328
        %v3941 = vpack.c.b16 %v3332, %v3329
        %v3942 = vpack.c.b16 %v3333, %v3330
        %v3943 = vpack.c.b16 %v3337, %v3334
        %v3944 = vpack.c.b16 %v3338, %v3335
        %v3945 = vpack.c.b16 %v3339, %v3336
        %v3946 = vpack.c.b16 %v3343, %v3340
        %v3947 = vpack.c.b16 %v3344, %v3341
        %v3948 = vpack.c.b16 %v3345, %v3342
        %v3949 = vpack.c.b16 %v3349, %v3346
        %v3950 = vpack.c.b16 %v3350, %v3347
        %v3951 = vpack.c.b16 %v3351, %v3348
        %v3952 = vpack.c.b16 %v3355, %v3352
        %v3953 = vpack.c.b16 %v3356, %v3353
        %v3954 = vpack.c.b16 %v3357, %v3354
        %v3955 = vpack.c.b16 %v3361, %v3358
        %v3956 = vpack.c.b16 %v3362, %v3359
        %v3957 = vpack.c.b16 %v3363, %v3360
        %v3958 = vpack.c.b16 %v3367, %v3364
        %v3959 = vpack.c.b16 %v3368, %v3365
        %v3960 = vpack.c.b16 %v3369, %v3366
        %v3961 = vpack.c.b16 %v3373, %v3370
        %v3962 = vpack.c.b16 %v3374, %v3371
        %v3963 = vpack.c.b16 %v3375, %v3372
        %v3964 = vpack.c.b16 %v3379, %v3376
        %v3965 = vpack.c.b16 %v3380, %v3377
        %v3966 = vpack.c.b16 %v3381, %v3378
        %v3967 = vpack.c.b16 %v3385, %v3382
        %v3968 = vpack.c.b16 %v3386, %v3383
        %v3969 = vpack.c.b16 %v3387, %v3384
        %v3970 = vpack.c.b16 %v3391, %v3388
        %v3971 = vpack.c.b16 %v3392, %v3389
        %v3972 = vpack.c.b16 %v3393, %v3390
        %v3973 = vpack.c.b16 %v3397, %v3394
        %v3974 = vpack.c.b16 %v3398, %v3395
        %v3975 = vpack.c.b16 %v3399, %v3396
        %v3976 = vpack.c.b16 %v3403, %v3400
        %v3977 = vpack.c.b16 %v3404, %v3401
        %v3978 = vpack.c.b16 %v3405, %v3402
        %v3979 = vpack.c.b16 %v3409, %v3406
        %v3980 = vpack.c.b16 %v3410, %v3407
        %v3981 = vpack.c.b16 %v3411, %v3408
        %v3982 = vpack.c.b16 %v3415, %v3412
        %v3983 = vpack.c.b16 %v3416, %v3413
        %v3984 = vpack.c.b16 %v3417, %v3414
        %v3985 = vpack.c.b16 %v3421, %v3418
        %v3986 = vpack.c.b16 %v3422, %v3419
        %v3987 = vpack.c.b16 %v3423, %v3420
        %v3988 = vpack.c.b16 %v3427, %v3424
        %v3989 = vpack.c.b16 %v3428, %v3425
        %v3990 = vpack.c.b16 %v3429, %v3426
        %v3991 = vpack.c.b16 %v3433, %v3430
        %v3992 = vpack.c.b16 %v3434, %v3431
        %v3993 = vpack.c.b16 %v3435, %v3432
        %v3994 = vpack.c.b16 %v3439, %v3436
        %v3995 = vpack.c.b16 %v3440, %v3437
        %v3996 = vpack.c.b16 %v3441, %v3438
        %v3997 = vpack.c.b16 %v3445, %v3442
        %v3998 = vpack.c.b16 %v3446, %v3443
        %v3999 = vpack.c.b16 %v3447, %v3444
        %v4000 = vpack.c.b16 %v3451, %v3448
        %v4001 = vpack.c.b16 %v3452, %v3449
        %v4002 = vpack.c.b16 %v3453, %v3450
        %v4003 = vpack.c.b16 %v3457, %v3454
        %v4004 = vpack.c.b16 %v3458, %v3455
        %v4005 = vpack.c.b16 %v3459, %v3456
        %v4006 = vpack.c.b16 %v3463, %v3460
        %v4007 = vpack.c.b16 %v3464, %v3461
        %v4008 = vpack.c.b16 %v3465, %v3462
        %v4009 = vpack.c.b16 %v3469, %v3466
        %v4010 = vpack.c.b16 %v3470, %v3467
        %v4011 = vpack.c.b16 %v3471, %v3468
        %v4012 = vpack.c.b16 %v3475, %v3472
        %v4013 = vpack.c.b16 %v3476, %v3473
        %v4014 = vpack.c.b16 %v3477, %v3474
        %v4015 = vpack.c.b16 %v3481, %v3478
        %v4016 = vpack.c.b16 %v3482, %v3479
        %v4017 = vpack.c.b16 %v3483, %v3480
        %v4018 = vpack.c.b16 %v3487, %v3484
        %v4019 = vpack.c.b16 %v3488, %v3485
        %v4020 = vpack.c.b16 %v3489, %v3486
        %v4021 = vpack.c.b16 %v3493, %v3490
        %v4022 = vpack.c.b16 %v3494, %v3491
        %v4023 = vpack.c.b16 %v3495, %v3492
        %v4024 = vpack.c.b16 %v3499, %v3496
        %v4025 = vpack.c.b16 %v3500, %v3497
        %v4026 = vpack.c.b16 %v3501, %v3498
        %v4027 = vpack.c.b16 %v3505, %v3502
        %v4028 = vpack.c.b16 %v3506, %v3503
        %v4029 = vpack.c.b16 %v3507, %v3504
        %v4030 = vpack.c.b16 %v3511, %v3508
        %v4031 = vpack.c.b16 %v3512, %v3509
        %v4032 = vpack.c.b16 %v3513, %v3510
        %v4033 = vpack.c.b16 %v3517, %v3514
        %v4034 = vpack.c.b16 %v3518, %v3515
        %v4035 = vpack.c.b16 %v3519, %v3516
        %v4036 = vpack.c.b16 %v3523, %v3520
        %v4037 = vpack.c.b16 %v3524, %v3521
        %v4038 = vpack.c.b16 %v3525, %v3522
        %v4039 = vpack.c.b16 %v3529, %v3526
        %v4040 = vpack.c.b16 %v3530, %v3527
        %v4041 = vpack.c.b16 %v3531, %v3528
        %v4042 = vpack.c.b16 %v3535, %v3532
        %v4043 = vpack.c.b16 %v3536, %v3533
        %v4044 = vpack.c.b16 %v3537, %v3534
        %v4045 = vpack.c.b16 %v3541, %v3538
        %v4046 = vpack.c.b16 %v3542, %v3539
        %v4047 = vpack.c.b16 %v3543, %v3540
        %v4048 = vpack.c.b16 %v3547, %v3544
        %v4049 = vpack.c.b16 %v3548, %v3545
        %v4050 = vpack.c.b16 %v3549, %v3546
        %v4051 = vpack.c.b16 %v3553, %v3550
        %v4052 = vpack.c.b16 %v3554, %v3551
        %v4053 = vpack.c.b16 %v3555, %v3552
        %v4054 = vpack.c.b16 %v3559, %v3556
        %v4055 = vpack.c.b16 %v3560, %v3557
        %v4056 = vpack.c.b16 %v3561, %v3558
        %v4057 = vpack.c.b16 %v3565, %v3562
        %v4058 = vpack.c.b16 %v3566, %v3563
        %v4059 = vpack.c.b16 %v3567, %v3564
        %v4060 = vpack.c.b16 %v3571, %v3568
        %v4061 = vpack.c.b16 %v3572, %v3569
        %v4062 = vpack.c.b16 %v3573, %v3570
        %v4063 = vpack.c.b16 %v3577, %v3574
        %v4064 = vpack.c.b16 %v3578, %v3575
        %v4065 = vpack.c.b16 %v3579, %v3576
        %v4066 = vpack.c.b16 %v3583, %v3580
        %v4067 = vpack.c.b16 %v3584, %v3581
        %v4068 = vpack.c.b16 %v3585, %v3582
        %v4069 = vpack.c.b16 %v3589, %v3586
        %v4070 = vpack.c.b16 %v3590, %v3587
        %v4071 = vpack.c.b16 %v3591, %v3588
        %v4072 = vpack.c.b16 %v3595, %v3592
        %v4073 = vpack.c.b16 %v3596, %v3593
        %v4074 = vpack.c.b16 %v3597, %v3594
        %v4075 = vpack.c.b16 %v3601, %v3598
        %v4076 = vpack.c.b16 %v3602, %v3599
        %v4077 = vpack.c.b16 %v3603, %v3600
        %v4078 = vpack.c.b16 %v3607, %v3604
        %v4079 = vpack.c.b16 %v3608, %v3605
        %v4080 = vpack.c.b16 %v3609, %v3606
        %v4081 = vpack.c.b16 %v3613, %v3610
        %v4082 = vpack.c.b16 %v3614, %v3611
        %v4083 = vpack.c.b16 %v3615, %v3612
        %v4084 = vpack.c.b16 %v3619, %v3616
        %v4085 = vpack.c.b16 %v3620, %v3617
        %v4086 = vpack.c.b16 %v3621, %v3618
        %v4087 = vpack.c.b16 %v3625, %v3622
        %v4088 = vpack.c.b16 %v3626, %v3623
        %v4089 = vpack.c.b16 %v3627, %v3624
        %v4090 = vpack.c.b16 %v3631, %v3628
        %v4091 = vpack.c.b16 %v3632, %v3629
        %v4092 = vpack.c.b16 %v3633, %v3630
        %v4093 = vpack.c.b16 %v3637, %v3634
        %v4094 = vpack.c.b16 %v3638, %v3635
        %v4095 = vpack.c.b16 %v3639, %v3636
        %v4096 = vpack.c.b16 %v3643, %v3640
        %v4097 = vpack.c.b16 %v3644, %v3641
        %v4098 = vpack.c.b16 %v3645, %v3642
        %v4099 = vpack.c.b16 %v3649, %v3646
        %v4100 = vpack.c.b16 %v3650, %v3647
        %v4101 = vpack.c.b16 %v3651, %v3648
        %v4102 = vpack.c.b16 %v3655, %v3652
        %v4103 = vpack.c.b16 %v3656, %v3653
        %v4104 = vpack.c.b16 %v3657, %v3654
        %v4105 = vpack.c.b16 %v3661, %v3658
        %v4106 = vpack.c.b16 %v3662, %v3659
        %v4107 = vpack.c.b16 %v3663, %v3660
        %v4108 = vpack.c.b16 %v3667, %v3664
        %v4109 = vpack.c.b16 %v3668, %v3665
        %v4110 = vpack.c.b16 %v3669, %v3666
        %v4111 = vpack.c.b16 %v3673, %v3670
        %v4112 = vpack.c.b16 %v3674, %v3671
        %v4113 = vpack.c.b16 %v3675, %v3672
        %v4114 = vpack.c.b16 %v3679, %v3676
        %v4115 = vpack.c.b16 %v3680, %v3677
        %v4116 = vpack.c.b16 %v3681, %v3678
        %v4117 = vpack.c.b16 %v3685, %v3682
        %v4118 = vpack.c.b16 %v3686, %v3683
        %v4119 = vpack.c.b16 %v3687, %v3684
        %v4120 = vpack.c.b16 %v3691, %v3688
        %v4121 = vpack.c.b16 %v3692, %v3689
        %v4122 = vpack.c.b16 %v3693, %v3690
        %v4123 = vpack.c.b16 %v3697, %v3694
        %v4124 = vpack.c.b16 %v3698, %v3695
        %v4125 = vpack.c.b16 %v3699, %v3696
        %v4126 = vpack.c.b16 %v3703, %v3700
        %v4127 = vpack.c.b16 %v3704, %v3701
        %v4128 = vpack.c.b16 %v3705, %v3702
        %v4129 = vpack.c.b16 %v3709, %v3706
        %v4130 = vpack.c.b16 %v3710, %v3707
        %v4131 = vpack.c.b16 %v3711, %v3708
        %v4132 = vpack.c.b16 %v3715, %v3712
        %v4133 = vpack.c.b16 %v3716, %v3713
        %v4134 = vpack.c.b16 %v3717, %v3714
        %v4135 = vpack.c.b16 %v3721, %v3718
        %v4136 = vpack.c.b16 %v3722, %v3719
        %v4137 = vpack.c.b16 %v3723, %v3720
        %v4138 = vpack.c.b16 %v3727, %v3724
        %v4139 = vpack.c.b16 %v3728, %v3725
        %v4140 = vpack.c.b16 %v3729, %v3726
        %v4141 = vpack.c.b16 %v3733, %v3730
        %v4142 = vpack.c.b16 %v3734, %v3731
        %v4143 = vpack.c.b16 %v3735, %v3732
        %v4144 = vpack.c.b16 %v3739, %v3736
        %v4145 = vpack.c.b16 %v3740, %v3737
        %v4146 = vpack.c.b16 %v3741, %v3738
        %v4147 = vpack.c.b16 %v3745, %v3742
        %v4148 = vpack.c.b16 %v3746, %v3743
        %v4149 = vpack.c.b16 %v3747, %v3744
        %v4150 = vpack.c.b16 %v3751, %v3748
        %v4151 = vpack.c.b16 %v3752, %v3749
        %v4152 = vpack.c.b16 %v3753, %v3750
        %v4153 = vpack.c.b16 %v3757, %v3754
        %v4154 = vpack.c.b16 %v3758, %v3755
        %v4155 = vpack.c.b16 %v3759, %v3756
        %v4156 = vpack.c.b16 %v3763, %v3760
        %v4157 = vpack.c.b16 %v3764, %v3761
        %v4158 = vpack.c.b16 %v3765, %v3762
        %v4159 = vpack.c.b16 %v3769, %v3766
        %v4160 = vpack.c.b16 %v3770, %v3767
        %v4161 = vpack.c.b16 %v3771, %v3768
        %v4162 = vpack.c.b16 %v3775, %v3772
        %v4163 = vpack.c.b16 %v3776, %v3773
        %v4164 = vpack.c.b16 %v3777, %v3774
        %v4165 = vpack.c.b16 %v3781, %v3778
        %v4166 = vpack.c.b16 %v3782, %v3779
        %v4167 = vpack.c.b16 %v3783, %v3780
        %v4168 = vpack.c.b16 %v3787, %v3784
        %v4169 = vpack.c.b16 %v3788, %v3785
        %v4170 = vpack.c.b16 %v3789, %v3786
        %v4171 = vpack.c.b16 %v3793, %v3790
        %v4172 = vpack.c.b16 %v3794, %v3791
        %v4173 = vpack.c.b16 %v3795, %v3792
        %v4174 = vpack.c.b16 %v3799, %v3796
        %v4175 = vpack.c.b16 %v3800, %v3797
        %v4176 = vpack.c.b16 %v3801, %v3798
        %v4177 = vpack.c.b16 %v3805, %v3802
        %v4178 = vpack.c.b16 %v3806, %v3803
        %v4179 = vpack.c.b16 %v3807, %v3804
        %v4180 = vpack.c.b16 %v3811, %v3808
        %v4181 = vpack.c.b16 %v3812, %v3809
        %v4182 = vpack.c.b16 %v3813, %v3810
        %v4183 = vpack.c.b16 %v3817, %v3814
        %v4184 = vpack.c.b16 %v3818, %v3815
        %v4185 = vpack.c.b16 %v3819, %v3816
        %v4186 = vpack.c.b16 %v3823, %v3820
        %v4187 = vpack.c.b16 %v3824, %v3821
        %v4188 = vpack.c.b16 %v3825, %v3822
        %v4189 = vpack.c.b16 %v3829, %v3826
        %v4190 = vpack.c.b16 %v3830, %v3827
        %v4191 = vpack.c.b16 %v3831, %v3828
        %4552 = vmatpush.bf16.msra.mxu0 %v3853
        %4553 = vmatpush.bf16.msra.mxu0 %v3850
        %4554 = vmatpush.bf16.msra.mxu0 %v3847
        %4555 = vmatpush.bf16.msra.mxu0 %v3844
        %4556 = vmatpush.bf16.msra.mxu0 %v3841
        %4557 = vmatpush.bf16.msra.mxu0 %v3838
        %4558 = vmatpush.bf16.msra.mxu0 %v3835
        %4559 = vmatpush.bf16.msra.mxu0 %v3832
        %4560 = vmatmul.bf16.gmra.mxu0 %v1926
        %v4561 = vpop.f32.mrf.mxu0
        %v4562 = vadd.f32 %v2626, %v4561
        %v4563 = vpop.f32.mrf.mxu0
        %v4564 = vadd.f32 %v2626, %v4563
        %4565 = vmatmul.bf16.gmra.mxu0 %v1929
        %v4566 = vpop.f32.mrf.mxu0
        %v4567 = vadd.f32 %v2626, %v4566
        %v4568 = vpop.f32.mrf.mxu0
        %4569 = vdwg.mxu0
        %4570 = vmatpush.bf16.msra.mxu0 %v3877
        %4571 = vmatpush.bf16.msra.mxu0 %v3874
        %4572 = vmatpush.bf16.msra.mxu0 %v3871
        %4573 = vmatpush.bf16.msra.mxu0 %v3868
        %4574 = vmatpush.bf16.msra.mxu0 %v3865
        %4575 = vmatpush.bf16.msra.mxu0 %v3862
        %4576 = vmatpush.bf16.msra.mxu0 %v3859
        %4577 = vmatpush.bf16.msra.mxu0 %v3856
        %4578 = vmatmul.bf16.gmra.mxu0 %v1927
        %v4579 = vpop.f32.mrf.mxu0
        %v4580 = vadd.f32 %v4562, %v4579
        %v4581 = vpop.f32.mrf.mxu0
        %v4582 = vadd.f32 %v4564, %v4581
        %4583 = vmatmul.bf16.gmra.mxu0 %v1930
        %v4584 = vpop.f32.mrf.mxu0
        %v4585 = vadd.f32 %v4567, %v4584
        %v4586 = vpop.f32.mrf.mxu0
        %4587 = vdwg.mxu0
        %4588 = vmatpush.bf16.msra.mxu0 %v3901
        %4589 = vmatpush.bf16.msra.mxu0 %v3898
        %4590 = vmatpush.bf16.msra.mxu0 %v3895
        %4591 = vmatpush.bf16.msra.mxu0 %v3892
        %4592 = vmatpush.bf16.msra.mxu0 %v3889
        %4593 = vmatpush.bf16.msra.mxu0 %v3886
        %4594 = vmatpush.bf16.msra.mxu0 %v3883
        %4595 = vmatpush.bf16.msra.mxu0 %v3880
        %4596 = vmatmul.bf16.gmra.mxu0 %v1928
        %v4597 = vpop.f32.mrf.mxu0
        %v4598 = vadd.f32 %v4580, %v4597
        %v4599 = vpop.f32.mrf.mxu0
        %v4600 = vadd.f32 %v4582, %v4599
        %4601 = vmatmul.bf16.gmra.mxu0 %v1931
        %v4602 = vpop.f32.mrf.mxu0
        %v4603 = vadd.f32 %v4585, %v4602
        %v4604 = vpop.f32.mrf.mxu0
        %4605 = vdwg.mxu0
        %4606 = vmatpush.bf16.msra.mxu0 %v3925
        %4607 = vmatpush.bf16.msra.mxu0 %v3922
        %4608 = vmatpush.bf16.msra.mxu0 %v3919
        %4609 = vmatpush.bf16.msra.mxu0 %v3916
        %4610 = vmatpush.bf16.msra.mxu0 %v3913
        %4611 = vmatpush.bf16.msra.mxu0 %v3910
        %4612 = vmatpush.bf16.msra.mxu0 %v3907
        %4613 = vmatpush.bf16.msra.mxu0 %v3904
        %4614 = vmatmul.bf16.gmra.mxu0 %v1966
        %v4615 = vpop.f32.mrf.mxu0
        %v4616 = vadd.f32 %v4598, %v4615
        %v4617 = vpop.f32.mrf.mxu0
        %v4618 = vadd.f32 %v4600, %v4617
        %4619 = vmatmul.bf16.gmra.mxu0 %v1993
        %v4620 = vpop.f32.mrf.mxu0
        %v4621 = vadd.f32 %v4603, %v4620
        %v4622 = vpop.f32.mrf.mxu0
        %4623 = vdwg.mxu0
        %4624 = vmatpush.bf16.msra.mxu0 %v3949
        %4625 = vmatpush.bf16.msra.mxu0 %v3946
        %4626 = vmatpush.bf16.msra.mxu0 %v3943
        %4627 = vmatpush.bf16.msra.mxu0 %v3940
        %4628 = vmatpush.bf16.msra.mxu0 %v3937
        %4629 = vmatpush.bf16.msra.mxu0 %v3934
        %4630 = vmatpush.bf16.msra.mxu0 %v3931
        %4631 = vmatpush.bf16.msra.mxu0 %v3928
        %4632 = vmatmul.bf16.gmra.mxu0 %v1978
        %v4633 = vpop.f32.mrf.mxu0
        %v4634 = vadd.f32 %v4616, %v4633
        %v4635 = vpop.f32.mrf.mxu0
        %v4636 = vadd.f32 %v4618, %v4635
        %4637 = vmatmul.bf16.gmra.mxu0 %v1996
        %v4638 = vpop.f32.mrf.mxu0
        %v4639 = vadd.f32 %v4621, %v4638
        %v4640 = vpop.f32.mrf.mxu0
        %4641 = vdwg.mxu0
        %4642 = vmatpush.bf16.msra.mxu0 %v3973
        %4643 = vmatpush.bf16.msra.mxu0 %v3970
        %4644 = vmatpush.bf16.msra.mxu0 %v3967
        %4645 = vmatpush.bf16.msra.mxu0 %v3964
        %4646 = vmatpush.bf16.msra.mxu0 %v3961
        %4647 = vmatpush.bf16.msra.mxu0 %v3958
        %4648 = vmatpush.bf16.msra.mxu0 %v3955
        %4649 = vmatpush.bf16.msra.mxu0 %v3952
        %4650 = vmatmul.bf16.gmra.mxu0 %v1990
        %v4651 = vpop.f32.mrf.mxu0
        %v4652 = vadd.f32 %v4634, %v4651
        %v4653 = vpop.f32.mrf.mxu0
        %v4654 = vadd.f32 %v4636, %v4653
        %4655 = vmatmul.bf16.gmra.mxu0 %v1999
        %v4656 = vpop.f32.mrf.mxu0
        %v4657 = vadd.f32 %v4639, %v4656
        %v4658 = vpop.f32.mrf.mxu0
        %4659 = vdwg.mxu0
        %4660 = vmatpush.bf16.msra.mxu0 %v3997
        %4661 = vmatpush.bf16.msra.mxu0 %v3994
        %4662 = vmatpush.bf16.msra.mxu0 %v3991
        %4663 = vmatpush.bf16.msra.mxu0 %v3988
        %4664 = vmatpush.bf16.msra.mxu0 %v3985
        %4665 = vmatpush.bf16.msra.mxu0 %v3982
        %4666 = vmatpush.bf16.msra.mxu0 %v3979
        %4667 = vmatpush.bf16.msra.mxu0 %v3976
        %4668 = vmatmul.bf16.gmra.mxu0 %v2025
        %v4669 = vpop.f32.mrf.mxu0
        %v4670 = vadd.f32 %v4652, %v4669
        %v4671 = vpop.f32.mrf.mxu0
        %v4672 = vadd.f32 %v4654, %v4671
        %4673 = vmatmul.bf16.gmra.mxu0 %v2024
        %v4674 = vpop.f32.mrf.mxu0
        %v4675 = vadd.f32 %v4657, %v4674
        %v4676 = vpop.f32.mrf.mxu0
        %4677 = vdwg.mxu0
        %4678 = vmatpush.bf16.msra.mxu0 %v4021
        %4679 = vmatpush.bf16.msra.mxu0 %v4018
        %4680 = vmatpush.bf16.msra.mxu0 %v4015
        %4681 = vmatpush.bf16.msra.mxu0 %v4012
        %4682 = vmatpush.bf16.msra.mxu0 %v4009
        %4683 = vmatpush.bf16.msra.mxu0 %v4006
        %4684 = vmatpush.bf16.msra.mxu0 %v4003
        %4685 = vmatpush.bf16.msra.mxu0 %v4000
        %4686 = vmatmul.bf16.gmra.mxu0 %v2028
        %v4687 = vpop.f32.mrf.mxu0
        %v4688 = vadd.f32 %v4670, %v4687
        %v4689 = vpop.f32.mrf.mxu0
        %v4690 = vadd.f32 %v4672, %v4689
        %4691 = vmatmul.bf16.gmra.mxu0 %v2027
        %v4692 = vpop.f32.mrf.mxu0
        %v4693 = vadd.f32 %v4675, %v4692
        %v4694 = vpop.f32.mrf.mxu0
        %4695 = vdwg.mxu0
        %4696 = vmatpush.bf16.msra.mxu0 %v4045
        %4697 = vmatpush.bf16.msra.mxu0 %v4042
        %4698 = vmatpush.bf16.msra.mxu0 %v4039
        %4699 = vmatpush.bf16.msra.mxu0 %v4036
        %4700 = vmatpush.bf16.msra.mxu0 %v4033
        %4701 = vmatpush.bf16.msra.mxu0 %v4030
        %4702 = vmatpush.bf16.msra.mxu0 %v4027
        %4703 = vmatpush.bf16.msra.mxu0 %v4024
        %4704 = vmatmul.bf16.gmra.mxu0 %v2031
        %v4705 = vpop.f32.mrf.mxu0
        %v4706 = vadd.f32 %v4688, %v4705
        %v4707 = vpop.f32.mrf.mxu0
        %v4708 = vadd.f32 %v4690, %v4707
        %4709 = vmatmul.bf16.gmra.mxu0 %v2030
        %v4710 = vpop.f32.mrf.mxu0
        %v4711 = vadd.f32 %v4693, %v4710
        %v4712 = vpop.f32.mrf.mxu0
        %4713 = vdwg.mxu0
        %4714 = vmatpush.bf16.msra.mxu0 %v4069
        %4715 = vmatpush.bf16.msra.mxu0 %v4066
        %4716 = vmatpush.bf16.msra.mxu0 %v4063
        %4717 = vmatpush.bf16.msra.mxu0 %v4060
        %4718 = vmatpush.bf16.msra.mxu0 %v4057
        %4719 = vmatpush.bf16.msra.mxu0 %v4054
        %4720 = vmatpush.bf16.msra.mxu0 %v4051
        %4721 = vmatpush.bf16.msra.mxu0 %v4048
        %4722 = vmatmul.bf16.gmra.mxu0 %v2071
        %v4723 = vpop.f32.mrf.mxu0
        %v4724 = vadd.f32 %v4706, %v4723
        %v4725 = vpop.f32.mrf.mxu0
        %v4726 = vadd.f32 %v4708, %v4725
        %4727 = vmatmul.bf16.gmra.mxu0 %v2070
        %v4728 = vpop.f32.mrf.mxu0
        %v4729 = vadd.f32 %v4711, %v4728
        %v4730 = vpop.f32.mrf.mxu0
        %4731 = vdwg.mxu0
        %4732 = vmatpush.bf16.msra.mxu0 %v4093
        %4733 = vmatpush.bf16.msra.mxu0 %v4090
        %4734 = vmatpush.bf16.msra.mxu0 %v4087
        %4735 = vmatpush.bf16.msra.mxu0 %v4084
        %4736 = vmatpush.bf16.msra.mxu0 %v4081
        %4737 = vmatpush.bf16.msra.mxu0 %v4078
        %4738 = vmatpush.bf16.msra.mxu0 %v4075
        %4739 = vmatpush.bf16.msra.mxu0 %v4072
        %4740 = vmatmul.bf16.gmra.mxu0 %v2088
        %v4741 = vpop.f32.mrf.mxu0
        %v4742 = vadd.f32 %v4724, %v4741
        %v4743 = vpop.f32.mrf.mxu0
        %v4744 = vadd.f32 %v4726, %v4743
        %4745 = vmatmul.bf16.gmra.mxu0 %v2087
        %v4746 = vpop.f32.mrf.mxu0
        %v4747 = vadd.f32 %v4729, %v4746
        %v4748 = vpop.f32.mrf.mxu0
        %4749 = vdwg.mxu0
        %4750 = vmatpush.bf16.msra.mxu0 %v4117
        %4751 = vmatpush.bf16.msra.mxu0 %v4114
        %4752 = vmatpush.bf16.msra.mxu0 %v4111
        %4753 = vmatpush.bf16.msra.mxu0 %v4108
        %4754 = vmatpush.bf16.msra.mxu0 %v4105
        %4755 = vmatpush.bf16.msra.mxu0 %v4102
        %4756 = vmatpush.bf16.msra.mxu0 %v4099
        %4757 = vmatpush.bf16.msra.mxu0 %v4096
        %4758 = vmatmul.bf16.gmra.mxu0 %v2105
        %v4759 = vpop.f32.mrf.mxu0
        %v4760 = vadd.f32 %v4742, %v4759
        %v4761 = vpop.f32.mrf.mxu0
        %v4762 = vadd.f32 %v4744, %v4761
        %4763 = vmatmul.bf16.gmra.mxu0 %v2104
        %v4764 = vpop.f32.mrf.mxu0
        %v4765 = vadd.f32 %v4747, %v4764
        %v4766 = vpop.f32.mrf.mxu0
        %4767 = vdwg.mxu0
        %4768 = vmatpush.bf16.msra.mxu0 %v4141
        %4769 = vmatpush.bf16.msra.mxu0 %v4138
        %4770 = vmatpush.bf16.msra.mxu0 %v4135
        %4771 = vmatpush.bf16.msra.mxu0 %v4132
        %4772 = vmatpush.bf16.msra.mxu0 %v4129
        %4773 = vmatpush.bf16.msra.mxu0 %v4126
        %4774 = vmatpush.bf16.msra.mxu0 %v4123
        %4775 = vmatpush.bf16.msra.mxu0 %v4120
        %4776 = vmatmul.bf16.gmra.mxu0 %v2131
        %v4777 = vpop.f32.mrf.mxu0
        %v4778 = vadd.f32 %v4760, %v4777
        %v4779 = vpop.f32.mrf.mxu0
        %v4780 = vadd.f32 %v4762, %v4779
        %4781 = vmatmul.bf16.gmra.mxu0 %v2130
        %v4782 = vpop.f32.mrf.mxu0
        %v4783 = vadd.f32 %v4765, %v4782
        %v4784 = vpop.f32.mrf.mxu0
        %4785 = vdwg.mxu0
        %4786 = vmatpush.bf16.msra.mxu0 %v4165
        %4787 = vmatpush.bf16.msra.mxu0 %v4162
        %4788 = vmatpush.bf16.msra.mxu0 %v4159
        %4789 = vmatpush.bf16.msra.mxu0 %v4156
        %4790 = vmatpush.bf16.msra.mxu0 %v4153
        %4791 = vmatpush.bf16.msra.mxu0 %v4150
        %4792 = vmatpush.bf16.msra.mxu0 %v4147
        %4793 = vmatpush.bf16.msra.mxu0 %v4144
        %4794 = vmatmul.bf16.gmra.mxu0 %v2134
        %v4795 = vpop.f32.mrf.mxu0
        %v4796 = vadd.f32 %v4778, %v4795
        %v4797 = vpop.f32.mrf.mxu0
        %v4798 = vadd.f32 %v4780, %v4797
        %4799 = vmatmul.bf16.gmra.mxu0 %v2133
        %v4800 = vpop.f32.mrf.mxu0
        %v4801 = vadd.f32 %v4783, %v4800
        %v4802 = vpop.f32.mrf.mxu0
        %4803 = vdwg.mxu0
        %4804 = vmatpush.bf16.msra.mxu0 %v4189
        %4805 = vmatpush.bf16.msra.mxu0 %v4186
        %4806 = vmatpush.bf16.msra.mxu0 %v4183
        %4807 = vmatpush.bf16.msra.mxu0 %v4180
        %4808 = vmatpush.bf16.msra.mxu0 %v4177
        %4809 = vmatpush.bf16.msra.mxu0 %v4174
        %4810 = vmatpush.bf16.msra.mxu0 %v4171
        %4811 = vmatpush.bf16.msra.mxu0 %v4168
        %4812 = vmatmul.bf16.gmra.mxu0 %v2137
        %v4813 = vpop.f32.mrf.mxu0
        %v4814 = vadd.f32 %v4796, %v4813
        %v4815 = vpop.f32.mrf.mxu0
        %v4816 = vadd.f32 %v4798, %v4815
        %4817 = vmatmul.bf16.gmra.mxu0 %v2136
        %v4818 = vpop.f32.mrf.mxu0
        %v4819 = vadd.f32 %v4801, %v4818
        %v4820 = vpop.f32.mrf.mxu0
        %4821 = vdwg.mxu0
        %4822 = vmatpush.bf16.msra.mxu0 %v3854
        %4823 = vmatpush.bf16.msra.mxu0 %v3851
        %4824 = vmatpush.bf16.msra.mxu0 %v3848
        %4825 = vmatpush.bf16.msra.mxu0 %v3845
        %4826 = vmatpush.bf16.msra.mxu0 %v3842
        %4827 = vmatpush.bf16.msra.mxu0 %v3839
        %4828 = vmatpush.bf16.msra.mxu0 %v3836
        %4829 = vmatpush.bf16.msra.mxu0 %v3833
        %4830 = vmatmul.bf16.gmra.mxu0 %v1926
        %v4831 = vpop.f32.mrf.mxu0
        %v4832 = vadd.f32 %v2627, %v4831
        %v4833 = vpop.f32.mrf.mxu0
        %v4834 = vadd.f32 %v2627, %v4833
        %4835 = vmatmul.bf16.gmra.mxu0 %v1929
        %v4836 = vpop.f32.mrf.mxu0
        %v4837 = vadd.f32 %v2627, %v4836
        %v4838 = vpop.f32.mrf.mxu0
        %4839 = vdwg.mxu0
        %4840 = vmatpush.bf16.msra.mxu0 %v3878
        %4841 = vmatpush.bf16.msra.mxu0 %v3875
        %4842 = vmatpush.bf16.msra.mxu0 %v3872
        %4843 = vmatpush.bf16.msra.mxu0 %v3869
        %4844 = vmatpush.bf16.msra.mxu0 %v3866
        %4845 = vmatpush.bf16.msra.mxu0 %v3863
        %4846 = vmatpush.bf16.msra.mxu0 %v3860
        %4847 = vmatpush.bf16.msra.mxu0 %v3857
        %4848 = vmatmul.bf16.gmra.mxu0 %v1927
        %v4849 = vpop.f32.mrf.mxu0
        %v4850 = vadd.f32 %v4832, %v4849
        %v4851 = vpop.f32.mrf.mxu0
        %v4852 = vadd.f32 %v4834, %v4851
        %4853 = vmatmul.bf16.gmra.mxu0 %v1930
        %v4854 = vpop.f32.mrf.mxu0
        %v4855 = vadd.f32 %v4837, %v4854
        %v4856 = vpop.f32.mrf.mxu0
        %4857 = vdwg.mxu0
        %4858 = vmatpush.bf16.msra.mxu0 %v3902
        %4859 = vmatpush.bf16.msra.mxu0 %v3899
        %4860 = vmatpush.bf16.msra.mxu0 %v3896
        %4861 = vmatpush.bf16.msra.mxu0 %v3893
        %4862 = vmatpush.bf16.msra.mxu0 %v3890
        %4863 = vmatpush.bf16.msra.mxu0 %v3887
        %4864 = vmatpush.bf16.msra.mxu0 %v3884
        %4865 = vmatpush.bf16.msra.mxu0 %v3881
        %4866 = vmatmul.bf16.gmra.mxu0 %v1928
        %v4867 = vpop.f32.mrf.mxu0
        %v4868 = vadd.f32 %v4850, %v4867
        %v4869 = vpop.f32.mrf.mxu0
        %v4870 = vadd.f32 %v4852, %v4869
        %4871 = vmatmul.bf16.gmra.mxu0 %v1931
        %v4872 = vpop.f32.mrf.mxu0
        %v4873 = vadd.f32 %v4855, %v4872
        %v4874 = vpop.f32.mrf.mxu0
        %4875 = vdwg.mxu0
        %4876 = vmatpush.bf16.msra.mxu0 %v3926
        %4877 = vmatpush.bf16.msra.mxu0 %v3923
        %4878 = vmatpush.bf16.msra.mxu0 %v3920
        %4879 = vmatpush.bf16.msra.mxu0 %v3917
        %4880 = vmatpush.bf16.msra.mxu0 %v3914
        %4881 = vmatpush.bf16.msra.mxu0 %v3911
        %4882 = vmatpush.bf16.msra.mxu0 %v3908
        %4883 = vmatpush.bf16.msra.mxu0 %v3905
        %4884 = vmatmul.bf16.gmra.mxu0 %v1966
        %v4885 = vpop.f32.mrf.mxu0
        %v4886 = vadd.f32 %v4868, %v4885
        %v4887 = vpop.f32.mrf.mxu0
        %v4888 = vadd.f32 %v4870, %v4887
        %4889 = vmatmul.bf16.gmra.mxu0 %v1993
        %v4890 = vpop.f32.mrf.mxu0
        %v4891 = vadd.f32 %v4873, %v4890
        %v4892 = vpop.f32.mrf.mxu0
        %4893 = vdwg.mxu0
        %4894 = vmatpush.bf16.msra.mxu0 %v3950
        %4895 = vmatpush.bf16.msra.mxu0 %v3947
        %4896 = vmatpush.bf16.msra.mxu0 %v3944
        %4897 = vmatpush.bf16.msra.mxu0 %v3941
        %4898 = vmatpush.bf16.msra.mxu0 %v3938
        %4899 = vmatpush.bf16.msra.mxu0 %v3935
        %4900 = vmatpush.bf16.msra.mxu0 %v3932
        %4901 = vmatpush.bf16.msra.mxu0 %v3929
        %4902 = vmatmul.bf16.gmra.mxu0 %v1978
        %v4903 = vpop.f32.mrf.mxu0
        %v4904 = vadd.f32 %v4886, %v4903
        %v4905 = vpop.f32.mrf.mxu0
        %v4906 = vadd.f32 %v4888, %v4905
        %4907 = vmatmul.bf16.gmra.mxu0 %v1996
        %v4908 = vpop.f32.mrf.mxu0
        %v4909 = vadd.f32 %v4891, %v4908
        %v4910 = vpop.f32.mrf.mxu0
        %4911 = vdwg.mxu0
        %4912 = vmatpush.bf16.msra.mxu0 %v3974
        %4913 = vmatpush.bf16.msra.mxu0 %v3971
        %4914 = vmatpush.bf16.msra.mxu0 %v3968
        %4915 = vmatpush.bf16.msra.mxu0 %v3965
        %4916 = vmatpush.bf16.msra.mxu0 %v3962
        %4917 = vmatpush.bf16.msra.mxu0 %v3959
        %4918 = vmatpush.bf16.msra.mxu0 %v3956
        %4919 = vmatpush.bf16.msra.mxu0 %v3953
        %4920 = vmatmul.bf16.gmra.mxu0 %v1990
        %v4921 = vpop.f32.mrf.mxu0
        %v4922 = vadd.f32 %v4904, %v4921
        %v4923 = vpop.f32.mrf.mxu0
        %v4924 = vadd.f32 %v4906, %v4923
        %4925 = vmatmul.bf16.gmra.mxu0 %v1999
        %v4926 = vpop.f32.mrf.mxu0
        %v4927 = vadd.f32 %v4909, %v4926
        %v4928 = vpop.f32.mrf.mxu0
        %4929 = vdwg.mxu0
        %4930 = vmatpush.bf16.msra.mxu0 %v3998
        %4931 = vmatpush.bf16.msra.mxu0 %v3995
        %4932 = vmatpush.bf16.msra.mxu0 %v3992
        %4933 = vmatpush.bf16.msra.mxu0 %v3989
        %4934 = vmatpush.bf16.msra.mxu0 %v3986
        %4935 = vmatpush.bf16.msra.mxu0 %v3983
        %4936 = vmatpush.bf16.msra.mxu0 %v3980
        %4937 = vmatpush.bf16.msra.mxu0 %v3977
        %4938 = vmatmul.bf16.gmra.mxu0 %v2025
        %v4939 = vpop.f32.mrf.mxu0
        %v4940 = vadd.f32 %v4922, %v4939
        %v4941 = vpop.f32.mrf.mxu0
        %v4942 = vadd.f32 %v4924, %v4941
        %4943 = vmatmul.bf16.gmra.mxu0 %v2024
        %v4944 = vpop.f32.mrf.mxu0
        %v4945 = vadd.f32 %v4927, %v4944
        %v4946 = vpop.f32.mrf.mxu0
        %4947 = vdwg.mxu0
        %4948 = vmatpush.bf16.msra.mxu0 %v4022
        %4949 = vmatpush.bf16.msra.mxu0 %v4019
        %4950 = vmatpush.bf16.msra.mxu0 %v4016
        %4951 = vmatpush.bf16.msra.mxu0 %v4013
        %4952 = vmatpush.bf16.msra.mxu0 %v4010
        %4953 = vmatpush.bf16.msra.mxu0 %v4007
        %4954 = vmatpush.bf16.msra.mxu0 %v4004
        %4955 = vmatpush.bf16.msra.mxu0 %v4001
        %4956 = vmatmul.bf16.gmra.mxu0 %v2028
        %v4957 = vpop.f32.mrf.mxu0
        %v4958 = vadd.f32 %v4940, %v4957
        %v4959 = vpop.f32.mrf.mxu0
        %v4960 = vadd.f32 %v4942, %v4959
        %4961 = vmatmul.bf16.gmra.mxu0 %v2027
        %v4962 = vpop.f32.mrf.mxu0
        %v4963 = vadd.f32 %v4945, %v4962
        %v4964 = vpop.f32.mrf.mxu0
        %4965 = vdwg.mxu0
        %4966 = vmatpush.bf16.msra.mxu0 %v4046
        %4967 = vmatpush.bf16.msra.mxu0 %v4043
        %4968 = vmatpush.bf16.msra.mxu0 %v4040
        %4969 = vmatpush.bf16.msra.mxu0 %v4037
        %4970 = vmatpush.bf16.msra.mxu0 %v4034
        %4971 = vmatpush.bf16.msra.mxu0 %v4031
        %4972 = vmatpush.bf16.msra.mxu0 %v4028
        %4973 = vmatpush.bf16.msra.mxu0 %v4025
        %4974 = vmatmul.bf16.gmra.mxu0 %v2031
        %v4975 = vpop.f32.mrf.mxu0
        %v4976 = vadd.f32 %v4958, %v4975
        %v4977 = vpop.f32.mrf.mxu0
        %v4978 = vadd.f32 %v4960, %v4977
        %4979 = vmatmul.bf16.gmra.mxu0 %v2030
        %v4980 = vpop.f32.mrf.mxu0
        %v4981 = vadd.f32 %v4963, %v4980
        %v4982 = vpop.f32.mrf.mxu0
        %4983 = vdwg.mxu0
        %4984 = vmatpush.bf16.msra.mxu0 %v4070
        %4985 = vmatpush.bf16.msra.mxu0 %v4067
        %4986 = vmatpush.bf16.msra.mxu0 %v4064
        %4987 = vmatpush.bf16.msra.mxu0 %v4061
        %4988 = vmatpush.bf16.msra.mxu0 %v4058
        %4989 = vmatpush.bf16.msra.mxu0 %v4055
        %4990 = vmatpush.bf16.msra.mxu0 %v4052
        %4991 = vmatpush.bf16.msra.mxu0 %v4049
        %4992 = vmatmul.bf16.gmra.mxu0 %v2071
        %v4993 = vpop.f32.mrf.mxu0
        %v4994 = vadd.f32 %v4976, %v4993
        %v4995 = vpop.f32.mrf.mxu0
        %v4996 = vadd.f32 %v4978, %v4995
        %4997 = vmatmul.bf16.gmra.mxu0 %v2070
        %v4998 = vpop.f32.mrf.mxu0
        %v4999 = vadd.f32 %v4981, %v4998
        %v5000 = vpop.f32.mrf.mxu0
        %5001 = vdwg.mxu0
        %5002 = vmatpush.bf16.msra.mxu0 %v4094
        %5003 = vmatpush.bf16.msra.mxu0 %v4091
        %5004 = vmatpush.bf16.msra.mxu0 %v4088
        %5005 = vmatpush.bf16.msra.mxu0 %v4085
        %5006 = vmatpush.bf16.msra.mxu0 %v4082
        %5007 = vmatpush.bf16.msra.mxu0 %v4079
        %5008 = vmatpush.bf16.msra.mxu0 %v4076
        %5009 = vmatpush.bf16.msra.mxu0 %v4073
        %5010 = vmatmul.bf16.gmra.mxu0 %v2088
        %v5011 = vpop.f32.mrf.mxu0
        %v5012 = vadd.f32 %v4994, %v5011
        %v5013 = vpop.f32.mrf.mxu0
        %v5014 = vadd.f32 %v4996, %v5013
        %5015 = vmatmul.bf16.gmra.mxu0 %v2087
        %v5016 = vpop.f32.mrf.mxu0
        %v5017 = vadd.f32 %v4999, %v5016
        %v5018 = vpop.f32.mrf.mxu0
        %5019 = vdwg.mxu0
        %5020 = vmatpush.bf16.msra.mxu0 %v4118
        %5021 = vmatpush.bf16.msra.mxu0 %v4115
        %5022 = vmatpush.bf16.msra.mxu0 %v4112
        %5023 = vmatpush.bf16.msra.mxu0 %v4109
        %5024 = vmatpush.bf16.msra.mxu0 %v4106
        %5025 = vmatpush.bf16.msra.mxu0 %v4103
        %5026 = vmatpush.bf16.msra.mxu0 %v4100
        %5027 = vmatpush.bf16.msra.mxu0 %v4097
        %5028 = vmatmul.bf16.gmra.mxu0 %v2105
        %v5029 = vpop.f32.mrf.mxu0
        %v5030 = vadd.f32 %v5012, %v5029
        %v5031 = vpop.f32.mrf.mxu0
        %v5032 = vadd.f32 %v5014, %v5031
        %5033 = vmatmul.bf16.gmra.mxu0 %v2104
        %v5034 = vpop.f32.mrf.mxu0
        %v5035 = vadd.f32 %v5017, %v5034
        %v5036 = vpop.f32.mrf.mxu0
        %5037 = vdwg.mxu0
        %5038 = vmatpush.bf16.msra.mxu0 %v4142
        %5039 = vmatpush.bf16.msra.mxu0 %v4139
        %5040 = vmatpush.bf16.msra.mxu0 %v4136
        %5041 = vmatpush.bf16.msra.mxu0 %v4133
        %5042 = vmatpush.bf16.msra.mxu0 %v4130
        %5043 = vmatpush.bf16.msra.mxu0 %v4127
        %5044 = vmatpush.bf16.msra.mxu0 %v4124
        %5045 = vmatpush.bf16.msra.mxu0 %v4121
        %5046 = vmatmul.bf16.gmra.mxu0 %v2131
        %v5047 = vpop.f32.mrf.mxu0
        %v5048 = vadd.f32 %v5030, %v5047
        %v5049 = vpop.f32.mrf.mxu0
        %v5050 = vadd.f32 %v5032, %v5049
        %5051 = vmatmul.bf16.gmra.mxu0 %v2130
        %v5052 = vpop.f32.mrf.mxu0
        %v5053 = vadd.f32 %v5035, %v5052
        %v5054 = vpop.f32.mrf.mxu0
        %5055 = vdwg.mxu0
        %5056 = vmatpush.bf16.msra.mxu0 %v4166
        %5057 = vmatpush.bf16.msra.mxu0 %v4163
        %5058 = vmatpush.bf16.msra.mxu0 %v4160
        %5059 = vmatpush.bf16.msra.mxu0 %v4157
        %5060 = vmatpush.bf16.msra.mxu0 %v4154
        %5061 = vmatpush.bf16.msra.mxu0 %v4151
        %5062 = vmatpush.bf16.msra.mxu0 %v4148
        %5063 = vmatpush.bf16.msra.mxu0 %v4145
        %5064 = vmatmul.bf16.gmra.mxu0 %v2134
        %v5065 = vpop.f32.mrf.mxu0
        %v5066 = vadd.f32 %v5048, %v5065
        %v5067 = vpop.f32.mrf.mxu0
        %v5068 = vadd.f32 %v5050, %v5067
        %5069 = vmatmul.bf16.gmra.mxu0 %v2133
        %v5070 = vpop.f32.mrf.mxu0
        %v5071 = vadd.f32 %v5053, %v5070
        %v5072 = vpop.f32.mrf.mxu0
        %5073 = vdwg.mxu0
        %5074 = vmatpush.bf16.msra.mxu0 %v4190
        %5075 = vmatpush.bf16.msra.mxu0 %v4187
        %5076 = vmatpush.bf16.msra.mxu0 %v4184
        %5077 = vmatpush.bf16.msra.mxu0 %v4181
        %5078 = vmatpush.bf16.msra.mxu0 %v4178
        %5079 = vmatpush.bf16.msra.mxu0 %v4175
        %5080 = vmatpush.bf16.msra.mxu0 %v4172
        %5081 = vmatpush.bf16.msra.mxu0 %v4169
        %5082 = vmatmul.bf16.gmra.mxu0 %v2137
        %v5083 = vpop.f32.mrf.mxu0
        %v5084 = vadd.f32 %v5066, %v5083
        %v5085 = vpop.f32.mrf.mxu0
        %v5086 = vadd.f32 %v5068, %v5085
        %5087 = vmatmul.bf16.gmra.mxu0 %v2136
        %v5088 = vpop.f32.mrf.mxu0
        %v5089 = vadd.f32 %v5071, %v5088
        %v5090 = vpop.f32.mrf.mxu0
        %5091 = vdwg.mxu0
        %5092 = vmatpush.bf16.msra.mxu0 %v3855
        %5093 = vmatpush.bf16.msra.mxu0 %v3852
        %5094 = vmatpush.bf16.msra.mxu0 %v3849
        %5095 = vmatpush.bf16.msra.mxu0 %v3846
        %5096 = vmatpush.bf16.msra.mxu0 %v3843
        %5097 = vmatpush.bf16.msra.mxu0 %v3840
        %5098 = vmatpush.bf16.msra.mxu0 %v3837
        %5099 = vmatpush.bf16.msra.mxu0 %v3834
        %5100 = vmatmul.bf16.gmra.mxu0 %v1926
        %v5101 = vpop.f32.mrf.mxu0
        %v5102 = vadd.f32 %v2628, %v5101
        %v5103 = vpop.f32.mrf.mxu0
        %v5104 = vadd.f32 %v2628, %v5103
        %5105 = vmatmul.bf16.gmra.mxu0 %v1929
        %v5106 = vpop.f32.mrf.mxu0
        %v5107 = vadd.f32 %v2628, %v5106
        %v5108 = vpop.f32.mrf.mxu0
        %5109 = vdwg.mxu0
        %5110 = vmatpush.bf16.msra.mxu0 %v3879
        %5111 = vmatpush.bf16.msra.mxu0 %v3876
        %5112 = vmatpush.bf16.msra.mxu0 %v3873
        %5113 = vmatpush.bf16.msra.mxu0 %v3870
        %5114 = vmatpush.bf16.msra.mxu0 %v3867
        %5115 = vmatpush.bf16.msra.mxu0 %v3864
        %5116 = vmatpush.bf16.msra.mxu0 %v3861
        %5117 = vmatpush.bf16.msra.mxu0 %v3858
        %5118 = vmatmul.bf16.gmra.mxu0 %v1927
        %v5119 = vpop.f32.mrf.mxu0
        %v5120 = vadd.f32 %v5102, %v5119
        %v5121 = vpop.f32.mrf.mxu0
        %v5122 = vadd.f32 %v5104, %v5121
        %5123 = vmatmul.bf16.gmra.mxu0 %v1930
        %v5124 = vpop.f32.mrf.mxu0
        %v5125 = vadd.f32 %v5107, %v5124
        %v5126 = vpop.f32.mrf.mxu0
        %5127 = vdwg.mxu0
        %5128 = vmatpush.bf16.msra.mxu0 %v3903
        %5129 = vmatpush.bf16.msra.mxu0 %v3900
        %5130 = vmatpush.bf16.msra.mxu0 %v3897
        %5131 = vmatpush.bf16.msra.mxu0 %v3894
        %5132 = vmatpush.bf16.msra.mxu0 %v3891
        %5133 = vmatpush.bf16.msra.mxu0 %v3888
        %5134 = vmatpush.bf16.msra.mxu0 %v3885
        %5135 = vmatpush.bf16.msra.mxu0 %v3882
        %5136 = vmatmul.bf16.gmra.mxu0 %v1928
        %v5137 = vpop.f32.mrf.mxu0
        %v5138 = vadd.f32 %v5120, %v5137
        %v5139 = vpop.f32.mrf.mxu0
        %v5140 = vadd.f32 %v5122, %v5139
        %5141 = vmatmul.bf16.gmra.mxu0 %v1931
        %v5142 = vpop.f32.mrf.mxu0
        %v5143 = vadd.f32 %v5125, %v5142
        %v5144 = vpop.f32.mrf.mxu0
        %5145 = vdwg.mxu0
        %5146 = vmatpush.bf16.msra.mxu0 %v3927
        %5147 = vmatpush.bf16.msra.mxu0 %v3924
        %5148 = vmatpush.bf16.msra.mxu0 %v3921
        %5149 = vmatpush.bf16.msra.mxu0 %v3918
        %5150 = vmatpush.bf16.msra.mxu0 %v3915
        %5151 = vmatpush.bf16.msra.mxu0 %v3912
        %5152 = vmatpush.bf16.msra.mxu0 %v3909
        %5153 = vmatpush.bf16.msra.mxu0 %v3906
        %5154 = vmatmul.bf16.gmra.mxu0 %v1966
        %v5155 = vpop.f32.mrf.mxu0
        %v5156 = vadd.f32 %v5138, %v5155
        %v5157 = vpop.f32.mrf.mxu0
        %v5158 = vadd.f32 %v5140, %v5157
        %5159 = vmatmul.bf16.gmra.mxu0 %v1993
        %v5160 = vpop.f32.mrf.mxu0
        %v5161 = vadd.f32 %v5143, %v5160
        %v5162 = vpop.f32.mrf.mxu0
        %5163 = vdwg.mxu0
        %5164 = vmatpush.bf16.msra.mxu0 %v3951
        %5165 = vmatpush.bf16.msra.mxu0 %v3948
        %5166 = vmatpush.bf16.msra.mxu0 %v3945
        %5167 = vmatpush.bf16.msra.mxu0 %v3942
        %5168 = vmatpush.bf16.msra.mxu0 %v3939
        %5169 = vmatpush.bf16.msra.mxu0 %v3936
        %5170 = vmatpush.bf16.msra.mxu0 %v3933
        %5171 = vmatpush.bf16.msra.mxu0 %v3930
        %5172 = vmatmul.bf16.gmra.mxu0 %v1978
        %v5173 = vpop.f32.mrf.mxu0
        %v5174 = vadd.f32 %v5156, %v5173
        %v5175 = vpop.f32.mrf.mxu0
        %v5176 = vadd.f32 %v5158, %v5175
        %5177 = vmatmul.bf16.gmra.mxu0 %v1996
        %v5178 = vpop.f32.mrf.mxu0
        %v5179 = vadd.f32 %v5161, %v5178
        %v5180 = vpop.f32.mrf.mxu0
        %5181 = vdwg.mxu0
        %5182 = vmatpush.bf16.msra.mxu0 %v3975
        %5183 = vmatpush.bf16.msra.mxu0 %v3972
        %5184 = vmatpush.bf16.msra.mxu0 %v3969
        %5185 = vmatpush.bf16.msra.mxu0 %v3966
        %5186 = vmatpush.bf16.msra.mxu0 %v3963
        %5187 = vmatpush.bf16.msra.mxu0 %v3960
        %5188 = vmatpush.bf16.msra.mxu0 %v3957
        %5189 = vmatpush.bf16.msra.mxu0 %v3954
        %5190 = vmatmul.bf16.gmra.mxu0 %v1990
        %v5191 = vpop.f32.mrf.mxu0
        %v5192 = vadd.f32 %v5174, %v5191
        %v5193 = vpop.f32.mrf.mxu0
        %v5194 = vadd.f32 %v5176, %v5193
        %5195 = vmatmul.bf16.gmra.mxu0 %v1999
        %v5196 = vpop.f32.mrf.mxu0
        %v5197 = vadd.f32 %v5179, %v5196
        %v5198 = vpop.f32.mrf.mxu0
        %5199 = vdwg.mxu0
        %5200 = vmatpush.bf16.msra.mxu0 %v3999
        %5201 = vmatpush.bf16.msra.mxu0 %v3996
        %5202 = vmatpush.bf16.msra.mxu0 %v3993
        %5203 = vmatpush.bf16.msra.mxu0 %v3990
        %5204 = vmatpush.bf16.msra.mxu0 %v3987
        %5205 = vmatpush.bf16.msra.mxu0 %v3984
        %5206 = vmatpush.bf16.msra.mxu0 %v3981
        %5207 = vmatpush.bf16.msra.mxu0 %v3978
        %5208 = vmatmul.bf16.gmra.mxu0 %v2025
        %v5209 = vpop.f32.mrf.mxu0
        %v5210 = vadd.f32 %v5192, %v5209
        %v5211 = vpop.f32.mrf.mxu0
        %v5212 = vadd.f32 %v5194, %v5211
        %5213 = vmatmul.bf16.gmra.mxu0 %v2024
        %v5214 = vpop.f32.mrf.mxu0
        %v5215 = vadd.f32 %v5197, %v5214
        %v5216 = vpop.f32.mrf.mxu0
        %5217 = vdwg.mxu0
        %5218 = vmatpush.bf16.msra.mxu0 %v4023
        %5219 = vmatpush.bf16.msra.mxu0 %v4020
        %5220 = vmatpush.bf16.msra.mxu0 %v4017
        %5221 = vmatpush.bf16.msra.mxu0 %v4014
        %5222 = vmatpush.bf16.msra.mxu0 %v4011
        %5223 = vmatpush.bf16.msra.mxu0 %v4008
        %5224 = vmatpush.bf16.msra.mxu0 %v4005
        %5225 = vmatpush.bf16.msra.mxu0 %v4002
        %5226 = vmatmul.bf16.gmra.mxu0 %v2028
        %v5227 = vpop.f32.mrf.mxu0
        %v5228 = vadd.f32 %v5210, %v5227
        %v5229 = vpop.f32.mrf.mxu0
        %v5230 = vadd.f32 %v5212, %v5229
        %5231 = vmatmul.bf16.gmra.mxu0 %v2027
        %v5232 = vpop.f32.mrf.mxu0
        %v5233 = vadd.f32 %v5215, %v5232
        %v5234 = vpop.f32.mrf.mxu0
        %5235 = vdwg.mxu0
        %5236 = vmatpush.bf16.msra.mxu0 %v4047
        %5237 = vmatpush.bf16.msra.mxu0 %v4044
        %5238 = vmatpush.bf16.msra.mxu0 %v4041
        %5239 = vmatpush.bf16.msra.mxu0 %v4038
        %5240 = vmatpush.bf16.msra.mxu0 %v4035
        %5241 = vmatpush.bf16.msra.mxu0 %v4032
        %5242 = vmatpush.bf16.msra.mxu0 %v4029
        %5243 = vmatpush.bf16.msra.mxu0 %v4026
        %5244 = vmatmul.bf16.gmra.mxu0 %v2031
        %v5245 = vpop.f32.mrf.mxu0
        %v5246 = vadd.f32 %v5228, %v5245
        %v5247 = vpop.f32.mrf.mxu0
        %v5248 = vadd.f32 %v5230, %v5247
        %5249 = vmatmul.bf16.gmra.mxu0 %v2030
        %v5250 = vpop.f32.mrf.mxu0
        %v5251 = vadd.f32 %v5233, %v5250
        %v5252 = vpop.f32.mrf.mxu0
        %5253 = vdwg.mxu0
        %5254 = vmatpush.bf16.msra.mxu0 %v4071
        %5255 = vmatpush.bf16.msra.mxu0 %v4068
        %5256 = vmatpush.bf16.msra.mxu0 %v4065
        %5257 = vmatpush.bf16.msra.mxu0 %v4062
        %5258 = vmatpush.bf16.msra.mxu0 %v4059
        %5259 = vmatpush.bf16.msra.mxu0 %v4056
        %5260 = vmatpush.bf16.msra.mxu0 %v4053
        %5261 = vmatpush.bf16.msra.mxu0 %v4050
        %5262 = vmatmul.bf16.gmra.mxu0 %v2071
        %v5263 = vpop.f32.mrf.mxu0
        %v5264 = vadd.f32 %v5246, %v5263
        %v5265 = vpop.f32.mrf.mxu0
        %v5266 = vadd.f32 %v5248, %v5265
        %5267 = vmatmul.bf16.gmra.mxu0 %v2070
        %v5268 = vpop.f32.mrf.mxu0
        %v5269 = vadd.f32 %v5251, %v5268
        %v5270 = vpop.f32.mrf.mxu0
        %5271 = vdwg.mxu0
        %5272 = vmatpush.bf16.msra.mxu0 %v4095
        %5273 = vmatpush.bf16.msra.mxu0 %v4092
        %5274 = vmatpush.bf16.msra.mxu0 %v4089
        %5275 = vmatpush.bf16.msra.mxu0 %v4086
        %5276 = vmatpush.bf16.msra.mxu0 %v4083
        %5277 = vmatpush.bf16.msra.mxu0 %v4080
        %5278 = vmatpush.bf16.msra.mxu0 %v4077
        %5279 = vmatpush.bf16.msra.mxu0 %v4074
        %5280 = vmatmul.bf16.gmra.mxu0 %v2088
        %v5281 = vpop.f32.mrf.mxu0
        %v5282 = vadd.f32 %v5264, %v5281
        %v5283 = vpop.f32.mrf.mxu0
        %v5284 = vadd.f32 %v5266, %v5283
        %5285 = vmatmul.bf16.gmra.mxu0 %v2087
        %v5286 = vpop.f32.mrf.mxu0
        %v5287 = vadd.f32 %v5269, %v5286
        %v5288 = vpop.f32.mrf.mxu0
        %5289 = vdwg.mxu0
        %5290 = vmatpush.bf16.msra.mxu0 %v4119
        %5291 = vmatpush.bf16.msra.mxu0 %v4116
        %5292 = vmatpush.bf16.msra.mxu0 %v4113
        %5293 = vmatpush.bf16.msra.mxu0 %v4110
        %5294 = vmatpush.bf16.msra.mxu0 %v4107
        %5295 = vmatpush.bf16.msra.mxu0 %v4104
        %5296 = vmatpush.bf16.msra.mxu0 %v4101
        %5297 = vmatpush.bf16.msra.mxu0 %v4098
        %5298 = vmatmul.bf16.gmra.mxu0 %v2105
        %v5299 = vpop.f32.mrf.mxu0
        %v5300 = vadd.f32 %v5282, %v5299
        %v5301 = vpop.f32.mrf.mxu0
        %v5302 = vadd.f32 %v5284, %v5301
        %5303 = vmatmul.bf16.gmra.mxu0 %v2104
        %v5304 = vpop.f32.mrf.mxu0
        %v5305 = vadd.f32 %v5287, %v5304
        %v5306 = vpop.f32.mrf.mxu0
        %5307 = vdwg.mxu0
        %5308 = vmatpush.bf16.msra.mxu0 %v4143
        %5309 = vmatpush.bf16.msra.mxu0 %v4140
        %5310 = vmatpush.bf16.msra.mxu0 %v4137
        %5311 = vmatpush.bf16.msra.mxu0 %v4134
        %5312 = vmatpush.bf16.msra.mxu0 %v4131
        %5313 = vmatpush.bf16.msra.mxu0 %v4128
        %5314 = vmatpush.bf16.msra.mxu0 %v4125
        %5315 = vmatpush.bf16.msra.mxu0 %v4122
        %5316 = vmatmul.bf16.gmra.mxu0 %v2131
        %v5317 = vpop.f32.mrf.mxu0
        %v5318 = vadd.f32 %v5300, %v5317
        %v5319 = vpop.f32.mrf.mxu0
        %v5320 = vadd.f32 %v5302, %v5319
        %5321 = vmatmul.bf16.gmra.mxu0 %v2130
        %v5322 = vpop.f32.mrf.mxu0
        %v5323 = vadd.f32 %v5305, %v5322
        %v5324 = vpop.f32.mrf.mxu0
        %5325 = vdwg.mxu0
        %5326 = vmatpush.bf16.msra.mxu0 %v4167
        %5327 = vmatpush.bf16.msra.mxu0 %v4164
        %5328 = vmatpush.bf16.msra.mxu0 %v4161
        %5329 = vmatpush.bf16.msra.mxu0 %v4158
        %5330 = vmatpush.bf16.msra.mxu0 %v4155
        %5331 = vmatpush.bf16.msra.mxu0 %v4152
        %5332 = vmatpush.bf16.msra.mxu0 %v4149
        %5333 = vmatpush.bf16.msra.mxu0 %v4146
        %5334 = vmatmul.bf16.gmra.mxu0 %v2134
        %v5335 = vpop.f32.mrf.mxu0
        %v5336 = vadd.f32 %v5318, %v5335
        %v5337 = vpop.f32.mrf.mxu0
        %v5338 = vadd.f32 %v5320, %v5337
        %5339 = vmatmul.bf16.gmra.mxu0 %v2133
        %v5340 = vpop.f32.mrf.mxu0
        %v5341 = vadd.f32 %v5323, %v5340
        %v5342 = vpop.f32.mrf.mxu0
        %5343 = vdwg.mxu0
        %5344 = vmatpush.bf16.msra.mxu0 %v4191
        %5345 = vmatpush.bf16.msra.mxu0 %v4188
        %5346 = vmatpush.bf16.msra.mxu0 %v4185
        %5347 = vmatpush.bf16.msra.mxu0 %v4182
        %5348 = vmatpush.bf16.msra.mxu0 %v4179
        %5349 = vmatpush.bf16.msra.mxu0 %v4176
        %5350 = vmatpush.bf16.msra.mxu0 %v4173
        %5351 = vmatpush.bf16.msra.mxu0 %v4170
        %5352 = vmatmul.bf16.gmra.mxu0 %v2137
        %v5353 = vpop.f32.mrf.mxu0
        %v5354 = vadd.f32 %v5336, %v5353
        %v5355 = vpop.f32.mrf.mxu0
        %v5356 = vadd.f32 %v5338, %v5355
        %5357 = vmatmul.bf16.gmra.mxu0 %v2136
        %v5358 = vpop.f32.mrf.mxu0
        %v5359 = vadd.f32 %v5341, %v5358
        %v5360 = vpop.f32.mrf.mxu0
        %5361 = vdwg.mxu0
        %v5362 = vmax.f32 %v4814, 0.0
        %v5363 = vmax.f32 %v5084, 0.0
        %v5364 = vmax.f32 %v5354, 0.0
        %v5365 = vmax.f32 %v4816, 0.0
        %v5366 = vmax.f32 %v5086, 0.0
        %v5367 = vmax.f32 %v5356, 0.0
        %v5368 = vmax.f32 %v4819, 0.0
        %v5369 = vmax.f32 %v5089, 0.0
        %v5370 = vmax.f32 %v5359, 0.0
        %vm5380 = vcmask 1040384
        %v5381 = vrot.slane %v5362, 7
        %v5382 = vrot.slane %v5363, 7
        %v5383 = vrot.slane %v5364, 7
        %v5384 = vrot.slane %v5365, 7
        %v5385 = vsel %vm5380, %v5381, %v5384
        %v5386 = vrot.slane %v5366, 7
        %v5387 = vsel %vm5380, %v5382, %v5386
        %v5388 = vrot.slane %v5367, 7
        %v5389 = vsel %vm5380, %v5383, %v5388
        %v5390 = vrot.slane %v5368, 7
        %v5391 = vsel %vm5380, %v5384, %v5390
        %v5392 = vrot.slane %v5369, 7
        %v5393 = vsel %vm5380, %v5386, %v5392
        %v5394 = vrot.slane %v5370, 7
        %v5395 = vsel %vm5380, %v5388, %v5394
        %5405 = vst [vmem:[#allocation3] sm:$0xfe] %v5381
        %5406 = vst [vmem:[#allocation3 + $0x8] sm:$0xfe] %v5382
        %5407 = vst [vmem:[#allocation3 + $0x10] sm:$0xfe] %v5383
        %5408 = vst [vmem:[#allocation3 + $0x18] sm:$0xff] %v5385
        %5409 = vst [vmem:[#allocation3 + $0x20] sm:$0xff] %v5387
        %5410 = vst [vmem:[#allocation3 + $0x28] sm:$0xff] %v5389
        %5411 = vst [vmem:[#allocation3 + $0x30] sm:$0x3f] %v5391
        %5412 = vst [vmem:[#allocation3 + $0x38] sm:$0x3f] %v5393
        %5413 = vst [vmem:[#allocation3 + $0x40] sm:$0x3f] %v5395
        %5414 = vst [vmem:[#allocation4] sm:$0xff] 0.0
        %5415 = vst [vmem:[#allocation4 + $0x8] sm:$0x1] 0.0
        %v5416 = vld [vmem:[#allocation3] ss:$8 sm:$0x7]
        %v5418 = vperm.slane %v5416, 0
        %v5419 = vperm.slane %v5416, 1
        %v5420 = vperm.slane %v5416, 2
        %v5424 = vpack.c.bf16 %v5419, %v5418
        %v5425 = vpack.c.bf16 %v5420, %v5420
        %s5426 = scalar_lea.vmem [#allocation3], 1
        %v5427 = vld [vmem:[%s5426] ss:$8 sm:$0x7]
        %v5429 = vperm.slane %v5427, 0
        %v5430 = vperm.slane %v5427, 1
        %v5431 = vperm.slane %v5427, 2
        %v5435 = vpack.c.bf16 %v5430, %v5429
        %v5436 = vpack.c.bf16 %v5431, %v5431
        %s5437 = scalar_lea.vmem [#allocation3], 2
        %v5438 = vld [vmem:[%s5437] ss:$8 sm:$0x7]
        %v5440 = vperm.slane %v5438, 0
        %v5441 = vperm.slane %v5438, 1
        %v5442 = vperm.slane %v5438, 2
        %v5446 = vpack.c.bf16 %v5441, %v5440
        %v5447 = vpack.c.bf16 %v5442, %v5442
        %v5450 = vunpack.c.l.b16 %v5424
        %v5451 = vunpack.c.h.b16 %v5424
        %v5452 = vunpack.c.l.b16 %v5425
        %v5453 = vpack.c.b16 %v5450, %v5450
        %v5454 = vpack.c.b16 %v5451, %v5451
        %v5455 = vpack.c.b16 %v5452, %v5452
        %v5461 = vunpack.c.l.b16 %v5435
        %v5462 = vunpack.c.h.b16 %v5435
        %v5463 = vunpack.c.l.b16 %v5436
        %v5464 = vpack.c.b16 %v5461, %v5461
        %v5465 = vpack.c.b16 %v5462, %v5462
        %v5466 = vpack.c.b16 %v5463, %v5463
        %v5472 = vunpack.c.l.b16 %v5446
        %v5473 = vunpack.c.h.b16 %v5446
        %v5474 = vunpack.c.l.b16 %v5447
        %v5475 = vpack.c.b16 %v5472, %v5472
        %v5476 = vpack.c.b16 %v5473, %v5473
        %v5477 = vpack.c.b16 %v5474, %v5474
        %v5481 = vld [vmem:[#allocation12] sm:$0xf]
        %v5482 = vld [vmem:[#allocation12 + $0x4] sm:$0xf]
        %v5483 = vld [vmem:[#allocation12 + $0x8] sm:$0xf]
        %v5484 = vld [vmem:[#allocation12 + $0xc] sm:$0xf]
        %v5485 = vld [vmem:[#allocation12 + $0x10] sm:$0xf]
        %v5486 = vld [vmem:[#allocation12 + $0x14] sm:$0xf]
        %v5487 = vld [vmem:[#allocation12 + $0x18] sm:$0xf]
        %v5488 = vld [vmem:[#allocation12 + $0x1c] sm:$0xf]
        %v5489 = vld [vmem:[#allocation12 + $0x20] sm:$0xf]
        %v5490 = vld [vmem:[#allocation12 + $0x24] sm:$0xf]
        %v5491 = vld [vmem:[#allocation12 + $0x28] sm:$0xf]
        %v5492 = vld [vmem:[#allocation12 + $0x2c] sm:$0xf]
        %v5493 = vld [vmem:[#allocation12 + $0x30] sm:$0xf]
        %v5494 = vld [vmem:[#allocation12 + $0x34] sm:$0xf]
        %v5495 = vld [vmem:[#allocation12 + $0x38] sm:$0xf]
        %v5496 = vld [vmem:[#allocation12 + $0x3c] sm:$0xf]
        %v5497 = vld [vmem:[#allocation12 + $0x40] sm:$0xf]
        %v5498 = vld [vmem:[#allocation12 + $0x44] sm:$0xf]
        %v5499 = vld [vmem:[#allocation12 + $0x48] sm:$0xf]
        %v5500 = vld [vmem:[#allocation12 + $0x4c] sm:$0xf]
        %v5501 = vld [vmem:[#allocation12 + $0x50] sm:$0xf]
        %v5502 = vld [vmem:[#allocation12 + $0x54] sm:$0xf]
        %v5503 = vld [vmem:[#allocation12 + $0x58] sm:$0xf]
        %v5504 = vld [vmem:[#allocation12 + $0x5c] sm:$0xf]
        %v5505 = vld [vmem:[#allocation12 + $0x60] sm:$0xf]
        %v5506 = vld [vmem:[#allocation12 + $0x64] sm:$0xf]
        %v5507 = vld [vmem:[#allocation12 + $0x68] sm:$0xf]
        %v5508 = vld [vmem:[#allocation12 + $0x6c] sm:$0xf]
        %v5509 = vld [vmem:[#allocation12 + $0x70] sm:$0xf]
        %v5510 = vld [vmem:[#allocation12 + $0x74] sm:$0xf]
        %v5511 = vld [vmem:[#allocation12 + $0x78] sm:$0xf]
        %v5512 = vld [vmem:[#allocation12 + $0x7c] sm:$0xf]
        %v5513 = vld [vmem:[#allocation12 + $0x80] sm:$0xf]
        %v5514 = vld [vmem:[#allocation12 + $0x84] sm:$0xf]
        %v5515 = vld [vmem:[#allocation12 + $0x88] sm:$0xf]
        %v5516 = vld [vmem:[#allocation12 + $0x8c] sm:$0xf]
        %v5517 = vld [vmem:[#allocation12 + $0x90] sm:$0xf]
        %v5518 = vld [vmem:[#allocation12 + $0x94] sm:$0xf]
        %v5519 = vld [vmem:[#allocation12 + $0x98] sm:$0xf]
        %v5520 = vld [vmem:[#allocation12 + $0x9c] sm:$0xf]
        %v5521 = vld [vmem:[#allocation12 + $0xa0] sm:$0xf]
        %v5522 = vld [vmem:[#allocation12 + $0xa4] sm:$0xf]
        %v5523 = vld [vmem:[#allocation12 + $0xa8] sm:$0xf]
        %v5524 = vld [vmem:[#allocation12 + $0xac] sm:$0xf]
        %v5525 = vld [vmem:[#allocation12 + $0xb0] sm:$0xf]
        %v5526 = vld [vmem:[#allocation12 + $0xb4] sm:$0xf]
        %v5527 = vld [vmem:[#allocation12 + $0xb8] sm:$0xf]
        %v5528 = vld [vmem:[#allocation12 + $0xbc] sm:$0xf]
        %v5529 = vld [vmem:[#allocation12 + $0xc0] sm:$0xf]
        %v5530 = vld [vmem:[#allocation12 + $0xc4] sm:$0xf]
        %v5531 = vld [vmem:[#allocation12 + $0xc8] sm:$0xf]
        %v5532 = vld [vmem:[#allocation12 + $0xcc] sm:$0xf]
        %v5533 = vld [vmem:[#allocation12 + $0xd0] sm:$0xf]
        %v5534 = vld [vmem:[#allocation12 + $0xd4] sm:$0xf]
        %v5535 = vld [vmem:[#allocation12 + $0xd8] sm:$0xf]
        %v5536 = vld [vmem:[#allocation12 + $0xdc] sm:$0xf]
        %v5537 = vld [vmem:[#allocation12 + $0xe0] sm:$0xf]
        %v5538 = vld [vmem:[#allocation12 + $0xe4] sm:$0xf]
        %v5539 = vld [vmem:[#allocation12 + $0xe8] sm:$0xf]
        %v5540 = vld [vmem:[#allocation12 + $0xec] sm:$0xf]
        %v5541 = vld [vmem:[#allocation12 + $0xf0] sm:$0xf]
        %v5542 = vld [vmem:[#allocation12 + $0xf4] sm:$0xf]
        %v5543 = vld [vmem:[#allocation12 + $0xf8] sm:$0xf]
        %v5544 = vld [vmem:[#allocation12 + $0xfc] sm:$0xf]
        %v5545 = vld [vmem:[#allocation12 + $0x100] sm:$0xf]
        %v5546 = vld [vmem:[#allocation12 + $0x104] sm:$0xf]
        %v5547 = vld [vmem:[#allocation12 + $0x108] sm:$0xf]
        %v5548 = vld [vmem:[#allocation12 + $0x10c] sm:$0xf]
        %v5549 = vld [vmem:[#allocation12 + $0x110] sm:$0xf]
        %v5550 = vld [vmem:[#allocation12 + $0x114] sm:$0xf]
        %v5551 = vld [vmem:[#allocation12 + $0x118] sm:$0xf]
        %v5552 = vld [vmem:[#allocation12 + $0x11c] sm:$0xf]
        %v5553 = vld [vmem:[#allocation12 + $0x120] sm:$0xf]
        %v5554 = vld [vmem:[#allocation12 + $0x124] sm:$0xf]
        %v5555 = vld [vmem:[#allocation12 + $0x128] sm:$0xf]
        %v5556 = vld [vmem:[#allocation12 + $0x12c] sm:$0xf]
        %v5557 = vld [vmem:[#allocation12 + $0x130] sm:$0xf]
        %v5558 = vld [vmem:[#allocation12 + $0x134] sm:$0xf]
        %v5559 = vld [vmem:[#allocation12 + $0x138] sm:$0xf]
        %v5560 = vld [vmem:[#allocation12 + $0x13c] sm:$0xf]
        %v5561 = vld [vmem:[#allocation12 + $0x140] sm:$0xf]
        %v5562 = vld [vmem:[#allocation12 + $0x144] sm:$0xf]
        %v5563 = vld [vmem:[#allocation12 + $0x148] sm:$0xf]
        %v5564 = vld [vmem:[#allocation12 + $0x14c] sm:$0xf]
        %v5565 = vld [vmem:[#allocation12 + $0x150] sm:$0xf]
        %v5566 = vld [vmem:[#allocation12 + $0x154] sm:$0xf]
        %v5567 = vld [vmem:[#allocation12 + $0x158] sm:$0xf]
        %v5568 = vld [vmem:[#allocation12 + $0x15c] sm:$0xf]
        %v5569 = vld [vmem:[#allocation12 + $0x160] sm:$0xf]
        %v5570 = vld [vmem:[#allocation12 + $0x164] sm:$0xf]
        %v5571 = vld [vmem:[#allocation12 + $0x168] sm:$0xf]
        %v5572 = vld [vmem:[#allocation12 + $0x16c] sm:$0xf]
        %v5573 = vld [vmem:[#allocation12 + $0x170] sm:$0xf]
        %v5574 = vld [vmem:[#allocation12 + $0x174] sm:$0xf]
        %v5575 = vld [vmem:[#allocation12 + $0x178] sm:$0xf]
        %v5576 = vld [vmem:[#allocation12 + $0x17c] sm:$0xf]
        %v5577 = vld [vmem:[#allocation12 + $0x180] sm:$0xf]
        %v5578 = vld [vmem:[#allocation12 + $0x184] sm:$0xf]
        %v5579 = vld [vmem:[#allocation12 + $0x188] sm:$0xf]
        %v5580 = vld [vmem:[#allocation12 + $0x18c] sm:$0xf]
        %v5581 = vld [vmem:[#allocation12 + $0x190] sm:$0xf]
        %v5582 = vld [vmem:[#allocation12 + $0x194] sm:$0xf]
        %v5583 = vld [vmem:[#allocation12 + $0x198] sm:$0xf]
        %v5584 = vld [vmem:[#allocation12 + $0x19c] sm:$0xf]
        %v5585 = vld [vmem:[#allocation12 + $0x1a0] sm:$0xf]
        %v5586 = vld [vmem:[#allocation12 + $0x1a4] sm:$0xf]
        %v5587 = vld [vmem:[#allocation12 + $0x1a8] sm:$0xf]
        %v5588 = vld [vmem:[#allocation12 + $0x1ac] sm:$0xf]
        %v5589 = vld [vmem:[#allocation12 + $0x1b0] sm:$0xf]
        %v5590 = vld [vmem:[#allocation12 + $0x1b4] sm:$0xf]
        %v5591 = vld [vmem:[#allocation12 + $0x1b8] sm:$0xf]
        %v5592 = vld [vmem:[#allocation12 + $0x1bc] sm:$0xf]
        %v5593 = vld [vmem:[#allocation12 + $0x1c0] sm:$0xf]
        %v5594 = vld [vmem:[#allocation12 + $0x1c4] sm:$0xf]
        %v5595 = vld [vmem:[#allocation12 + $0x1c8] sm:$0xf]
        %v5596 = vld [vmem:[#allocation12 + $0x1cc] sm:$0xf]
        %v5597 = vld [vmem:[#allocation12 + $0x1d0] sm:$0xf]
        %v5598 = vld [vmem:[#allocation12 + $0x1d4] sm:$0xf]
        %v5599 = vld [vmem:[#allocation12 + $0x1d8] sm:$0xf]
        %v5600 = vld [vmem:[#allocation12 + $0x1dc] sm:$0xf]
        %v5601 = vld [vmem:[#allocation12 + $0x1e0] sm:$0xf]
        %v5602 = vld [vmem:[#allocation12 + $0x1e4] sm:$0xf]
        %v5603 = vld [vmem:[#allocation12 + $0x1e8] sm:$0xf]
        %v5604 = vld [vmem:[#allocation12 + $0x1ec] sm:$0xf]
        %v5605 = vld [vmem:[#allocation12 + $0x1f0] sm:$0xf]
        %v5606 = vld [vmem:[#allocation12 + $0x1f4] sm:$0xf]
        %v5607 = vld [vmem:[#allocation12 + $0x1f8] sm:$0xf]
        %v5608 = vld [vmem:[#allocation12 + $0x1fc] sm:$0xf]
        %v5609 = vld [vmem:[#allocation12 + $0x200] sm:$0xf]
        %v5610 = vld [vmem:[#allocation12 + $0x204] sm:$0xf]
        %v5611 = vld [vmem:[#allocation12 + $0x208] sm:$0xf]
        %v5612 = vld [vmem:[#allocation12 + $0x20c] sm:$0xf]
        %v5613 = vld [vmem:[#allocation12 + $0x210] sm:$0xf]
        %v5614 = vld [vmem:[#allocation12 + $0x214] sm:$0xf]
        %v5615 = vld [vmem:[#allocation12 + $0x218] sm:$0xf]
        %v5616 = vld [vmem:[#allocation12 + $0x21c] sm:$0xf]
        %v5617 = vld [vmem:[#allocation12 + $0x220] sm:$0xf]
        %v5618 = vld [vmem:[#allocation12 + $0x224] sm:$0xf]
        %v5619 = vld [vmem:[#allocation12 + $0x228] sm:$0xf]
        %v5620 = vld [vmem:[#allocation12 + $0x22c] sm:$0xf]
        %v5621 = vld [vmem:[#allocation12 + $0x230] sm:$0xf]
        %v5622 = vld [vmem:[#allocation12 + $0x234] sm:$0xf]
        %v5623 = vld [vmem:[#allocation12 + $0x238] sm:$0xf]
        %v5624 = vld [vmem:[#allocation12 + $0x23c] sm:$0xf]
        %v5625 = vld [vmem:[#allocation21] sm:$0x1]
        %v5770 = vunpack.c.l.b16 %v5481
        %v5771 = vunpack.c.l.b16 %v5482
        %v5772 = vunpack.c.l.b16 %v5483
        %v5773 = vunpack.c.l.b16 %v5484
        %v5774 = vunpack.c.l.b16 %v5485
        %v5775 = vunpack.c.l.b16 %v5486
        %v5776 = vunpack.c.l.b16 %v5487
        %v5777 = vunpack.c.l.b16 %v5488
        %v5778 = vunpack.c.l.b16 %v5489
        %v5779 = vunpack.c.l.b16 %v5490
        %v5780 = vunpack.c.l.b16 %v5491
        %v5781 = vunpack.c.l.b16 %v5492
        %v5782 = vunpack.c.l.b16 %v5493
        %v5783 = vunpack.c.l.b16 %v5494
        %v5784 = vunpack.c.l.b16 %v5495
        %v5785 = vunpack.c.l.b16 %v5496
        %v5786 = vunpack.c.l.b16 %v5497
        %v5787 = vunpack.c.l.b16 %v5498
        %v5788 = vunpack.c.l.b16 %v5499
        %v5789 = vunpack.c.l.b16 %v5500
        %v5790 = vunpack.c.l.b16 %v5501
        %v5791 = vunpack.c.l.b16 %v5502
        %v5792 = vunpack.c.l.b16 %v5503
        %v5793 = vunpack.c.l.b16 %v5504
        %v5794 = vunpack.c.l.b16 %v5505
        %v5795 = vunpack.c.l.b16 %v5506
        %v5796 = vunpack.c.l.b16 %v5507
        %v5797 = vunpack.c.l.b16 %v5508
        %v5798 = vunpack.c.l.b16 %v5509
        %v5799 = vunpack.c.l.b16 %v5510
        %v5800 = vunpack.c.l.b16 %v5511
        %v5801 = vunpack.c.l.b16 %v5512
        %v5802 = vunpack.c.l.b16 %v5513
        %v5803 = vunpack.c.l.b16 %v5514
        %v5804 = vunpack.c.l.b16 %v5515
        %v5805 = vunpack.c.l.b16 %v5516
        %v5806 = vunpack.c.l.b16 %v5517
        %v5807 = vunpack.c.l.b16 %v5518
        %v5808 = vunpack.c.l.b16 %v5519
        %v5809 = vunpack.c.l.b16 %v5520
        %v5810 = vunpack.c.l.b16 %v5521
        %v5811 = vunpack.c.l.b16 %v5522
        %v5812 = vunpack.c.l.b16 %v5523
        %v5813 = vunpack.c.l.b16 %v5524
        %v5814 = vunpack.c.l.b16 %v5525
        %v5815 = vunpack.c.l.b16 %v5526
        %v5816 = vunpack.c.l.b16 %v5527
        %v5817 = vunpack.c.l.b16 %v5528
        %v5818 = vunpack.c.l.b16 %v5529
        %v5819 = vunpack.c.l.b16 %v5530
        %v5820 = vunpack.c.l.b16 %v5531
        %v5821 = vunpack.c.l.b16 %v5532
        %v5822 = vunpack.c.l.b16 %v5533
        %v5823 = vunpack.c.l.b16 %v5534
        %v5824 = vunpack.c.l.b16 %v5535
        %v5825 = vunpack.c.l.b16 %v5536
        %v5826 = vunpack.c.l.b16 %v5537
        %v5827 = vunpack.c.l.b16 %v5538
        %v5828 = vunpack.c.l.b16 %v5539
        %v5829 = vunpack.c.l.b16 %v5540
        %v5830 = vunpack.c.l.b16 %v5541
        %v5831 = vunpack.c.l.b16 %v5542
        %v5832 = vunpack.c.l.b16 %v5543
        %v5833 = vunpack.c.l.b16 %v5544
        %v5834 = vunpack.c.l.b16 %v5545
        %v5835 = vunpack.c.l.b16 %v5546
        %v5836 = vunpack.c.l.b16 %v5547
        %v5837 = vunpack.c.l.b16 %v5548
        %v5838 = vunpack.c.l.b16 %v5549
        %v5839 = vunpack.c.l.b16 %v5550
        %v5840 = vunpack.c.l.b16 %v5551
        %v5841 = vunpack.c.l.b16 %v5552
        %v5842 = vunpack.c.l.b16 %v5553
        %v5843 = vunpack.c.l.b16 %v5554
        %v5844 = vunpack.c.l.b16 %v5555
        %v5845 = vunpack.c.l.b16 %v5556
        %v5846 = vunpack.c.l.b16 %v5557
        %v5847 = vunpack.c.l.b16 %v5558
        %v5848 = vunpack.c.l.b16 %v5559
        %v5849 = vunpack.c.l.b16 %v5560
        %v5850 = vunpack.c.l.b16 %v5561
        %v5851 = vunpack.c.l.b16 %v5562
        %v5852 = vunpack.c.l.b16 %v5563
        %v5853 = vunpack.c.l.b16 %v5564
        %v5854 = vunpack.c.l.b16 %v5565
        %v5855 = vunpack.c.l.b16 %v5566
        %v5856 = vunpack.c.l.b16 %v5567
        %v5857 = vunpack.c.l.b16 %v5568
        %v5858 = vunpack.c.l.b16 %v5569
        %v5859 = vunpack.c.l.b16 %v5570
        %v5860 = vunpack.c.l.b16 %v5571
        %v5861 = vunpack.c.l.b16 %v5572
        %v5862 = vunpack.c.l.b16 %v5573
        %v5863 = vunpack.c.l.b16 %v5574
        %v5864 = vunpack.c.l.b16 %v5575
        %v5865 = vunpack.c.l.b16 %v5576
        %v5866 = vunpack.c.l.b16 %v5577
        %v5867 = vunpack.c.l.b16 %v5578
        %v5868 = vunpack.c.l.b16 %v5579
        %v5869 = vunpack.c.l.b16 %v5580
        %v5870 = vunpack.c.l.b16 %v5581
        %v5871 = vunpack.c.l.b16 %v5582
        %v5872 = vunpack.c.l.b16 %v5583
        %v5873 = vunpack.c.l.b16 %v5584
        %v5874 = vunpack.c.l.b16 %v5585
        %v5875 = vunpack.c.l.b16 %v5586
        %v5876 = vunpack.c.l.b16 %v5587
        %v5877 = vunpack.c.l.b16 %v5588
        %v5878 = vunpack.c.l.b16 %v5589
        %v5879 = vunpack.c.l.b16 %v5590
        %v5880 = vunpack.c.l.b16 %v5591
        %v5881 = vunpack.c.l.b16 %v5592
        %v5882 = vunpack.c.l.b16 %v5593
        %v5883 = vunpack.c.l.b16 %v5594
        %v5884 = vunpack.c.l.b16 %v5595
        %v5885 = vunpack.c.l.b16 %v5596
        %v5886 = vunpack.c.l.b16 %v5597
        %v5887 = vunpack.c.l.b16 %v5598
        %v5888 = vunpack.c.l.b16 %v5599
        %v5889 = vunpack.c.l.b16 %v5600
        %v5890 = vunpack.c.l.b16 %v5601
        %v5891 = vunpack.c.l.b16 %v5602
        %v5892 = vunpack.c.l.b16 %v5603
        %v5893 = vunpack.c.l.b16 %v5604
        %v5894 = vunpack.c.l.b16 %v5605
        %v5895 = vunpack.c.l.b16 %v5606
        %v5896 = vunpack.c.l.b16 %v5607
        %v5897 = vunpack.c.l.b16 %v5608
        %v5898 = vunpack.c.l.b16 %v5609
        %v5899 = vunpack.c.l.b16 %v5610
        %v5900 = vunpack.c.l.b16 %v5611
        %v5901 = vunpack.c.l.b16 %v5612
        %v5902 = vunpack.c.l.b16 %v5613
        %v5903 = vunpack.c.l.b16 %v5614
        %v5904 = vunpack.c.l.b16 %v5615
        %v5905 = vunpack.c.l.b16 %v5616
        %v5906 = vunpack.c.l.b16 %v5617
        %v5907 = vunpack.c.l.b16 %v5618
        %v5908 = vunpack.c.l.b16 %v5619
        %v5909 = vunpack.c.l.b16 %v5620
        %v5910 = vunpack.c.l.b16 %v5621
        %v5911 = vunpack.c.l.b16 %v5622
        %v5912 = vunpack.c.l.b16 %v5623
        %v5913 = vunpack.c.l.b16 %v5624
        %v5914 = vpack.c.b16 %v5771, %v5770
        %v5915 = vpack.c.b16 %v5773, %v5772
        %v5916 = vpack.c.b16 %v5775, %v5774
        %v5917 = vpack.c.b16 %v5777, %v5776
        %v5918 = vpack.c.b16 %v5779, %v5778
        %v5919 = vpack.c.b16 %v5781, %v5780
        %v5920 = vpack.c.b16 %v5783, %v5782
        %v5921 = vpack.c.b16 %v5785, %v5784
        %v5922 = vpack.c.b16 %v5787, %v5786
        %v5923 = vpack.c.b16 %v5789, %v5788
        %v5924 = vpack.c.b16 %v5791, %v5790
        %v5925 = vpack.c.b16 %v5793, %v5792
        %v5926 = vpack.c.b16 %v5795, %v5794
        %v5927 = vpack.c.b16 %v5797, %v5796
        %v5928 = vpack.c.b16 %v5799, %v5798
        %v5929 = vpack.c.b16 %v5801, %v5800
        %v5930 = vpack.c.b16 %v5803, %v5802
        %v5931 = vpack.c.b16 %v5805, %v5804
        %v5932 = vpack.c.b16 %v5807, %v5806
        %v5933 = vpack.c.b16 %v5809, %v5808
        %v5934 = vpack.c.b16 %v5811, %v5810
        %v5935 = vpack.c.b16 %v5813, %v5812
        %v5936 = vpack.c.b16 %v5815, %v5814
        %v5937 = vpack.c.b16 %v5817, %v5816
        %v5938 = vpack.c.b16 %v5819, %v5818
        %v5939 = vpack.c.b16 %v5821, %v5820
        %v5940 = vpack.c.b16 %v5823, %v5822
        %v5941 = vpack.c.b16 %v5825, %v5824
        %v5942 = vpack.c.b16 %v5827, %v5826
        %v5943 = vpack.c.b16 %v5829, %v5828
        %v5944 = vpack.c.b16 %v5831, %v5830
        %v5945 = vpack.c.b16 %v5833, %v5832
        %v5946 = vpack.c.b16 %v5835, %v5834
        %v5947 = vpack.c.b16 %v5837, %v5836
        %v5948 = vpack.c.b16 %v5839, %v5838
        %v5949 = vpack.c.b16 %v5841, %v5840
        %v5950 = vpack.c.b16 %v5843, %v5842
        %v5951 = vpack.c.b16 %v5845, %v5844
        %v5952 = vpack.c.b16 %v5847, %v5846
        %v5953 = vpack.c.b16 %v5849, %v5848
        %v5954 = vpack.c.b16 %v5851, %v5850
        %v5955 = vpack.c.b16 %v5853, %v5852
        %v5956 = vpack.c.b16 %v5855, %v5854
        %v5957 = vpack.c.b16 %v5857, %v5856
        %v5958 = vpack.c.b16 %v5859, %v5858
        %v5959 = vpack.c.b16 %v5861, %v5860
        %v5960 = vpack.c.b16 %v5863, %v5862
        %v5961 = vpack.c.b16 %v5865, %v5864
        %v5962 = vpack.c.b16 %v5867, %v5866
        %v5963 = vpack.c.b16 %v5869, %v5868
        %v5964 = vpack.c.b16 %v5871, %v5870
        %v5965 = vpack.c.b16 %v5873, %v5872
        %v5966 = vpack.c.b16 %v5875, %v5874
        %v5967 = vpack.c.b16 %v5877, %v5876
        %v5968 = vpack.c.b16 %v5879, %v5878
        %v5969 = vpack.c.b16 %v5881, %v5880
        %v5970 = vpack.c.b16 %v5883, %v5882
        %v5971 = vpack.c.b16 %v5885, %v5884
        %v5972 = vpack.c.b16 %v5887, %v5886
        %v5973 = vpack.c.b16 %v5889, %v5888
        %v5974 = vpack.c.b16 %v5891, %v5890
        %v5975 = vpack.c.b16 %v5893, %v5892
        %v5976 = vpack.c.b16 %v5895, %v5894
        %v5977 = vpack.c.b16 %v5897, %v5896
        %v5978 = vpack.c.b16 %v5899, %v5898
        %v5979 = vpack.c.b16 %v5901, %v5900
        %v5980 = vpack.c.b16 %v5903, %v5902
        %v5981 = vpack.c.b16 %v5905, %v5904
        %v5982 = vpack.c.b16 %v5907, %v5906
        %v5983 = vpack.c.b16 %v5909, %v5908
        %v5984 = vpack.c.b16 %v5911, %v5910
        %v5985 = vpack.c.b16 %v5913, %v5912
        %6058 = vmatpush.bf16.msra.mxu0 %v5921
        %6059 = vmatpush.bf16.msra.mxu0 %v5920
        %6060 = vmatpush.bf16.msra.mxu0 %v5919
        %6061 = vmatpush.bf16.msra.mxu0 %v5918
        %6062 = vmatpush.bf16.msra.mxu0 %v5917
        %6063 = vmatpush.bf16.msra.mxu0 %v5916
        %6064 = vmatpush.bf16.msra.mxu0 %v5915
        %6065 = vmatpush.bf16.msra.mxu0 %v5914
        %6066 = vmatmul.bf16.gmra.mxu0 %v5453
        %v6067 = vpop.f32.mrf.mxu0
        %v6068 = vadd.f32 %v5625, %v6067
        %v6069 = vpop.f32.mrf.mxu0
        %6070 = vdwg.mxu0
        %6071 = vmatpush.bf16.msra.mxu0 %v5929
        %6072 = vmatpush.bf16.msra.mxu0 %v5928
        %6073 = vmatpush.bf16.msra.mxu0 %v5927
        %6074 = vmatpush.bf16.msra.mxu0 %v5926
        %6075 = vmatpush.bf16.msra.mxu0 %v5925
        %6076 = vmatpush.bf16.msra.mxu0 %v5924
        %6077 = vmatpush.bf16.msra.mxu0 %v5923
        %6078 = vmatpush.bf16.msra.mxu0 %v5922
        %6079 = vmatmul.bf16.gmra.mxu0 %v5454
        %v6080 = vpop.f32.mrf.mxu0
        %v6081 = vadd.f32 %v6068, %v6080
        %v6082 = vpop.f32.mrf.mxu0
        %6083 = vdwg.mxu0
        %6084 = vmatpush.bf16.msra.mxu0 %v5937
        %6085 = vmatpush.bf16.msra.mxu0 %v5936
        %6086 = vmatpush.bf16.msra.mxu0 %v5935
        %6087 = vmatpush.bf16.msra.mxu0 %v5934
        %6088 = vmatpush.bf16.msra.mxu0 %v5933
        %6089 = vmatpush.bf16.msra.mxu0 %v5932
        %6090 = vmatpush.bf16.msra.mxu0 %v5931
        %6091 = vmatpush.bf16.msra.mxu0 %v5930
        %6092 = vmatmul.bf16.gmra.mxu0 %v5455
        %v6093 = vpop.f32.mrf.mxu0
        %v6094 = vadd.f32 %v6081, %v6093
        %v6095 = vpop.f32.mrf.mxu0
        %6096 = vdwg.mxu0
        %6097 = vmatpush.bf16.msra.mxu0 %v5945
        %6098 = vmatpush.bf16.msra.mxu0 %v5944
        %6099 = vmatpush.bf16.msra.mxu0 %v5943
        %6100 = vmatpush.bf16.msra.mxu0 %v5942
        %6101 = vmatpush.bf16.msra.mxu0 %v5941
        %6102 = vmatpush.bf16.msra.mxu0 %v5940
        %6103 = vmatpush.bf16.msra.mxu0 %v5939
        %6104 = vmatpush.bf16.msra.mxu0 %v5938
        %6105 = vmatmul.bf16.gmra.mxu0 %v5464
        %v6106 = vpop.f32.mrf.mxu0
        %v6107 = vadd.f32 %v6094, %v6106
        %v6108 = vpop.f32.mrf.mxu0
        %6109 = vdwg.mxu0
        %6110 = vmatpush.bf16.msra.mxu0 %v5953
        %6111 = vmatpush.bf16.msra.mxu0 %v5952
        %6112 = vmatpush.bf16.msra.mxu0 %v5951
        %6113 = vmatpush.bf16.msra.mxu0 %v5950
        %6114 = vmatpush.bf16.msra.mxu0 %v5949
        %6115 = vmatpush.bf16.msra.mxu0 %v5948
        %6116 = vmatpush.bf16.msra.mxu0 %v5947
        %6117 = vmatpush.bf16.msra.mxu0 %v5946
        %6118 = vmatmul.bf16.gmra.mxu0 %v5465
        %v6119 = vpop.f32.mrf.mxu0
        %v6120 = vadd.f32 %v6107, %v6119
        %v6121 = vpop.f32.mrf.mxu0
        %6122 = vdwg.mxu0
        %6123 = vmatpush.bf16.msra.mxu0 %v5961
        %6124 = vmatpush.bf16.msra.mxu0 %v5960
        %6125 = vmatpush.bf16.msra.mxu0 %v5959
        %6126 = vmatpush.bf16.msra.mxu0 %v5958
        %6127 = vmatpush.bf16.msra.mxu0 %v5957
        %6128 = vmatpush.bf16.msra.mxu0 %v5956
        %6129 = vmatpush.bf16.msra.mxu0 %v5955
        %6130 = vmatpush.bf16.msra.mxu0 %v5954
        %6131 = vmatmul.bf16.gmra.mxu0 %v5466
        %v6132 = vpop.f32.mrf.mxu0
        %v6133 = vadd.f32 %v6120, %v6132
        %v6134 = vpop.f32.mrf.mxu0
        %6135 = vdwg.mxu0
        %6136 = vmatpush.bf16.msra.mxu0 %v5969
        %6137 = vmatpush.bf16.msra.mxu0 %v5968
        %6138 = vmatpush.bf16.msra.mxu0 %v5967
        %6139 = vmatpush.bf16.msra.mxu0 %v5966
        %6140 = vmatpush.bf16.msra.mxu0 %v5965
        %6141 = vmatpush.bf16.msra.mxu0 %v5964
        %6142 = vmatpush.bf16.msra.mxu0 %v5963
        %6143 = vmatpush.bf16.msra.mxu0 %v5962
        %6144 = vmatmul.bf16.gmra.mxu0 %v5475
        %v6145 = vpop.f32.mrf.mxu0
        %v6146 = vadd.f32 %v6133, %v6145
        %v6147 = vpop.f32.mrf.mxu0
        %6148 = vdwg.mxu0
        %6149 = vmatpush.bf16.msra.mxu0 %v5977
        %6150 = vmatpush.bf16.msra.mxu0 %v5976
        %6151 = vmatpush.bf16.msra.mxu0 %v5975
        %6152 = vmatpush.bf16.msra.mxu0 %v5974
        %6153 = vmatpush.bf16.msra.mxu0 %v5973
        %6154 = vmatpush.bf16.msra.mxu0 %v5972
        %6155 = vmatpush.bf16.msra.mxu0 %v5971
        %6156 = vmatpush.bf16.msra.mxu0 %v5970
        %6157 = vmatmul.bf16.gmra.mxu0 %v5476
        %v6158 = vpop.f32.mrf.mxu0
        %v6159 = vadd.f32 %v6146, %v6158
        %v6160 = vpop.f32.mrf.mxu0
        %6161 = vdwg.mxu0
        %6162 = vmatpush.bf16.msra.mxu0 %v5985
        %6163 = vmatpush.bf16.msra.mxu0 %v5984
        %6164 = vmatpush.bf16.msra.mxu0 %v5983
        %6165 = vmatpush.bf16.msra.mxu0 %v5982
        %6166 = vmatpush.bf16.msra.mxu0 %v5981
        %6167 = vmatpush.bf16.msra.mxu0 %v5980
        %6168 = vmatpush.bf16.msra.mxu0 %v5979
        %6169 = vmatpush.bf16.msra.mxu0 %v5978
        %6170 = vmatmul.bf16.gmra.mxu0 %v5477
        %v6171 = vpop.f32.mrf.mxu0
        %v6172 = vadd.f32 %v6159, %v6171
        %v6173 = vpop.f32.mrf.mxu0
        %6174 = vdwg.mxu0
        %v6175 = vmax.f32 %v6172, 0.0
        %6176 = vst [vmem:[#allocation4 + $0x1] sm:$0x1] %v6175
        %s6177 = scalar_lea.vmem [#allocation3], 3
        %v6178 = vld [vmem:[%s6177] ss:$8 sm:$0x7]
        %v6180 = vperm.slane %v6178, 0
        %v6181 = vperm.slane %v6178, 1
        %v6182 = vperm.slane %v6178, 2
        %v6186 = vpack.c.bf16 %v6181, %v6180
        %v6187 = vpack.c.bf16 %v6182, %v6182
        %s6188 = scalar_lea.vmem [#allocation3], 4
        %v6189 = vld [vmem:[%s6188] ss:$8 sm:$0x7]
        %v6191 = vperm.slane %v6189, 0
        %v6192 = vperm.slane %v6189, 1
        %v6193 = vperm.slane %v6189, 2
        %v6197 = vpack.c.bf16 %v6192, %v6191
        %v6198 = vpack.c.bf16 %v6193, %v6193
        %s6199 = scalar_lea.vmem [#allocation3], 5
        %v6200 = vld [vmem:[%s6199] ss:$8 sm:$0x7]
        %v6202 = vperm.slane %v6200, 0
        %v6203 = vperm.slane %v6200, 1
        %v6204 = vperm.slane %v6200, 2
        %v6208 = vpack.c.bf16 %v6203, %v6202
        %v6209 = vpack.c.bf16 %v6204, %v6204
        %v6212 = vunpack.c.l.b16 %v6186
        %v6213 = vunpack.c.h.b16 %v6186
        %v6214 = vunpack.c.l.b16 %v6187
        %v6215 = vpack.c.b16 %v6212, %v6212
        %v6216 = vpack.c.b16 %v6213, %v6213
        %v6217 = vpack.c.b16 %v6214, %v6214
        %v6223 = vunpack.c.l.b16 %v6197
        %v6224 = vunpack.c.h.b16 %v6197
        %v6225 = vunpack.c.l.b16 %v6198
        %v6226 = vpack.c.b16 %v6223, %v6223
        %v6227 = vpack.c.b16 %v6224, %v6224
        %v6228 = vpack.c.b16 %v6225, %v6225
        %v6234 = vunpack.c.l.b16 %v6208
        %v6235 = vunpack.c.h.b16 %v6208
        %v6236 = vunpack.c.l.b16 %v6209
        %v6237 = vpack.c.b16 %v6234, %v6234
        %v6238 = vpack.c.b16 %v6235, %v6235
        %v6239 = vpack.c.b16 %v6236, %v6236
        %v6243 = vld [vmem:[#allocation12] sm:$0xf]
        %v6244 = vld [vmem:[#allocation12 + $0x4] sm:$0xf]
        %v6245 = vld [vmem:[#allocation12 + $0x8] sm:$0xf]
        %v6246 = vld [vmem:[#allocation12 + $0xc] sm:$0xf]
        %v6247 = vld [vmem:[#allocation12 + $0x10] sm:$0xf]
        %v6248 = vld [vmem:[#allocation12 + $0x14] sm:$0xf]
        %v6249 = vld [vmem:[#allocation12 + $0x18] sm:$0xf]
        %v6250 = vld [vmem:[#allocation12 + $0x1c] sm:$0xf]
        %v6251 = vld [vmem:[#allocation12 + $0x20] sm:$0xf]
        %v6252 = vld [vmem:[#allocation12 + $0x24] sm:$0xf]
        %v6253 = vld [vmem:[#allocation12 + $0x28] sm:$0xf]
        %v6254 = vld [vmem:[#allocation12 + $0x2c] sm:$0xf]
        %v6255 = vld [vmem:[#allocation12 + $0x30] sm:$0xf]
        %v6256 = vld [vmem:[#allocation12 + $0x34] sm:$0xf]
        %v6257 = vld [vmem:[#allocation12 + $0x38] sm:$0xf]
        %v6258 = vld [vmem:[#allocation12 + $0x3c] sm:$0xf]
        %v6259 = vld [vmem:[#allocation12 + $0x40] sm:$0xf]
        %v6260 = vld [vmem:[#allocation12 + $0x44] sm:$0xf]
        %v6261 = vld [vmem:[#allocation12 + $0x48] sm:$0xf]
        %v6262 = vld [vmem:[#allocation12 + $0x4c] sm:$0xf]
        %v6263 = vld [vmem:[#allocation12 + $0x50] sm:$0xf]
        %v6264 = vld [vmem:[#allocation12 + $0x54] sm:$0xf]
        %v6265 = vld [vmem:[#allocation12 + $0x58] sm:$0xf]
        %v6266 = vld [vmem:[#allocation12 + $0x5c] sm:$0xf]
        %v6267 = vld [vmem:[#allocation12 + $0x60] sm:$0xf]
        %v6268 = vld [vmem:[#allocation12 + $0x64] sm:$0xf]
        %v6269 = vld [vmem:[#allocation12 + $0x68] sm:$0xf]
        %v6270 = vld [vmem:[#allocation12 + $0x6c] sm:$0xf]
        %v6271 = vld [vmem:[#allocation12 + $0x70] sm:$0xf]
        %v6272 = vld [vmem:[#allocation12 + $0x74] sm:$0xf]
        %v6273 = vld [vmem:[#allocation12 + $0x78] sm:$0xf]
        %v6274 = vld [vmem:[#allocation12 + $0x7c] sm:$0xf]
        %v6275 = vld [vmem:[#allocation12 + $0x80] sm:$0xf]
        %v6276 = vld [vmem:[#allocation12 + $0x84] sm:$0xf]
        %v6277 = vld [vmem:[#allocation12 + $0x88] sm:$0xf]
        %v6278 = vld [vmem:[#allocation12 + $0x8c] sm:$0xf]
        %v6279 = vld [vmem:[#allocation12 + $0x90] sm:$0xf]
        %v6280 = vld [vmem:[#allocation12 + $0x94] sm:$0xf]
        %v6281 = vld [vmem:[#allocation12 + $0x98] sm:$0xf]
        %v6282 = vld [vmem:[#allocation12 + $0x9c] sm:$0xf]
        %v6283 = vld [vmem:[#allocation12 + $0xa0] sm:$0xf]
        %v6284 = vld [vmem:[#allocation12 + $0xa4] sm:$0xf]
        %v6285 = vld [vmem:[#allocation12 + $0xa8] sm:$0xf]
        %v6286 = vld [vmem:[#allocation12 + $0xac] sm:$0xf]
        %v6287 = vld [vmem:[#allocation12 + $0xb0] sm:$0xf]
        %v6288 = vld [vmem:[#allocation12 + $0xb4] sm:$0xf]
        %v6289 = vld [vmem:[#allocation12 + $0xb8] sm:$0xf]
        %v6290 = vld [vmem:[#allocation12 + $0xbc] sm:$0xf]
        %v6291 = vld [vmem:[#allocation12 + $0xc0] sm:$0xf]
        %v6292 = vld [vmem:[#allocation12 + $0xc4] sm:$0xf]
        %v6293 = vld [vmem:[#allocation12 + $0xc8] sm:$0xf]
        %v6294 = vld [vmem:[#allocation12 + $0xcc] sm:$0xf]
        %v6295 = vld [vmem:[#allocation12 + $0xd0] sm:$0xf]
        %v6296 = vld [vmem:[#allocation12 + $0xd4] sm:$0xf]
        %v6297 = vld [vmem:[#allocation12 + $0xd8] sm:$0xf]
        %v6298 = vld [vmem:[#allocation12 + $0xdc] sm:$0xf]
        %v6299 = vld [vmem:[#allocation12 + $0xe0] sm:$0xf]
        %v6300 = vld [vmem:[#allocation12 + $0xe4] sm:$0xf]
        %v6301 = vld [vmem:[#allocation12 + $0xe8] sm:$0xf]
        %v6302 = vld [vmem:[#allocation12 + $0xec] sm:$0xf]
        %v6303 = vld [vmem:[#allocation12 + $0xf0] sm:$0xf]
        %v6304 = vld [vmem:[#allocation12 + $0xf4] sm:$0xf]
        %v6305 = vld [vmem:[#allocation12 + $0xf8] sm:$0xf]
        %v6306 = vld [vmem:[#allocation12 + $0xfc] sm:$0xf]
        %v6307 = vld [vmem:[#allocation12 + $0x100] sm:$0xf]
        %v6308 = vld [vmem:[#allocation12 + $0x104] sm:$0xf]
        %v6309 = vld [vmem:[#allocation12 + $0x108] sm:$0xf]
        %v6310 = vld [vmem:[#allocation12 + $0x10c] sm:$0xf]
        %v6311 = vld [vmem:[#allocation12 + $0x110] sm:$0xf]
        %v6312 = vld [vmem:[#allocation12 + $0x114] sm:$0xf]
        %v6313 = vld [vmem:[#allocation12 + $0x118] sm:$0xf]
        %v6314 = vld [vmem:[#allocation12 + $0x11c] sm:$0xf]
        %v6315 = vld [vmem:[#allocation12 + $0x120] sm:$0xf]
        %v6316 = vld [vmem:[#allocation12 + $0x124] sm:$0xf]
        %v6317 = vld [vmem:[#allocation12 + $0x128] sm:$0xf]
        %v6318 = vld [vmem:[#allocation12 + $0x12c] sm:$0xf]
        %v6319 = vld [vmem:[#allocation12 + $0x130] sm:$0xf]
        %v6320 = vld [vmem:[#allocation12 + $0x134] sm:$0xf]
        %v6321 = vld [vmem:[#allocation12 + $0x138] sm:$0xf]
        %v6322 = vld [vmem:[#allocation12 + $0x13c] sm:$0xf]
        %v6323 = vld [vmem:[#allocation12 + $0x140] sm:$0xf]
        %v6324 = vld [vmem:[#allocation12 + $0x144] sm:$0xf]
        %v6325 = vld [vmem:[#allocation12 + $0x148] sm:$0xf]
        %v6326 = vld [vmem:[#allocation12 + $0x14c] sm:$0xf]
        %v6327 = vld [vmem:[#allocation12 + $0x150] sm:$0xf]
        %v6328 = vld [vmem:[#allocation12 + $0x154] sm:$0xf]
        %v6329 = vld [vmem:[#allocation12 + $0x158] sm:$0xf]
        %v6330 = vld [vmem:[#allocation12 + $0x15c] sm:$0xf]
        %v6331 = vld [vmem:[#allocation12 + $0x160] sm:$0xf]
        %v6332 = vld [vmem:[#allocation12 + $0x164] sm:$0xf]
        %v6333 = vld [vmem:[#allocation12 + $0x168] sm:$0xf]
        %v6334 = vld [vmem:[#allocation12 + $0x16c] sm:$0xf]
        %v6335 = vld [vmem:[#allocation12 + $0x170] sm:$0xf]
        %v6336 = vld [vmem:[#allocation12 + $0x174] sm:$0xf]
        %v6337 = vld [vmem:[#allocation12 + $0x178] sm:$0xf]
        %v6338 = vld [vmem:[#allocation12 + $0x17c] sm:$0xf]
        %v6339 = vld [vmem:[#allocation12 + $0x180] sm:$0xf]
        %v6340 = vld [vmem:[#allocation12 + $0x184] sm:$0xf]
        %v6341 = vld [vmem:[#allocation12 + $0x188] sm:$0xf]
        %v6342 = vld [vmem:[#allocation12 + $0x18c] sm:$0xf]
        %v6343 = vld [vmem:[#allocation12 + $0x190] sm:$0xf]
        %v6344 = vld [vmem:[#allocation12 + $0x194] sm:$0xf]
        %v6345 = vld [vmem:[#allocation12 + $0x198] sm:$0xf]
        %v6346 = vld [vmem:[#allocation12 + $0x19c] sm:$0xf]
        %v6347 = vld [vmem:[#allocation12 + $0x1a0] sm:$0xf]
        %v6348 = vld [vmem:[#allocation12 + $0x1a4] sm:$0xf]
        %v6349 = vld [vmem:[#allocation12 + $0x1a8] sm:$0xf]
        %v6350 = vld [vmem:[#allocation12 + $0x1ac] sm:$0xf]
        %v6351 = vld [vmem:[#allocation12 + $0x1b0] sm:$0xf]
        %v6352 = vld [vmem:[#allocation12 + $0x1b4] sm:$0xf]
        %v6353 = vld [vmem:[#allocation12 + $0x1b8] sm:$0xf]
        %v6354 = vld [vmem:[#allocation12 + $0x1bc] sm:$0xf]
        %v6355 = vld [vmem:[#allocation12 + $0x1c0] sm:$0xf]
        %v6356 = vld [vmem:[#allocation12 + $0x1c4] sm:$0xf]
        %v6357 = vld [vmem:[#allocation12 + $0x1c8] sm:$0xf]
        %v6358 = vld [vmem:[#allocation12 + $0x1cc] sm:$0xf]
        %v6359 = vld [vmem:[#allocation12 + $0x1d0] sm:$0xf]
        %v6360 = vld [vmem:[#allocation12 + $0x1d4] sm:$0xf]
        %v6361 = vld [vmem:[#allocation12 + $0x1d8] sm:$0xf]
        %v6362 = vld [vmem:[#allocation12 + $0x1dc] sm:$0xf]
        %v6363 = vld [vmem:[#allocation12 + $0x1e0] sm:$0xf]
        %v6364 = vld [vmem:[#allocation12 + $0x1e4] sm:$0xf]
        %v6365 = vld [vmem:[#allocation12 + $0x1e8] sm:$0xf]
        %v6366 = vld [vmem:[#allocation12 + $0x1ec] sm:$0xf]
        %v6367 = vld [vmem:[#allocation12 + $0x1f0] sm:$0xf]
        %v6368 = vld [vmem:[#allocation12 + $0x1f4] sm:$0xf]
        %v6369 = vld [vmem:[#allocation12 + $0x1f8] sm:$0xf]
        %v6370 = vld [vmem:[#allocation12 + $0x1fc] sm:$0xf]
        %v6371 = vld [vmem:[#allocation12 + $0x200] sm:$0xf]
        %v6372 = vld [vmem:[#allocation12 + $0x204] sm:$0xf]
        %v6373 = vld [vmem:[#allocation12 + $0x208] sm:$0xf]
        %v6374 = vld [vmem:[#allocation12 + $0x20c] sm:$0xf]
        %v6375 = vld [vmem:[#allocation12 + $0x210] sm:$0xf]
        %v6376 = vld [vmem:[#allocation12 + $0x214] sm:$0xf]
        %v6377 = vld [vmem:[#allocation12 + $0x218] sm:$0xf]
        %v6378 = vld [vmem:[#allocation12 + $0x21c] sm:$0xf]
        %v6379 = vld [vmem:[#allocation12 + $0x220] sm:$0xf]
        %v6380 = vld [vmem:[#allocation12 + $0x224] sm:$0xf]
        %v6381 = vld [vmem:[#allocation12 + $0x228] sm:$0xf]
        %v6382 = vld [vmem:[#allocation12 + $0x22c] sm:$0xf]
        %v6383 = vld [vmem:[#allocation12 + $0x230] sm:$0xf]
        %v6384 = vld [vmem:[#allocation12 + $0x234] sm:$0xf]
        %v6385 = vld [vmem:[#allocation12 + $0x238] sm:$0xf]
        %v6386 = vld [vmem:[#allocation12 + $0x23c] sm:$0xf]
        %v6387 = vld [vmem:[#allocation21] sm:$0x1]
        %v6532 = vunpack.c.l.b16 %v6243
        %v6533 = vunpack.c.l.b16 %v6244
        %v6534 = vunpack.c.l.b16 %v6245
        %v6535 = vunpack.c.l.b16 %v6246
        %v6536 = vunpack.c.l.b16 %v6247
        %v6537 = vunpack.c.l.b16 %v6248
        %v6538 = vunpack.c.l.b16 %v6249
        %v6539 = vunpack.c.l.b16 %v6250
        %v6540 = vunpack.c.l.b16 %v6251
        %v6541 = vunpack.c.l.b16 %v6252
        %v6542 = vunpack.c.l.b16 %v6253
        %v6543 = vunpack.c.l.b16 %v6254
        %v6544 = vunpack.c.l.b16 %v6255
        %v6545 = vunpack.c.l.b16 %v6256
        %v6546 = vunpack.c.l.b16 %v6257
        %v6547 = vunpack.c.l.b16 %v6258
        %v6548 = vunpack.c.l.b16 %v6259
        %v6549 = vunpack.c.l.b16 %v6260
        %v6550 = vunpack.c.l.b16 %v6261
        %v6551 = vunpack.c.l.b16 %v6262
        %v6552 = vunpack.c.l.b16 %v6263
        %v6553 = vunpack.c.l.b16 %v6264
        %v6554 = vunpack.c.l.b16 %v6265
        %v6555 = vunpack.c.l.b16 %v6266
        %v6556 = vunpack.c.l.b16 %v6267
        %v6557 = vunpack.c.l.b16 %v6268
        %v6558 = vunpack.c.l.b16 %v6269
        %v6559 = vunpack.c.l.b16 %v6270
        %v6560 = vunpack.c.l.b16 %v6271
        %v6561 = vunpack.c.l.b16 %v6272
        %v6562 = vunpack.c.l.b16 %v6273
        %v6563 = vunpack.c.l.b16 %v6274
        %v6564 = vunpack.c.l.b16 %v6275
        %v6565 = vunpack.c.l.b16 %v6276
        %v6566 = vunpack.c.l.b16 %v6277
        %v6567 = vunpack.c.l.b16 %v6278
        %v6568 = vunpack.c.l.b16 %v6279
        %v6569 = vunpack.c.l.b16 %v6280
        %v6570 = vunpack.c.l.b16 %v6281
        %v6571 = vunpack.c.l.b16 %v6282
        %v6572 = vunpack.c.l.b16 %v6283
        %v6573 = vunpack.c.l.b16 %v6284
        %v6574 = vunpack.c.l.b16 %v6285
        %v6575 = vunpack.c.l.b16 %v6286
        %v6576 = vunpack.c.l.b16 %v6287
        %v6577 = vunpack.c.l.b16 %v6288
        %v6578 = vunpack.c.l.b16 %v6289
        %v6579 = vunpack.c.l.b16 %v6290
        %v6580 = vunpack.c.l.b16 %v6291
        %v6581 = vunpack.c.l.b16 %v6292
        %v6582 = vunpack.c.l.b16 %v6293
        %v6583 = vunpack.c.l.b16 %v6294
        %v6584 = vunpack.c.l.b16 %v6295
        %v6585 = vunpack.c.l.b16 %v6296
        %v6586 = vunpack.c.l.b16 %v6297
        %v6587 = vunpack.c.l.b16 %v6298
        %v6588 = vunpack.c.l.b16 %v6299
        %v6589 = vunpack.c.l.b16 %v6300
        %v6590 = vunpack.c.l.b16 %v6301
        %v6591 = vunpack.c.l.b16 %v6302
        %v6592 = vunpack.c.l.b16 %v6303
        %v6593 = vunpack.c.l.b16 %v6304
        %v6594 = vunpack.c.l.b16 %v6305
        %v6595 = vunpack.c.l.b16 %v6306
        %v6596 = vunpack.c.l.b16 %v6307
        %v6597 = vunpack.c.l.b16 %v6308
        %v6598 = vunpack.c.l.b16 %v6309
        %v6599 = vunpack.c.l.b16 %v6310
        %v6600 = vunpack.c.l.b16 %v6311
        %v6601 = vunpack.c.l.b16 %v6312
        %v6602 = vunpack.c.l.b16 %v6313
        %v6603 = vunpack.c.l.b16 %v6314
        %v6604 = vunpack.c.l.b16 %v6315
        %v6605 = vunpack.c.l.b16 %v6316
        %v6606 = vunpack.c.l.b16 %v6317
        %v6607 = vunpack.c.l.b16 %v6318
        %v6608 = vunpack.c.l.b16 %v6319
        %v6609 = vunpack.c.l.b16 %v6320
        %v6610 = vunpack.c.l.b16 %v6321
        %v6611 = vunpack.c.l.b16 %v6322
        %v6612 = vunpack.c.l.b16 %v6323
        %v6613 = vunpack.c.l.b16 %v6324
        %v6614 = vunpack.c.l.b16 %v6325
        %v6615 = vunpack.c.l.b16 %v6326
        %v6616 = vunpack.c.l.b16 %v6327
        %v6617 = vunpack.c.l.b16 %v6328
        %v6618 = vunpack.c.l.b16 %v6329
        %v6619 = vunpack.c.l.b16 %v6330
        %v6620 = vunpack.c.l.b16 %v6331
        %v6621 = vunpack.c.l.b16 %v6332
        %v6622 = vunpack.c.l.b16 %v6333
        %v6623 = vunpack.c.l.b16 %v6334
        %v6624 = vunpack.c.l.b16 %v6335
        %v6625 = vunpack.c.l.b16 %v6336
        %v6626 = vunpack.c.l.b16 %v6337
        %v6627 = vunpack.c.l.b16 %v6338
        %v6628 = vunpack.c.l.b16 %v6339
        %v6629 = vunpack.c.l.b16 %v6340
        %v6630 = vunpack.c.l.b16 %v6341
        %v6631 = vunpack.c.l.b16 %v6342
        %v6632 = vunpack.c.l.b16 %v6343
        %v6633 = vunpack.c.l.b16 %v6344
        %v6634 = vunpack.c.l.b16 %v6345
        %v6635 = vunpack.c.l.b16 %v6346
        %v6636 = vunpack.c.l.b16 %v6347
        %v6637 = vunpack.c.l.b16 %v6348
        %v6638 = vunpack.c.l.b16 %v6349
        %v6639 = vunpack.c.l.b16 %v6350
        %v6640 = vunpack.c.l.b16 %v6351
        %v6641 = vunpack.c.l.b16 %v6352
        %v6642 = vunpack.c.l.b16 %v6353
        %v6643 = vunpack.c.l.b16 %v6354
        %v6644 = vunpack.c.l.b16 %v6355
        %v6645 = vunpack.c.l.b16 %v6356
        %v6646 = vunpack.c.l.b16 %v6357
        %v6647 = vunpack.c.l.b16 %v6358
        %v6648 = vunpack.c.l.b16 %v6359
        %v6649 = vunpack.c.l.b16 %v6360
        %v6650 = vunpack.c.l.b16 %v6361
        %v6651 = vunpack.c.l.b16 %v6362
        %v6652 = vunpack.c.l.b16 %v6363
        %v6653 = vunpack.c.l.b16 %v6364
        %v6654 = vunpack.c.l.b16 %v6365
        %v6655 = vunpack.c.l.b16 %v6366
        %v6656 = vunpack.c.l.b16 %v6367
        %v6657 = vunpack.c.l.b16 %v6368
        %v6658 = vunpack.c.l.b16 %v6369
        %v6659 = vunpack.c.l.b16 %v6370
        %v6660 = vunpack.c.l.b16 %v6371
        %v6661 = vunpack.c.l.b16 %v6372
        %v6662 = vunpack.c.l.b16 %v6373
        %v6663 = vunpack.c.l.b16 %v6374
        %v6664 = vunpack.c.l.b16 %v6375
        %v6665 = vunpack.c.l.b16 %v6376
        %v6666 = vunpack.c.l.b16 %v6377
        %v6667 = vunpack.c.l.b16 %v6378
        %v6668 = vunpack.c.l.b16 %v6379
        %v6669 = vunpack.c.l.b16 %v6380
        %v6670 = vunpack.c.l.b16 %v6381
        %v6671 = vunpack.c.l.b16 %v6382
        %v6672 = vunpack.c.l.b16 %v6383
        %v6673 = vunpack.c.l.b16 %v6384
        %v6674 = vunpack.c.l.b16 %v6385
        %v6675 = vunpack.c.l.b16 %v6386
        %v6676 = vpack.c.b16 %v6533, %v6532
        %v6677 = vpack.c.b16 %v6535, %v6534
        %v6678 = vpack.c.b16 %v6537, %v6536
        %v6679 = vpack.c.b16 %v6539, %v6538
        %v6680 = vpack.c.b16 %v6541, %v6540
        %v6681 = vpack.c.b16 %v6543, %v6542
        %v6682 = vpack.c.b16 %v6545, %v6544
        %v6683 = vpack.c.b16 %v6547, %v6546
        %v6684 = vpack.c.b16 %v6549, %v6548
        %v6685 = vpack.c.b16 %v6551, %v6550
        %v6686 = vpack.c.b16 %v6553, %v6552
        %v6687 = vpack.c.b16 %v6555, %v6554
        %v6688 = vpack.c.b16 %v6557, %v6556
        %v6689 = vpack.c.b16 %v6559, %v6558
        %v6690 = vpack.c.b16 %v6561, %v6560
        %v6691 = vpack.c.b16 %v6563, %v6562
        %v6692 = vpack.c.b16 %v6565, %v6564
        %v6693 = vpack.c.b16 %v6567, %v6566
        %v6694 = vpack.c.b16 %v6569, %v6568
        %v6695 = vpack.c.b16 %v6571, %v6570
        %v6696 = vpack.c.b16 %v6573, %v6572
        %v6697 = vpack.c.b16 %v6575, %v6574
        %v6698 = vpack.c.b16 %v6577, %v6576
        %v6699 = vpack.c.b16 %v6579, %v6578
        %v6700 = vpack.c.b16 %v6581, %v6580
        %v6701 = vpack.c.b16 %v6583, %v6582
        %v6702 = vpack.c.b16 %v6585, %v6584
        %v6703 = vpack.c.b16 %v6587, %v6586
        %v6704 = vpack.c.b16 %v6589, %v6588
        %v6705 = vpack.c.b16 %v6591, %v6590
        %v6706 = vpack.c.b16 %v6593, %v6592
        %v6707 = vpack.c.b16 %v6595, %v6594
        %v6708 = vpack.c.b16 %v6597, %v6596
        %v6709 = vpack.c.b16 %v6599, %v6598
        %v6710 = vpack.c.b16 %v6601, %v6600
        %v6711 = vpack.c.b16 %v6603, %v6602
        %v6712 = vpack.c.b16 %v6605, %v6604
        %v6713 = vpack.c.b16 %v6607, %v6606
        %v6714 = vpack.c.b16 %v6609, %v6608
        %v6715 = vpack.c.b16 %v6611, %v6610
        %v6716 = vpack.c.b16 %v6613, %v6612
        %v6717 = vpack.c.b16 %v6615, %v6614
        %v6718 = vpack.c.b16 %v6617, %v6616
        %v6719 = vpack.c.b16 %v6619, %v6618
        %v6720 = vpack.c.b16 %v6621, %v6620
        %v6721 = vpack.c.b16 %v6623, %v6622
        %v6722 = vpack.c.b16 %v6625, %v6624
        %v6723 = vpack.c.b16 %v6627, %v6626
        %v6724 = vpack.c.b16 %v6629, %v6628
        %v6725 = vpack.c.b16 %v6631, %v6630
        %v6726 = vpack.c.b16 %v6633, %v6632
        %v6727 = vpack.c.b16 %v6635, %v6634
        %v6728 = vpack.c.b16 %v6637, %v6636
        %v6729 = vpack.c.b16 %v6639, %v6638
        %v6730 = vpack.c.b16 %v6641, %v6640
        %v6731 = vpack.c.b16 %v6643, %v6642
        %v6732 = vpack.c.b16 %v6645, %v6644
        %v6733 = vpack.c.b16 %v6647, %v6646
        %v6734 = vpack.c.b16 %v6649, %v6648
        %v6735 = vpack.c.b16 %v6651, %v6650
        %v6736 = vpack.c.b16 %v6653, %v6652
        %v6737 = vpack.c.b16 %v6655, %v6654
        %v6738 = vpack.c.b16 %v6657, %v6656
        %v6739 = vpack.c.b16 %v6659, %v6658
        %v6740 = vpack.c.b16 %v6661, %v6660
        %v6741 = vpack.c.b16 %v6663, %v6662
        %v6742 = vpack.c.b16 %v6665, %v6664
        %v6743 = vpack.c.b16 %v6667, %v6666
        %v6744 = vpack.c.b16 %v6669, %v6668
        %v6745 = vpack.c.b16 %v6671, %v6670
        %v6746 = vpack.c.b16 %v6673, %v6672
        %v6747 = vpack.c.b16 %v6675, %v6674
        %6820 = vmatpush.bf16.msra.mxu0 %v6683
        %6821 = vmatpush.bf16.msra.mxu0 %v6682
        %6822 = vmatpush.bf16.msra.mxu0 %v6681
        %6823 = vmatpush.bf16.msra.mxu0 %v6680
        %6824 = vmatpush.bf16.msra.mxu0 %v6679
        %6825 = vmatpush.bf16.msra.mxu0 %v6678
        %6826 = vmatpush.bf16.msra.mxu0 %v6677
        %6827 = vmatpush.bf16.msra.mxu0 %v6676
        %6828 = vmatmul.bf16.gmra.mxu0 %v6215
        %v6829 = vpop.f32.mrf.mxu0
        %v6830 = vadd.f32 %v6387, %v6829
        %v6831 = vpop.f32.mrf.mxu0
        %6832 = vdwg.mxu0
        %6833 = vmatpush.bf16.msra.mxu0 %v6691
        %6834 = vmatpush.bf16.msra.mxu0 %v6690
        %6835 = vmatpush.bf16.msra.mxu0 %v6689
        %6836 = vmatpush.bf16.msra.mxu0 %v6688
        %6837 = vmatpush.bf16.msra.mxu0 %v6687
        %6838 = vmatpush.bf16.msra.mxu0 %v6686
        %6839 = vmatpush.bf16.msra.mxu0 %v6685
        %6840 = vmatpush.bf16.msra.mxu0 %v6684
        %6841 = vmatmul.bf16.gmra.mxu0 %v6216
        %v6842 = vpop.f32.mrf.mxu0
        %v6843 = vadd.f32 %v6830, %v6842
        %v6844 = vpop.f32.mrf.mxu0
        %6845 = vdwg.mxu0
        %6846 = vmatpush.bf16.msra.mxu0 %v6699
        %6847 = vmatpush.bf16.msra.mxu0 %v6698
        %6848 = vmatpush.bf16.msra.mxu0 %v6697
        %6849 = vmatpush.bf16.msra.mxu0 %v6696
        %6850 = vmatpush.bf16.msra.mxu0 %v6695
        %6851 = vmatpush.bf16.msra.mxu0 %v6694
        %6852 = vmatpush.bf16.msra.mxu0 %v6693
        %6853 = vmatpush.bf16.msra.mxu0 %v6692
        %6854 = vmatmul.bf16.gmra.mxu0 %v6217
        %v6855 = vpop.f32.mrf.mxu0
        %v6856 = vadd.f32 %v6843, %v6855
        %v6857 = vpop.f32.mrf.mxu0
        %6858 = vdwg.mxu0
        %6859 = vmatpush.bf16.msra.mxu0 %v6707
        %6860 = vmatpush.bf16.msra.mxu0 %v6706
        %6861 = vmatpush.bf16.msra.mxu0 %v6705
        %6862 = vmatpush.bf16.msra.mxu0 %v6704
        %6863 = vmatpush.bf16.msra.mxu0 %v6703
        %6864 = vmatpush.bf16.msra.mxu0 %v6702
        %6865 = vmatpush.bf16.msra.mxu0 %v6701
        %6866 = vmatpush.bf16.msra.mxu0 %v6700
        %6867 = vmatmul.bf16.gmra.mxu0 %v6226
        %v6868 = vpop.f32.mrf.mxu0
        %v6869 = vadd.f32 %v6856, %v6868
        %v6870 = vpop.f32.mrf.mxu0
        %6871 = vdwg.mxu0
        %6872 = vmatpush.bf16.msra.mxu0 %v6715
        %6873 = vmatpush.bf16.msra.mxu0 %v6714
        %6874 = vmatpush.bf16.msra.mxu0 %v6713
        %6875 = vmatpush.bf16.msra.mxu0 %v6712
        %6876 = vmatpush.bf16.msra.mxu0 %v6711
        %6877 = vmatpush.bf16.msra.mxu0 %v6710
        %6878 = vmatpush.bf16.msra.mxu0 %v6709
        %6879 = vmatpush.bf16.msra.mxu0 %v6708
        %6880 = vmatmul.bf16.gmra.mxu0 %v6227
        %v6881 = vpop.f32.mrf.mxu0
        %v6882 = vadd.f32 %v6869, %v6881
        %v6883 = vpop.f32.mrf.mxu0
        %6884 = vdwg.mxu0
        %6885 = vmatpush.bf16.msra.mxu0 %v6723
        %6886 = vmatpush.bf16.msra.mxu0 %v6722
        %6887 = vmatpush.bf16.msra.mxu0 %v6721
        %6888 = vmatpush.bf16.msra.mxu0 %v6720
        %6889 = vmatpush.bf16.msra.mxu0 %v6719
        %6890 = vmatpush.bf16.msra.mxu0 %v6718
        %6891 = vmatpush.bf16.msra.mxu0 %v6717
        %6892 = vmatpush.bf16.msra.mxu0 %v6716
        %6893 = vmatmul.bf16.gmra.mxu0 %v6228
        %v6894 = vpop.f32.mrf.mxu0
        %v6895 = vadd.f32 %v6882, %v6894
        %v6896 = vpop.f32.mrf.mxu0
        %6897 = vdwg.mxu0
        %6898 = vmatpush.bf16.msra.mxu0 %v6731
        %6899 = vmatpush.bf16.msra.mxu0 %v6730
        %6900 = vmatpush.bf16.msra.mxu0 %v6729
        %6901 = vmatpush.bf16.msra.mxu0 %v6728
        %6902 = vmatpush.bf16.msra.mxu0 %v6727
        %6903 = vmatpush.bf16.msra.mxu0 %v6726
        %6904 = vmatpush.bf16.msra.mxu0 %v6725
        %6905 = vmatpush.bf16.msra.mxu0 %v6724
        %6906 = vmatmul.bf16.gmra.mxu0 %v6237
        %v6907 = vpop.f32.mrf.mxu0
        %v6908 = vadd.f32 %v6895, %v6907
        %v6909 = vpop.f32.mrf.mxu0
        %6910 = vdwg.mxu0
        %6911 = vmatpush.bf16.msra.mxu0 %v6739
        %6912 = vmatpush.bf16.msra.mxu0 %v6738
        %6913 = vmatpush.bf16.msra.mxu0 %v6737
        %6914 = vmatpush.bf16.msra.mxu0 %v6736
        %6915 = vmatpush.bf16.msra.mxu0 %v6735
        %6916 = vmatpush.bf16.msra.mxu0 %v6734
        %6917 = vmatpush.bf16.msra.mxu0 %v6733
        %6918 = vmatpush.bf16.msra.mxu0 %v6732
        %6919 = vmatmul.bf16.gmra.mxu0 %v6238
        %v6920 = vpop.f32.mrf.mxu0
        %v6921 = vadd.f32 %v6908, %v6920
        %v6922 = vpop.f32.mrf.mxu0
        %6923 = vdwg.mxu0
        %6924 = vmatpush.bf16.msra.mxu0 %v6747
        %6925 = vmatpush.bf16.msra.mxu0 %v6746
        %6926 = vmatpush.bf16.msra.mxu0 %v6745
        %6927 = vmatpush.bf16.msra.mxu0 %v6744
        %6928 = vmatpush.bf16.msra.mxu0 %v6743
        %6929 = vmatpush.bf16.msra.mxu0 %v6742
        %6930 = vmatpush.bf16.msra.mxu0 %v6741
        %6931 = vmatpush.bf16.msra.mxu0 %v6740
        %6932 = vmatmul.bf16.gmra.mxu0 %v6239
        %v6933 = vpop.f32.mrf.mxu0
        %v6934 = vadd.f32 %v6921, %v6933
        %v6935 = vpop.f32.mrf.mxu0
        %6936 = vdwg.mxu0
        %v6937 = vmax.f32 %v6934, 0.0
        %6938 = vst [vmem:[#allocation4 + $0x2] sm:$0x1] %v6937
        %s6939 = scalar_lea.vmem [#allocation3], 6
        %v6940 = vld [vmem:[%s6939] ss:$8 sm:$0x7]
        %v6942 = vperm.slane %v6940, 0
        %v6943 = vperm.slane %v6940, 1
        %v6944 = vperm.slane %v6940, 2
        %v6948 = vpack.c.bf16 %v6943, %v6942
        %v6949 = vpack.c.bf16 %v6944, %v6944
        %s6950 = scalar_lea.vmem [#allocation3], 7
        %v6951 = vld [vmem:[%s6950] ss:$8 sm:$0x7]
        %v6953 = vperm.slane %v6951, 0
        %v6954 = vperm.slane %v6951, 1
        %v6955 = vperm.slane %v6951, 2
        %v6959 = vpack.c.bf16 %v6954, %v6953
        %v6960 = vpack.c.bf16 %v6955, %v6955
        %s6961 = scalar_lea.vmem [#allocation3], 24
        %v6962 = vld [vmem:[%s6961] ss:$8 sm:$0x7]
        %v6964 = vperm.slane %v6962, 0
        %v6965 = vperm.slane %v6962, 1
        %v6966 = vperm.slane %v6962, 2
        %v6970 = vpack.c.bf16 %v6965, %v6964
        %v6971 = vpack.c.bf16 %v6966, %v6966
        %v6974 = vunpack.c.l.b16 %v6948
        %v6975 = vunpack.c.h.b16 %v6948
        %v6976 = vunpack.c.l.b16 %v6949
        %v6977 = vpack.c.b16 %v6974, %v6974
        %v6978 = vpack.c.b16 %v6975, %v6975
        %v6979 = vpack.c.b16 %v6976, %v6976
        %v6985 = vunpack.c.l.b16 %v6959
        %v6986 = vunpack.c.h.b16 %v6959
        %v6987 = vunpack.c.l.b16 %v6960
        %v6988 = vpack.c.b16 %v6985, %v6985
        %v6989 = vpack.c.b16 %v6986, %v6986
        %v6990 = vpack.c.b16 %v6987, %v6987
        %v6996 = vunpack.c.l.b16 %v6970
        %v6997 = vunpack.c.h.b16 %v6970
        %v6998 = vunpack.c.l.b16 %v6971
        %v6999 = vpack.c.b16 %v6996, %v6996
        %v7000 = vpack.c.b16 %v6997, %v6997
        %v7001 = vpack.c.b16 %v6998, %v6998
        %v7005 = vld [vmem:[#allocation12] sm:$0xf]
        %v7006 = vld [vmem:[#allocation12 + $0x4] sm:$0xf]
        %v7007 = vld [vmem:[#allocation12 + $0x8] sm:$0xf]
        %v7008 = vld [vmem:[#allocation12 + $0xc] sm:$0xf]
        %v7009 = vld [vmem:[#allocation12 + $0x10] sm:$0xf]
        %v7010 = vld [vmem:[#allocation12 + $0x14] sm:$0xf]
        %v7011 = vld [vmem:[#allocation12 + $0x18] sm:$0xf]
        %v7012 = vld [vmem:[#allocation12 + $0x1c] sm:$0xf]
        %v7013 = vld [vmem:[#allocation12 + $0x20] sm:$0xf]
        %v7014 = vld [vmem:[#allocation12 + $0x24] sm:$0xf]
        %v7015 = vld [vmem:[#allocation12 + $0x28] sm:$0xf]
        %v7016 = vld [vmem:[#allocation12 + $0x2c] sm:$0xf]
        %v7017 = vld [vmem:[#allocation12 + $0x30] sm:$0xf]
        %v7018 = vld [vmem:[#allocation12 + $0x34] sm:$0xf]
        %v7019 = vld [vmem:[#allocation12 + $0x38] sm:$0xf]
        %v7020 = vld [vmem:[#allocation12 + $0x3c] sm:$0xf]
        %v7021 = vld [vmem:[#allocation12 + $0x40] sm:$0xf]
        %v7022 = vld [vmem:[#allocation12 + $0x44] sm:$0xf]
        %v7023 = vld [vmem:[#allocation12 + $0x48] sm:$0xf]
        %v7024 = vld [vmem:[#allocation12 + $0x4c] sm:$0xf]
        %v7025 = vld [vmem:[#allocation12 + $0x50] sm:$0xf]
        %v7026 = vld [vmem:[#allocation12 + $0x54] sm:$0xf]
        %v7027 = vld [vmem:[#allocation12 + $0x58] sm:$0xf]
        %v7028 = vld [vmem:[#allocation12 + $0x5c] sm:$0xf]
        %v7029 = vld [vmem:[#allocation12 + $0x60] sm:$0xf]
        %v7030 = vld [vmem:[#allocation12 + $0x64] sm:$0xf]
        %v7031 = vld [vmem:[#allocation12 + $0x68] sm:$0xf]
        %v7032 = vld [vmem:[#allocation12 + $0x6c] sm:$0xf]
        %v7033 = vld [vmem:[#allocation12 + $0x70] sm:$0xf]
        %v7034 = vld [vmem:[#allocation12 + $0x74] sm:$0xf]
        %v7035 = vld [vmem:[#allocation12 + $0x78] sm:$0xf]
        %v7036 = vld [vmem:[#allocation12 + $0x7c] sm:$0xf]
        %v7037 = vld [vmem:[#allocation12 + $0x80] sm:$0xf]
        %v7038 = vld [vmem:[#allocation12 + $0x84] sm:$0xf]
        %v7039 = vld [vmem:[#allocation12 + $0x88] sm:$0xf]
        %v7040 = vld [vmem:[#allocation12 + $0x8c] sm:$0xf]
        %v7041 = vld [vmem:[#allocation12 + $0x90] sm:$0xf]
        %v7042 = vld [vmem:[#allocation12 + $0x94] sm:$0xf]
        %v7043 = vld [vmem:[#allocation12 + $0x98] sm:$0xf]
        %v7044 = vld [vmem:[#allocation12 + $0x9c] sm:$0xf]
        %v7045 = vld [vmem:[#allocation12 + $0xa0] sm:$0xf]
        %v7046 = vld [vmem:[#allocation12 + $0xa4] sm:$0xf]
        %v7047 = vld [vmem:[#allocation12 + $0xa8] sm:$0xf]
        %v7048 = vld [vmem:[#allocation12 + $0xac] sm:$0xf]
        %v7049 = vld [vmem:[#allocation12 + $0xb0] sm:$0xf]
        %v7050 = vld [vmem:[#allocation12 + $0xb4] sm:$0xf]
        %v7051 = vld [vmem:[#allocation12 + $0xb8] sm:$0xf]
        %v7052 = vld [vmem:[#allocation12 + $0xbc] sm:$0xf]
        %v7053 = vld [vmem:[#allocation12 + $0xc0] sm:$0xf]
        %v7054 = vld [vmem:[#allocation12 + $0xc4] sm:$0xf]
        %v7055 = vld [vmem:[#allocation12 + $0xc8] sm:$0xf]
        %v7056 = vld [vmem:[#allocation12 + $0xcc] sm:$0xf]
        %v7057 = vld [vmem:[#allocation12 + $0xd0] sm:$0xf]
        %v7058 = vld [vmem:[#allocation12 + $0xd4] sm:$0xf]
        %v7059 = vld [vmem:[#allocation12 + $0xd8] sm:$0xf]
        %v7060 = vld [vmem:[#allocation12 + $0xdc] sm:$0xf]
        %v7061 = vld [vmem:[#allocation12 + $0xe0] sm:$0xf]
        %v7062 = vld [vmem:[#allocation12 + $0xe4] sm:$0xf]
        %v7063 = vld [vmem:[#allocation12 + $0xe8] sm:$0xf]
        %v7064 = vld [vmem:[#allocation12 + $0xec] sm:$0xf]
        %v7065 = vld [vmem:[#allocation12 + $0xf0] sm:$0xf]
        %v7066 = vld [vmem:[#allocation12 + $0xf4] sm:$0xf]
        %v7067 = vld [vmem:[#allocation12 + $0xf8] sm:$0xf]
        %v7068 = vld [vmem:[#allocation12 + $0xfc] sm:$0xf]
        %v7069 = vld [vmem:[#allocation12 + $0x100] sm:$0xf]
        %v7070 = vld [vmem:[#allocation12 + $0x104] sm:$0xf]
        %v7071 = vld [vmem:[#allocation12 + $0x108] sm:$0xf]
        %v7072 = vld [vmem:[#allocation12 + $0x10c] sm:$0xf]
        %v7073 = vld [vmem:[#allocation12 + $0x110] sm:$0xf]
        %v7074 = vld [vmem:[#allocation12 + $0x114] sm:$0xf]
        %v7075 = vld [vmem:[#allocation12 + $0x118] sm:$0xf]
        %v7076 = vld [vmem:[#allocation12 + $0x11c] sm:$0xf]
        %v7077 = vld [vmem:[#allocation12 + $0x120] sm:$0xf]
        %v7078 = vld [vmem:[#allocation12 + $0x124] sm:$0xf]
        %v7079 = vld [vmem:[#allocation12 + $0x128] sm:$0xf]
        %v7080 = vld [vmem:[#allocation12 + $0x12c] sm:$0xf]
        %v7081 = vld [vmem:[#allocation12 + $0x130] sm:$0xf]
        %v7082 = vld [vmem:[#allocation12 + $0x134] sm:$0xf]
        %v7083 = vld [vmem:[#allocation12 + $0x138] sm:$0xf]
        %v7084 = vld [vmem:[#allocation12 + $0x13c] sm:$0xf]
        %v7085 = vld [vmem:[#allocation12 + $0x140] sm:$0xf]
        %v7086 = vld [vmem:[#allocation12 + $0x144] sm:$0xf]
        %v7087 = vld [vmem:[#allocation12 + $0x148] sm:$0xf]
        %v7088 = vld [vmem:[#allocation12 + $0x14c] sm:$0xf]
        %v7089 = vld [vmem:[#allocation12 + $0x150] sm:$0xf]
        %v7090 = vld [vmem:[#allocation12 + $0x154] sm:$0xf]
        %v7091 = vld [vmem:[#allocation12 + $0x158] sm:$0xf]
        %v7092 = vld [vmem:[#allocation12 + $0x15c] sm:$0xf]
        %v7093 = vld [vmem:[#allocation12 + $0x160] sm:$0xf]
        %v7094 = vld [vmem:[#allocation12 + $0x164] sm:$0xf]
        %v7095 = vld [vmem:[#allocation12 + $0x168] sm:$0xf]
        %v7096 = vld [vmem:[#allocation12 + $0x16c] sm:$0xf]
        %v7097 = vld [vmem:[#allocation12 + $0x170] sm:$0xf]
        %v7098 = vld [vmem:[#allocation12 + $0x174] sm:$0xf]
        %v7099 = vld [vmem:[#allocation12 + $0x178] sm:$0xf]
        %v7100 = vld [vmem:[#allocation12 + $0x17c] sm:$0xf]
        %v7101 = vld [vmem:[#allocation12 + $0x180] sm:$0xf]
        %v7102 = vld [vmem:[#allocation12 + $0x184] sm:$0xf]
        %v7103 = vld [vmem:[#allocation12 + $0x188] sm:$0xf]
        %v7104 = vld [vmem:[#allocation12 + $0x18c] sm:$0xf]
        %v7105 = vld [vmem:[#allocation12 + $0x190] sm:$0xf]
        %v7106 = vld [vmem:[#allocation12 + $0x194] sm:$0xf]
        %v7107 = vld [vmem:[#allocation12 + $0x198] sm:$0xf]
        %v7108 = vld [vmem:[#allocation12 + $0x19c] sm:$0xf]
        %v7109 = vld [vmem:[#allocation12 + $0x1a0] sm:$0xf]
        %v7110 = vld [vmem:[#allocation12 + $0x1a4] sm:$0xf]
        %v7111 = vld [vmem:[#allocation12 + $0x1a8] sm:$0xf]
        %v7112 = vld [vmem:[#allocation12 + $0x1ac] sm:$0xf]
        %v7113 = vld [vmem:[#allocation12 + $0x1b0] sm:$0xf]
        %v7114 = vld [vmem:[#allocation12 + $0x1b4] sm:$0xf]
        %v7115 = vld [vmem:[#allocation12 + $0x1b8] sm:$0xf]
        %v7116 = vld [vmem:[#allocation12 + $0x1bc] sm:$0xf]
        %v7117 = vld [vmem:[#allocation12 + $0x1c0] sm:$0xf]
        %v7118 = vld [vmem:[#allocation12 + $0x1c4] sm:$0xf]
        %v7119 = vld [vmem:[#allocation12 + $0x1c8] sm:$0xf]
        %v7120 = vld [vmem:[#allocation12 + $0x1cc] sm:$0xf]
        %v7121 = vld [vmem:[#allocation12 + $0x1d0] sm:$0xf]
        %v7122 = vld [vmem:[#allocation12 + $0x1d4] sm:$0xf]
        %v7123 = vld [vmem:[#allocation12 + $0x1d8] sm:$0xf]
        %v7124 = vld [vmem:[#allocation12 + $0x1dc] sm:$0xf]
        %v7125 = vld [vmem:[#allocation12 + $0x1e0] sm:$0xf]
        %v7126 = vld [vmem:[#allocation12 + $0x1e4] sm:$0xf]
        %v7127 = vld [vmem:[#allocation12 + $0x1e8] sm:$0xf]
        %v7128 = vld [vmem:[#allocation12 + $0x1ec] sm:$0xf]
        %v7129 = vld [vmem:[#allocation12 + $0x1f0] sm:$0xf]
        %v7130 = vld [vmem:[#allocation12 + $0x1f4] sm:$0xf]
        %v7131 = vld [vmem:[#allocation12 + $0x1f8] sm:$0xf]
        %v7132 = vld [vmem:[#allocation12 + $0x1fc] sm:$0xf]
        %v7133 = vld [vmem:[#allocation12 + $0x200] sm:$0xf]
        %v7134 = vld [vmem:[#allocation12 + $0x204] sm:$0xf]
        %v7135 = vld [vmem:[#allocation12 + $0x208] sm:$0xf]
        %v7136 = vld [vmem:[#allocation12 + $0x20c] sm:$0xf]
        %v7137 = vld [vmem:[#allocation12 + $0x210] sm:$0xf]
        %v7138 = vld [vmem:[#allocation12 + $0x214] sm:$0xf]
        %v7139 = vld [vmem:[#allocation12 + $0x218] sm:$0xf]
        %v7140 = vld [vmem:[#allocation12 + $0x21c] sm:$0xf]
        %v7141 = vld [vmem:[#allocation12 + $0x220] sm:$0xf]
        %v7142 = vld [vmem:[#allocation12 + $0x224] sm:$0xf]
        %v7143 = vld [vmem:[#allocation12 + $0x228] sm:$0xf]
        %v7144 = vld [vmem:[#allocation12 + $0x22c] sm:$0xf]
        %v7145 = vld [vmem:[#allocation12 + $0x230] sm:$0xf]
        %v7146 = vld [vmem:[#allocation12 + $0x234] sm:$0xf]
        %v7147 = vld [vmem:[#allocation12 + $0x238] sm:$0xf]
        %v7148 = vld [vmem:[#allocation12 + $0x23c] sm:$0xf]
        %v7149 = vld [vmem:[#allocation21] sm:$0x1]
        %v7294 = vunpack.c.l.b16 %v7005
        %v7295 = vunpack.c.l.b16 %v7006
        %v7296 = vunpack.c.l.b16 %v7007
        %v7297 = vunpack.c.l.b16 %v7008
        %v7298 = vunpack.c.l.b16 %v7009
        %v7299 = vunpack.c.l.b16 %v7010
        %v7300 = vunpack.c.l.b16 %v7011
        %v7301 = vunpack.c.l.b16 %v7012
        %v7302 = vunpack.c.l.b16 %v7013
        %v7303 = vunpack.c.l.b16 %v7014
        %v7304 = vunpack.c.l.b16 %v7015
        %v7305 = vunpack.c.l.b16 %v7016
        %v7306 = vunpack.c.l.b16 %v7017
        %v7307 = vunpack.c.l.b16 %v7018
        %v7308 = vunpack.c.l.b16 %v7019
        %v7309 = vunpack.c.l.b16 %v7020
        %v7310 = vunpack.c.l.b16 %v7021
        %v7311 = vunpack.c.l.b16 %v7022
        %v7312 = vunpack.c.l.b16 %v7023
        %v7313 = vunpack.c.l.b16 %v7024
        %v7314 = vunpack.c.l.b16 %v7025
        %v7315 = vunpack.c.l.b16 %v7026
        %v7316 = vunpack.c.l.b16 %v7027
        %v7317 = vunpack.c.l.b16 %v7028
        %v7318 = vunpack.c.l.b16 %v7029
        %v7319 = vunpack.c.l.b16 %v7030
        %v7320 = vunpack.c.l.b16 %v7031
        %v7321 = vunpack.c.l.b16 %v7032
        %v7322 = vunpack.c.l.b16 %v7033
        %v7323 = vunpack.c.l.b16 %v7034
        %v7324 = vunpack.c.l.b16 %v7035
        %v7325 = vunpack.c.l.b16 %v7036
        %v7326 = vunpack.c.l.b16 %v7037
        %v7327 = vunpack.c.l.b16 %v7038
        %v7328 = vunpack.c.l.b16 %v7039
        %v7329 = vunpack.c.l.b16 %v7040
        %v7330 = vunpack.c.l.b16 %v7041
        %v7331 = vunpack.c.l.b16 %v7042
        %v7332 = vunpack.c.l.b16 %v7043
        %v7333 = vunpack.c.l.b16 %v7044
        %v7334 = vunpack.c.l.b16 %v7045
        %v7335 = vunpack.c.l.b16 %v7046
        %v7336 = vunpack.c.l.b16 %v7047
        %v7337 = vunpack.c.l.b16 %v7048
        %v7338 = vunpack.c.l.b16 %v7049
        %v7339 = vunpack.c.l.b16 %v7050
        %v7340 = vunpack.c.l.b16 %v7051
        %v7341 = vunpack.c.l.b16 %v7052
        %v7342 = vunpack.c.l.b16 %v7053
        %v7343 = vunpack.c.l.b16 %v7054
        %v7344 = vunpack.c.l.b16 %v7055
        %v7345 = vunpack.c.l.b16 %v7056
        %v7346 = vunpack.c.l.b16 %v7057
        %v7347 = vunpack.c.l.b16 %v7058
        %v7348 = vunpack.c.l.b16 %v7059
        %v7349 = vunpack.c.l.b16 %v7060
        %v7350 = vunpack.c.l.b16 %v7061
        %v7351 = vunpack.c.l.b16 %v7062
        %v7352 = vunpack.c.l.b16 %v7063
        %v7353 = vunpack.c.l.b16 %v7064
        %v7354 = vunpack.c.l.b16 %v7065
        %v7355 = vunpack.c.l.b16 %v7066
        %v7356 = vunpack.c.l.b16 %v7067
        %v7357 = vunpack.c.l.b16 %v7068
        %v7358 = vunpack.c.l.b16 %v7069
        %v7359 = vunpack.c.l.b16 %v7070
        %v7360 = vunpack.c.l.b16 %v7071
        %v7361 = vunpack.c.l.b16 %v7072
        %v7362 = vunpack.c.l.b16 %v7073
        %v7363 = vunpack.c.l.b16 %v7074
        %v7364 = vunpack.c.l.b16 %v7075
        %v7365 = vunpack.c.l.b16 %v7076
        %v7366 = vunpack.c.l.b16 %v7077
        %v7367 = vunpack.c.l.b16 %v7078
        %v7368 = vunpack.c.l.b16 %v7079
        %v7369 = vunpack.c.l.b16 %v7080
        %v7370 = vunpack.c.l.b16 %v7081
        %v7371 = vunpack.c.l.b16 %v7082
        %v7372 = vunpack.c.l.b16 %v7083
        %v7373 = vunpack.c.l.b16 %v7084
        %v7374 = vunpack.c.l.b16 %v7085
        %v7375 = vunpack.c.l.b16 %v7086
        %v7376 = vunpack.c.l.b16 %v7087
        %v7377 = vunpack.c.l.b16 %v7088
        %v7378 = vunpack.c.l.b16 %v7089
        %v7379 = vunpack.c.l.b16 %v7090
        %v7380 = vunpack.c.l.b16 %v7091
        %v7381 = vunpack.c.l.b16 %v7092
        %v7382 = vunpack.c.l.b16 %v7093
        %v7383 = vunpack.c.l.b16 %v7094
        %v7384 = vunpack.c.l.b16 %v7095
        %v7385 = vunpack.c.l.b16 %v7096
        %v7386 = vunpack.c.l.b16 %v7097
        %v7387 = vunpack.c.l.b16 %v7098
        %v7388 = vunpack.c.l.b16 %v7099
        %v7389 = vunpack.c.l.b16 %v7100
        %v7390 = vunpack.c.l.b16 %v7101
        %v7391 = vunpack.c.l.b16 %v7102
        %v7392 = vunpack.c.l.b16 %v7103
        %v7393 = vunpack.c.l.b16 %v7104
        %v7394 = vunpack.c.l.b16 %v7105
        %v7395 = vunpack.c.l.b16 %v7106
        %v7396 = vunpack.c.l.b16 %v7107
        %v7397 = vunpack.c.l.b16 %v7108
        %v7398 = vunpack.c.l.b16 %v7109
        %v7399 = vunpack.c.l.b16 %v7110
        %v7400 = vunpack.c.l.b16 %v7111
        %v7401 = vunpack.c.l.b16 %v7112
        %v7402 = vunpack.c.l.b16 %v7113
        %v7403 = vunpack.c.l.b16 %v7114
        %v7404 = vunpack.c.l.b16 %v7115
        %v7405 = vunpack.c.l.b16 %v7116
        %v7406 = vunpack.c.l.b16 %v7117
        %v7407 = vunpack.c.l.b16 %v7118
        %v7408 = vunpack.c.l.b16 %v7119
        %v7409 = vunpack.c.l.b16 %v7120
        %v7410 = vunpack.c.l.b16 %v7121
        %v7411 = vunpack.c.l.b16 %v7122
        %v7412 = vunpack.c.l.b16 %v7123
        %v7413 = vunpack.c.l.b16 %v7124
        %v7414 = vunpack.c.l.b16 %v7125
        %v7415 = vunpack.c.l.b16 %v7126
        %v7416 = vunpack.c.l.b16 %v7127
        %v7417 = vunpack.c.l.b16 %v7128
        %v7418 = vunpack.c.l.b16 %v7129
        %v7419 = vunpack.c.l.b16 %v7130
        %v7420 = vunpack.c.l.b16 %v7131
        %v7421 = vunpack.c.l.b16 %v7132
        %v7422 = vunpack.c.l.b16 %v7133
        %v7423 = vunpack.c.l.b16 %v7134
        %v7424 = vunpack.c.l.b16 %v7135
        %v7425 = vunpack.c.l.b16 %v7136
        %v7426 = vunpack.c.l.b16 %v7137
        %v7427 = vunpack.c.l.b16 %v7138
        %v7428 = vunpack.c.l.b16 %v7139
        %v7429 = vunpack.c.l.b16 %v7140
        %v7430 = vunpack.c.l.b16 %v7141
        %v7431 = vunpack.c.l.b16 %v7142
        %v7432 = vunpack.c.l.b16 %v7143
        %v7433 = vunpack.c.l.b16 %v7144
        %v7434 = vunpack.c.l.b16 %v7145
        %v7435 = vunpack.c.l.b16 %v7146
        %v7436 = vunpack.c.l.b16 %v7147
        %v7437 = vunpack.c.l.b16 %v7148
        %v7438 = vpack.c.b16 %v7295, %v7294
        %v7439 = vpack.c.b16 %v7297, %v7296
        %v7440 = vpack.c.b16 %v7299, %v7298
        %v7441 = vpack.c.b16 %v7301, %v7300
        %v7442 = vpack.c.b16 %v7303, %v7302
        %v7443 = vpack.c.b16 %v7305, %v7304
        %v7444 = vpack.c.b16 %v7307, %v7306
        %v7445 = vpack.c.b16 %v7309, %v7308
        %v7446 = vpack.c.b16 %v7311, %v7310
        %v7447 = vpack.c.b16 %v7313, %v7312
        %v7448 = vpack.c.b16 %v7315, %v7314
        %v7449 = vpack.c.b16 %v7317, %v7316
        %v7450 = vpack.c.b16 %v7319, %v7318
        %v7451 = vpack.c.b16 %v7321, %v7320
        %v7452 = vpack.c.b16 %v7323, %v7322
        %v7453 = vpack.c.b16 %v7325, %v7324
        %v7454 = vpack.c.b16 %v7327, %v7326
        %v7455 = vpack.c.b16 %v7329, %v7328
        %v7456 = vpack.c.b16 %v7331, %v7330
        %v7457 = vpack.c.b16 %v7333, %v7332
        %v7458 = vpack.c.b16 %v7335, %v7334
        %v7459 = vpack.c.b16 %v7337, %v7336
        %v7460 = vpack.c.b16 %v7339, %v7338
        %v7461 = vpack.c.b16 %v7341, %v7340
        %v7462 = vpack.c.b16 %v7343, %v7342
        %v7463 = vpack.c.b16 %v7345, %v7344
        %v7464 = vpack.c.b16 %v7347, %v7346
        %v7465 = vpack.c.b16 %v7349, %v7348
        %v7466 = vpack.c.b16 %v7351, %v7350
        %v7467 = vpack.c.b16 %v7353, %v7352
        %v7468 = vpack.c.b16 %v7355, %v7354
        %v7469 = vpack.c.b16 %v7357, %v7356
        %v7470 = vpack.c.b16 %v7359, %v7358
        %v7471 = vpack.c.b16 %v7361, %v7360
        %v7472 = vpack.c.b16 %v7363, %v7362
        %v7473 = vpack.c.b16 %v7365, %v7364
        %v7474 = vpack.c.b16 %v7367, %v7366
        %v7475 = vpack.c.b16 %v7369, %v7368
        %v7476 = vpack.c.b16 %v7371, %v7370
        %v7477 = vpack.c.b16 %v7373, %v7372
        %v7478 = vpack.c.b16 %v7375, %v7374
        %v7479 = vpack.c.b16 %v7377, %v7376
        %v7480 = vpack.c.b16 %v7379, %v7378
        %v7481 = vpack.c.b16 %v7381, %v7380
        %v7482 = vpack.c.b16 %v7383, %v7382
        %v7483 = vpack.c.b16 %v7385, %v7384
        %v7484 = vpack.c.b16 %v7387, %v7386
        %v7485 = vpack.c.b16 %v7389, %v7388
        %v7486 = vpack.c.b16 %v7391, %v7390
        %v7487 = vpack.c.b16 %v7393, %v7392
        %v7488 = vpack.c.b16 %v7395, %v7394
        %v7489 = vpack.c.b16 %v7397, %v7396
        %v7490 = vpack.c.b16 %v7399, %v7398
        %v7491 = vpack.c.b16 %v7401, %v7400
        %v7492 = vpack.c.b16 %v7403, %v7402
        %v7493 = vpack.c.b16 %v7405, %v7404
        %v7494 = vpack.c.b16 %v7407, %v7406
        %v7495 = vpack.c.b16 %v7409, %v7408
        %v7496 = vpack.c.b16 %v7411, %v7410
        %v7497 = vpack.c.b16 %v7413, %v7412
        %v7498 = vpack.c.b16 %v7415, %v7414
        %v7499 = vpack.c.b16 %v7417, %v7416
        %v7500 = vpack.c.b16 %v7419, %v7418
        %v7501 = vpack.c.b16 %v7421, %v7420
        %v7502 = vpack.c.b16 %v7423, %v7422
        %v7503 = vpack.c.b16 %v7425, %v7424
        %v7504 = vpack.c.b16 %v7427, %v7426
        %v7505 = vpack.c.b16 %v7429, %v7428
        %v7506 = vpack.c.b16 %v7431, %v7430
        %v7507 = vpack.c.b16 %v7433, %v7432
        %v7508 = vpack.c.b16 %v7435, %v7434
        %v7509 = vpack.c.b16 %v7437, %v7436
        %7582 = vmatpush.bf16.msra.mxu0 %v7445
        %7583 = vmatpush.bf16.msra.mxu0 %v7444
        %7584 = vmatpush.bf16.msra.mxu0 %v7443
        %7585 = vmatpush.bf16.msra.mxu0 %v7442
        %7586 = vmatpush.bf16.msra.mxu0 %v7441
        %7587 = vmatpush.bf16.msra.mxu0 %v7440
        %7588 = vmatpush.bf16.msra.mxu0 %v7439
        %7589 = vmatpush.bf16.msra.mxu0 %v7438
        %7590 = vmatmul.bf16.gmra.mxu0 %v6977
        %v7591 = vpop.f32.mrf.mxu0
        %v7592 = vadd.f32 %v7149, %v7591
        %v7593 = vpop.f32.mrf.mxu0
        %7594 = vdwg.mxu0
        %7595 = vmatpush.bf16.msra.mxu0 %v7453
        %7596 = vmatpush.bf16.msra.mxu0 %v7452
        %7597 = vmatpush.bf16.msra.mxu0 %v7451
        %7598 = vmatpush.bf16.msra.mxu0 %v7450
        %7599 = vmatpush.bf16.msra.mxu0 %v7449
        %7600 = vmatpush.bf16.msra.mxu0 %v7448
        %7601 = vmatpush.bf16.msra.mxu0 %v7447
        %7602 = vmatpush.bf16.msra.mxu0 %v7446
        %7603 = vmatmul.bf16.gmra.mxu0 %v6978
        %v7604 = vpop.f32.mrf.mxu0
        %v7605 = vadd.f32 %v7592, %v7604
        %v7606 = vpop.f32.mrf.mxu0
        %7607 = vdwg.mxu0
        %7608 = vmatpush.bf16.msra.mxu0 %v7461
        %7609 = vmatpush.bf16.msra.mxu0 %v7460
        %7610 = vmatpush.bf16.msra.mxu0 %v7459
        %7611 = vmatpush.bf16.msra.mxu0 %v7458
        %7612 = vmatpush.bf16.msra.mxu0 %v7457
        %7613 = vmatpush.bf16.msra.mxu0 %v7456
        %7614 = vmatpush.bf16.msra.mxu0 %v7455
        %7615 = vmatpush.bf16.msra.mxu0 %v7454
        %7616 = vmatmul.bf16.gmra.mxu0 %v6979
        %v7617 = vpop.f32.mrf.mxu0
        %v7618 = vadd.f32 %v7605, %v7617
        %v7619 = vpop.f32.mrf.mxu0
        %7620 = vdwg.mxu0
        %7621 = vmatpush.bf16.msra.mxu0 %v7469
        %7622 = vmatpush.bf16.msra.mxu0 %v7468
        %7623 = vmatpush.bf16.msra.mxu0 %v7467
        %7624 = vmatpush.bf16.msra.mxu0 %v7466
        %7625 = vmatpush.bf16.msra.mxu0 %v7465
        %7626 = vmatpush.bf16.msra.mxu0 %v7464
        %7627 = vmatpush.bf16.msra.mxu0 %v7463
        %7628 = vmatpush.bf16.msra.mxu0 %v7462
        %7629 = vmatmul.bf16.gmra.mxu0 %v6988
        %v7630 = vpop.f32.mrf.mxu0
        %v7631 = vadd.f32 %v7618, %v7630
        %v7632 = vpop.f32.mrf.mxu0
        %7633 = vdwg.mxu0
        %7634 = vmatpush.bf16.msra.mxu0 %v7477
        %7635 = vmatpush.bf16.msra.mxu0 %v7476
        %7636 = vmatpush.bf16.msra.mxu0 %v7475
        %7637 = vmatpush.bf16.msra.mxu0 %v7474
        %7638 = vmatpush.bf16.msra.mxu0 %v7473
        %7639 = vmatpush.bf16.msra.mxu0 %v7472
        %7640 = vmatpush.bf16.msra.mxu0 %v7471
        %7641 = vmatpush.bf16.msra.mxu0 %v7470
        %7642 = vmatmul.bf16.gmra.mxu0 %v6989
        %v7643 = vpop.f32.mrf.mxu0
        %v7644 = vadd.f32 %v7631, %v7643
        %v7645 = vpop.f32.mrf.mxu0
        %7646 = vdwg.mxu0
        %7647 = vmatpush.bf16.msra.mxu0 %v7485
        %7648 = vmatpush.bf16.msra.mxu0 %v7484
        %7649 = vmatpush.bf16.msra.mxu0 %v7483
        %7650 = vmatpush.bf16.msra.mxu0 %v7482
        %7651 = vmatpush.bf16.msra.mxu0 %v7481
        %7652 = vmatpush.bf16.msra.mxu0 %v7480
        %7653 = vmatpush.bf16.msra.mxu0 %v7479
        %7654 = vmatpush.bf16.msra.mxu0 %v7478
        %7655 = vmatmul.bf16.gmra.mxu0 %v6990
        %v7656 = vpop.f32.mrf.mxu0
        %v7657 = vadd.f32 %v7644, %v7656
        %v7658 = vpop.f32.mrf.mxu0
        %7659 = vdwg.mxu0
        %7660 = vmatpush.bf16.msra.mxu0 %v7493
        %7661 = vmatpush.bf16.msra.mxu0 %v7492
        %7662 = vmatpush.bf16.msra.mxu0 %v7491
        %7663 = vmatpush.bf16.msra.mxu0 %v7490
        %7664 = vmatpush.bf16.msra.mxu0 %v7489
        %7665 = vmatpush.bf16.msra.mxu0 %v7488
        %7666 = vmatpush.bf16.msra.mxu0 %v7487
        %7667 = vmatpush.bf16.msra.mxu0 %v7486
        %7668 = vmatmul.bf16.gmra.mxu0 %v6999
        %v7669 = vpop.f32.mrf.mxu0
        %v7670 = vadd.f32 %v7657, %v7669
        %v7671 = vpop.f32.mrf.mxu0
        %7672 = vdwg.mxu0
        %7673 = vmatpush.bf16.msra.mxu0 %v7501
        %7674 = vmatpush.bf16.msra.mxu0 %v7500
        %7675 = vmatpush.bf16.msra.mxu0 %v7499
        %7676 = vmatpush.bf16.msra.mxu0 %v7498
        %7677 = vmatpush.bf16.msra.mxu0 %v7497
        %7678 = vmatpush.bf16.msra.mxu0 %v7496
        %7679 = vmatpush.bf16.msra.mxu0 %v7495
        %7680 = vmatpush.bf16.msra.mxu0 %v7494
        %7681 = vmatmul.bf16.gmra.mxu0 %v7000
        %v7682 = vpop.f32.mrf.mxu0
        %v7683 = vadd.f32 %v7670, %v7682
        %v7684 = vpop.f32.mrf.mxu0
        %7685 = vdwg.mxu0
        %7686 = vmatpush.bf16.msra.mxu0 %v7509
        %7687 = vmatpush.bf16.msra.mxu0 %v7508
        %7688 = vmatpush.bf16.msra.mxu0 %v7507
        %7689 = vmatpush.bf16.msra.mxu0 %v7506
        %7690 = vmatpush.bf16.msra.mxu0 %v7505
        %7691 = vmatpush.bf16.msra.mxu0 %v7504
        %7692 = vmatpush.bf16.msra.mxu0 %v7503
        %7693 = vmatpush.bf16.msra.mxu0 %v7502
        %7694 = vmatmul.bf16.gmra.mxu0 %v7001
        %v7695 = vpop.f32.mrf.mxu0
        %v7696 = vadd.f32 %v7683, %v7695
        %v7697 = vpop.f32.mrf.mxu0
        %7698 = vdwg.mxu0
        %v7699 = vmax.f32 %v7696, 0.0
        %7700 = vst [vmem:[#allocation4 + $0x3] sm:$0x1] %v7699
        %s7701 = scalar_lea.vmem [#allocation3], 25
        %v7702 = vld [vmem:[%s7701] ss:$8 sm:$0x7]
        %v7704 = vperm.slane %v7702, 0
        %v7705 = vperm.slane %v7702, 1
        %v7706 = vperm.slane %v7702, 2
        %v7710 = vpack.c.bf16 %v7705, %v7704
        %v7711 = vpack.c.bf16 %v7706, %v7706
        %s7712 = scalar_lea.vmem [#allocation3], 26
        %v7713 = vld [vmem:[%s7712] ss:$8 sm:$0x7]
        %v7715 = vperm.slane %v7713, 0
        %v7716 = vperm.slane %v7713, 1
        %v7717 = vperm.slane %v7713, 2
        %v7721 = vpack.c.bf16 %v7716, %v7715
        %v7722 = vpack.c.bf16 %v7717, %v7717
        %s7723 = scalar_lea.vmem [#allocation3], 27
        %v7724 = vld [vmem:[%s7723] ss:$8 sm:$0x7]
        %v7726 = vperm.slane %v7724, 0
        %v7727 = vperm.slane %v7724, 1
        %v7728 = vperm.slane %v7724, 2
        %v7732 = vpack.c.bf16 %v7727, %v7726
        %v7733 = vpack.c.bf16 %v7728, %v7728
        %v7736 = vunpack.c.l.b16 %v7710
        %v7737 = vunpack.c.h.b16 %v7710
        %v7738 = vunpack.c.l.b16 %v7711
        %v7739 = vpack.c.b16 %v7736, %v7736
        %v7740 = vpack.c.b16 %v7737, %v7737
        %v7741 = vpack.c.b16 %v7738, %v7738
        %v7747 = vunpack.c.l.b16 %v7721
        %v7748 = vunpack.c.h.b16 %v7721
        %v7749 = vunpack.c.l.b16 %v7722
        %v7750 = vpack.c.b16 %v7747, %v7747
        %v7751 = vpack.c.b16 %v7748, %v7748
        %v7752 = vpack.c.b16 %v7749, %v7749
        %v7758 = vunpack.c.l.b16 %v7732
        %v7759 = vunpack.c.h.b16 %v7732
        %v7760 = vunpack.c.l.b16 %v7733
        %v7761 = vpack.c.b16 %v7758, %v7758
        %v7762 = vpack.c.b16 %v7759, %v7759
        %v7763 = vpack.c.b16 %v7760, %v7760
        %v7767 = vld [vmem:[#allocation12] sm:$0xf]
        %v7768 = vld [vmem:[#allocation12 + $0x4] sm:$0xf]
        %v7769 = vld [vmem:[#allocation12 + $0x8] sm:$0xf]
        %v7770 = vld [vmem:[#allocation12 + $0xc] sm:$0xf]
        %v7771 = vld [vmem:[#allocation12 + $0x10] sm:$0xf]
        %v7772 = vld [vmem:[#allocation12 + $0x14] sm:$0xf]
        %v7773 = vld [vmem:[#allocation12 + $0x18] sm:$0xf]
        %v7774 = vld [vmem:[#allocation12 + $0x1c] sm:$0xf]
        %v7775 = vld [vmem:[#allocation12 + $0x20] sm:$0xf]
        %v7776 = vld [vmem:[#allocation12 + $0x24] sm:$0xf]
        %v7777 = vld [vmem:[#allocation12 + $0x28] sm:$0xf]
        %v7778 = vld [vmem:[#allocation12 + $0x2c] sm:$0xf]
        %v7779 = vld [vmem:[#allocation12 + $0x30] sm:$0xf]
        %v7780 = vld [vmem:[#allocation12 + $0x34] sm:$0xf]
        %v7781 = vld [vmem:[#allocation12 + $0x38] sm:$0xf]
        %v7782 = vld [vmem:[#allocation12 + $0x3c] sm:$0xf]
        %v7783 = vld [vmem:[#allocation12 + $0x40] sm:$0xf]
        %v7784 = vld [vmem:[#allocation12 + $0x44] sm:$0xf]
        %v7785 = vld [vmem:[#allocation12 + $0x48] sm:$0xf]
        %v7786 = vld [vmem:[#allocation12 + $0x4c] sm:$0xf]
        %v7787 = vld [vmem:[#allocation12 + $0x50] sm:$0xf]
        %v7788 = vld [vmem:[#allocation12 + $0x54] sm:$0xf]
        %v7789 = vld [vmem:[#allocation12 + $0x58] sm:$0xf]
        %v7790 = vld [vmem:[#allocation12 + $0x5c] sm:$0xf]
        %v7791 = vld [vmem:[#allocation12 + $0x60] sm:$0xf]
        %v7792 = vld [vmem:[#allocation12 + $0x64] sm:$0xf]
        %v7793 = vld [vmem:[#allocation12 + $0x68] sm:$0xf]
        %v7794 = vld [vmem:[#allocation12 + $0x6c] sm:$0xf]
        %v7795 = vld [vmem:[#allocation12 + $0x70] sm:$0xf]
        %v7796 = vld [vmem:[#allocation12 + $0x74] sm:$0xf]
        %v7797 = vld [vmem:[#allocation12 + $0x78] sm:$0xf]
        %v7798 = vld [vmem:[#allocation12 + $0x7c] sm:$0xf]
        %v7799 = vld [vmem:[#allocation12 + $0x80] sm:$0xf]
        %v7800 = vld [vmem:[#allocation12 + $0x84] sm:$0xf]
        %v7801 = vld [vmem:[#allocation12 + $0x88] sm:$0xf]
        %v7802 = vld [vmem:[#allocation12 + $0x8c] sm:$0xf]
        %v7803 = vld [vmem:[#allocation12 + $0x90] sm:$0xf]
        %v7804 = vld [vmem:[#allocation12 + $0x94] sm:$0xf]
        %v7805 = vld [vmem:[#allocation12 + $0x98] sm:$0xf]
        %v7806 = vld [vmem:[#allocation12 + $0x9c] sm:$0xf]
        %v7807 = vld [vmem:[#allocation12 + $0xa0] sm:$0xf]
        %v7808 = vld [vmem:[#allocation12 + $0xa4] sm:$0xf]
        %v7809 = vld [vmem:[#allocation12 + $0xa8] sm:$0xf]
        %v7810 = vld [vmem:[#allocation12 + $0xac] sm:$0xf]
        %v7811 = vld [vmem:[#allocation12 + $0xb0] sm:$0xf]
        %v7812 = vld [vmem:[#allocation12 + $0xb4] sm:$0xf]
        %v7813 = vld [vmem:[#allocation12 + $0xb8] sm:$0xf]
        %v7814 = vld [vmem:[#allocation12 + $0xbc] sm:$0xf]
        %v7815 = vld [vmem:[#allocation12 + $0xc0] sm:$0xf]
        %v7816 = vld [vmem:[#allocation12 + $0xc4] sm:$0xf]
        %v7817 = vld [vmem:[#allocation12 + $0xc8] sm:$0xf]
        %v7818 = vld [vmem:[#allocation12 + $0xcc] sm:$0xf]
        %v7819 = vld [vmem:[#allocation12 + $0xd0] sm:$0xf]
        %v7820 = vld [vmem:[#allocation12 + $0xd4] sm:$0xf]
        %v7821 = vld [vmem:[#allocation12 + $0xd8] sm:$0xf]
        %v7822 = vld [vmem:[#allocation12 + $0xdc] sm:$0xf]
        %v7823 = vld [vmem:[#allocation12 + $0xe0] sm:$0xf]
        %v7824 = vld [vmem:[#allocation12 + $0xe4] sm:$0xf]
        %v7825 = vld [vmem:[#allocation12 + $0xe8] sm:$0xf]
        %v7826 = vld [vmem:[#allocation12 + $0xec] sm:$0xf]
        %v7827 = vld [vmem:[#allocation12 + $0xf0] sm:$0xf]
        %v7828 = vld [vmem:[#allocation12 + $0xf4] sm:$0xf]
        %v7829 = vld [vmem:[#allocation12 + $0xf8] sm:$0xf]
        %v7830 = vld [vmem:[#allocation12 + $0xfc] sm:$0xf]
        %v7831 = vld [vmem:[#allocation12 + $0x100] sm:$0xf]
        %v7832 = vld [vmem:[#allocation12 + $0x104] sm:$0xf]
        %v7833 = vld [vmem:[#allocation12 + $0x108] sm:$0xf]
        %v7834 = vld [vmem:[#allocation12 + $0x10c] sm:$0xf]
        %v7835 = vld [vmem:[#allocation12 + $0x110] sm:$0xf]
        %v7836 = vld [vmem:[#allocation12 + $0x114] sm:$0xf]
        %v7837 = vld [vmem:[#allocation12 + $0x118] sm:$0xf]
        %v7838 = vld [vmem:[#allocation12 + $0x11c] sm:$0xf]
        %v7839 = vld [vmem:[#allocation12 + $0x120] sm:$0xf]
        %v7840 = vld [vmem:[#allocation12 + $0x124] sm:$0xf]
        %v7841 = vld [vmem:[#allocation12 + $0x128] sm:$0xf]
        %v7842 = vld [vmem:[#allocation12 + $0x12c] sm:$0xf]
        %v7843 = vld [vmem:[#allocation12 + $0x130] sm:$0xf]
        %v7844 = vld [vmem:[#allocation12 + $0x134] sm:$0xf]
        %v7845 = vld [vmem:[#allocation12 + $0x138] sm:$0xf]
        %v7846 = vld [vmem:[#allocation12 + $0x13c] sm:$0xf]
        %v7847 = vld [vmem:[#allocation12 + $0x140] sm:$0xf]
        %v7848 = vld [vmem:[#allocation12 + $0x144] sm:$0xf]
        %v7849 = vld [vmem:[#allocation12 + $0x148] sm:$0xf]
        %v7850 = vld [vmem:[#allocation12 + $0x14c] sm:$0xf]
        %v7851 = vld [vmem:[#allocation12 + $0x150] sm:$0xf]
        %v7852 = vld [vmem:[#allocation12 + $0x154] sm:$0xf]
        %v7853 = vld [vmem:[#allocation12 + $0x158] sm:$0xf]
        %v7854 = vld [vmem:[#allocation12 + $0x15c] sm:$0xf]
        %v7855 = vld [vmem:[#allocation12 + $0x160] sm:$0xf]
        %v7856 = vld [vmem:[#allocation12 + $0x164] sm:$0xf]
        %v7857 = vld [vmem:[#allocation12 + $0x168] sm:$0xf]
        %v7858 = vld [vmem:[#allocation12 + $0x16c] sm:$0xf]
        %v7859 = vld [vmem:[#allocation12 + $0x170] sm:$0xf]
        %v7860 = vld [vmem:[#allocation12 + $0x174] sm:$0xf]
        %v7861 = vld [vmem:[#allocation12 + $0x178] sm:$0xf]
        %v7862 = vld [vmem:[#allocation12 + $0x17c] sm:$0xf]
        %v7863 = vld [vmem:[#allocation12 + $0x180] sm:$0xf]
        %v7864 = vld [vmem:[#allocation12 + $0x184] sm:$0xf]
        %v7865 = vld [vmem:[#allocation12 + $0x188] sm:$0xf]
        %v7866 = vld [vmem:[#allocation12 + $0x18c] sm:$0xf]
        %v7867 = vld [vmem:[#allocation12 + $0x190] sm:$0xf]
        %v7868 = vld [vmem:[#allocation12 + $0x194] sm:$0xf]
        %v7869 = vld [vmem:[#allocation12 + $0x198] sm:$0xf]
        %v7870 = vld [vmem:[#allocation12 + $0x19c] sm:$0xf]
        %v7871 = vld [vmem:[#allocation12 + $0x1a0] sm:$0xf]
        %v7872 = vld [vmem:[#allocation12 + $0x1a4] sm:$0xf]
        %v7873 = vld [vmem:[#allocation12 + $0x1a8] sm:$0xf]
        %v7874 = vld [vmem:[#allocation12 + $0x1ac] sm:$0xf]
        %v7875 = vld [vmem:[#allocation12 + $0x1b0] sm:$0xf]
        %v7876 = vld [vmem:[#allocation12 + $0x1b4] sm:$0xf]
        %v7877 = vld [vmem:[#allocation12 + $0x1b8] sm:$0xf]
        %v7878 = vld [vmem:[#allocation12 + $0x1bc] sm:$0xf]
        %v7879 = vld [vmem:[#allocation12 + $0x1c0] sm:$0xf]
        %v7880 = vld [vmem:[#allocation12 + $0x1c4] sm:$0xf]
        %v7881 = vld [vmem:[#allocation12 + $0x1c8] sm:$0xf]
        %v7882 = vld [vmem:[#allocation12 + $0x1cc] sm:$0xf]
        %v7883 = vld [vmem:[#allocation12 + $0x1d0] sm:$0xf]
        %v7884 = vld [vmem:[#allocation12 + $0x1d4] sm:$0xf]
        %v7885 = vld [vmem:[#allocation12 + $0x1d8] sm:$0xf]
        %v7886 = vld [vmem:[#allocation12 + $0x1dc] sm:$0xf]
        %v7887 = vld [vmem:[#allocation12 + $0x1e0] sm:$0xf]
        %v7888 = vld [vmem:[#allocation12 + $0x1e4] sm:$0xf]
        %v7889 = vld [vmem:[#allocation12 + $0x1e8] sm:$0xf]
        %v7890 = vld [vmem:[#allocation12 + $0x1ec] sm:$0xf]
        %v7891 = vld [vmem:[#allocation12 + $0x1f0] sm:$0xf]
        %v7892 = vld [vmem:[#allocation12 + $0x1f4] sm:$0xf]
        %v7893 = vld [vmem:[#allocation12 + $0x1f8] sm:$0xf]
        %v7894 = vld [vmem:[#allocation12 + $0x1fc] sm:$0xf]
        %v7895 = vld [vmem:[#allocation12 + $0x200] sm:$0xf]
        %v7896 = vld [vmem:[#allocation12 + $0x204] sm:$0xf]
        %v7897 = vld [vmem:[#allocation12 + $0x208] sm:$0xf]
        %v7898 = vld [vmem:[#allocation12 + $0x20c] sm:$0xf]
        %v7899 = vld [vmem:[#allocation12 + $0x210] sm:$0xf]
        %v7900 = vld [vmem:[#allocation12 + $0x214] sm:$0xf]
        %v7901 = vld [vmem:[#allocation12 + $0x218] sm:$0xf]
        %v7902 = vld [vmem:[#allocation12 + $0x21c] sm:$0xf]
        %v7903 = vld [vmem:[#allocation12 + $0x220] sm:$0xf]
        %v7904 = vld [vmem:[#allocation12 + $0x224] sm:$0xf]
        %v7905 = vld [vmem:[#allocation12 + $0x228] sm:$0xf]
        %v7906 = vld [vmem:[#allocation12 + $0x22c] sm:$0xf]
        %v7907 = vld [vmem:[#allocation12 + $0x230] sm:$0xf]
        %v7908 = vld [vmem:[#allocation12 + $0x234] sm:$0xf]
        %v7909 = vld [vmem:[#allocation12 + $0x238] sm:$0xf]
        %v7910 = vld [vmem:[#allocation12 + $0x23c] sm:$0xf]
        %v7911 = vld [vmem:[#allocation21] sm:$0x1]
        %v8056 = vunpack.c.l.b16 %v7767
        %v8057 = vunpack.c.l.b16 %v7768
        %v8058 = vunpack.c.l.b16 %v7769
        %v8059 = vunpack.c.l.b16 %v7770
        %v8060 = vunpack.c.l.b16 %v7771
        %v8061 = vunpack.c.l.b16 %v7772
        %v8062 = vunpack.c.l.b16 %v7773
        %v8063 = vunpack.c.l.b16 %v7774
        %v8064 = vunpack.c.l.b16 %v7775
        %v8065 = vunpack.c.l.b16 %v7776
        %v8066 = vunpack.c.l.b16 %v7777
        %v8067 = vunpack.c.l.b16 %v7778
        %v8068 = vunpack.c.l.b16 %v7779
        %v8069 = vunpack.c.l.b16 %v7780
        %v8070 = vunpack.c.l.b16 %v7781
        %v8071 = vunpack.c.l.b16 %v7782
        %v8072 = vunpack.c.l.b16 %v7783
        %v8073 = vunpack.c.l.b16 %v7784
        %v8074 = vunpack.c.l.b16 %v7785
        %v8075 = vunpack.c.l.b16 %v7786
        %v8076 = vunpack.c.l.b16 %v7787
        %v8077 = vunpack.c.l.b16 %v7788
        %v8078 = vunpack.c.l.b16 %v7789
        %v8079 = vunpack.c.l.b16 %v7790
        %v8080 = vunpack.c.l.b16 %v7791
        %v8081 = vunpack.c.l.b16 %v7792
        %v8082 = vunpack.c.l.b16 %v7793
        %v8083 = vunpack.c.l.b16 %v7794
        %v8084 = vunpack.c.l.b16 %v7795
        %v8085 = vunpack.c.l.b16 %v7796
        %v8086 = vunpack.c.l.b16 %v7797
        %v8087 = vunpack.c.l.b16 %v7798
        %v8088 = vunpack.c.l.b16 %v7799
        %v8089 = vunpack.c.l.b16 %v7800
        %v8090 = vunpack.c.l.b16 %v7801
        %v8091 = vunpack.c.l.b16 %v7802
        %v8092 = vunpack.c.l.b16 %v7803
        %v8093 = vunpack.c.l.b16 %v7804
        %v8094 = vunpack.c.l.b16 %v7805
        %v8095 = vunpack.c.l.b16 %v7806
        %v8096 = vunpack.c.l.b16 %v7807
        %v8097 = vunpack.c.l.b16 %v7808
        %v8098 = vunpack.c.l.b16 %v7809
        %v8099 = vunpack.c.l.b16 %v7810
        %v8100 = vunpack.c.l.b16 %v7811
        %v8101 = vunpack.c.l.b16 %v7812
        %v8102 = vunpack.c.l.b16 %v7813
        %v8103 = vunpack.c.l.b16 %v7814
        %v8104 = vunpack.c.l.b16 %v7815
        %v8105 = vunpack.c.l.b16 %v7816
        %v8106 = vunpack.c.l.b16 %v7817
        %v8107 = vunpack.c.l.b16 %v7818
        %v8108 = vunpack.c.l.b16 %v7819
        %v8109 = vunpack.c.l.b16 %v7820
        %v8110 = vunpack.c.l.b16 %v7821
        %v8111 = vunpack.c.l.b16 %v7822
        %v8112 = vunpack.c.l.b16 %v7823
        %v8113 = vunpack.c.l.b16 %v7824
        %v8114 = vunpack.c.l.b16 %v7825
        %v8115 = vunpack.c.l.b16 %v7826
        %v8116 = vunpack.c.l.b16 %v7827
        %v8117 = vunpack.c.l.b16 %v7828
        %v8118 = vunpack.c.l.b16 %v7829
        %v8119 = vunpack.c.l.b16 %v7830
        %v8120 = vunpack.c.l.b16 %v7831
        %v8121 = vunpack.c.l.b16 %v7832
        %v8122 = vunpack.c.l.b16 %v7833
        %v8123 = vunpack.c.l.b16 %v7834
        %v8124 = vunpack.c.l.b16 %v7835
        %v8125 = vunpack.c.l.b16 %v7836
        %v8126 = vunpack.c.l.b16 %v7837
        %v8127 = vunpack.c.l.b16 %v7838
        %v8128 = vunpack.c.l.b16 %v7839
        %v8129 = vunpack.c.l.b16 %v7840
        %v8130 = vunpack.c.l.b16 %v7841
        %v8131 = vunpack.c.l.b16 %v7842
        %v8132 = vunpack.c.l.b16 %v7843
        %v8133 = vunpack.c.l.b16 %v7844
        %v8134 = vunpack.c.l.b16 %v7845
        %v8135 = vunpack.c.l.b16 %v7846
        %v8136 = vunpack.c.l.b16 %v7847
        %v8137 = vunpack.c.l.b16 %v7848
        %v8138 = vunpack.c.l.b16 %v7849
        %v8139 = vunpack.c.l.b16 %v7850
        %v8140 = vunpack.c.l.b16 %v7851
        %v8141 = vunpack.c.l.b16 %v7852
        %v8142 = vunpack.c.l.b16 %v7853
        %v8143 = vunpack.c.l.b16 %v7854
        %v8144 = vunpack.c.l.b16 %v7855
        %v8145 = vunpack.c.l.b16 %v7856
        %v8146 = vunpack.c.l.b16 %v7857
        %v8147 = vunpack.c.l.b16 %v7858
        %v8148 = vunpack.c.l.b16 %v7859
        %v8149 = vunpack.c.l.b16 %v7860
        %v8150 = vunpack.c.l.b16 %v7861
        %v8151 = vunpack.c.l.b16 %v7862
        %v8152 = vunpack.c.l.b16 %v7863
        %v8153 = vunpack.c.l.b16 %v7864
        %v8154 = vunpack.c.l.b16 %v7865
        %v8155 = vunpack.c.l.b16 %v7866
        %v8156 = vunpack.c.l.b16 %v7867
        %v8157 = vunpack.c.l.b16 %v7868
        %v8158 = vunpack.c.l.b16 %v7869
        %v8159 = vunpack.c.l.b16 %v7870
        %v8160 = vunpack.c.l.b16 %v7871
        %v8161 = vunpack.c.l.b16 %v7872
        %v8162 = vunpack.c.l.b16 %v7873
        %v8163 = vunpack.c.l.b16 %v7874
        %v8164 = vunpack.c.l.b16 %v7875
        %v8165 = vunpack.c.l.b16 %v7876
        %v8166 = vunpack.c.l.b16 %v7877
        %v8167 = vunpack.c.l.b16 %v7878
        %v8168 = vunpack.c.l.b16 %v7879
        %v8169 = vunpack.c.l.b16 %v7880
        %v8170 = vunpack.c.l.b16 %v7881
        %v8171 = vunpack.c.l.b16 %v7882
        %v8172 = vunpack.c.l.b16 %v7883
        %v8173 = vunpack.c.l.b16 %v7884
        %v8174 = vunpack.c.l.b16 %v7885
        %v8175 = vunpack.c.l.b16 %v7886
        %v8176 = vunpack.c.l.b16 %v7887
        %v8177 = vunpack.c.l.b16 %v7888
        %v8178 = vunpack.c.l.b16 %v7889
        %v8179 = vunpack.c.l.b16 %v7890
        %v8180 = vunpack.c.l.b16 %v7891
        %v8181 = vunpack.c.l.b16 %v7892
        %v8182 = vunpack.c.l.b16 %v7893
        %v8183 = vunpack.c.l.b16 %v7894
        %v8184 = vunpack.c.l.b16 %v7895
        %v8185 = vunpack.c.l.b16 %v7896
        %v8186 = vunpack.c.l.b16 %v7897
        %v8187 = vunpack.c.l.b16 %v7898
        %v8188 = vunpack.c.l.b16 %v7899
        %v8189 = vunpack.c.l.b16 %v7900
        %v8190 = vunpack.c.l.b16 %v7901
        %v8191 = vunpack.c.l.b16 %v7902
        %v8192 = vunpack.c.l.b16 %v7903
        %v8193 = vunpack.c.l.b16 %v7904
        %v8194 = vunpack.c.l.b16 %v7905
        %v8195 = vunpack.c.l.b16 %v7906
        %v8196 = vunpack.c.l.b16 %v7907
        %v8197 = vunpack.c.l.b16 %v7908
        %v8198 = vunpack.c.l.b16 %v7909
        %v8199 = vunpack.c.l.b16 %v7910
        %v8200 = vpack.c.b16 %v8057, %v8056
        %v8201 = vpack.c.b16 %v8059, %v8058
        %v8202 = vpack.c.b16 %v8061, %v8060
        %v8203 = vpack.c.b16 %v8063, %v8062
        %v8204 = vpack.c.b16 %v8065, %v8064
        %v8205 = vpack.c.b16 %v8067, %v8066
        %v8206 = vpack.c.b16 %v8069, %v8068
        %v8207 = vpack.c.b16 %v8071, %v8070
        %v8208 = vpack.c.b16 %v8073, %v8072
        %v8209 = vpack.c.b16 %v8075, %v8074
        %v8210 = vpack.c.b16 %v8077, %v8076
        %v8211 = vpack.c.b16 %v8079, %v8078
        %v8212 = vpack.c.b16 %v8081, %v8080
        %v8213 = vpack.c.b16 %v8083, %v8082
        %v8214 = vpack.c.b16 %v8085, %v8084
        %v8215 = vpack.c.b16 %v8087, %v8086
        %v8216 = vpack.c.b16 %v8089, %v8088
        %v8217 = vpack.c.b16 %v8091, %v8090
        %v8218 = vpack.c.b16 %v8093, %v8092
        %v8219 = vpack.c.b16 %v8095, %v8094
        %v8220 = vpack.c.b16 %v8097, %v8096
        %v8221 = vpack.c.b16 %v8099, %v8098
        %v8222 = vpack.c.b16 %v8101, %v8100
        %v8223 = vpack.c.b16 %v8103, %v8102
        %v8224 = vpack.c.b16 %v8105, %v8104
        %v8225 = vpack.c.b16 %v8107, %v8106
        %v8226 = vpack.c.b16 %v8109, %v8108
        %v8227 = vpack.c.b16 %v8111, %v8110
        %v8228 = vpack.c.b16 %v8113, %v8112
        %v8229 = vpack.c.b16 %v8115, %v8114
        %v8230 = vpack.c.b16 %v8117, %v8116
        %v8231 = vpack.c.b16 %v8119, %v8118
        %v8232 = vpack.c.b16 %v8121, %v8120
        %v8233 = vpack.c.b16 %v8123, %v8122
        %v8234 = vpack.c.b16 %v8125, %v8124
        %v8235 = vpack.c.b16 %v8127, %v8126
        %v8236 = vpack.c.b16 %v8129, %v8128
        %v8237 = vpack.c.b16 %v8131, %v8130
        %v8238 = vpack.c.b16 %v8133, %v8132
        %v8239 = vpack.c.b16 %v8135, %v8134
        %v8240 = vpack.c.b16 %v8137, %v8136
        %v8241 = vpack.c.b16 %v8139, %v8138
        %v8242 = vpack.c.b16 %v8141, %v8140
        %v8243 = vpack.c.b16 %v8143, %v8142
        %v8244 = vpack.c.b16 %v8145, %v8144
        %v8245 = vpack.c.b16 %v8147, %v8146
        %v8246 = vpack.c.b16 %v8149, %v8148
        %v8247 = vpack.c.b16 %v8151, %v8150
        %v8248 = vpack.c.b16 %v8153, %v8152
        %v8249 = vpack.c.b16 %v8155, %v8154
        %v8250 = vpack.c.b16 %v8157, %v8156
        %v8251 = vpack.c.b16 %v8159, %v8158
        %v8252 = vpack.c.b16 %v8161, %v8160
        %v8253 = vpack.c.b16 %v8163, %v8162
        %v8254 = vpack.c.b16 %v8165, %v8164
        %v8255 = vpack.c.b16 %v8167, %v8166
        %v8256 = vpack.c.b16 %v8169, %v8168
        %v8257 = vpack.c.b16 %v8171, %v8170
        %v8258 = vpack.c.b16 %v8173, %v8172
        %v8259 = vpack.c.b16 %v8175, %v8174
        %v8260 = vpack.c.b16 %v8177, %v8176
        %v8261 = vpack.c.b16 %v8179, %v8178
        %v8262 = vpack.c.b16 %v8181, %v8180
        %v8263 = vpack.c.b16 %v8183, %v8182
        %v8264 = vpack.c.b16 %v8185, %v8184
        %v8265 = vpack.c.b16 %v8187, %v8186
        %v8266 = vpack.c.b16 %v8189, %v8188
        %v8267 = vpack.c.b16 %v8191, %v8190
        %v8268 = vpack.c.b16 %v8193, %v8192
        %v8269 = vpack.c.b16 %v8195, %v8194
        %v8270 = vpack.c.b16 %v8197, %v8196
        %v8271 = vpack.c.b16 %v8199, %v8198
        %8344 = vmatpush.bf16.msra.mxu0 %v8207
        %8345 = vmatpush.bf16.msra.mxu0 %v8206
        %8346 = vmatpush.bf16.msra.mxu0 %v8205
        %8347 = vmatpush.bf16.msra.mxu0 %v8204
        %8348 = vmatpush.bf16.msra.mxu0 %v8203
        %8349 = vmatpush.bf16.msra.mxu0 %v8202
        %8350 = vmatpush.bf16.msra.mxu0 %v8201
        %8351 = vmatpush.bf16.msra.mxu0 %v8200
        %8352 = vmatmul.bf16.gmra.mxu0 %v7739
        %v8353 = vpop.f32.mrf.mxu0
        %v8354 = vadd.f32 %v7911, %v8353
        %v8355 = vpop.f32.mrf.mxu0
        %8356 = vdwg.mxu0
        %8357 = vmatpush.bf16.msra.mxu0 %v8215
        %8358 = vmatpush.bf16.msra.mxu0 %v8214
        %8359 = vmatpush.bf16.msra.mxu0 %v8213
        %8360 = vmatpush.bf16.msra.mxu0 %v8212
        %8361 = vmatpush.bf16.msra.mxu0 %v8211
        %8362 = vmatpush.bf16.msra.mxu0 %v8210
        %8363 = vmatpush.bf16.msra.mxu0 %v8209
        %8364 = vmatpush.bf16.msra.mxu0 %v8208
        %8365 = vmatmul.bf16.gmra.mxu0 %v7740
        %v8366 = vpop.f32.mrf.mxu0
        %v8367 = vadd.f32 %v8354, %v8366
        %v8368 = vpop.f32.mrf.mxu0
        %8369 = vdwg.mxu0
        %8370 = vmatpush.bf16.msra.mxu0 %v8223
        %8371 = vmatpush.bf16.msra.mxu0 %v8222
        %8372 = vmatpush.bf16.msra.mxu0 %v8221
        %8373 = vmatpush.bf16.msra.mxu0 %v8220
        %8374 = vmatpush.bf16.msra.mxu0 %v8219
        %8375 = vmatpush.bf16.msra.mxu0 %v8218
        %8376 = vmatpush.bf16.msra.mxu0 %v8217
        %8377 = vmatpush.bf16.msra.mxu0 %v8216
        %8378 = vmatmul.bf16.gmra.mxu0 %v7741
        %v8379 = vpop.f32.mrf.mxu0
        %v8380 = vadd.f32 %v8367, %v8379
        %v8381 = vpop.f32.mrf.mxu0
        %8382 = vdwg.mxu0
        %8383 = vmatpush.bf16.msra.mxu0 %v8231
        %8384 = vmatpush.bf16.msra.mxu0 %v8230
        %8385 = vmatpush.bf16.msra.mxu0 %v8229
        %8386 = vmatpush.bf16.msra.mxu0 %v8228
        %8387 = vmatpush.bf16.msra.mxu0 %v8227
        %8388 = vmatpush.bf16.msra.mxu0 %v8226
        %8389 = vmatpush.bf16.msra.mxu0 %v8225
        %8390 = vmatpush.bf16.msra.mxu0 %v8224
        %8391 = vmatmul.bf16.gmra.mxu0 %v7750
        %v8392 = vpop.f32.mrf.mxu0
        %v8393 = vadd.f32 %v8380, %v8392
        %v8394 = vpop.f32.mrf.mxu0
        %8395 = vdwg.mxu0
        %8396 = vmatpush.bf16.msra.mxu0 %v8239
        %8397 = vmatpush.bf16.msra.mxu0 %v8238
        %8398 = vmatpush.bf16.msra.mxu0 %v8237
        %8399 = vmatpush.bf16.msra.mxu0 %v8236
        %8400 = vmatpush.bf16.msra.mxu0 %v8235
        %8401 = vmatpush.bf16.msra.mxu0 %v8234
        %8402 = vmatpush.bf16.msra.mxu0 %v8233
        %8403 = vmatpush.bf16.msra.mxu0 %v8232
        %8404 = vmatmul.bf16.gmra.mxu0 %v7751
        %v8405 = vpop.f32.mrf.mxu0
        %v8406 = vadd.f32 %v8393, %v8405
        %v8407 = vpop.f32.mrf.mxu0
        %8408 = vdwg.mxu0
        %8409 = vmatpush.bf16.msra.mxu0 %v8247
        %8410 = vmatpush.bf16.msra.mxu0 %v8246
        %8411 = vmatpush.bf16.msra.mxu0 %v8245
        %8412 = vmatpush.bf16.msra.mxu0 %v8244
        %8413 = vmatpush.bf16.msra.mxu0 %v8243
        %8414 = vmatpush.bf16.msra.mxu0 %v8242
        %8415 = vmatpush.bf16.msra.mxu0 %v8241
        %8416 = vmatpush.bf16.msra.mxu0 %v8240
        %8417 = vmatmul.bf16.gmra.mxu0 %v7752
        %v8418 = vpop.f32.mrf.mxu0
        %v8419 = vadd.f32 %v8406, %v8418
        %v8420 = vpop.f32.mrf.mxu0
        %8421 = vdwg.mxu0
        %8422 = vmatpush.bf16.msra.mxu0 %v8255
        %8423 = vmatpush.bf16.msra.mxu0 %v8254
        %8424 = vmatpush.bf16.msra.mxu0 %v8253
        %8425 = vmatpush.bf16.msra.mxu0 %v8252
        %8426 = vmatpush.bf16.msra.mxu0 %v8251
        %8427 = vmatpush.bf16.msra.mxu0 %v8250
        %8428 = vmatpush.bf16.msra.mxu0 %v8249
        %8429 = vmatpush.bf16.msra.mxu0 %v8248
        %8430 = vmatmul.bf16.gmra.mxu0 %v7761
        %v8431 = vpop.f32.mrf.mxu0
        %v8432 = vadd.f32 %v8419, %v8431
        %v8433 = vpop.f32.mrf.mxu0
        %8434 = vdwg.mxu0
        %8435 = vmatpush.bf16.msra.mxu0 %v8263
        %8436 = vmatpush.bf16.msra.mxu0 %v8262
        %8437 = vmatpush.bf16.msra.mxu0 %v8261
        %8438 = vmatpush.bf16.msra.mxu0 %v8260
        %8439 = vmatpush.bf16.msra.mxu0 %v8259
        %8440 = vmatpush.bf16.msra.mxu0 %v8258
        %8441 = vmatpush.bf16.msra.mxu0 %v8257
        %8442 = vmatpush.bf16.msra.mxu0 %v8256
        %8443 = vmatmul.bf16.gmra.mxu0 %v7762
        %v8444 = vpop.f32.mrf.mxu0
        %v8445 = vadd.f32 %v8432, %v8444
        %v8446 = vpop.f32.mrf.mxu0
        %8447 = vdwg.mxu0
        %8448 = vmatpush.bf16.msra.mxu0 %v8271
        %8449 = vmatpush.bf16.msra.mxu0 %v8270
        %8450 = vmatpush.bf16.msra.mxu0 %v8269
        %8451 = vmatpush.bf16.msra.mxu0 %v8268
        %8452 = vmatpush.bf16.msra.mxu0 %v8267
        %8453 = vmatpush.bf16.msra.mxu0 %v8266
        %8454 = vmatpush.bf16.msra.mxu0 %v8265
        %8455 = vmatpush.bf16.msra.mxu0 %v8264
        %8456 = vmatmul.bf16.gmra.mxu0 %v7763
        %v8457 = vpop.f32.mrf.mxu0
        %v8458 = vadd.f32 %v8445, %v8457
        %v8459 = vpop.f32.mrf.mxu0
        %8460 = vdwg.mxu0
        %v8461 = vmax.f32 %v8458, 0.0
        %8462 = vst [vmem:[#allocation4 + $0x4] sm:$0x1] %v8461
        %s8463 = scalar_lea.vmem [#allocation3], 28
        %v8464 = vld [vmem:[%s8463] ss:$8 sm:$0x7]
        %v8466 = vperm.slane %v8464, 0
        %v8467 = vperm.slane %v8464, 1
        %v8468 = vperm.slane %v8464, 2
        %v8472 = vpack.c.bf16 %v8467, %v8466
        %v8473 = vpack.c.bf16 %v8468, %v8468
        %s8474 = scalar_lea.vmem [#allocation3], 29
        %v8475 = vld [vmem:[%s8474] ss:$8 sm:$0x7]
        %v8477 = vperm.slane %v8475, 0
        %v8478 = vperm.slane %v8475, 1
        %v8479 = vperm.slane %v8475, 2
        %v8483 = vpack.c.bf16 %v8478, %v8477
        %v8484 = vpack.c.bf16 %v8479, %v8479
        %s8485 = scalar_lea.vmem [#allocation3], 30
        %v8486 = vld [vmem:[%s8485] ss:$8 sm:$0x7]
        %v8488 = vperm.slane %v8486, 0
        %v8489 = vperm.slane %v8486, 1
        %v8490 = vperm.slane %v8486, 2
        %v8494 = vpack.c.bf16 %v8489, %v8488
        %v8495 = vpack.c.bf16 %v8490, %v8490
        %v8498 = vunpack.c.l.b16 %v8472
        %v8499 = vunpack.c.h.b16 %v8472
        %v8500 = vunpack.c.l.b16 %v8473
        %v8501 = vpack.c.b16 %v8498, %v8498
        %v8502 = vpack.c.b16 %v8499, %v8499
        %v8503 = vpack.c.b16 %v8500, %v8500
        %v8509 = vunpack.c.l.b16 %v8483
        %v8510 = vunpack.c.h.b16 %v8483
        %v8511 = vunpack.c.l.b16 %v8484
        %v8512 = vpack.c.b16 %v8509, %v8509
        %v8513 = vpack.c.b16 %v8510, %v8510
        %v8514 = vpack.c.b16 %v8511, %v8511
        %v8520 = vunpack.c.l.b16 %v8494
        %v8521 = vunpack.c.h.b16 %v8494
        %v8522 = vunpack.c.l.b16 %v8495
        %v8523 = vpack.c.b16 %v8520, %v8520
        %v8524 = vpack.c.b16 %v8521, %v8521
        %v8525 = vpack.c.b16 %v8522, %v8522
        %v8529 = vld [vmem:[#allocation12] sm:$0xf]
        %v8530 = vld [vmem:[#allocation12 + $0x4] sm:$0xf]
        %v8531 = vld [vmem:[#allocation12 + $0x8] sm:$0xf]
        %v8532 = vld [vmem:[#allocation12 + $0xc] sm:$0xf]
        %v8533 = vld [vmem:[#allocation12 + $0x10] sm:$0xf]
        %v8534 = vld [vmem:[#allocation12 + $0x14] sm:$0xf]
        %v8535 = vld [vmem:[#allocation12 + $0x18] sm:$0xf]
        %v8536 = vld [vmem:[#allocation12 + $0x1c] sm:$0xf]
        %v8537 = vld [vmem:[#allocation12 + $0x20] sm:$0xf]
        %v8538 = vld [vmem:[#allocation12 + $0x24] sm:$0xf]
        %v8539 = vld [vmem:[#allocation12 + $0x28] sm:$0xf]
        %v8540 = vld [vmem:[#allocation12 + $0x2c] sm:$0xf]
        %v8541 = vld [vmem:[#allocation12 + $0x30] sm:$0xf]
        %v8542 = vld [vmem:[#allocation12 + $0x34] sm:$0xf]
        %v8543 = vld [vmem:[#allocation12 + $0x38] sm:$0xf]
        %v8544 = vld [vmem:[#allocation12 + $0x3c] sm:$0xf]
        %v8545 = vld [vmem:[#allocation12 + $0x40] sm:$0xf]
        %v8546 = vld [vmem:[#allocation12 + $0x44] sm:$0xf]
        %v8547 = vld [vmem:[#allocation12 + $0x48] sm:$0xf]
        %v8548 = vld [vmem:[#allocation12 + $0x4c] sm:$0xf]
        %v8549 = vld [vmem:[#allocation12 + $0x50] sm:$0xf]
        %v8550 = vld [vmem:[#allocation12 + $0x54] sm:$0xf]
        %v8551 = vld [vmem:[#allocation12 + $0x58] sm:$0xf]
        %v8552 = vld [vmem:[#allocation12 + $0x5c] sm:$0xf]
        %v8553 = vld [vmem:[#allocation12 + $0x60] sm:$0xf]
        %v8554 = vld [vmem:[#allocation12 + $0x64] sm:$0xf]
        %v8555 = vld [vmem:[#allocation12 + $0x68] sm:$0xf]
        %v8556 = vld [vmem:[#allocation12 + $0x6c] sm:$0xf]
        %v8557 = vld [vmem:[#allocation12 + $0x70] sm:$0xf]
        %v8558 = vld [vmem:[#allocation12 + $0x74] sm:$0xf]
        %v8559 = vld [vmem:[#allocation12 + $0x78] sm:$0xf]
        %v8560 = vld [vmem:[#allocation12 + $0x7c] sm:$0xf]
        %v8561 = vld [vmem:[#allocation12 + $0x80] sm:$0xf]
        %v8562 = vld [vmem:[#allocation12 + $0x84] sm:$0xf]
        %v8563 = vld [vmem:[#allocation12 + $0x88] sm:$0xf]
        %v8564 = vld [vmem:[#allocation12 + $0x8c] sm:$0xf]
        %v8565 = vld [vmem:[#allocation12 + $0x90] sm:$0xf]
        %v8566 = vld [vmem:[#allocation12 + $0x94] sm:$0xf]
        %v8567 = vld [vmem:[#allocation12 + $0x98] sm:$0xf]
        %v8568 = vld [vmem:[#allocation12 + $0x9c] sm:$0xf]
        %v8569 = vld [vmem:[#allocation12 + $0xa0] sm:$0xf]
        %v8570 = vld [vmem:[#allocation12 + $0xa4] sm:$0xf]
        %v8571 = vld [vmem:[#allocation12 + $0xa8] sm:$0xf]
        %v8572 = vld [vmem:[#allocation12 + $0xac] sm:$0xf]
        %v8573 = vld [vmem:[#allocation12 + $0xb0] sm:$0xf]
        %v8574 = vld [vmem:[#allocation12 + $0xb4] sm:$0xf]
        %v8575 = vld [vmem:[#allocation12 + $0xb8] sm:$0xf]
        %v8576 = vld [vmem:[#allocation12 + $0xbc] sm:$0xf]
        %v8577 = vld [vmem:[#allocation12 + $0xc0] sm:$0xf]
        %v8578 = vld [vmem:[#allocation12 + $0xc4] sm:$0xf]
        %v8579 = vld [vmem:[#allocation12 + $0xc8] sm:$0xf]
        %v8580 = vld [vmem:[#allocation12 + $0xcc] sm:$0xf]
        %v8581 = vld [vmem:[#allocation12 + $0xd0] sm:$0xf]
        %v8582 = vld [vmem:[#allocation12 + $0xd4] sm:$0xf]
        %v8583 = vld [vmem:[#allocation12 + $0xd8] sm:$0xf]
        %v8584 = vld [vmem:[#allocation12 + $0xdc] sm:$0xf]
        %v8585 = vld [vmem:[#allocation12 + $0xe0] sm:$0xf]
        %v8586 = vld [vmem:[#allocation12 + $0xe4] sm:$0xf]
        %v8587 = vld [vmem:[#allocation12 + $0xe8] sm:$0xf]
        %v8588 = vld [vmem:[#allocation12 + $0xec] sm:$0xf]
        %v8589 = vld [vmem:[#allocation12 + $0xf0] sm:$0xf]
        %v8590 = vld [vmem:[#allocation12 + $0xf4] sm:$0xf]
        %v8591 = vld [vmem:[#allocation12 + $0xf8] sm:$0xf]
        %v8592 = vld [vmem:[#allocation12 + $0xfc] sm:$0xf]
        %v8593 = vld [vmem:[#allocation12 + $0x100] sm:$0xf]
        %v8594 = vld [vmem:[#allocation12 + $0x104] sm:$0xf]
        %v8595 = vld [vmem:[#allocation12 + $0x108] sm:$0xf]
        %v8596 = vld [vmem:[#allocation12 + $0x10c] sm:$0xf]
        %v8597 = vld [vmem:[#allocation12 + $0x110] sm:$0xf]
        %v8598 = vld [vmem:[#allocation12 + $0x114] sm:$0xf]
        %v8599 = vld [vmem:[#allocation12 + $0x118] sm:$0xf]
        %v8600 = vld [vmem:[#allocation12 + $0x11c] sm:$0xf]
        %v8601 = vld [vmem:[#allocation12 + $0x120] sm:$0xf]
        %v8602 = vld [vmem:[#allocation12 + $0x124] sm:$0xf]
        %v8603 = vld [vmem:[#allocation12 + $0x128] sm:$0xf]
        %v8604 = vld [vmem:[#allocation12 + $0x12c] sm:$0xf]
        %v8605 = vld [vmem:[#allocation12 + $0x130] sm:$0xf]
        %v8606 = vld [vmem:[#allocation12 + $0x134] sm:$0xf]
        %v8607 = vld [vmem:[#allocation12 + $0x138] sm:$0xf]
        %v8608 = vld [vmem:[#allocation12 + $0x13c] sm:$0xf]
        %v8609 = vld [vmem:[#allocation12 + $0x140] sm:$0xf]
        %v8610 = vld [vmem:[#allocation12 + $0x144] sm:$0xf]
        %v8611 = vld [vmem:[#allocation12 + $0x148] sm:$0xf]
        %v8612 = vld [vmem:[#allocation12 + $0x14c] sm:$0xf]
        %v8613 = vld [vmem:[#allocation12 + $0x150] sm:$0xf]
        %v8614 = vld [vmem:[#allocation12 + $0x154] sm:$0xf]
        %v8615 = vld [vmem:[#allocation12 + $0x158] sm:$0xf]
        %v8616 = vld [vmem:[#allocation12 + $0x15c] sm:$0xf]
        %v8617 = vld [vmem:[#allocation12 + $0x160] sm:$0xf]
        %v8618 = vld [vmem:[#allocation12 + $0x164] sm:$0xf]
        %v8619 = vld [vmem:[#allocation12 + $0x168] sm:$0xf]
        %v8620 = vld [vmem:[#allocation12 + $0x16c] sm:$0xf]
        %v8621 = vld [vmem:[#allocation12 + $0x170] sm:$0xf]
        %v8622 = vld [vmem:[#allocation12 + $0x174] sm:$0xf]
        %v8623 = vld [vmem:[#allocation12 + $0x178] sm:$0xf]
        %v8624 = vld [vmem:[#allocation12 + $0x17c] sm:$0xf]
        %v8625 = vld [vmem:[#allocation12 + $0x180] sm:$0xf]
        %v8626 = vld [vmem:[#allocation12 + $0x184] sm:$0xf]
        %v8627 = vld [vmem:[#allocation12 + $0x188] sm:$0xf]
        %v8628 = vld [vmem:[#allocation12 + $0x18c] sm:$0xf]
        %v8629 = vld [vmem:[#allocation12 + $0x190] sm:$0xf]
        %v8630 = vld [vmem:[#allocation12 + $0x194] sm:$0xf]
        %v8631 = vld [vmem:[#allocation12 + $0x198] sm:$0xf]
        %v8632 = vld [vmem:[#allocation12 + $0x19c] sm:$0xf]
        %v8633 = vld [vmem:[#allocation12 + $0x1a0] sm:$0xf]
        %v8634 = vld [vmem:[#allocation12 + $0x1a4] sm:$0xf]
        %v8635 = vld [vmem:[#allocation12 + $0x1a8] sm:$0xf]
        %v8636 = vld [vmem:[#allocation12 + $0x1ac] sm:$0xf]
        %v8637 = vld [vmem:[#allocation12 + $0x1b0] sm:$0xf]
        %v8638 = vld [vmem:[#allocation12 + $0x1b4] sm:$0xf]
        %v8639 = vld [vmem:[#allocation12 + $0x1b8] sm:$0xf]
        %v8640 = vld [vmem:[#allocation12 + $0x1bc] sm:$0xf]
        %v8641 = vld [vmem:[#allocation12 + $0x1c0] sm:$0xf]
        %v8642 = vld [vmem:[#allocation12 + $0x1c4] sm:$0xf]
        %v8643 = vld [vmem:[#allocation12 + $0x1c8] sm:$0xf]
        %v8644 = vld [vmem:[#allocation12 + $0x1cc] sm:$0xf]
        %v8645 = vld [vmem:[#allocation12 + $0x1d0] sm:$0xf]
        %v8646 = vld [vmem:[#allocation12 + $0x1d4] sm:$0xf]
        %v8647 = vld [vmem:[#allocation12 + $0x1d8] sm:$0xf]
        %v8648 = vld [vmem:[#allocation12 + $0x1dc] sm:$0xf]
        %v8649 = vld [vmem:[#allocation12 + $0x1e0] sm:$0xf]
        %v8650 = vld [vmem:[#allocation12 + $0x1e4] sm:$0xf]
        %v8651 = vld [vmem:[#allocation12 + $0x1e8] sm:$0xf]
        %v8652 = vld [vmem:[#allocation12 + $0x1ec] sm:$0xf]
        %v8653 = vld [vmem:[#allocation12 + $0x1f0] sm:$0xf]
        %v8654 = vld [vmem:[#allocation12 + $0x1f4] sm:$0xf]
        %v8655 = vld [vmem:[#allocation12 + $0x1f8] sm:$0xf]
        %v8656 = vld [vmem:[#allocation12 + $0x1fc] sm:$0xf]
        %v8657 = vld [vmem:[#allocation12 + $0x200] sm:$0xf]
        %v8658 = vld [vmem:[#allocation12 + $0x204] sm:$0xf]
        %v8659 = vld [vmem:[#allocation12 + $0x208] sm:$0xf]
        %v8660 = vld [vmem:[#allocation12 + $0x20c] sm:$0xf]
        %v8661 = vld [vmem:[#allocation12 + $0x210] sm:$0xf]
        %v8662 = vld [vmem:[#allocation12 + $0x214] sm:$0xf]
        %v8663 = vld [vmem:[#allocation12 + $0x218] sm:$0xf]
        %v8664 = vld [vmem:[#allocation12 + $0x21c] sm:$0xf]
        %v8665 = vld [vmem:[#allocation12 + $0x220] sm:$0xf]
        %v8666 = vld [vmem:[#allocation12 + $0x224] sm:$0xf]
        %v8667 = vld [vmem:[#allocation12 + $0x228] sm:$0xf]
        %v8668 = vld [vmem:[#allocation12 + $0x22c] sm:$0xf]
        %v8669 = vld [vmem:[#allocation12 + $0x230] sm:$0xf]
        %v8670 = vld [vmem:[#allocation12 + $0x234] sm:$0xf]
        %v8671 = vld [vmem:[#allocation12 + $0x238] sm:$0xf]
        %v8672 = vld [vmem:[#allocation12 + $0x23c] sm:$0xf]
        %v8673 = vld [vmem:[#allocation21] sm:$0x1]
        %v8818 = vunpack.c.l.b16 %v8529
        %v8819 = vunpack.c.l.b16 %v8530
        %v8820 = vunpack.c.l.b16 %v8531
        %v8821 = vunpack.c.l.b16 %v8532
        %v8822 = vunpack.c.l.b16 %v8533
        %v8823 = vunpack.c.l.b16 %v8534
        %v8824 = vunpack.c.l.b16 %v8535
        %v8825 = vunpack.c.l.b16 %v8536
        %v8826 = vunpack.c.l.b16 %v8537
        %v8827 = vunpack.c.l.b16 %v8538
        %v8828 = vunpack.c.l.b16 %v8539
        %v8829 = vunpack.c.l.b16 %v8540
        %v8830 = vunpack.c.l.b16 %v8541
        %v8831 = vunpack.c.l.b16 %v8542
        %v8832 = vunpack.c.l.b16 %v8543
        %v8833 = vunpack.c.l.b16 %v8544
        %v8834 = vunpack.c.l.b16 %v8545
        %v8835 = vunpack.c.l.b16 %v8546
        %v8836 = vunpack.c.l.b16 %v8547
        %v8837 = vunpack.c.l.b16 %v8548
        %v8838 = vunpack.c.l.b16 %v8549
        %v8839 = vunpack.c.l.b16 %v8550
        %v8840 = vunpack.c.l.b16 %v8551
        %v8841 = vunpack.c.l.b16 %v8552
        %v8842 = vunpack.c.l.b16 %v8553
        %v8843 = vunpack.c.l.b16 %v8554
        %v8844 = vunpack.c.l.b16 %v8555
        %v8845 = vunpack.c.l.b16 %v8556
        %v8846 = vunpack.c.l.b16 %v8557
        %v8847 = vunpack.c.l.b16 %v8558
        %v8848 = vunpack.c.l.b16 %v8559
        %v8849 = vunpack.c.l.b16 %v8560
        %v8850 = vunpack.c.l.b16 %v8561
        %v8851 = vunpack.c.l.b16 %v8562
        %v8852 = vunpack.c.l.b16 %v8563
        %v8853 = vunpack.c.l.b16 %v8564
        %v8854 = vunpack.c.l.b16 %v8565
        %v8855 = vunpack.c.l.b16 %v8566
        %v8856 = vunpack.c.l.b16 %v8567
        %v8857 = vunpack.c.l.b16 %v8568
        %v8858 = vunpack.c.l.b16 %v8569
        %v8859 = vunpack.c.l.b16 %v8570
        %v8860 = vunpack.c.l.b16 %v8571
        %v8861 = vunpack.c.l.b16 %v8572
        %v8862 = vunpack.c.l.b16 %v8573
        %v8863 = vunpack.c.l.b16 %v8574
        %v8864 = vunpack.c.l.b16 %v8575
        %v8865 = vunpack.c.l.b16 %v8576
        %v8866 = vunpack.c.l.b16 %v8577
        %v8867 = vunpack.c.l.b16 %v8578
        %v8868 = vunpack.c.l.b16 %v8579
        %v8869 = vunpack.c.l.b16 %v8580
        %v8870 = vunpack.c.l.b16 %v8581
        %v8871 = vunpack.c.l.b16 %v8582
        %v8872 = vunpack.c.l.b16 %v8583
        %v8873 = vunpack.c.l.b16 %v8584
        %v8874 = vunpack.c.l.b16 %v8585
        %v8875 = vunpack.c.l.b16 %v8586
        %v8876 = vunpack.c.l.b16 %v8587
        %v8877 = vunpack.c.l.b16 %v8588
        %v8878 = vunpack.c.l.b16 %v8589
        %v8879 = vunpack.c.l.b16 %v8590
        %v8880 = vunpack.c.l.b16 %v8591
        %v8881 = vunpack.c.l.b16 %v8592
        %v8882 = vunpack.c.l.b16 %v8593
        %v8883 = vunpack.c.l.b16 %v8594
        %v8884 = vunpack.c.l.b16 %v8595
        %v8885 = vunpack.c.l.b16 %v8596
        %v8886 = vunpack.c.l.b16 %v8597
        %v8887 = vunpack.c.l.b16 %v8598
        %v8888 = vunpack.c.l.b16 %v8599
        %v8889 = vunpack.c.l.b16 %v8600
        %v8890 = vunpack.c.l.b16 %v8601
        %v8891 = vunpack.c.l.b16 %v8602
        %v8892 = vunpack.c.l.b16 %v8603
        %v8893 = vunpack.c.l.b16 %v8604
        %v8894 = vunpack.c.l.b16 %v8605
        %v8895 = vunpack.c.l.b16 %v8606
        %v8896 = vunpack.c.l.b16 %v8607
        %v8897 = vunpack.c.l.b16 %v8608
        %v8898 = vunpack.c.l.b16 %v8609
        %v8899 = vunpack.c.l.b16 %v8610
        %v8900 = vunpack.c.l.b16 %v8611
        %v8901 = vunpack.c.l.b16 %v8612
        %v8902 = vunpack.c.l.b16 %v8613
        %v8903 = vunpack.c.l.b16 %v8614
        %v8904 = vunpack.c.l.b16 %v8615
        %v8905 = vunpack.c.l.b16 %v8616
        %v8906 = vunpack.c.l.b16 %v8617
        %v8907 = vunpack.c.l.b16 %v8618
        %v8908 = vunpack.c.l.b16 %v8619
        %v8909 = vunpack.c.l.b16 %v8620
        %v8910 = vunpack.c.l.b16 %v8621
        %v8911 = vunpack.c.l.b16 %v8622
        %v8912 = vunpack.c.l.b16 %v8623
        %v8913 = vunpack.c.l.b16 %v8624
        %v8914 = vunpack.c.l.b16 %v8625
        %v8915 = vunpack.c.l.b16 %v8626
        %v8916 = vunpack.c.l.b16 %v8627
        %v8917 = vunpack.c.l.b16 %v8628
        %v8918 = vunpack.c.l.b16 %v8629
        %v8919 = vunpack.c.l.b16 %v8630
        %v8920 = vunpack.c.l.b16 %v8631
        %v8921 = vunpack.c.l.b16 %v8632
        %v8922 = vunpack.c.l.b16 %v8633
        %v8923 = vunpack.c.l.b16 %v8634
        %v8924 = vunpack.c.l.b16 %v8635
        %v8925 = vunpack.c.l.b16 %v8636
        %v8926 = vunpack.c.l.b16 %v8637
        %v8927 = vunpack.c.l.b16 %v8638
        %v8928 = vunpack.c.l.b16 %v8639
        %v8929 = vunpack.c.l.b16 %v8640
        %v8930 = vunpack.c.l.b16 %v8641
        %v8931 = vunpack.c.l.b16 %v8642
        %v8932 = vunpack.c.l.b16 %v8643
        %v8933 = vunpack.c.l.b16 %v8644
        %v8934 = vunpack.c.l.b16 %v8645
        %v8935 = vunpack.c.l.b16 %v8646
        %v8936 = vunpack.c.l.b16 %v8647
        %v8937 = vunpack.c.l.b16 %v8648
        %v8938 = vunpack.c.l.b16 %v8649
        %v8939 = vunpack.c.l.b16 %v8650
        %v8940 = vunpack.c.l.b16 %v8651
        %v8941 = vunpack.c.l.b16 %v8652
        %v8942 = vunpack.c.l.b16 %v8653
        %v8943 = vunpack.c.l.b16 %v8654
        %v8944 = vunpack.c.l.b16 %v8655
        %v8945 = vunpack.c.l.b16 %v8656
        %v8946 = vunpack.c.l.b16 %v8657
        %v8947 = vunpack.c.l.b16 %v8658
        %v8948 = vunpack.c.l.b16 %v8659
        %v8949 = vunpack.c.l.b16 %v8660
        %v8950 = vunpack.c.l.b16 %v8661
        %v8951 = vunpack.c.l.b16 %v8662
        %v8952 = vunpack.c.l.b16 %v8663
        %v8953 = vunpack.c.l.b16 %v8664
        %v8954 = vunpack.c.l.b16 %v8665
        %v8955 = vunpack.c.l.b16 %v8666
        %v8956 = vunpack.c.l.b16 %v8667
        %v8957 = vunpack.c.l.b16 %v8668
        %v8958 = vunpack.c.l.b16 %v8669
        %v8959 = vunpack.c.l.b16 %v8670
        %v8960 = vunpack.c.l.b16 %v8671
        %v8961 = vunpack.c.l.b16 %v8672
        %v8962 = vpack.c.b16 %v8819, %v8818
        %v8963 = vpack.c.b16 %v8821, %v8820
        %v8964 = vpack.c.b16 %v8823, %v8822
        %v8965 = vpack.c.b16 %v8825, %v8824
        %v8966 = vpack.c.b16 %v8827, %v8826
        %v8967 = vpack.c.b16 %v8829, %v8828
        %v8968 = vpack.c.b16 %v8831, %v8830
        %v8969 = vpack.c.b16 %v8833, %v8832
        %v8970 = vpack.c.b16 %v8835, %v8834
        %v8971 = vpack.c.b16 %v8837, %v8836
        %v8972 = vpack.c.b16 %v8839, %v8838
        %v8973 = vpack.c.b16 %v8841, %v8840
        %v8974 = vpack.c.b16 %v8843, %v8842
        %v8975 = vpack.c.b16 %v8845, %v8844
        %v8976 = vpack.c.b16 %v8847, %v8846
        %v8977 = vpack.c.b16 %v8849, %v8848
        %v8978 = vpack.c.b16 %v8851, %v8850
        %v8979 = vpack.c.b16 %v8853, %v8852
        %v8980 = vpack.c.b16 %v8855, %v8854
        %v8981 = vpack.c.b16 %v8857, %v8856
        %v8982 = vpack.c.b16 %v8859, %v8858
        %v8983 = vpack.c.b16 %v8861, %v8860
        %v8984 = vpack.c.b16 %v8863, %v8862
        %v8985 = vpack.c.b16 %v8865, %v8864
        %v8986 = vpack.c.b16 %v8867, %v8866
        %v8987 = vpack.c.b16 %v8869, %v8868
        %v8988 = vpack.c.b16 %v8871, %v8870
        %v8989 = vpack.c.b16 %v8873, %v8872
        %v8990 = vpack.c.b16 %v8875, %v8874
        %v8991 = vpack.c.b16 %v8877, %v8876
        %v8992 = vpack.c.b16 %v8879, %v8878
        %v8993 = vpack.c.b16 %v8881, %v8880
        %v8994 = vpack.c.b16 %v8883, %v8882
        %v8995 = vpack.c.b16 %v8885, %v8884
        %v8996 = vpack.c.b16 %v8887, %v8886
        %v8997 = vpack.c.b16 %v8889, %v8888
        %v8998 = vpack.c.b16 %v8891, %v8890
        %v8999 = vpack.c.b16 %v8893, %v8892
        %v9000 = vpack.c.b16 %v8895, %v8894
        %v9001 = vpack.c.b16 %v8897, %v8896
        %v9002 = vpack.c.b16 %v8899, %v8898
        %v9003 = vpack.c.b16 %v8901, %v8900
        %v9004 = vpack.c.b16 %v8903, %v8902
        %v9005 = vpack.c.b16 %v8905, %v8904
        %v9006 = vpack.c.b16 %v8907, %v8906
        %v9007 = vpack.c.b16 %v8909, %v8908
        %v9008 = vpack.c.b16 %v8911, %v8910
        %v9009 = vpack.c.b16 %v8913, %v8912
        %v9010 = vpack.c.b16 %v8915, %v8914
        %v9011 = vpack.c.b16 %v8917, %v8916
        %v9012 = vpack.c.b16 %v8919, %v8918
        %v9013 = vpack.c.b16 %v8921, %v8920
        %v9014 = vpack.c.b16 %v8923, %v8922
        %v9015 = vpack.c.b16 %v8925, %v8924
        %v9016 = vpack.c.b16 %v8927, %v8926
        %v9017 = vpack.c.b16 %v8929, %v8928
        %v9018 = vpack.c.b16 %v8931, %v8930
        %v9019 = vpack.c.b16 %v8933, %v8932
        %v9020 = vpack.c.b16 %v8935, %v8934
        %v9021 = vpack.c.b16 %v8937, %v8936
        %v9022 = vpack.c.b16 %v8939, %v8938
        %v9023 = vpack.c.b16 %v8941, %v8940
        %v9024 = vpack.c.b16 %v8943, %v8942
        %v9025 = vpack.c.b16 %v8945, %v8944
        %v9026 = vpack.c.b16 %v8947, %v8946
        %v9027 = vpack.c.b16 %v8949, %v8948
        %v9028 = vpack.c.b16 %v8951, %v8950
        %v9029 = vpack.c.b16 %v8953, %v8952
        %v9030 = vpack.c.b16 %v8955, %v8954
        %v9031 = vpack.c.b16 %v8957, %v8956
        %v9032 = vpack.c.b16 %v8959, %v8958
        %v9033 = vpack.c.b16 %v8961, %v8960
        %9106 = vmatpush.bf16.msra.mxu0 %v8969
        %9107 = vmatpush.bf16.msra.mxu0 %v8968
        %9108 = vmatpush.bf16.msra.mxu0 %v8967
        %9109 = vmatpush.bf16.msra.mxu0 %v8966
        %9110 = vmatpush.bf16.msra.mxu0 %v8965
        %9111 = vmatpush.bf16.msra.mxu0 %v8964
        %9112 = vmatpush.bf16.msra.mxu0 %v8963
        %9113 = vmatpush.bf16.msra.mxu0 %v8962
        %9114 = vmatmul.bf16.gmra.mxu0 %v8501
        %v9115 = vpop.f32.mrf.mxu0
        %v9116 = vadd.f32 %v8673, %v9115
        %v9117 = vpop.f32.mrf.mxu0
        %9118 = vdwg.mxu0
        %9119 = vmatpush.bf16.msra.mxu0 %v8977
        %9120 = vmatpush.bf16.msra.mxu0 %v8976
        %9121 = vmatpush.bf16.msra.mxu0 %v8975
        %9122 = vmatpush.bf16.msra.mxu0 %v8974
        %9123 = vmatpush.bf16.msra.mxu0 %v8973
        %9124 = vmatpush.bf16.msra.mxu0 %v8972
        %9125 = vmatpush.bf16.msra.mxu0 %v8971
        %9126 = vmatpush.bf16.msra.mxu0 %v8970
        %9127 = vmatmul.bf16.gmra.mxu0 %v8502
        %v9128 = vpop.f32.mrf.mxu0
        %v9129 = vadd.f32 %v9116, %v9128
        %v9130 = vpop.f32.mrf.mxu0
        %9131 = vdwg.mxu0
        %9132 = vmatpush.bf16.msra.mxu0 %v8985
        %9133 = vmatpush.bf16.msra.mxu0 %v8984
        %9134 = vmatpush.bf16.msra.mxu0 %v8983
        %9135 = vmatpush.bf16.msra.mxu0 %v8982
        %9136 = vmatpush.bf16.msra.mxu0 %v8981
        %9137 = vmatpush.bf16.msra.mxu0 %v8980
        %9138 = vmatpush.bf16.msra.mxu0 %v8979
        %9139 = vmatpush.bf16.msra.mxu0 %v8978
        %9140 = vmatmul.bf16.gmra.mxu0 %v8503
        %v9141 = vpop.f32.mrf.mxu0
        %v9142 = vadd.f32 %v9129, %v9141
        %v9143 = vpop.f32.mrf.mxu0
        %9144 = vdwg.mxu0
        %9145 = vmatpush.bf16.msra.mxu0 %v8993
        %9146 = vmatpush.bf16.msra.mxu0 %v8992
        %9147 = vmatpush.bf16.msra.mxu0 %v8991
        %9148 = vmatpush.bf16.msra.mxu0 %v8990
        %9149 = vmatpush.bf16.msra.mxu0 %v8989
        %9150 = vmatpush.bf16.msra.mxu0 %v8988
        %9151 = vmatpush.bf16.msra.mxu0 %v8987
        %9152 = vmatpush.bf16.msra.mxu0 %v8986
        %9153 = vmatmul.bf16.gmra.mxu0 %v8512
        %v9154 = vpop.f32.mrf.mxu0
        %v9155 = vadd.f32 %v9142, %v9154
        %v9156 = vpop.f32.mrf.mxu0
        %9157 = vdwg.mxu0
        %9158 = vmatpush.bf16.msra.mxu0 %v9001
        %9159 = vmatpush.bf16.msra.mxu0 %v9000
        %9160 = vmatpush.bf16.msra.mxu0 %v8999
        %9161 = vmatpush.bf16.msra.mxu0 %v8998
        %9162 = vmatpush.bf16.msra.mxu0 %v8997
        %9163 = vmatpush.bf16.msra.mxu0 %v8996
        %9164 = vmatpush.bf16.msra.mxu0 %v8995
        %9165 = vmatpush.bf16.msra.mxu0 %v8994
        %9166 = vmatmul.bf16.gmra.mxu0 %v8513
        %v9167 = vpop.f32.mrf.mxu0
        %v9168 = vadd.f32 %v9155, %v9167
        %v9169 = vpop.f32.mrf.mxu0
        %9170 = vdwg.mxu0
        %9171 = vmatpush.bf16.msra.mxu0 %v9009
        %9172 = vmatpush.bf16.msra.mxu0 %v9008
        %9173 = vmatpush.bf16.msra.mxu0 %v9007
        %9174 = vmatpush.bf16.msra.mxu0 %v9006
        %9175 = vmatpush.bf16.msra.mxu0 %v9005
        %9176 = vmatpush.bf16.msra.mxu0 %v9004
        %9177 = vmatpush.bf16.msra.mxu0 %v9003
        %9178 = vmatpush.bf16.msra.mxu0 %v9002
        %9179 = vmatmul.bf16.gmra.mxu0 %v8514
        %v9180 = vpop.f32.mrf.mxu0
        %v9181 = vadd.f32 %v9168, %v9180
        %v9182 = vpop.f32.mrf.mxu0
        %9183 = vdwg.mxu0
        %9184 = vmatpush.bf16.msra.mxu0 %v9017
        %9185 = vmatpush.bf16.msra.mxu0 %v9016
        %9186 = vmatpush.bf16.msra.mxu0 %v9015
        %9187 = vmatpush.bf16.msra.mxu0 %v9014
        %9188 = vmatpush.bf16.msra.mxu0 %v9013
        %9189 = vmatpush.bf16.msra.mxu0 %v9012
        %9190 = vmatpush.bf16.msra.mxu0 %v9011
        %9191 = vmatpush.bf16.msra.mxu0 %v9010
        %9192 = vmatmul.bf16.gmra.mxu0 %v8523
        %v9193 = vpop.f32.mrf.mxu0
        %v9194 = vadd.f32 %v9181, %v9193
        %v9195 = vpop.f32.mrf.mxu0
        %9196 = vdwg.mxu0
        %9197 = vmatpush.bf16.msra.mxu0 %v9025
        %9198 = vmatpush.bf16.msra.mxu0 %v9024
        %9199 = vmatpush.bf16.msra.mxu0 %v9023
        %9200 = vmatpush.bf16.msra.mxu0 %v9022
        %9201 = vmatpush.bf16.msra.mxu0 %v9021
        %9202 = vmatpush.bf16.msra.mxu0 %v9020
        %9203 = vmatpush.bf16.msra.mxu0 %v9019
        %9204 = vmatpush.bf16.msra.mxu0 %v9018
        %9205 = vmatmul.bf16.gmra.mxu0 %v8524
        %v9206 = vpop.f32.mrf.mxu0
        %v9207 = vadd.f32 %v9194, %v9206
        %v9208 = vpop.f32.mrf.mxu0
        %9209 = vdwg.mxu0
        %9210 = vmatpush.bf16.msra.mxu0 %v9033
        %9211 = vmatpush.bf16.msra.mxu0 %v9032
        %9212 = vmatpush.bf16.msra.mxu0 %v9031
        %9213 = vmatpush.bf16.msra.mxu0 %v9030
        %9214 = vmatpush.bf16.msra.mxu0 %v9029
        %9215 = vmatpush.bf16.msra.mxu0 %v9028
        %9216 = vmatpush.bf16.msra.mxu0 %v9027
        %9217 = vmatpush.bf16.msra.mxu0 %v9026
        %9218 = vmatmul.bf16.gmra.mxu0 %v8525
        %v9219 = vpop.f32.mrf.mxu0
        %v9220 = vadd.f32 %v9207, %v9219
        %v9221 = vpop.f32.mrf.mxu0
        %9222 = vdwg.mxu0
        %v9223 = vmax.f32 %v9220, 0.0
        %9224 = vst [vmem:[#allocation4 + $0x5] sm:$0x1] %v9223
        %s9225 = scalar_lea.vmem [#allocation3], 31
        %v9226 = vld [vmem:[%s9225] ss:$8 sm:$0x7]
        %v9228 = vperm.slane %v9226, 0
        %v9229 = vperm.slane %v9226, 1
        %v9230 = vperm.slane %v9226, 2
        %v9234 = vpack.c.bf16 %v9229, %v9228
        %v9235 = vpack.c.bf16 %v9230, %v9230
        %s9236 = scalar_lea.vmem [#allocation3], 48
        %v9237 = vld [vmem:[%s9236] ss:$8 sm:$0x7]
        %v9239 = vperm.slane %v9237, 0
        %v9240 = vperm.slane %v9237, 1
        %v9241 = vperm.slane %v9237, 2
        %v9245 = vpack.c.bf16 %v9240, %v9239
        %v9246 = vpack.c.bf16 %v9241, %v9241
        %s9247 = scalar_lea.vmem [#allocation3], 49
        %v9248 = vld [vmem:[%s9247] ss:$8 sm:$0x7]
        %v9250 = vperm.slane %v9248, 0
        %v9251 = vperm.slane %v9248, 1
        %v9252 = vperm.slane %v9248, 2
        %v9256 = vpack.c.bf16 %v9251, %v9250
        %v9257 = vpack.c.bf16 %v9252, %v9252
        %v9260 = vunpack.c.l.b16 %v9234
        %v9261 = vunpack.c.h.b16 %v9234
        %v9262 = vunpack.c.l.b16 %v9235
        %v9263 = vpack.c.b16 %v9260, %v9260
        %v9264 = vpack.c.b16 %v9261, %v9261
        %v9265 = vpack.c.b16 %v9262, %v9262
        %v9271 = vunpack.c.l.b16 %v9245
        %v9272 = vunpack.c.h.b16 %v9245
        %v9273 = vunpack.c.l.b16 %v9246
        %v9274 = vpack.c.b16 %v9271, %v9271
        %v9275 = vpack.c.b16 %v9272, %v9272
        %v9276 = vpack.c.b16 %v9273, %v9273
        %v9282 = vunpack.c.l.b16 %v9256
        %v9283 = vunpack.c.h.b16 %v9256
        %v9284 = vunpack.c.l.b16 %v9257
        %v9285 = vpack.c.b16 %v9282, %v9282
        %v9286 = vpack.c.b16 %v9283, %v9283
        %v9287 = vpack.c.b16 %v9284, %v9284
        %v9291 = vld [vmem:[#allocation12] sm:$0xf]
        %v9292 = vld [vmem:[#allocation12 + $0x4] sm:$0xf]
        %v9293 = vld [vmem:[#allocation12 + $0x8] sm:$0xf]
        %v9294 = vld [vmem:[#allocation12 + $0xc] sm:$0xf]
        %v9295 = vld [vmem:[#allocation12 + $0x10] sm:$0xf]
        %v9296 = vld [vmem:[#allocation12 + $0x14] sm:$0xf]
        %v9297 = vld [vmem:[#allocation12 + $0x18] sm:$0xf]
        %v9298 = vld [vmem:[#allocation12 + $0x1c] sm:$0xf]
        %v9299 = vld [vmem:[#allocation12 + $0x20] sm:$0xf]
        %v9300 = vld [vmem:[#allocation12 + $0x24] sm:$0xf]
        %v9301 = vld [vmem:[#allocation12 + $0x28] sm:$0xf]
        %v9302 = vld [vmem:[#allocation12 + $0x2c] sm:$0xf]
        %v9303 = vld [vmem:[#allocation12 + $0x30] sm:$0xf]
        %v9304 = vld [vmem:[#allocation12 + $0x34] sm:$0xf]
        %v9305 = vld [vmem:[#allocation12 + $0x38] sm:$0xf]
        %v9306 = vld [vmem:[#allocation12 + $0x3c] sm:$0xf]
        %v9307 = vld [vmem:[#allocation12 + $0x40] sm:$0xf]
        %v9308 = vld [vmem:[#allocation12 + $0x44] sm:$0xf]
        %v9309 = vld [vmem:[#allocation12 + $0x48] sm:$0xf]
        %v9310 = vld [vmem:[#allocation12 + $0x4c] sm:$0xf]
        %v9311 = vld [vmem:[#allocation12 + $0x50] sm:$0xf]
        %v9312 = vld [vmem:[#allocation12 + $0x54] sm:$0xf]
        %v9313 = vld [vmem:[#allocation12 + $0x58] sm:$0xf]
        %v9314 = vld [vmem:[#allocation12 + $0x5c] sm:$0xf]
        %v9315 = vld [vmem:[#allocation12 + $0x60] sm:$0xf]
        %v9316 = vld [vmem:[#allocation12 + $0x64] sm:$0xf]
        %v9317 = vld [vmem:[#allocation12 + $0x68] sm:$0xf]
        %v9318 = vld [vmem:[#allocation12 + $0x6c] sm:$0xf]
        %v9319 = vld [vmem:[#allocation12 + $0x70] sm:$0xf]
        %v9320 = vld [vmem:[#allocation12 + $0x74] sm:$0xf]
        %v9321 = vld [vmem:[#allocation12 + $0x78] sm:$0xf]
        %v9322 = vld [vmem:[#allocation12 + $0x7c] sm:$0xf]
        %v9323 = vld [vmem:[#allocation12 + $0x80] sm:$0xf]
        %v9324 = vld [vmem:[#allocation12 + $0x84] sm:$0xf]
        %v9325 = vld [vmem:[#allocation12 + $0x88] sm:$0xf]
        %v9326 = vld [vmem:[#allocation12 + $0x8c] sm:$0xf]
        %v9327 = vld [vmem:[#allocation12 + $0x90] sm:$0xf]
        %v9328 = vld [vmem:[#allocation12 + $0x94] sm:$0xf]
        %v9329 = vld [vmem:[#allocation12 + $0x98] sm:$0xf]
        %v9330 = vld [vmem:[#allocation12 + $0x9c] sm:$0xf]
        %v9331 = vld [vmem:[#allocation12 + $0xa0] sm:$0xf]
        %v9332 = vld [vmem:[#allocation12 + $0xa4] sm:$0xf]
        %v9333 = vld [vmem:[#allocation12 + $0xa8] sm:$0xf]
        %v9334 = vld [vmem:[#allocation12 + $0xac] sm:$0xf]
        %v9335 = vld [vmem:[#allocation12 + $0xb0] sm:$0xf]
        %v9336 = vld [vmem:[#allocation12 + $0xb4] sm:$0xf]
        %v9337 = vld [vmem:[#allocation12 + $0xb8] sm:$0xf]
        %v9338 = vld [vmem:[#allocation12 + $0xbc] sm:$0xf]
        %v9339 = vld [vmem:[#allocation12 + $0xc0] sm:$0xf]
        %v9340 = vld [vmem:[#allocation12 + $0xc4] sm:$0xf]
        %v9341 = vld [vmem:[#allocation12 + $0xc8] sm:$0xf]
        %v9342 = vld [vmem:[#allocation12 + $0xcc] sm:$0xf]
        %v9343 = vld [vmem:[#allocation12 + $0xd0] sm:$0xf]
        %v9344 = vld [vmem:[#allocation12 + $0xd4] sm:$0xf]
        %v9345 = vld [vmem:[#allocation12 + $0xd8] sm:$0xf]
        %v9346 = vld [vmem:[#allocation12 + $0xdc] sm:$0xf]
        %v9347 = vld [vmem:[#allocation12 + $0xe0] sm:$0xf]
        %v9348 = vld [vmem:[#allocation12 + $0xe4] sm:$0xf]
        %v9349 = vld [vmem:[#allocation12 + $0xe8] sm:$0xf]
        %v9350 = vld [vmem:[#allocation12 + $0xec] sm:$0xf]
        %v9351 = vld [vmem:[#allocation12 + $0xf0] sm:$0xf]
        %v9352 = vld [vmem:[#allocation12 + $0xf4] sm:$0xf]
        %v9353 = vld [vmem:[#allocation12 + $0xf8] sm:$0xf]
        %v9354 = vld [vmem:[#allocation12 + $0xfc] sm:$0xf]
        %v9355 = vld [vmem:[#allocation12 + $0x100] sm:$0xf]
        %v9356 = vld [vmem:[#allocation12 + $0x104] sm:$0xf]
        %v9357 = vld [vmem:[#allocation12 + $0x108] sm:$0xf]
        %v9358 = vld [vmem:[#allocation12 + $0x10c] sm:$0xf]
        %v9359 = vld [vmem:[#allocation12 + $0x110] sm:$0xf]
        %v9360 = vld [vmem:[#allocation12 + $0x114] sm:$0xf]
        %v9361 = vld [vmem:[#allocation12 + $0x118] sm:$0xf]
        %v9362 = vld [vmem:[#allocation12 + $0x11c] sm:$0xf]
        %v9363 = vld [vmem:[#allocation12 + $0x120] sm:$0xf]
        %v9364 = vld [vmem:[#allocation12 + $0x124] sm:$0xf]
        %v9365 = vld [vmem:[#allocation12 + $0x128] sm:$0xf]
        %v9366 = vld [vmem:[#allocation12 + $0x12c] sm:$0xf]
        %v9367 = vld [vmem:[#allocation12 + $0x130] sm:$0xf]
        %v9368 = vld [vmem:[#allocation12 + $0x134] sm:$0xf]
        %v9369 = vld [vmem:[#allocation12 + $0x138] sm:$0xf]
        %v9370 = vld [vmem:[#allocation12 + $0x13c] sm:$0xf]
        %v9371 = vld [vmem:[#allocation12 + $0x140] sm:$0xf]
        %v9372 = vld [vmem:[#allocation12 + $0x144] sm:$0xf]
        %v9373 = vld [vmem:[#allocation12 + $0x148] sm:$0xf]
        %v9374 = vld [vmem:[#allocation12 + $0x14c] sm:$0xf]
        %v9375 = vld [vmem:[#allocation12 + $0x150] sm:$0xf]
        %v9376 = vld [vmem:[#allocation12 + $0x154] sm:$0xf]
        %v9377 = vld [vmem:[#allocation12 + $0x158] sm:$0xf]
        %v9378 = vld [vmem:[#allocation12 + $0x15c] sm:$0xf]
        %v9379 = vld [vmem:[#allocation12 + $0x160] sm:$0xf]
        %v9380 = vld [vmem:[#allocation12 + $0x164] sm:$0xf]
        %v9381 = vld [vmem:[#allocation12 + $0x168] sm:$0xf]
        %v9382 = vld [vmem:[#allocation12 + $0x16c] sm:$0xf]
        %v9383 = vld [vmem:[#allocation12 + $0x170] sm:$0xf]
        %v9384 = vld [vmem:[#allocation12 + $0x174] sm:$0xf]
        %v9385 = vld [vmem:[#allocation12 + $0x178] sm:$0xf]
        %v9386 = vld [vmem:[#allocation12 + $0x17c] sm:$0xf]
        %v9387 = vld [vmem:[#allocation12 + $0x180] sm:$0xf]
        %v9388 = vld [vmem:[#allocation12 + $0x184] sm:$0xf]
        %v9389 = vld [vmem:[#allocation12 + $0x188] sm:$0xf]
        %v9390 = vld [vmem:[#allocation12 + $0x18c] sm:$0xf]
        %v9391 = vld [vmem:[#allocation12 + $0x190] sm:$0xf]
        %v9392 = vld [vmem:[#allocation12 + $0x194] sm:$0xf]
        %v9393 = vld [vmem:[#allocation12 + $0x198] sm:$0xf]
        %v9394 = vld [vmem:[#allocation12 + $0x19c] sm:$0xf]
        %v9395 = vld [vmem:[#allocation12 + $0x1a0] sm:$0xf]
        %v9396 = vld [vmem:[#allocation12 + $0x1a4] sm:$0xf]
        %v9397 = vld [vmem:[#allocation12 + $0x1a8] sm:$0xf]
        %v9398 = vld [vmem:[#allocation12 + $0x1ac] sm:$0xf]
        %v9399 = vld [vmem:[#allocation12 + $0x1b0] sm:$0xf]
        %v9400 = vld [vmem:[#allocation12 + $0x1b4] sm:$0xf]
        %v9401 = vld [vmem:[#allocation12 + $0x1b8] sm:$0xf]
        %v9402 = vld [vmem:[#allocation12 + $0x1bc] sm:$0xf]
        %v9403 = vld [vmem:[#allocation12 + $0x1c0] sm:$0xf]
        %v9404 = vld [vmem:[#allocation12 + $0x1c4] sm:$0xf]
        %v9405 = vld [vmem:[#allocation12 + $0x1c8] sm:$0xf]
        %v9406 = vld [vmem:[#allocation12 + $0x1cc] sm:$0xf]
        %v9407 = vld [vmem:[#allocation12 + $0x1d0] sm:$0xf]
        %v9408 = vld [vmem:[#allocation12 + $0x1d4] sm:$0xf]
        %v9409 = vld [vmem:[#allocation12 + $0x1d8] sm:$0xf]
        %v9410 = vld [vmem:[#allocation12 + $0x1dc] sm:$0xf]
        %v9411 = vld [vmem:[#allocation12 + $0x1e0] sm:$0xf]
        %v9412 = vld [vmem:[#allocation12 + $0x1e4] sm:$0xf]
        %v9413 = vld [vmem:[#allocation12 + $0x1e8] sm:$0xf]
        %v9414 = vld [vmem:[#allocation12 + $0x1ec] sm:$0xf]
        %v9415 = vld [vmem:[#allocation12 + $0x1f0] sm:$0xf]
        %v9416 = vld [vmem:[#allocation12 + $0x1f4] sm:$0xf]
        %v9417 = vld [vmem:[#allocation12 + $0x1f8] sm:$0xf]
        %v9418 = vld [vmem:[#allocation12 + $0x1fc] sm:$0xf]
        %v9419 = vld [vmem:[#allocation12 + $0x200] sm:$0xf]
        %v9420 = vld [vmem:[#allocation12 + $0x204] sm:$0xf]
        %v9421 = vld [vmem:[#allocation12 + $0x208] sm:$0xf]
        %v9422 = vld [vmem:[#allocation12 + $0x20c] sm:$0xf]
        %v9423 = vld [vmem:[#allocation12 + $0x210] sm:$0xf]
        %v9424 = vld [vmem:[#allocation12 + $0x214] sm:$0xf]
        %v9425 = vld [vmem:[#allocation12 + $0x218] sm:$0xf]
        %v9426 = vld [vmem:[#allocation12 + $0x21c] sm:$0xf]
        %v9427 = vld [vmem:[#allocation12 + $0x220] sm:$0xf]
        %v9428 = vld [vmem:[#allocation12 + $0x224] sm:$0xf]
        %v9429 = vld [vmem:[#allocation12 + $0x228] sm:$0xf]
        %v9430 = vld [vmem:[#allocation12 + $0x22c] sm:$0xf]
        %v9431 = vld [vmem:[#allocation12 + $0x230] sm:$0xf]
        %v9432 = vld [vmem:[#allocation12 + $0x234] sm:$0xf]
        %v9433 = vld [vmem:[#allocation12 + $0x238] sm:$0xf]
        %v9434 = vld [vmem:[#allocation12 + $0x23c] sm:$0xf]
        %v9435 = vld [vmem:[#allocation21] sm:$0x1]
        %v9580 = vunpack.c.l.b16 %v9291
        %v9581 = vunpack.c.l.b16 %v9292
        %v9582 = vunpack.c.l.b16 %v9293
        %v9583 = vunpack.c.l.b16 %v9294
        %v9584 = vunpack.c.l.b16 %v9295
        %v9585 = vunpack.c.l.b16 %v9296
        %v9586 = vunpack.c.l.b16 %v9297
        %v9587 = vunpack.c.l.b16 %v9298
        %v9588 = vunpack.c.l.b16 %v9299
        %v9589 = vunpack.c.l.b16 %v9300
        %v9590 = vunpack.c.l.b16 %v9301
        %v9591 = vunpack.c.l.b16 %v9302
        %v9592 = vunpack.c.l.b16 %v9303
        %v9593 = vunpack.c.l.b16 %v9304
        %v9594 = vunpack.c.l.b16 %v9305
        %v9595 = vunpack.c.l.b16 %v9306
        %v9596 = vunpack.c.l.b16 %v9307
        %v9597 = vunpack.c.l.b16 %v9308
        %v9598 = vunpack.c.l.b16 %v9309
        %v9599 = vunpack.c.l.b16 %v9310
        %v9600 = vunpack.c.l.b16 %v9311
        %v9601 = vunpack.c.l.b16 %v9312
        %v9602 = vunpack.c.l.b16 %v9313
        %v9603 = vunpack.c.l.b16 %v9314
        %v9604 = vunpack.c.l.b16 %v9315
        %v9605 = vunpack.c.l.b16 %v9316
        %v9606 = vunpack.c.l.b16 %v9317
        %v9607 = vunpack.c.l.b16 %v9318
        %v9608 = vunpack.c.l.b16 %v9319
        %v9609 = vunpack.c.l.b16 %v9320
        %v9610 = vunpack.c.l.b16 %v9321
        %v9611 = vunpack.c.l.b16 %v9322
        %v9612 = vunpack.c.l.b16 %v9323
        %v9613 = vunpack.c.l.b16 %v9324
        %v9614 = vunpack.c.l.b16 %v9325
        %v9615 = vunpack.c.l.b16 %v9326
        %v9616 = vunpack.c.l.b16 %v9327
        %v9617 = vunpack.c.l.b16 %v9328
        %v9618 = vunpack.c.l.b16 %v9329
        %v9619 = vunpack.c.l.b16 %v9330
        %v9620 = vunpack.c.l.b16 %v9331
        %v9621 = vunpack.c.l.b16 %v9332
        %v9622 = vunpack.c.l.b16 %v9333
        %v9623 = vunpack.c.l.b16 %v9334
        %v9624 = vunpack.c.l.b16 %v9335
        %v9625 = vunpack.c.l.b16 %v9336
        %v9626 = vunpack.c.l.b16 %v9337
        %v9627 = vunpack.c.l.b16 %v9338
        %v9628 = vunpack.c.l.b16 %v9339
        %v9629 = vunpack.c.l.b16 %v9340
        %v9630 = vunpack.c.l.b16 %v9341
        %v9631 = vunpack.c.l.b16 %v9342
        %v9632 = vunpack.c.l.b16 %v9343
        %v9633 = vunpack.c.l.b16 %v9344
        %v9634 = vunpack.c.l.b16 %v9345
        %v9635 = vunpack.c.l.b16 %v9346
        %v9636 = vunpack.c.l.b16 %v9347
        %v9637 = vunpack.c.l.b16 %v9348
        %v9638 = vunpack.c.l.b16 %v9349
        %v9639 = vunpack.c.l.b16 %v9350
        %v9640 = vunpack.c.l.b16 %v9351
        %v9641 = vunpack.c.l.b16 %v9352
        %v9642 = vunpack.c.l.b16 %v9353
        %v9643 = vunpack.c.l.b16 %v9354
        %v9644 = vunpack.c.l.b16 %v9355
        %v9645 = vunpack.c.l.b16 %v9356
        %v9646 = vunpack.c.l.b16 %v9357
        %v9647 = vunpack.c.l.b16 %v9358
        %v9648 = vunpack.c.l.b16 %v9359
        %v9649 = vunpack.c.l.b16 %v9360
        %v9650 = vunpack.c.l.b16 %v9361
        %v9651 = vunpack.c.l.b16 %v9362
        %v9652 = vunpack.c.l.b16 %v9363
        %v9653 = vunpack.c.l.b16 %v9364
        %v9654 = vunpack.c.l.b16 %v9365
        %v9655 = vunpack.c.l.b16 %v9366
        %v9656 = vunpack.c.l.b16 %v9367
        %v9657 = vunpack.c.l.b16 %v9368
        %v9658 = vunpack.c.l.b16 %v9369
        %v9659 = vunpack.c.l.b16 %v9370
        %v9660 = vunpack.c.l.b16 %v9371
        %v9661 = vunpack.c.l.b16 %v9372
        %v9662 = vunpack.c.l.b16 %v9373
        %v9663 = vunpack.c.l.b16 %v9374
        %v9664 = vunpack.c.l.b16 %v9375
        %v9665 = vunpack.c.l.b16 %v9376
        %v9666 = vunpack.c.l.b16 %v9377
        %v9667 = vunpack.c.l.b16 %v9378
        %v9668 = vunpack.c.l.b16 %v9379
        %v9669 = vunpack.c.l.b16 %v9380
        %v9670 = vunpack.c.l.b16 %v9381
        %v9671 = vunpack.c.l.b16 %v9382
        %v9672 = vunpack.c.l.b16 %v9383
        %v9673 = vunpack.c.l.b16 %v9384
        %v9674 = vunpack.c.l.b16 %v9385
        %v9675 = vunpack.c.l.b16 %v9386
        %v9676 = vunpack.c.l.b16 %v9387
        %v9677 = vunpack.c.l.b16 %v9388
        %v9678 = vunpack.c.l.b16 %v9389
        %v9679 = vunpack.c.l.b16 %v9390
        %v9680 = vunpack.c.l.b16 %v9391
        %v9681 = vunpack.c.l.b16 %v9392
        %v9682 = vunpack.c.l.b16 %v9393
        %v9683 = vunpack.c.l.b16 %v9394
        %v9684 = vunpack.c.l.b16 %v9395
        %v9685 = vunpack.c.l.b16 %v9396
        %v9686 = vunpack.c.l.b16 %v9397
        %v9687 = vunpack.c.l.b16 %v9398
        %v9688 = vunpack.c.l.b16 %v9399
        %v9689 = vunpack.c.l.b16 %v9400
        %v9690 = vunpack.c.l.b16 %v9401
        %v9691 = vunpack.c.l.b16 %v9402
        %v9692 = vunpack.c.l.b16 %v9403
        %v9693 = vunpack.c.l.b16 %v9404
        %v9694 = vunpack.c.l.b16 %v9405
        %v9695 = vunpack.c.l.b16 %v9406
        %v9696 = vunpack.c.l.b16 %v9407
        %v9697 = vunpack.c.l.b16 %v9408
        %v9698 = vunpack.c.l.b16 %v9409
        %v9699 = vunpack.c.l.b16 %v9410
        %v9700 = vunpack.c.l.b16 %v9411
        %v9701 = vunpack.c.l.b16 %v9412
        %v9702 = vunpack.c.l.b16 %v9413
        %v9703 = vunpack.c.l.b16 %v9414
        %v9704 = vunpack.c.l.b16 %v9415
        %v9705 = vunpack.c.l.b16 %v9416
        %v9706 = vunpack.c.l.b16 %v9417
        %v9707 = vunpack.c.l.b16 %v9418
        %v9708 = vunpack.c.l.b16 %v9419
        %v9709 = vunpack.c.l.b16 %v9420
        %v9710 = vunpack.c.l.b16 %v9421
        %v9711 = vunpack.c.l.b16 %v9422
        %v9712 = vunpack.c.l.b16 %v9423
        %v9713 = vunpack.c.l.b16 %v9424
        %v9714 = vunpack.c.l.b16 %v9425
        %v9715 = vunpack.c.l.b16 %v9426
        %v9716 = vunpack.c.l.b16 %v9427
        %v9717 = vunpack.c.l.b16 %v9428
        %v9718 = vunpack.c.l.b16 %v9429
        %v9719 = vunpack.c.l.b16 %v9430
        %v9720 = vunpack.c.l.b16 %v9431
        %v9721 = vunpack.c.l.b16 %v9432
        %v9722 = vunpack.c.l.b16 %v9433
        %v9723 = vunpack.c.l.b16 %v9434
        %v9724 = vpack.c.b16 %v9581, %v9580
        %v9725 = vpack.c.b16 %v9583, %v9582
        %v9726 = vpack.c.b16 %v9585, %v9584
        %v9727 = vpack.c.b16 %v9587, %v9586
        %v9728 = vpack.c.b16 %v9589, %v9588
        %v9729 = vpack.c.b16 %v9591, %v9590
        %v9730 = vpack.c.b16 %v9593, %v9592
        %v9731 = vpack.c.b16 %v9595, %v9594
        %v9732 = vpack.c.b16 %v9597, %v9596
        %v9733 = vpack.c.b16 %v9599, %v9598
        %v9734 = vpack.c.b16 %v9601, %v9600
        %v9735 = vpack.c.b16 %v9603, %v9602
        %v9736 = vpack.c.b16 %v9605, %v9604
        %v9737 = vpack.c.b16 %v9607, %v9606
        %v9738 = vpack.c.b16 %v9609, %v9608
        %v9739 = vpack.c.b16 %v9611, %v9610
        %v9740 = vpack.c.b16 %v9613, %v9612
        %v9741 = vpack.c.b16 %v9615, %v9614
        %v9742 = vpack.c.b16 %v9617, %v9616
        %v9743 = vpack.c.b16 %v9619, %v9618
        %v9744 = vpack.c.b16 %v9621, %v9620
        %v9745 = vpack.c.b16 %v9623, %v9622
        %v9746 = vpack.c.b16 %v9625, %v9624
        %v9747 = vpack.c.b16 %v9627, %v9626
        %v9748 = vpack.c.b16 %v9629, %v9628
        %v9749 = vpack.c.b16 %v9631, %v9630
        %v9750 = vpack.c.b16 %v9633, %v9632
        %v9751 = vpack.c.b16 %v9635, %v9634
        %v9752 = vpack.c.b16 %v9637, %v9636
        %v9753 = vpack.c.b16 %v9639, %v9638
        %v9754 = vpack.c.b16 %v9641, %v9640
        %v9755 = vpack.c.b16 %v9643, %v9642
        %v9756 = vpack.c.b16 %v9645, %v9644
        %v9757 = vpack.c.b16 %v9647, %v9646
        %v9758 = vpack.c.b16 %v9649, %v9648
        %v9759 = vpack.c.b16 %v9651, %v9650
        %v9760 = vpack.c.b16 %v9653, %v9652
        %v9761 = vpack.c.b16 %v9655, %v9654
        %v9762 = vpack.c.b16 %v9657, %v9656
        %v9763 = vpack.c.b16 %v9659, %v9658
        %v9764 = vpack.c.b16 %v9661, %v9660
        %v9765 = vpack.c.b16 %v9663, %v9662
        %v9766 = vpack.c.b16 %v9665, %v9664
        %v9767 = vpack.c.b16 %v9667, %v9666
        %v9768 = vpack.c.b16 %v9669, %v9668
        %v9769 = vpack.c.b16 %v9671, %v9670
        %v9770 = vpack.c.b16 %v9673, %v9672
        %v9771 = vpack.c.b16 %v9675, %v9674
        %v9772 = vpack.c.b16 %v9677, %v9676
        %v9773 = vpack.c.b16 %v9679, %v9678
        %v9774 = vpack.c.b16 %v9681, %v9680
        %v9775 = vpack.c.b16 %v9683, %v9682
        %v9776 = vpack.c.b16 %v9685, %v9684
        %v9777 = vpack.c.b16 %v9687, %v9686
        %v9778 = vpack.c.b16 %v9689, %v9688
        %v9779 = vpack.c.b16 %v9691, %v9690
        %v9780 = vpack.c.b16 %v9693, %v9692
        %v9781 = vpack.c.b16 %v9695, %v9694
        %v9782 = vpack.c.b16 %v9697, %v9696
        %v9783 = vpack.c.b16 %v9699, %v9698
        %v9784 = vpack.c.b16 %v9701, %v9700
        %v9785 = vpack.c.b16 %v9703, %v9702
        %v9786 = vpack.c.b16 %v9705, %v9704
        %v9787 = vpack.c.b16 %v9707, %v9706
        %v9788 = vpack.c.b16 %v9709, %v9708
        %v9789 = vpack.c.b16 %v9711, %v9710
        %v9790 = vpack.c.b16 %v9713, %v9712
        %v9791 = vpack.c.b16 %v9715, %v9714
        %v9792 = vpack.c.b16 %v9717, %v9716
        %v9793 = vpack.c.b16 %v9719, %v9718
        %v9794 = vpack.c.b16 %v9721, %v9720
        %v9795 = vpack.c.b16 %v9723, %v9722
        %9868 = vmatpush.bf16.msra.mxu0 %v9731
        %9869 = vmatpush.bf16.msra.mxu0 %v9730
        %9870 = vmatpush.bf16.msra.mxu0 %v9729
        %9871 = vmatpush.bf16.msra.mxu0 %v9728
        %9872 = vmatpush.bf16.msra.mxu0 %v9727
        %9873 = vmatpush.bf16.msra.mxu0 %v9726
        %9874 = vmatpush.bf16.msra.mxu0 %v9725
        %9875 = vmatpush.bf16.msra.mxu0 %v9724
        %9876 = vmatmul.bf16.gmra.mxu0 %v9263
        %v9877 = vpop.f32.mrf.mxu0
        %v9878 = vadd.f32 %v9435, %v9877
        %v9879 = vpop.f32.mrf.mxu0
        %9880 = vdwg.mxu0
        %9881 = vmatpush.bf16.msra.mxu0 %v9739
        %9882 = vmatpush.bf16.msra.mxu0 %v9738
        %9883 = vmatpush.bf16.msra.mxu0 %v9737
        %9884 = vmatpush.bf16.msra.mxu0 %v9736
        %9885 = vmatpush.bf16.msra.mxu0 %v9735
        %9886 = vmatpush.bf16.msra.mxu0 %v9734
        %9887 = vmatpush.bf16.msra.mxu0 %v9733
        %9888 = vmatpush.bf16.msra.mxu0 %v9732
        %9889 = vmatmul.bf16.gmra.mxu0 %v9264
        %v9890 = vpop.f32.mrf.mxu0
        %v9891 = vadd.f32 %v9878, %v9890
        %v9892 = vpop.f32.mrf.mxu0
        %9893 = vdwg.mxu0
        %9894 = vmatpush.bf16.msra.mxu0 %v9747
        %9895 = vmatpush.bf16.msra.mxu0 %v9746
        %9896 = vmatpush.bf16.msra.mxu0 %v9745
        %9897 = vmatpush.bf16.msra.mxu0 %v9744
        %9898 = vmatpush.bf16.msra.mxu0 %v9743
        %9899 = vmatpush.bf16.msra.mxu0 %v9742
        %9900 = vmatpush.bf16.msra.mxu0 %v9741
        %9901 = vmatpush.bf16.msra.mxu0 %v9740
        %9902 = vmatmul.bf16.gmra.mxu0 %v9265
        %v9903 = vpop.f32.mrf.mxu0
        %v9904 = vadd.f32 %v9891, %v9903
        %v9905 = vpop.f32.mrf.mxu0
        %9906 = vdwg.mxu0
        %9907 = vmatpush.bf16.msra.mxu0 %v9755
        %9908 = vmatpush.bf16.msra.mxu0 %v9754
        %9909 = vmatpush.bf16.msra.mxu0 %v9753
        %9910 = vmatpush.bf16.msra.mxu0 %v9752
        %9911 = vmatpush.bf16.msra.mxu0 %v9751
        %9912 = vmatpush.bf16.msra.mxu0 %v9750
        %9913 = vmatpush.bf16.msra.mxu0 %v9749
        %9914 = vmatpush.bf16.msra.mxu0 %v9748
        %9915 = vmatmul.bf16.gmra.mxu0 %v9274
        %v9916 = vpop.f32.mrf.mxu0
        %v9917 = vadd.f32 %v9904, %v9916
        %v9918 = vpop.f32.mrf.mxu0
        %9919 = vdwg.mxu0
        %9920 = vmatpush.bf16.msra.mxu0 %v9763
        %9921 = vmatpush.bf16.msra.mxu0 %v9762
        %9922 = vmatpush.bf16.msra.mxu0 %v9761
        %9923 = vmatpush.bf16.msra.mxu0 %v9760
        %9924 = vmatpush.bf16.msra.mxu0 %v9759
        %9925 = vmatpush.bf16.msra.mxu0 %v9758
        %9926 = vmatpush.bf16.msra.mxu0 %v9757
        %9927 = vmatpush.bf16.msra.mxu0 %v9756
        %9928 = vmatmul.bf16.gmra.mxu0 %v9275
        %v9929 = vpop.f32.mrf.mxu0
        %v9930 = vadd.f32 %v9917, %v9929
        %v9931 = vpop.f32.mrf.mxu0
        %9932 = vdwg.mxu0
        %9933 = vmatpush.bf16.msra.mxu0 %v9771
        %9934 = vmatpush.bf16.msra.mxu0 %v9770
        %9935 = vmatpush.bf16.msra.mxu0 %v9769
        %9936 = vmatpush.bf16.msra.mxu0 %v9768
        %9937 = vmatpush.bf16.msra.mxu0 %v9767
        %9938 = vmatpush.bf16.msra.mxu0 %v9766
        %9939 = vmatpush.bf16.msra.mxu0 %v9765
        %9940 = vmatpush.bf16.msra.mxu0 %v9764
        %9941 = vmatmul.bf16.gmra.mxu0 %v9276
        %v9942 = vpop.f32.mrf.mxu0
        %v9943 = vadd.f32 %v9930, %v9942
        %v9944 = vpop.f32.mrf.mxu0
        %9945 = vdwg.mxu0
        %9946 = vmatpush.bf16.msra.mxu0 %v9779
        %9947 = vmatpush.bf16.msra.mxu0 %v9778
        %9948 = vmatpush.bf16.msra.mxu0 %v9777
        %9949 = vmatpush.bf16.msra.mxu0 %v9776
        %9950 = vmatpush.bf16.msra.mxu0 %v9775
        %9951 = vmatpush.bf16.msra.mxu0 %v9774
        %9952 = vmatpush.bf16.msra.mxu0 %v9773
        %9953 = vmatpush.bf16.msra.mxu0 %v9772
        %9954 = vmatmul.bf16.gmra.mxu0 %v9285
        %v9955 = vpop.f32.mrf.mxu0
        %v9956 = vadd.f32 %v9943, %v9955
        %v9957 = vpop.f32.mrf.mxu0
        %9958 = vdwg.mxu0
        %9959 = vmatpush.bf16.msra.mxu0 %v9787
        %9960 = vmatpush.bf16.msra.mxu0 %v9786
        %9961 = vmatpush.bf16.msra.mxu0 %v9785
        %9962 = vmatpush.bf16.msra.mxu0 %v9784
        %9963 = vmatpush.bf16.msra.mxu0 %v9783
        %9964 = vmatpush.bf16.msra.mxu0 %v9782
        %9965 = vmatpush.bf16.msra.mxu0 %v9781
        %9966 = vmatpush.bf16.msra.mxu0 %v9780
        %9967 = vmatmul.bf16.gmra.mxu0 %v9286
        %v9968 = vpop.f32.mrf.mxu0
        %v9969 = vadd.f32 %v9956, %v9968
        %v9970 = vpop.f32.mrf.mxu0
        %9971 = vdwg.mxu0
        %9972 = vmatpush.bf16.msra.mxu0 %v9795
        %9973 = vmatpush.bf16.msra.mxu0 %v9794
        %9974 = vmatpush.bf16.msra.mxu0 %v9793
        %9975 = vmatpush.bf16.msra.mxu0 %v9792
        %9976 = vmatpush.bf16.msra.mxu0 %v9791
        %9977 = vmatpush.bf16.msra.mxu0 %v9790
        %9978 = vmatpush.bf16.msra.mxu0 %v9789
        %9979 = vmatpush.bf16.msra.mxu0 %v9788
        %9980 = vmatmul.bf16.gmra.mxu0 %v9287
        %v9981 = vpop.f32.mrf.mxu0
        %v9982 = vadd.f32 %v9969, %v9981
        %v9983 = vpop.f32.mrf.mxu0
        %9984 = vdwg.mxu0
        %v9985 = vmax.f32 %v9982, 0.0
        %9986 = vst [vmem:[#allocation4 + $0x6] sm:$0x1] %v9985
        %s9987 = scalar_lea.vmem [#allocation3], 50
        %v9988 = vld [vmem:[%s9987] ss:$8 sm:$0x7]
        %v9990 = vperm.slane %v9988, 0
        %v9991 = vperm.slane %v9988, 1
        %v9992 = vperm.slane %v9988, 2
        %v9996 = vpack.c.bf16 %v9991, %v9990
        %v9997 = vpack.c.bf16 %v9992, %v9992
        %s9998 = scalar_lea.vmem [#allocation3], 51
        %v9999 = vld [vmem:[%s9998] ss:$8 sm:$0x7]
        %v10001 = vperm.slane %v9999, 0
        %v10002 = vperm.slane %v9999, 1
        %v10003 = vperm.slane %v9999, 2
        %v10007 = vpack.c.bf16 %v10002, %v10001
        %v10008 = vpack.c.bf16 %v10003, %v10003
        %s10009 = scalar_lea.vmem [#allocation3], 52
        %v10010 = vld [vmem:[%s10009] ss:$8 sm:$0x7]
        %v10012 = vperm.slane %v10010, 0
        %v10013 = vperm.slane %v10010, 1
        %v10014 = vperm.slane %v10010, 2
        %v10018 = vpack.c.bf16 %v10013, %v10012
        %v10019 = vpack.c.bf16 %v10014, %v10014
        %v10022 = vunpack.c.l.b16 %v9996
        %v10023 = vunpack.c.h.b16 %v9996
        %v10024 = vunpack.c.l.b16 %v9997
        %v10025 = vpack.c.b16 %v10022, %v10022
        %v10026 = vpack.c.b16 %v10023, %v10023
        %v10027 = vpack.c.b16 %v10024, %v10024
        %v10033 = vunpack.c.l.b16 %v10007
        %v10034 = vunpack.c.h.b16 %v10007
        %v10035 = vunpack.c.l.b16 %v10008
        %v10036 = vpack.c.b16 %v10033, %v10033
        %v10037 = vpack.c.b16 %v10034, %v10034
        %v10038 = vpack.c.b16 %v10035, %v10035
        %v10044 = vunpack.c.l.b16 %v10018
        %v10045 = vunpack.c.h.b16 %v10018
        %v10046 = vunpack.c.l.b16 %v10019
        %v10047 = vpack.c.b16 %v10044, %v10044
        %v10048 = vpack.c.b16 %v10045, %v10045
        %v10049 = vpack.c.b16 %v10046, %v10046
        %v10053 = vld [vmem:[#allocation12] sm:$0xf]
        %v10054 = vld [vmem:[#allocation12 + $0x4] sm:$0xf]
        %v10055 = vld [vmem:[#allocation12 + $0x8] sm:$0xf]
        %v10056 = vld [vmem:[#allocation12 + $0xc] sm:$0xf]
        %v10057 = vld [vmem:[#allocation12 + $0x10] sm:$0xf]
        %v10058 = vld [vmem:[#allocation12 + $0x14] sm:$0xf]
        %v10059 = vld [vmem:[#allocation12 + $0x18] sm:$0xf]
        %v10060 = vld [vmem:[#allocation12 + $0x1c] sm:$0xf]
        %v10061 = vld [vmem:[#allocation12 + $0x20] sm:$0xf]
        %v10062 = vld [vmem:[#allocation12 + $0x24] sm:$0xf]
        %v10063 = vld [vmem:[#allocation12 + $0x28] sm:$0xf]
        %v10064 = vld [vmem:[#allocation12 + $0x2c] sm:$0xf]
        %v10065 = vld [vmem:[#allocation12 + $0x30] sm:$0xf]
        %v10066 = vld [vmem:[#allocation12 + $0x34] sm:$0xf]
        %v10067 = vld [vmem:[#allocation12 + $0x38] sm:$0xf]
        %v10068 = vld [vmem:[#allocation12 + $0x3c] sm:$0xf]
        %v10069 = vld [vmem:[#allocation12 + $0x40] sm:$0xf]
        %v10070 = vld [vmem:[#allocation12 + $0x44] sm:$0xf]
        %v10071 = vld [vmem:[#allocation12 + $0x48] sm:$0xf]
        %v10072 = vld [vmem:[#allocation12 + $0x4c] sm:$0xf]
        %v10073 = vld [vmem:[#allocation12 + $0x50] sm:$0xf]
        %v10074 = vld [vmem:[#allocation12 + $0x54] sm:$0xf]
        %v10075 = vld [vmem:[#allocation12 + $0x58] sm:$0xf]
        %v10076 = vld [vmem:[#allocation12 + $0x5c] sm:$0xf]
        %v10077 = vld [vmem:[#allocation12 + $0x60] sm:$0xf]
        %v10078 = vld [vmem:[#allocation12 + $0x64] sm:$0xf]
        %v10079 = vld [vmem:[#allocation12 + $0x68] sm:$0xf]
        %v10080 = vld [vmem:[#allocation12 + $0x6c] sm:$0xf]
        %v10081 = vld [vmem:[#allocation12 + $0x70] sm:$0xf]
        %v10082 = vld [vmem:[#allocation12 + $0x74] sm:$0xf]
        %v10083 = vld [vmem:[#allocation12 + $0x78] sm:$0xf]
        %v10084 = vld [vmem:[#allocation12 + $0x7c] sm:$0xf]
        %v10085 = vld [vmem:[#allocation12 + $0x80] sm:$0xf]
        %v10086 = vld [vmem:[#allocation12 + $0x84] sm:$0xf]
        %v10087 = vld [vmem:[#allocation12 + $0x88] sm:$0xf]
        %v10088 = vld [vmem:[#allocation12 + $0x8c] sm:$0xf]
        %v10089 = vld [vmem:[#allocation12 + $0x90] sm:$0xf]
        %v10090 = vld [vmem:[#allocation12 + $0x94] sm:$0xf]
        %v10091 = vld [vmem:[#allocation12 + $0x98] sm:$0xf]
        %v10092 = vld [vmem:[#allocation12 + $0x9c] sm:$0xf]
        %v10093 = vld [vmem:[#allocation12 + $0xa0] sm:$0xf]
        %v10094 = vld [vmem:[#allocation12 + $0xa4] sm:$0xf]
        %v10095 = vld [vmem:[#allocation12 + $0xa8] sm:$0xf]
        %v10096 = vld [vmem:[#allocation12 + $0xac] sm:$0xf]
        %v10097 = vld [vmem:[#allocation12 + $0xb0] sm:$0xf]
        %v10098 = vld [vmem:[#allocation12 + $0xb4] sm:$0xf]
        %v10099 = vld [vmem:[#allocation12 + $0xb8] sm:$0xf]
        %v10100 = vld [vmem:[#allocation12 + $0xbc] sm:$0xf]
        %v10101 = vld [vmem:[#allocation12 + $0xc0] sm:$0xf]
        %v10102 = vld [vmem:[#allocation12 + $0xc4] sm:$0xf]
        %v10103 = vld [vmem:[#allocation12 + $0xc8] sm:$0xf]
        %v10104 = vld [vmem:[#allocation12 + $0xcc] sm:$0xf]
        %v10105 = vld [vmem:[#allocation12 + $0xd0] sm:$0xf]
        %v10106 = vld [vmem:[#allocation12 + $0xd4] sm:$0xf]
        %v10107 = vld [vmem:[#allocation12 + $0xd8] sm:$0xf]
        %v10108 = vld [vmem:[#allocation12 + $0xdc] sm:$0xf]
        %v10109 = vld [vmem:[#allocation12 + $0xe0] sm:$0xf]
        %v10110 = vld [vmem:[#allocation12 + $0xe4] sm:$0xf]
        %v10111 = vld [vmem:[#allocation12 + $0xe8] sm:$0xf]
        %v10112 = vld [vmem:[#allocation12 + $0xec] sm:$0xf]
        %v10113 = vld [vmem:[#allocation12 + $0xf0] sm:$0xf]
        %v10114 = vld [vmem:[#allocation12 + $0xf4] sm:$0xf]
        %v10115 = vld [vmem:[#allocation12 + $0xf8] sm:$0xf]
        %v10116 = vld [vmem:[#allocation12 + $0xfc] sm:$0xf]
        %v10117 = vld [vmem:[#allocation12 + $0x100] sm:$0xf]
        %v10118 = vld [vmem:[#allocation12 + $0x104] sm:$0xf]
        %v10119 = vld [vmem:[#allocation12 + $0x108] sm:$0xf]
        %v10120 = vld [vmem:[#allocation12 + $0x10c] sm:$0xf]
        %v10121 = vld [vmem:[#allocation12 + $0x110] sm:$0xf]
        %v10122 = vld [vmem:[#allocation12 + $0x114] sm:$0xf]
        %v10123 = vld [vmem:[#allocation12 + $0x118] sm:$0xf]
        %v10124 = vld [vmem:[#allocation12 + $0x11c] sm:$0xf]
        %v10125 = vld [vmem:[#allocation12 + $0x120] sm:$0xf]
        %v10126 = vld [vmem:[#allocation12 + $0x124] sm:$0xf]
        %v10127 = vld [vmem:[#allocation12 + $0x128] sm:$0xf]
        %v10128 = vld [vmem:[#allocation12 + $0x12c] sm:$0xf]
        %v10129 = vld [vmem:[#allocation12 + $0x130] sm:$0xf]
        %v10130 = vld [vmem:[#allocation12 + $0x134] sm:$0xf]
        %v10131 = vld [vmem:[#allocation12 + $0x138] sm:$0xf]
        %v10132 = vld [vmem:[#allocation12 + $0x13c] sm:$0xf]
        %v10133 = vld [vmem:[#allocation12 + $0x140] sm:$0xf]
        %v10134 = vld [vmem:[#allocation12 + $0x144] sm:$0xf]
        %v10135 = vld [vmem:[#allocation12 + $0x148] sm:$0xf]
        %v10136 = vld [vmem:[#allocation12 + $0x14c] sm:$0xf]
        %v10137 = vld [vmem:[#allocation12 + $0x150] sm:$0xf]
        %v10138 = vld [vmem:[#allocation12 + $0x154] sm:$0xf]
        %v10139 = vld [vmem:[#allocation12 + $0x158] sm:$0xf]
        %v10140 = vld [vmem:[#allocation12 + $0x15c] sm:$0xf]
        %v10141 = vld [vmem:[#allocation12 + $0x160] sm:$0xf]
        %v10142 = vld [vmem:[#allocation12 + $0x164] sm:$0xf]
        %v10143 = vld [vmem:[#allocation12 + $0x168] sm:$0xf]
        %v10144 = vld [vmem:[#allocation12 + $0x16c] sm:$0xf]
        %v10145 = vld [vmem:[#allocation12 + $0x170] sm:$0xf]
        %v10146 = vld [vmem:[#allocation12 + $0x174] sm:$0xf]
        %v10147 = vld [vmem:[#allocation12 + $0x178] sm:$0xf]
        %v10148 = vld [vmem:[#allocation12 + $0x17c] sm:$0xf]
        %v10149 = vld [vmem:[#allocation12 + $0x180] sm:$0xf]
        %v10150 = vld [vmem:[#allocation12 + $0x184] sm:$0xf]
        %v10151 = vld [vmem:[#allocation12 + $0x188] sm:$0xf]
        %v10152 = vld [vmem:[#allocation12 + $0x18c] sm:$0xf]
        %v10153 = vld [vmem:[#allocation12 + $0x190] sm:$0xf]
        %v10154 = vld [vmem:[#allocation12 + $0x194] sm:$0xf]
        %v10155 = vld [vmem:[#allocation12 + $0x198] sm:$0xf]
        %v10156 = vld [vmem:[#allocation12 + $0x19c] sm:$0xf]
        %v10157 = vld [vmem:[#allocation12 + $0x1a0] sm:$0xf]
        %v10158 = vld [vmem:[#allocation12 + $0x1a4] sm:$0xf]
        %v10159 = vld [vmem:[#allocation12 + $0x1a8] sm:$0xf]
        %v10160 = vld [vmem:[#allocation12 + $0x1ac] sm:$0xf]
        %v10161 = vld [vmem:[#allocation12 + $0x1b0] sm:$0xf]
        %v10162 = vld [vmem:[#allocation12 + $0x1b4] sm:$0xf]
        %v10163 = vld [vmem:[#allocation12 + $0x1b8] sm:$0xf]
        %v10164 = vld [vmem:[#allocation12 + $0x1bc] sm:$0xf]
        %v10165 = vld [vmem:[#allocation12 + $0x1c0] sm:$0xf]
        %v10166 = vld [vmem:[#allocation12 + $0x1c4] sm:$0xf]
        %v10167 = vld [vmem:[#allocation12 + $0x1c8] sm:$0xf]
        %v10168 = vld [vmem:[#allocation12 + $0x1cc] sm:$0xf]
        %v10169 = vld [vmem:[#allocation12 + $0x1d0] sm:$0xf]
        %v10170 = vld [vmem:[#allocation12 + $0x1d4] sm:$0xf]
        %v10171 = vld [vmem:[#allocation12 + $0x1d8] sm:$0xf]
        %v10172 = vld [vmem:[#allocation12 + $0x1dc] sm:$0xf]
        %v10173 = vld [vmem:[#allocation12 + $0x1e0] sm:$0xf]
        %v10174 = vld [vmem:[#allocation12 + $0x1e4] sm:$0xf]
        %v10175 = vld [vmem:[#allocation12 + $0x1e8] sm:$0xf]
        %v10176 = vld [vmem:[#allocation12 + $0x1ec] sm:$0xf]
        %v10177 = vld [vmem:[#allocation12 + $0x1f0] sm:$0xf]
        %v10178 = vld [vmem:[#allocation12 + $0x1f4] sm:$0xf]
        %v10179 = vld [vmem:[#allocation12 + $0x1f8] sm:$0xf]
        %v10180 = vld [vmem:[#allocation12 + $0x1fc] sm:$0xf]
        %v10181 = vld [vmem:[#allocation12 + $0x200] sm:$0xf]
        %v10182 = vld [vmem:[#allocation12 + $0x204] sm:$0xf]
        %v10183 = vld [vmem:[#allocation12 + $0x208] sm:$0xf]
        %v10184 = vld [vmem:[#allocation12 + $0x20c] sm:$0xf]
        %v10185 = vld [vmem:[#allocation12 + $0x210] sm:$0xf]
        %v10186 = vld [vmem:[#allocation12 + $0x214] sm:$0xf]
        %v10187 = vld [vmem:[#allocation12 + $0x218] sm:$0xf]
        %v10188 = vld [vmem:[#allocation12 + $0x21c] sm:$0xf]
        %v10189 = vld [vmem:[#allocation12 + $0x220] sm:$0xf]
        %v10190 = vld [vmem:[#allocation12 + $0x224] sm:$0xf]
        %v10191 = vld [vmem:[#allocation12 + $0x228] sm:$0xf]
        %v10192 = vld [vmem:[#allocation12 + $0x22c] sm:$0xf]
        %v10193 = vld [vmem:[#allocation12 + $0x230] sm:$0xf]
        %v10194 = vld [vmem:[#allocation12 + $0x234] sm:$0xf]
        %v10195 = vld [vmem:[#allocation12 + $0x238] sm:$0xf]
        %v10196 = vld [vmem:[#allocation12 + $0x23c] sm:$0xf]
        %v10197 = vld [vmem:[#allocation21] sm:$0x1]
        %v10342 = vunpack.c.l.b16 %v10053
        %v10343 = vunpack.c.l.b16 %v10054
        %v10344 = vunpack.c.l.b16 %v10055
        %v10345 = vunpack.c.l.b16 %v10056
        %v10346 = vunpack.c.l.b16 %v10057
        %v10347 = vunpack.c.l.b16 %v10058
        %v10348 = vunpack.c.l.b16 %v10059
        %v10349 = vunpack.c.l.b16 %v10060
        %v10350 = vunpack.c.l.b16 %v10061
        %v10351 = vunpack.c.l.b16 %v10062
        %v10352 = vunpack.c.l.b16 %v10063
        %v10353 = vunpack.c.l.b16 %v10064
        %v10354 = vunpack.c.l.b16 %v10065
        %v10355 = vunpack.c.l.b16 %v10066
        %v10356 = vunpack.c.l.b16 %v10067
        %v10357 = vunpack.c.l.b16 %v10068
        %v10358 = vunpack.c.l.b16 %v10069
        %v10359 = vunpack.c.l.b16 %v10070
        %v10360 = vunpack.c.l.b16 %v10071
        %v10361 = vunpack.c.l.b16 %v10072
        %v10362 = vunpack.c.l.b16 %v10073
        %v10363 = vunpack.c.l.b16 %v10074
        %v10364 = vunpack.c.l.b16 %v10075
        %v10365 = vunpack.c.l.b16 %v10076
        %v10366 = vunpack.c.l.b16 %v10077
        %v10367 = vunpack.c.l.b16 %v10078
        %v10368 = vunpack.c.l.b16 %v10079
        %v10369 = vunpack.c.l.b16 %v10080
        %v10370 = vunpack.c.l.b16 %v10081
        %v10371 = vunpack.c.l.b16 %v10082
        %v10372 = vunpack.c.l.b16 %v10083
        %v10373 = vunpack.c.l.b16 %v10084
        %v10374 = vunpack.c.l.b16 %v10085
        %v10375 = vunpack.c.l.b16 %v10086
        %v10376 = vunpack.c.l.b16 %v10087
        %v10377 = vunpack.c.l.b16 %v10088
        %v10378 = vunpack.c.l.b16 %v10089
        %v10379 = vunpack.c.l.b16 %v10090
        %v10380 = vunpack.c.l.b16 %v10091
        %v10381 = vunpack.c.l.b16 %v10092
        %v10382 = vunpack.c.l.b16 %v10093
        %v10383 = vunpack.c.l.b16 %v10094
        %v10384 = vunpack.c.l.b16 %v10095
        %v10385 = vunpack.c.l.b16 %v10096
        %v10386 = vunpack.c.l.b16 %v10097
        %v10387 = vunpack.c.l.b16 %v10098
        %v10388 = vunpack.c.l.b16 %v10099
        %v10389 = vunpack.c.l.b16 %v10100
        %v10390 = vunpack.c.l.b16 %v10101
        %v10391 = vunpack.c.l.b16 %v10102
        %v10392 = vunpack.c.l.b16 %v10103
        %v10393 = vunpack.c.l.b16 %v10104
        %v10394 = vunpack.c.l.b16 %v10105
        %v10395 = vunpack.c.l.b16 %v10106
        %v10396 = vunpack.c.l.b16 %v10107
        %v10397 = vunpack.c.l.b16 %v10108
        %v10398 = vunpack.c.l.b16 %v10109
        %v10399 = vunpack.c.l.b16 %v10110
        %v10400 = vunpack.c.l.b16 %v10111
        %v10401 = vunpack.c.l.b16 %v10112
        %v10402 = vunpack.c.l.b16 %v10113
        %v10403 = vunpack.c.l.b16 %v10114
        %v10404 = vunpack.c.l.b16 %v10115
        %v10405 = vunpack.c.l.b16 %v10116
        %v10406 = vunpack.c.l.b16 %v10117
        %v10407 = vunpack.c.l.b16 %v10118
        %v10408 = vunpack.c.l.b16 %v10119
        %v10409 = vunpack.c.l.b16 %v10120
        %v10410 = vunpack.c.l.b16 %v10121
        %v10411 = vunpack.c.l.b16 %v10122
        %v10412 = vunpack.c.l.b16 %v10123
        %v10413 = vunpack.c.l.b16 %v10124
        %v10414 = vunpack.c.l.b16 %v10125
        %v10415 = vunpack.c.l.b16 %v10126
        %v10416 = vunpack.c.l.b16 %v10127
        %v10417 = vunpack.c.l.b16 %v10128
        %v10418 = vunpack.c.l.b16 %v10129
        %v10419 = vunpack.c.l.b16 %v10130
        %v10420 = vunpack.c.l.b16 %v10131
        %v10421 = vunpack.c.l.b16 %v10132
        %v10422 = vunpack.c.l.b16 %v10133
        %v10423 = vunpack.c.l.b16 %v10134
        %v10424 = vunpack.c.l.b16 %v10135
        %v10425 = vunpack.c.l.b16 %v10136
        %v10426 = vunpack.c.l.b16 %v10137
        %v10427 = vunpack.c.l.b16 %v10138
        %v10428 = vunpack.c.l.b16 %v10139
        %v10429 = vunpack.c.l.b16 %v10140
        %v10430 = vunpack.c.l.b16 %v10141
        %v10431 = vunpack.c.l.b16 %v10142
        %v10432 = vunpack.c.l.b16 %v10143
        %v10433 = vunpack.c.l.b16 %v10144
        %v10434 = vunpack.c.l.b16 %v10145
        %v10435 = vunpack.c.l.b16 %v10146
        %v10436 = vunpack.c.l.b16 %v10147
        %v10437 = vunpack.c.l.b16 %v10148
        %v10438 = vunpack.c.l.b16 %v10149
        %v10439 = vunpack.c.l.b16 %v10150
        %v10440 = vunpack.c.l.b16 %v10151
        %v10441 = vunpack.c.l.b16 %v10152
        %v10442 = vunpack.c.l.b16 %v10153
        %v10443 = vunpack.c.l.b16 %v10154
        %v10444 = vunpack.c.l.b16 %v10155
        %v10445 = vunpack.c.l.b16 %v10156
        %v10446 = vunpack.c.l.b16 %v10157
        %v10447 = vunpack.c.l.b16 %v10158
        %v10448 = vunpack.c.l.b16 %v10159
        %v10449 = vunpack.c.l.b16 %v10160
        %v10450 = vunpack.c.l.b16 %v10161
        %v10451 = vunpack.c.l.b16 %v10162
        %v10452 = vunpack.c.l.b16 %v10163
        %v10453 = vunpack.c.l.b16 %v10164
        %v10454 = vunpack.c.l.b16 %v10165
        %v10455 = vunpack.c.l.b16 %v10166
        %v10456 = vunpack.c.l.b16 %v10167
        %v10457 = vunpack.c.l.b16 %v10168
        %v10458 = vunpack.c.l.b16 %v10169
        %v10459 = vunpack.c.l.b16 %v10170
        %v10460 = vunpack.c.l.b16 %v10171
        %v10461 = vunpack.c.l.b16 %v10172
        %v10462 = vunpack.c.l.b16 %v10173
        %v10463 = vunpack.c.l.b16 %v10174
        %v10464 = vunpack.c.l.b16 %v10175
        %v10465 = vunpack.c.l.b16 %v10176
        %v10466 = vunpack.c.l.b16 %v10177
        %v10467 = vunpack.c.l.b16 %v10178
        %v10468 = vunpack.c.l.b16 %v10179
        %v10469 = vunpack.c.l.b16 %v10180
        %v10470 = vunpack.c.l.b16 %v10181
        %v10471 = vunpack.c.l.b16 %v10182
        %v10472 = vunpack.c.l.b16 %v10183
        %v10473 = vunpack.c.l.b16 %v10184
        %v10474 = vunpack.c.l.b16 %v10185
        %v10475 = vunpack.c.l.b16 %v10186
        %v10476 = vunpack.c.l.b16 %v10187
        %v10477 = vunpack.c.l.b16 %v10188
        %v10478 = vunpack.c.l.b16 %v10189
        %v10479 = vunpack.c.l.b16 %v10190
        %v10480 = vunpack.c.l.b16 %v10191
        %v10481 = vunpack.c.l.b16 %v10192
        %v10482 = vunpack.c.l.b16 %v10193
        %v10483 = vunpack.c.l.b16 %v10194
        %v10484 = vunpack.c.l.b16 %v10195
        %v10485 = vunpack.c.l.b16 %v10196
        %v10486 = vpack.c.b16 %v10343, %v10342
        %v10487 = vpack.c.b16 %v10345, %v10344
        %v10488 = vpack.c.b16 %v10347, %v10346
        %v10489 = vpack.c.b16 %v10349, %v10348
        %v10490 = vpack.c.b16 %v10351, %v10350
        %v10491 = vpack.c.b16 %v10353, %v10352
        %v10492 = vpack.c.b16 %v10355, %v10354
        %v10493 = vpack.c.b16 %v10357, %v10356
        %v10494 = vpack.c.b16 %v10359, %v10358
        %v10495 = vpack.c.b16 %v10361, %v10360
        %v10496 = vpack.c.b16 %v10363, %v10362
        %v10497 = vpack.c.b16 %v10365, %v10364
        %v10498 = vpack.c.b16 %v10367, %v10366
        %v10499 = vpack.c.b16 %v10369, %v10368
        %v10500 = vpack.c.b16 %v10371, %v10370
        %v10501 = vpack.c.b16 %v10373, %v10372
        %v10502 = vpack.c.b16 %v10375, %v10374
        %v10503 = vpack.c.b16 %v10377, %v10376
        %v10504 = vpack.c.b16 %v10379, %v10378
        %v10505 = vpack.c.b16 %v10381, %v10380
        %v10506 = vpack.c.b16 %v10383, %v10382
        %v10507 = vpack.c.b16 %v10385, %v10384
        %v10508 = vpack.c.b16 %v10387, %v10386
        %v10509 = vpack.c.b16 %v10389, %v10388
        %v10510 = vpack.c.b16 %v10391, %v10390
        %v10511 = vpack.c.b16 %v10393, %v10392
        %v10512 = vpack.c.b16 %v10395, %v10394
        %v10513 = vpack.c.b16 %v10397, %v10396
        %v10514 = vpack.c.b16 %v10399, %v10398
        %v10515 = vpack.c.b16 %v10401, %v10400
        %v10516 = vpack.c.b16 %v10403, %v10402
        %v10517 = vpack.c.b16 %v10405, %v10404
        %v10518 = vpack.c.b16 %v10407, %v10406
        %v10519 = vpack.c.b16 %v10409, %v10408
        %v10520 = vpack.c.b16 %v10411, %v10410
        %v10521 = vpack.c.b16 %v10413, %v10412
        %v10522 = vpack.c.b16 %v10415, %v10414
        %v10523 = vpack.c.b16 %v10417, %v10416
        %v10524 = vpack.c.b16 %v10419, %v10418
        %v10525 = vpack.c.b16 %v10421, %v10420
        %v10526 = vpack.c.b16 %v10423, %v10422
        %v10527 = vpack.c.b16 %v10425, %v10424
        %v10528 = vpack.c.b16 %v10427, %v10426
        %v10529 = vpack.c.b16 %v10429, %v10428
        %v10530 = vpack.c.b16 %v10431, %v10430
        %v10531 = vpack.c.b16 %v10433, %v10432
        %v10532 = vpack.c.b16 %v10435, %v10434
        %v10533 = vpack.c.b16 %v10437, %v10436
        %v10534 = vpack.c.b16 %v10439, %v10438
        %v10535 = vpack.c.b16 %v10441, %v10440
        %v10536 = vpack.c.b16 %v10443, %v10442
        %v10537 = vpack.c.b16 %v10445, %v10444
        %v10538 = vpack.c.b16 %v10447, %v10446
        %v10539 = vpack.c.b16 %v10449, %v10448
        %v10540 = vpack.c.b16 %v10451, %v10450
        %v10541 = vpack.c.b16 %v10453, %v10452
        %v10542 = vpack.c.b16 %v10455, %v10454
        %v10543 = vpack.c.b16 %v10457, %v10456
        %v10544 = vpack.c.b16 %v10459, %v10458
        %v10545 = vpack.c.b16 %v10461, %v10460
        %v10546 = vpack.c.b16 %v10463, %v10462
        %v10547 = vpack.c.b16 %v10465, %v10464
        %v10548 = vpack.c.b16 %v10467, %v10466
        %v10549 = vpack.c.b16 %v10469, %v10468
        %v10550 = vpack.c.b16 %v10471, %v10470
        %v10551 = vpack.c.b16 %v10473, %v10472
        %v10552 = vpack.c.b16 %v10475, %v10474
        %v10553 = vpack.c.b16 %v10477, %v10476
        %v10554 = vpack.c.b16 %v10479, %v10478
        %v10555 = vpack.c.b16 %v10481, %v10480
        %v10556 = vpack.c.b16 %v10483, %v10482
        %v10557 = vpack.c.b16 %v10485, %v10484
        %10630 = vmatpush.bf16.msra.mxu0 %v10493
        %10631 = vmatpush.bf16.msra.mxu0 %v10492
        %10632 = vmatpush.bf16.msra.mxu0 %v10491
        %10633 = vmatpush.bf16.msra.mxu0 %v10490
        %10634 = vmatpush.bf16.msra.mxu0 %v10489
        %10635 = vmatpush.bf16.msra.mxu0 %v10488
        %10636 = vmatpush.bf16.msra.mxu0 %v10487
        %10637 = vmatpush.bf16.msra.mxu0 %v10486
        %10638 = vmatmul.bf16.gmra.mxu0 %v10025
        %v10639 = vpop.f32.mrf.mxu0
        %v10640 = vadd.f32 %v10197, %v10639
        %v10641 = vpop.f32.mrf.mxu0
        %10642 = vdwg.mxu0
        %10643 = vmatpush.bf16.msra.mxu0 %v10501
        %10644 = vmatpush.bf16.msra.mxu0 %v10500
        %10645 = vmatpush.bf16.msra.mxu0 %v10499
        %10646 = vmatpush.bf16.msra.mxu0 %v10498
        %10647 = vmatpush.bf16.msra.mxu0 %v10497
        %10648 = vmatpush.bf16.msra.mxu0 %v10496
        %10649 = vmatpush.bf16.msra.mxu0 %v10495
        %10650 = vmatpush.bf16.msra.mxu0 %v10494
        %10651 = vmatmul.bf16.gmra.mxu0 %v10026
        %v10652 = vpop.f32.mrf.mxu0
        %v10653 = vadd.f32 %v10640, %v10652
        %v10654 = vpop.f32.mrf.mxu0
        %10655 = vdwg.mxu0
        %10656 = vmatpush.bf16.msra.mxu0 %v10509
        %10657 = vmatpush.bf16.msra.mxu0 %v10508
        %10658 = vmatpush.bf16.msra.mxu0 %v10507
        %10659 = vmatpush.bf16.msra.mxu0 %v10506
        %10660 = vmatpush.bf16.msra.mxu0 %v10505
        %10661 = vmatpush.bf16.msra.mxu0 %v10504
        %10662 = vmatpush.bf16.msra.mxu0 %v10503
        %10663 = vmatpush.bf16.msra.mxu0 %v10502
        %10664 = vmatmul.bf16.gmra.mxu0 %v10027
        %v10665 = vpop.f32.mrf.mxu0
        %v10666 = vadd.f32 %v10653, %v10665
        %v10667 = vpop.f32.mrf.mxu0
        %10668 = vdwg.mxu0
        %10669 = vmatpush.bf16.msra.mxu0 %v10517
        %10670 = vmatpush.bf16.msra.mxu0 %v10516
        %10671 = vmatpush.bf16.msra.mxu0 %v10515
        %10672 = vmatpush.bf16.msra.mxu0 %v10514
        %10673 = vmatpush.bf16.msra.mxu0 %v10513
        %10674 = vmatpush.bf16.msra.mxu0 %v10512
        %10675 = vmatpush.bf16.msra.mxu0 %v10511
        %10676 = vmatpush.bf16.msra.mxu0 %v10510
        %10677 = vmatmul.bf16.gmra.mxu0 %v10036
        %v10678 = vpop.f32.mrf.mxu0
        %v10679 = vadd.f32 %v10666, %v10678
        %v10680 = vpop.f32.mrf.mxu0
        %10681 = vdwg.mxu0
        %10682 = vmatpush.bf16.msra.mxu0 %v10525
        %10683 = vmatpush.bf16.msra.mxu0 %v10524
        %10684 = vmatpush.bf16.msra.mxu0 %v10523
        %10685 = vmatpush.bf16.msra.mxu0 %v10522
        %10686 = vmatpush.bf16.msra.mxu0 %v10521
        %10687 = vmatpush.bf16.msra.mxu0 %v10520
        %10688 = vmatpush.bf16.msra.mxu0 %v10519
        %10689 = vmatpush.bf16.msra.mxu0 %v10518
        %10690 = vmatmul.bf16.gmra.mxu0 %v10037
        %v10691 = vpop.f32.mrf.mxu0
        %v10692 = vadd.f32 %v10679, %v10691
        %v10693 = vpop.f32.mrf.mxu0
        %10694 = vdwg.mxu0
        %10695 = vmatpush.bf16.msra.mxu0 %v10533
        %10696 = vmatpush.bf16.msra.mxu0 %v10532
        %10697 = vmatpush.bf16.msra.mxu0 %v10531
        %10698 = vmatpush.bf16.msra.mxu0 %v10530
        %10699 = vmatpush.bf16.msra.mxu0 %v10529
        %10700 = vmatpush.bf16.msra.mxu0 %v10528
        %10701 = vmatpush.bf16.msra.mxu0 %v10527
        %10702 = vmatpush.bf16.msra.mxu0 %v10526
        %10703 = vmatmul.bf16.gmra.mxu0 %v10038
        %v10704 = vpop.f32.mrf.mxu0
        %v10705 = vadd.f32 %v10692, %v10704
        %v10706 = vpop.f32.mrf.mxu0
        %10707 = vdwg.mxu0
        %10708 = vmatpush.bf16.msra.mxu0 %v10541
        %10709 = vmatpush.bf16.msra.mxu0 %v10540
        %10710 = vmatpush.bf16.msra.mxu0 %v10539
        %10711 = vmatpush.bf16.msra.mxu0 %v10538
        %10712 = vmatpush.bf16.msra.mxu0 %v10537
        %10713 = vmatpush.bf16.msra.mxu0 %v10536
        %10714 = vmatpush.bf16.msra.mxu0 %v10535
        %10715 = vmatpush.bf16.msra.mxu0 %v10534
        %10716 = vmatmul.bf16.gmra.mxu0 %v10047
        %v10717 = vpop.f32.mrf.mxu0
        %v10718 = vadd.f32 %v10705, %v10717
        %v10719 = vpop.f32.mrf.mxu0
        %10720 = vdwg.mxu0
        %10721 = vmatpush.bf16.msra.mxu0 %v10549
        %10722 = vmatpush.bf16.msra.mxu0 %v10548
        %10723 = vmatpush.bf16.msra.mxu0 %v10547
        %10724 = vmatpush.bf16.msra.mxu0 %v10546
        %10725 = vmatpush.bf16.msra.mxu0 %v10545
        %10726 = vmatpush.bf16.msra.mxu0 %v10544
        %10727 = vmatpush.bf16.msra.mxu0 %v10543
        %10728 = vmatpush.bf16.msra.mxu0 %v10542
        %10729 = vmatmul.bf16.gmra.mxu0 %v10048
        %v10730 = vpop.f32.mrf.mxu0
        %v10731 = vadd.f32 %v10718, %v10730
        %v10732 = vpop.f32.mrf.mxu0
        %10733 = vdwg.mxu0
        %10734 = vmatpush.bf16.msra.mxu0 %v10557
        %10735 = vmatpush.bf16.msra.mxu0 %v10556
        %10736 = vmatpush.bf16.msra.mxu0 %v10555
        %10737 = vmatpush.bf16.msra.mxu0 %v10554
        %10738 = vmatpush.bf16.msra.mxu0 %v10553
        %10739 = vmatpush.bf16.msra.mxu0 %v10552
        %10740 = vmatpush.bf16.msra.mxu0 %v10551
        %10741 = vmatpush.bf16.msra.mxu0 %v10550
        %10742 = vmatmul.bf16.gmra.mxu0 %v10049
        %v10743 = vpop.f32.mrf.mxu0
        %v10744 = vadd.f32 %v10731, %v10743
        %v10745 = vpop.f32.mrf.mxu0
        %10746 = vdwg.mxu0
        %v10747 = vmax.f32 %v10744, 0.0
        %10748 = vst [vmem:[#allocation4 + $0x7] sm:$0x1] %v10747
        %v10749 = vld [vmem:[#allocation4] sm:$0x1]
        %v10750 = vpack.c.bf16 %v10749, %v10749
        %v10751 = vld [vmem:[#allocation4 + $0x1] sm:$0x1]
        %v10752 = vpack.c.bf16 %v10751, %v10751
        %v10753 = vld [vmem:[#allocation4 + $0x2] sm:$0x1]
        %v10754 = vpack.c.bf16 %v10753, %v10753
        %v10755 = vld [vmem:[#allocation13] sm:$0xf]
        %v10756 = vld [vmem:[#allocation13 + $0x4] sm:$0xf]
        %v10757 = vld [vmem:[#allocation13 + $0x8] sm:$0xf]
        %v10758 = vld [vmem:[#allocation13 + $0xc] sm:$0xf]
        %v10759 = vld [vmem:[#allocation13 + $0x10] sm:$0xf]
        %v10760 = vld [vmem:[#allocation13 + $0x14] sm:$0xf]
        %v10761 = vld [vmem:[#allocation13 + $0x18] sm:$0xf]
        %v10762 = vld [vmem:[#allocation13 + $0x1c] sm:$0xf]
        %v10763 = vld [vmem:[#allocation13 + $0x20] sm:$0xf]
        %v10764 = vld [vmem:[#allocation13 + $0x24] sm:$0xf]
        %v10765 = vld [vmem:[#allocation13 + $0x28] sm:$0xf]
        %v10766 = vld [vmem:[#allocation13 + $0x2c] sm:$0xf]
        %v10767 = vld [vmem:[#allocation13 + $0x30] sm:$0xf]
        %v10768 = vld [vmem:[#allocation13 + $0x34] sm:$0xf]
        %v10769 = vld [vmem:[#allocation13 + $0x38] sm:$0xf]
        %v10770 = vld [vmem:[#allocation13 + $0x3c] sm:$0xf]
        %v10771 = vld [vmem:[#allocation13 + $0x40] sm:$0xf]
        %v10772 = vld [vmem:[#allocation13 + $0x44] sm:$0xf]
        %v10773 = vld [vmem:[#allocation13 + $0x48] sm:$0xf]
        %v10774 = vld [vmem:[#allocation13 + $0x4c] sm:$0xf]
        %v10775 = vld [vmem:[#allocation13 + $0x50] sm:$0xf]
        %v10776 = vld [vmem:[#allocation13 + $0x54] sm:$0xf]
        %v10777 = vld [vmem:[#allocation13 + $0x58] sm:$0xf]
        %v10778 = vld [vmem:[#allocation13 + $0x5c] sm:$0xf]
        %v10779 = vld [vmem:[#allocation13 + $0x60] sm:$0xf]
        %v10780 = vld [vmem:[#allocation13 + $0x64] sm:$0xf]
        %v10781 = vld [vmem:[#allocation13 + $0x68] sm:$0xf]
        %v10782 = vld [vmem:[#allocation13 + $0x6c] sm:$0xf]
        %v10783 = vld [vmem:[#allocation13 + $0x70] sm:$0xf]
        %v10784 = vld [vmem:[#allocation13 + $0x74] sm:$0xf]
        %v10785 = vld [vmem:[#allocation13 + $0x78] sm:$0xf]
        %v10786 = vld [vmem:[#allocation13 + $0x7c] sm:$0xf]
        %v10787 = vld [vmem:[#allocation13 + $0x80] sm:$0xf]
        %v10788 = vld [vmem:[#allocation13 + $0x84] sm:$0xf]
        %v10789 = vld [vmem:[#allocation13 + $0x88] sm:$0xf]
        %v10790 = vld [vmem:[#allocation13 + $0x8c] sm:$0xf]
        %v10791 = vld [vmem:[#allocation13 + $0x90] sm:$0xf]
        %v10792 = vld [vmem:[#allocation13 + $0x94] sm:$0xf]
        %v10793 = vld [vmem:[#allocation13 + $0x98] sm:$0xf]
        %v10794 = vld [vmem:[#allocation13 + $0x9c] sm:$0xf]
        %v10795 = vld [vmem:[#allocation13 + $0xa0] sm:$0xf]
        %v10796 = vld [vmem:[#allocation13 + $0xa4] sm:$0xf]
        %v10797 = vld [vmem:[#allocation13 + $0xa8] sm:$0xf]
        %v10798 = vld [vmem:[#allocation13 + $0xac] sm:$0xf]
        %v10799 = vld [vmem:[#allocation13 + $0xb0] sm:$0xf]
        %v10800 = vld [vmem:[#allocation13 + $0xb4] sm:$0xf]
        %v10801 = vld [vmem:[#allocation13 + $0xb8] sm:$0xf]
        %v10802 = vld [vmem:[#allocation13 + $0xbc] sm:$0xf]
        %v10803 = vld [vmem:[#allocation22] sm:$0x1]
        %v10852 = vunpack.c.l.b16 %v10755
        %v10853 = vunpack.c.l.b16 %v10756
        %v10854 = vunpack.c.l.b16 %v10757
        %v10855 = vunpack.c.l.b16 %v10758
        %v10856 = vunpack.c.l.b16 %v10759
        %v10857 = vunpack.c.l.b16 %v10760
        %v10858 = vunpack.c.l.b16 %v10761
        %v10859 = vunpack.c.l.b16 %v10762
        %v10860 = vunpack.c.l.b16 %v10763
        %v10861 = vunpack.c.l.b16 %v10764
        %v10862 = vunpack.c.l.b16 %v10765
        %v10863 = vunpack.c.l.b16 %v10766
        %v10864 = vunpack.c.l.b16 %v10767
        %v10865 = vunpack.c.l.b16 %v10768
        %v10866 = vunpack.c.l.b16 %v10769
        %v10867 = vunpack.c.l.b16 %v10770
        %v10868 = vunpack.c.l.b16 %v10771
        %v10869 = vunpack.c.l.b16 %v10772
        %v10870 = vunpack.c.l.b16 %v10773
        %v10871 = vunpack.c.l.b16 %v10774
        %v10872 = vunpack.c.l.b16 %v10775
        %v10873 = vunpack.c.l.b16 %v10776
        %v10874 = vunpack.c.l.b16 %v10777
        %v10875 = vunpack.c.l.b16 %v10778
        %v10876 = vunpack.c.l.b16 %v10779
        %v10877 = vunpack.c.l.b16 %v10780
        %v10878 = vunpack.c.l.b16 %v10781
        %v10879 = vunpack.c.l.b16 %v10782
        %v10880 = vunpack.c.l.b16 %v10783
        %v10881 = vunpack.c.l.b16 %v10784
        %v10882 = vunpack.c.l.b16 %v10785
        %v10883 = vunpack.c.l.b16 %v10786
        %v10884 = vunpack.c.l.b16 %v10787
        %v10885 = vunpack.c.l.b16 %v10788
        %v10886 = vunpack.c.l.b16 %v10789
        %v10887 = vunpack.c.l.b16 %v10790
        %v10888 = vunpack.c.l.b16 %v10791
        %v10889 = vunpack.c.l.b16 %v10792
        %v10890 = vunpack.c.l.b16 %v10793
        %v10891 = vunpack.c.l.b16 %v10794
        %v10892 = vunpack.c.l.b16 %v10795
        %v10893 = vunpack.c.l.b16 %v10796
        %v10894 = vunpack.c.l.b16 %v10797
        %v10895 = vunpack.c.l.b16 %v10798
        %v10896 = vunpack.c.l.b16 %v10799
        %v10897 = vunpack.c.l.b16 %v10800
        %v10898 = vunpack.c.l.b16 %v10801
        %v10899 = vunpack.c.l.b16 %v10802
        %v10900 = vpack.c.b16 %v10853, %v10852
        %v10901 = vpack.c.b16 %v10855, %v10854
        %v10902 = vpack.c.b16 %v10857, %v10856
        %v10903 = vpack.c.b16 %v10859, %v10858
        %v10904 = vpack.c.b16 %v10861, %v10860
        %v10905 = vpack.c.b16 %v10863, %v10862
        %v10906 = vpack.c.b16 %v10865, %v10864
        %v10907 = vpack.c.b16 %v10867, %v10866
        %v10908 = vpack.c.b16 %v10869, %v10868
        %v10909 = vpack.c.b16 %v10871, %v10870
        %v10910 = vpack.c.b16 %v10873, %v10872
        %v10911 = vpack.c.b16 %v10875, %v10874
        %v10912 = vpack.c.b16 %v10877, %v10876
        %v10913 = vpack.c.b16 %v10879, %v10878
        %v10914 = vpack.c.b16 %v10881, %v10880
        %v10915 = vpack.c.b16 %v10883, %v10882
        %v10916 = vpack.c.b16 %v10885, %v10884
        %v10917 = vpack.c.b16 %v10887, %v10886
        %v10918 = vpack.c.b16 %v10889, %v10888
        %v10919 = vpack.c.b16 %v10891, %v10890
        %v10920 = vpack.c.b16 %v10893, %v10892
        %v10921 = vpack.c.b16 %v10895, %v10894
        %v10922 = vpack.c.b16 %v10897, %v10896
        %v10923 = vpack.c.b16 %v10899, %v10898
        %10948 = vmatpush.bf16.msra.mxu0 %v10907
        %10949 = vmatpush.bf16.msra.mxu0 %v10906
        %10950 = vmatpush.bf16.msra.mxu0 %v10905
        %10951 = vmatpush.bf16.msra.mxu0 %v10904
        %10952 = vmatpush.bf16.msra.mxu0 %v10903
        %10953 = vmatpush.bf16.msra.mxu0 %v10902
        %10954 = vmatpush.bf16.msra.mxu0 %v10901
        %10955 = vmatpush.bf16.msra.mxu0 %v10900
        %10956 = vmatmul.bf16.gmra.mxu0 %v10750
        %v10957 = vpop.f32.mrf.mxu0
        %v10958 = vadd.f32 %v10803, %v10957
        %v10959 = vpop.f32.mrf.mxu0
        %10960 = vdwg.mxu0
        %10961 = vmatpush.bf16.msra.mxu0 %v10915
        %10962 = vmatpush.bf16.msra.mxu0 %v10914
        %10963 = vmatpush.bf16.msra.mxu0 %v10913
        %10964 = vmatpush.bf16.msra.mxu0 %v10912
        %10965 = vmatpush.bf16.msra.mxu0 %v10911
        %10966 = vmatpush.bf16.msra.mxu0 %v10910
        %10967 = vmatpush.bf16.msra.mxu0 %v10909
        %10968 = vmatpush.bf16.msra.mxu0 %v10908
        %10969 = vmatmul.bf16.gmra.mxu0 %v10752
        %v10970 = vpop.f32.mrf.mxu0
        %v10971 = vadd.f32 %v10958, %v10970
        %v10972 = vpop.f32.mrf.mxu0
        %10973 = vdwg.mxu0
        %10974 = vmatpush.bf16.msra.mxu0 %v10923
        %10975 = vmatpush.bf16.msra.mxu0 %v10922
        %10976 = vmatpush.bf16.msra.mxu0 %v10921
        %10977 = vmatpush.bf16.msra.mxu0 %v10920
        %10978 = vmatpush.bf16.msra.mxu0 %v10919
        %10979 = vmatpush.bf16.msra.mxu0 %v10918
        %10980 = vmatpush.bf16.msra.mxu0 %v10917
        %10981 = vmatpush.bf16.msra.mxu0 %v10916
        %10982 = vmatmul.bf16.gmra.mxu0 %v10754
        %v10983 = vpop.f32.mrf.mxu0
        %v10984 = vadd.f32 %v10971, %v10983
        %v10985 = vpop.f32.mrf.mxu0
        %10986 = vdwg.mxu0
        %v10987 = vmax.f32 %v10984, 0.0
        %10988 = vst [vmem:[#allocation5] sm:$0x1] %v10987
        %v10989 = vld [vmem:[#allocation4 + $0x3] sm:$0x1]
        %v10990 = vpack.c.bf16 %v10989, %v10989
        %v10991 = vld [vmem:[#allocation4 + $0x4] sm:$0x1]
        %v10992 = vpack.c.bf16 %v10991, %v10991
        %v10993 = vld [vmem:[#allocation4 + $0x5] sm:$0x1]
        %v10994 = vpack.c.bf16 %v10993, %v10993
        %v10995 = vld [vmem:[#allocation13] sm:$0xf]
        %v10996 = vld [vmem:[#allocation13 + $0x4] sm:$0xf]
        %v10997 = vld [vmem:[#allocation13 + $0x8] sm:$0xf]
        %v10998 = vld [vmem:[#allocation13 + $0xc] sm:$0xf]
        %v10999 = vld [vmem:[#allocation13 + $0x10] sm:$0xf]
        %v11000 = vld [vmem:[#allocation13 + $0x14] sm:$0xf]
        %v11001 = vld [vmem:[#allocation13 + $0x18] sm:$0xf]
        %v11002 = vld [vmem:[#allocation13 + $0x1c] sm:$0xf]
        %v11003 = vld [vmem:[#allocation13 + $0x20] sm:$0xf]
        %v11004 = vld [vmem:[#allocation13 + $0x24] sm:$0xf]
        %v11005 = vld [vmem:[#allocation13 + $0x28] sm:$0xf]
        %v11006 = vld [vmem:[#allocation13 + $0x2c] sm:$0xf]
        %v11007 = vld [vmem:[#allocation13 + $0x30] sm:$0xf]
        %v11008 = vld [vmem:[#allocation13 + $0x34] sm:$0xf]
        %v11009 = vld [vmem:[#allocation13 + $0x38] sm:$0xf]
        %v11010 = vld [vmem:[#allocation13 + $0x3c] sm:$0xf]
        %v11011 = vld [vmem:[#allocation13 + $0x40] sm:$0xf]
        %v11012 = vld [vmem:[#allocation13 + $0x44] sm:$0xf]
        %v11013 = vld [vmem:[#allocation13 + $0x48] sm:$0xf]
        %v11014 = vld [vmem:[#allocation13 + $0x4c] sm:$0xf]
        %v11015 = vld [vmem:[#allocation13 + $0x50] sm:$0xf]
        %v11016 = vld [vmem:[#allocation13 + $0x54] sm:$0xf]
        %v11017 = vld [vmem:[#allocation13 + $0x58] sm:$0xf]
        %v11018 = vld [vmem:[#allocation13 + $0x5c] sm:$0xf]
        %v11019 = vld [vmem:[#allocation13 + $0x60] sm:$0xf]
        %v11020 = vld [vmem:[#allocation13 + $0x64] sm:$0xf]
        %v11021 = vld [vmem:[#allocation13 + $0x68] sm:$0xf]
        %v11022 = vld [vmem:[#allocation13 + $0x6c] sm:$0xf]
        %v11023 = vld [vmem:[#allocation13 + $0x70] sm:$0xf]
        %v11024 = vld [vmem:[#allocation13 + $0x74] sm:$0xf]
        %v11025 = vld [vmem:[#allocation13 + $0x78] sm:$0xf]
        %v11026 = vld [vmem:[#allocation13 + $0x7c] sm:$0xf]
        %v11027 = vld [vmem:[#allocation13 + $0x80] sm:$0xf]
        %v11028 = vld [vmem:[#allocation13 + $0x84] sm:$0xf]
        %v11029 = vld [vmem:[#allocation13 + $0x88] sm:$0xf]
        %v11030 = vld [vmem:[#allocation13 + $0x8c] sm:$0xf]
        %v11031 = vld [vmem:[#allocation13 + $0x90] sm:$0xf]
        %v11032 = vld [vmem:[#allocation13 + $0x94] sm:$0xf]
        %v11033 = vld [vmem:[#allocation13 + $0x98] sm:$0xf]
        %v11034 = vld [vmem:[#allocation13 + $0x9c] sm:$0xf]
        %v11035 = vld [vmem:[#allocation13 + $0xa0] sm:$0xf]
        %v11036 = vld [vmem:[#allocation13 + $0xa4] sm:$0xf]
        %v11037 = vld [vmem:[#allocation13 + $0xa8] sm:$0xf]
        %v11038 = vld [vmem:[#allocation13 + $0xac] sm:$0xf]
        %v11039 = vld [vmem:[#allocation13 + $0xb0] sm:$0xf]
        %v11040 = vld [vmem:[#allocation13 + $0xb4] sm:$0xf]
        %v11041 = vld [vmem:[#allocation13 + $0xb8] sm:$0xf]
        %v11042 = vld [vmem:[#allocation13 + $0xbc] sm:$0xf]
        %v11043 = vld [vmem:[#allocation22] sm:$0x1]
        %v11092 = vunpack.c.l.b16 %v10995
        %v11093 = vunpack.c.l.b16 %v10996
        %v11094 = vunpack.c.l.b16 %v10997
        %v11095 = vunpack.c.l.b16 %v10998
        %v11096 = vunpack.c.l.b16 %v10999
        %v11097 = vunpack.c.l.b16 %v11000
        %v11098 = vunpack.c.l.b16 %v11001
        %v11099 = vunpack.c.l.b16 %v11002
        %v11100 = vunpack.c.l.b16 %v11003
        %v11101 = vunpack.c.l.b16 %v11004
        %v11102 = vunpack.c.l.b16 %v11005
        %v11103 = vunpack.c.l.b16 %v11006
        %v11104 = vunpack.c.l.b16 %v11007
        %v11105 = vunpack.c.l.b16 %v11008
        %v11106 = vunpack.c.l.b16 %v11009
        %v11107 = vunpack.c.l.b16 %v11010
        %v11108 = vunpack.c.l.b16 %v11011
        %v11109 = vunpack.c.l.b16 %v11012
        %v11110 = vunpack.c.l.b16 %v11013
        %v11111 = vunpack.c.l.b16 %v11014
        %v11112 = vunpack.c.l.b16 %v11015
        %v11113 = vunpack.c.l.b16 %v11016
        %v11114 = vunpack.c.l.b16 %v11017
        %v11115 = vunpack.c.l.b16 %v11018
        %v11116 = vunpack.c.l.b16 %v11019
        %v11117 = vunpack.c.l.b16 %v11020
        %v11118 = vunpack.c.l.b16 %v11021
        %v11119 = vunpack.c.l.b16 %v11022
        %v11120 = vunpack.c.l.b16 %v11023
        %v11121 = vunpack.c.l.b16 %v11024
        %v11122 = vunpack.c.l.b16 %v11025
        %v11123 = vunpack.c.l.b16 %v11026
        %v11124 = vunpack.c.l.b16 %v11027
        %v11125 = vunpack.c.l.b16 %v11028
        %v11126 = vunpack.c.l.b16 %v11029
        %v11127 = vunpack.c.l.b16 %v11030
        %v11128 = vunpack.c.l.b16 %v11031
        %v11129 = vunpack.c.l.b16 %v11032
        %v11130 = vunpack.c.l.b16 %v11033
        %v11131 = vunpack.c.l.b16 %v11034
        %v11132 = vunpack.c.l.b16 %v11035
        %v11133 = vunpack.c.l.b16 %v11036
        %v11134 = vunpack.c.l.b16 %v11037
        %v11135 = vunpack.c.l.b16 %v11038
        %v11136 = vunpack.c.l.b16 %v11039
        %v11137 = vunpack.c.l.b16 %v11040
        %v11138 = vunpack.c.l.b16 %v11041
        %v11139 = vunpack.c.l.b16 %v11042
        %v11140 = vpack.c.b16 %v11093, %v11092
        %v11141 = vpack.c.b16 %v11095, %v11094
        %v11142 = vpack.c.b16 %v11097, %v11096
        %v11143 = vpack.c.b16 %v11099, %v11098
        %v11144 = vpack.c.b16 %v11101, %v11100
        %v11145 = vpack.c.b16 %v11103, %v11102
        %v11146 = vpack.c.b16 %v11105, %v11104
        %v11147 = vpack.c.b16 %v11107, %v11106
        %v11148 = vpack.c.b16 %v11109, %v11108
        %v11149 = vpack.c.b16 %v11111, %v11110
        %v11150 = vpack.c.b16 %v11113, %v11112
        %v11151 = vpack.c.b16 %v11115, %v11114
        %v11152 = vpack.c.b16 %v11117, %v11116
        %v11153 = vpack.c.b16 %v11119, %v11118
        %v11154 = vpack.c.b16 %v11121, %v11120
        %v11155 = vpack.c.b16 %v11123, %v11122
        %v11156 = vpack.c.b16 %v11125, %v11124
        %v11157 = vpack.c.b16 %v11127, %v11126
        %v11158 = vpack.c.b16 %v11129, %v11128
        %v11159 = vpack.c.b16 %v11131, %v11130
        %v11160 = vpack.c.b16 %v11133, %v11132
        %v11161 = vpack.c.b16 %v11135, %v11134
        %v11162 = vpack.c.b16 %v11137, %v11136
        %v11163 = vpack.c.b16 %v11139, %v11138
        %11188 = vmatpush.bf16.msra.mxu0 %v11147
        %11189 = vmatpush.bf16.msra.mxu0 %v11146
        %11190 = vmatpush.bf16.msra.mxu0 %v11145
        %11191 = vmatpush.bf16.msra.mxu0 %v11144
        %11192 = vmatpush.bf16.msra.mxu0 %v11143
        %11193 = vmatpush.bf16.msra.mxu0 %v11142
        %11194 = vmatpush.bf16.msra.mxu0 %v11141
        %11195 = vmatpush.bf16.msra.mxu0 %v11140
        %11196 = vmatmul.bf16.gmra.mxu0 %v10990
        %v11197 = vpop.f32.mrf.mxu0
        %v11198 = vadd.f32 %v11043, %v11197
        %v11199 = vpop.f32.mrf.mxu0
        %11200 = vdwg.mxu0
        %11201 = vmatpush.bf16.msra.mxu0 %v11155
        %11202 = vmatpush.bf16.msra.mxu0 %v11154
        %11203 = vmatpush.bf16.msra.mxu0 %v11153
        %11204 = vmatpush.bf16.msra.mxu0 %v11152
        %11205 = vmatpush.bf16.msra.mxu0 %v11151
        %11206 = vmatpush.bf16.msra.mxu0 %v11150
        %11207 = vmatpush.bf16.msra.mxu0 %v11149
        %11208 = vmatpush.bf16.msra.mxu0 %v11148
        %11209 = vmatmul.bf16.gmra.mxu0 %v10992
        %v11210 = vpop.f32.mrf.mxu0
        %v11211 = vadd.f32 %v11198, %v11210
        %v11212 = vpop.f32.mrf.mxu0
        %11213 = vdwg.mxu0
        %11214 = vmatpush.bf16.msra.mxu0 %v11163
        %11215 = vmatpush.bf16.msra.mxu0 %v11162
        %11216 = vmatpush.bf16.msra.mxu0 %v11161
        %11217 = vmatpush.bf16.msra.mxu0 %v11160
        %11218 = vmatpush.bf16.msra.mxu0 %v11159
        %11219 = vmatpush.bf16.msra.mxu0 %v11158
        %11220 = vmatpush.bf16.msra.mxu0 %v11157
        %11221 = vmatpush.bf16.msra.mxu0 %v11156
        %11222 = vmatmul.bf16.gmra.mxu0 %v10994
        %v11223 = vpop.f32.mrf.mxu0
        %v11224 = vadd.f32 %v11211, %v11223
        %v11225 = vpop.f32.mrf.mxu0
        %11226 = vdwg.mxu0
        %v11227 = vmax.f32 %v11224, 0.0
        %11228 = vst [vmem:[#allocation5 + $0x1] sm:$0x1] %v11227
        %v11229 = vld [vmem:[#allocation4 + $0x6] sm:$0x1]
        %v11230 = vpack.c.bf16 %v11229, %v11229
        %v11231 = vld [vmem:[#allocation4 + $0x7] sm:$0x1]
        %v11232 = vpack.c.bf16 %v11231, %v11231
        %v11233 = vld [vmem:[#allocation4 + $0x8] sm:$0x1]
        %v11234 = vpack.c.bf16 %v11233, %v11233
        %v11235 = vld [vmem:[#allocation13] sm:$0xf]
        %v11236 = vld [vmem:[#allocation13 + $0x4] sm:$0xf]
        %v11237 = vld [vmem:[#allocation13 + $0x8] sm:$0xf]
        %v11238 = vld [vmem:[#allocation13 + $0xc] sm:$0xf]
        %v11239 = vld [vmem:[#allocation13 + $0x10] sm:$0xf]
        %v11240 = vld [vmem:[#allocation13 + $0x14] sm:$0xf]
        %v11241 = vld [vmem:[#allocation13 + $0x18] sm:$0xf]
        %v11242 = vld [vmem:[#allocation13 + $0x1c] sm:$0xf]
        %v11243 = vld [vmem:[#allocation13 + $0x20] sm:$0xf]
        %v11244 = vld [vmem:[#allocation13 + $0x24] sm:$0xf]
        %v11245 = vld [vmem:[#allocation13 + $0x28] sm:$0xf]
        %v11246 = vld [vmem:[#allocation13 + $0x2c] sm:$0xf]
        %v11247 = vld [vmem:[#allocation13 + $0x30] sm:$0xf]
        %v11248 = vld [vmem:[#allocation13 + $0x34] sm:$0xf]
        %v11249 = vld [vmem:[#allocation13 + $0x38] sm:$0xf]
        %v11250 = vld [vmem:[#allocation13 + $0x3c] sm:$0xf]
        %v11251 = vld [vmem:[#allocation13 + $0x40] sm:$0xf]
        %v11252 = vld [vmem:[#allocation13 + $0x44] sm:$0xf]
        %v11253 = vld [vmem:[#allocation13 + $0x48] sm:$0xf]
        %v11254 = vld [vmem:[#allocation13 + $0x4c] sm:$0xf]
        %v11255 = vld [vmem:[#allocation13 + $0x50] sm:$0xf]
        %v11256 = vld [vmem:[#allocation13 + $0x54] sm:$0xf]
        %v11257 = vld [vmem:[#allocation13 + $0x58] sm:$0xf]
        %v11258 = vld [vmem:[#allocation13 + $0x5c] sm:$0xf]
        %v11259 = vld [vmem:[#allocation13 + $0x60] sm:$0xf]
        %v11260 = vld [vmem:[#allocation13 + $0x64] sm:$0xf]
        %v11261 = vld [vmem:[#allocation13 + $0x68] sm:$0xf]
        %v11262 = vld [vmem:[#allocation13 + $0x6c] sm:$0xf]
        %v11263 = vld [vmem:[#allocation13 + $0x70] sm:$0xf]
        %v11264 = vld [vmem:[#allocation13 + $0x74] sm:$0xf]
        %v11265 = vld [vmem:[#allocation13 + $0x78] sm:$0xf]
        %v11266 = vld [vmem:[#allocation13 + $0x7c] sm:$0xf]
        %v11267 = vld [vmem:[#allocation13 + $0x80] sm:$0xf]
        %v11268 = vld [vmem:[#allocation13 + $0x84] sm:$0xf]
        %v11269 = vld [vmem:[#allocation13 + $0x88] sm:$0xf]
        %v11270 = vld [vmem:[#allocation13 + $0x8c] sm:$0xf]
        %v11271 = vld [vmem:[#allocation13 + $0x90] sm:$0xf]
        %v11272 = vld [vmem:[#allocation13 + $0x94] sm:$0xf]
        %v11273 = vld [vmem:[#allocation13 + $0x98] sm:$0xf]
        %v11274 = vld [vmem:[#allocation13 + $0x9c] sm:$0xf]
        %v11275 = vld [vmem:[#allocation13 + $0xa0] sm:$0xf]
        %v11276 = vld [vmem:[#allocation13 + $0xa4] sm:$0xf]
        %v11277 = vld [vmem:[#allocation13 + $0xa8] sm:$0xf]
        %v11278 = vld [vmem:[#allocation13 + $0xac] sm:$0xf]
        %v11279 = vld [vmem:[#allocation13 + $0xb0] sm:$0xf]
        %v11280 = vld [vmem:[#allocation13 + $0xb4] sm:$0xf]
        %v11281 = vld [vmem:[#allocation13 + $0xb8] sm:$0xf]
        %v11282 = vld [vmem:[#allocation13 + $0xbc] sm:$0xf]
        %v11283 = vld [vmem:[#allocation22] sm:$0x1]
        %v11332 = vunpack.c.l.b16 %v11235
        %v11333 = vunpack.c.l.b16 %v11236
        %v11334 = vunpack.c.l.b16 %v11237
        %v11335 = vunpack.c.l.b16 %v11238
        %v11336 = vunpack.c.l.b16 %v11239
        %v11337 = vunpack.c.l.b16 %v11240
        %v11338 = vunpack.c.l.b16 %v11241
        %v11339 = vunpack.c.l.b16 %v11242
        %v11340 = vunpack.c.l.b16 %v11243
        %v11341 = vunpack.c.l.b16 %v11244
        %v11342 = vunpack.c.l.b16 %v11245
        %v11343 = vunpack.c.l.b16 %v11246
        %v11344 = vunpack.c.l.b16 %v11247
        %v11345 = vunpack.c.l.b16 %v11248
        %v11346 = vunpack.c.l.b16 %v11249
        %v11347 = vunpack.c.l.b16 %v11250
        %v11348 = vunpack.c.l.b16 %v11251
        %v11349 = vunpack.c.l.b16 %v11252
        %v11350 = vunpack.c.l.b16 %v11253
        %v11351 = vunpack.c.l.b16 %v11254
        %v11352 = vunpack.c.l.b16 %v11255
        %v11353 = vunpack.c.l.b16 %v11256
        %v11354 = vunpack.c.l.b16 %v11257
        %v11355 = vunpack.c.l.b16 %v11258
        %v11356 = vunpack.c.l.b16 %v11259
        %v11357 = vunpack.c.l.b16 %v11260
        %v11358 = vunpack.c.l.b16 %v11261
        %v11359 = vunpack.c.l.b16 %v11262
        %v11360 = vunpack.c.l.b16 %v11263
        %v11361 = vunpack.c.l.b16 %v11264
        %v11362 = vunpack.c.l.b16 %v11265
        %v11363 = vunpack.c.l.b16 %v11266
        %v11364 = vunpack.c.l.b16 %v11267
        %v11365 = vunpack.c.l.b16 %v11268
        %v11366 = vunpack.c.l.b16 %v11269
        %v11367 = vunpack.c.l.b16 %v11270
        %v11368 = vunpack.c.l.b16 %v11271
        %v11369 = vunpack.c.l.b16 %v11272
        %v11370 = vunpack.c.l.b16 %v11273
        %v11371 = vunpack.c.l.b16 %v11274
        %v11372 = vunpack.c.l.b16 %v11275
        %v11373 = vunpack.c.l.b16 %v11276
        %v11374 = vunpack.c.l.b16 %v11277
        %v11375 = vunpack.c.l.b16 %v11278
        %v11376 = vunpack.c.l.b16 %v11279
        %v11377 = vunpack.c.l.b16 %v11280
        %v11378 = vunpack.c.l.b16 %v11281
        %v11379 = vunpack.c.l.b16 %v11282
        %v11380 = vpack.c.b16 %v11333, %v11332
        %v11381 = vpack.c.b16 %v11335, %v11334
        %v11382 = vpack.c.b16 %v11337, %v11336
        %v11383 = vpack.c.b16 %v11339, %v11338
        %v11384 = vpack.c.b16 %v11341, %v11340
        %v11385 = vpack.c.b16 %v11343, %v11342
        %v11386 = vpack.c.b16 %v11345, %v11344
        %v11387 = vpack.c.b16 %v11347, %v11346
        %v11388 = vpack.c.b16 %v11349, %v11348
        %v11389 = vpack.c.b16 %v11351, %v11350
        %v11390 = vpack.c.b16 %v11353, %v11352
        %v11391 = vpack.c.b16 %v11355, %v11354
        %v11392 = vpack.c.b16 %v11357, %v11356
        %v11393 = vpack.c.b16 %v11359, %v11358
        %v11394 = vpack.c.b16 %v11361, %v11360
        %v11395 = vpack.c.b16 %v11363, %v11362
        %v11396 = vpack.c.b16 %v11365, %v11364
        %v11397 = vpack.c.b16 %v11367, %v11366
        %v11398 = vpack.c.b16 %v11369, %v11368
        %v11399 = vpack.c.b16 %v11371, %v11370
        %v11400 = vpack.c.b16 %v11373, %v11372
        %v11401 = vpack.c.b16 %v11375, %v11374
        %v11402 = vpack.c.b16 %v11377, %v11376
        %v11403 = vpack.c.b16 %v11379, %v11378
        %11428 = vmatpush.bf16.msra.mxu0 %v11387
        %11429 = vmatpush.bf16.msra.mxu0 %v11386
        %11430 = vmatpush.bf16.msra.mxu0 %v11385
        %11431 = vmatpush.bf16.msra.mxu0 %v11384
        %11432 = vmatpush.bf16.msra.mxu0 %v11383
        %11433 = vmatpush.bf16.msra.mxu0 %v11382
        %11434 = vmatpush.bf16.msra.mxu0 %v11381
        %11435 = vmatpush.bf16.msra.mxu0 %v11380
        %11436 = vmatmul.bf16.gmra.mxu0 %v11230
        %v11437 = vpop.f32.mrf.mxu0
        %v11438 = vadd.f32 %v11283, %v11437
        %v11439 = vpop.f32.mrf.mxu0
        %11440 = vdwg.mxu0
        %11441 = vmatpush.bf16.msra.mxu0 %v11395
        %11442 = vmatpush.bf16.msra.mxu0 %v11394
        %11443 = vmatpush.bf16.msra.mxu0 %v11393
        %11444 = vmatpush.bf16.msra.mxu0 %v11392
        %11445 = vmatpush.bf16.msra.mxu0 %v11391
        %11446 = vmatpush.bf16.msra.mxu0 %v11390
        %11447 = vmatpush.bf16.msra.mxu0 %v11389
        %11448 = vmatpush.bf16.msra.mxu0 %v11388
        %11449 = vmatmul.bf16.gmra.mxu0 %v11232
        %v11450 = vpop.f32.mrf.mxu0
        %v11451 = vadd.f32 %v11438, %v11450
        %v11452 = vpop.f32.mrf.mxu0
        %11453 = vdwg.mxu0
        %11454 = vmatpush.bf16.msra.mxu0 %v11403
        %11455 = vmatpush.bf16.msra.mxu0 %v11402
        %11456 = vmatpush.bf16.msra.mxu0 %v11401
        %11457 = vmatpush.bf16.msra.mxu0 %v11400
        %11458 = vmatpush.bf16.msra.mxu0 %v11399
        %11459 = vmatpush.bf16.msra.mxu0 %v11398
        %11460 = vmatpush.bf16.msra.mxu0 %v11397
        %11461 = vmatpush.bf16.msra.mxu0 %v11396
        %11462 = vmatmul.bf16.gmra.mxu0 %v11234
        %v11463 = vpop.f32.mrf.mxu0
        %v11464 = vadd.f32 %v11451, %v11463
        %v11465 = vpop.f32.mrf.mxu0
        %11466 = vdwg.mxu0
        %v11467 = vmax.f32 %v11464, 0.0
        %11468 = vst [vmem:[#allocation5 + $0x2] sm:$0x1] %v11467
        %v11469 = vld [vmem:[#allocation5] sm:$0x1]
        %v11470 = vpack.c.bf16 %v11469, %v11469
        %v11471 = vld [vmem:[#allocation5 + $0x1] sm:$0x1]
        %v11472 = vpack.c.bf16 %v11471, %v11471
        %v11473 = vld [vmem:[#allocation5 + $0x2] sm:$0x1]
        %v11474 = vpack.c.bf16 %v11473, %v11473
        %v11475 = vld [vmem:[#allocation15] sm:$0xf]
        %v11476 = vld [vmem:[#allocation15 + $0x4] sm:$0xf]
        %v11477 = vld [vmem:[#allocation15 + $0x8] sm:$0xf]
        %v11478 = vld [vmem:[#allocation15 + $0xc] sm:$0xf]
        %v11479 = vld [vmem:[#allocation15 + $0x10] sm:$0xf]
        %v11480 = vld [vmem:[#allocation15 + $0x14] sm:$0xf]
        %v11481 = vld [vmem:[#allocation15 + $0x18] sm:$0xf]
        %v11482 = vld [vmem:[#allocation15 + $0x1c] sm:$0xf]
        %v11483 = vld [vmem:[#allocation15 + $0x20] sm:$0xf]
        %v11484 = vld [vmem:[#allocation15 + $0x24] sm:$0xf]
        %v11485 = vld [vmem:[#allocation15 + $0x28] sm:$0xf]
        %v11486 = vld [vmem:[#allocation15 + $0x2c] sm:$0xf]
        %v11487 = vld [vmem:[#allocation15 + $0x30] sm:$0xf]
        %v11488 = vld [vmem:[#allocation15 + $0x34] sm:$0xf]
        %v11489 = vld [vmem:[#allocation15 + $0x38] sm:$0xf]
        %v11490 = vld [vmem:[#allocation15 + $0x3c] sm:$0xf]
        %v11491 = vld [vmem:[#allocation15 + $0x40] sm:$0xf]
        %v11492 = vld [vmem:[#allocation15 + $0x44] sm:$0xf]
        %v11493 = vld [vmem:[#allocation15 + $0x48] sm:$0xf]
        %v11494 = vld [vmem:[#allocation15 + $0x4c] sm:$0xf]
        %v11495 = vld [vmem:[#allocation15 + $0x50] sm:$0xf]
        %v11496 = vld [vmem:[#allocation15 + $0x54] sm:$0xf]
        %v11497 = vld [vmem:[#allocation15 + $0x58] sm:$0xf]
        %v11498 = vld [vmem:[#allocation15 + $0x5c] sm:$0xf]
        %v11499 = vld [vmem:[#allocation15 + $0x60] sm:$0xf]
        %v11500 = vld [vmem:[#allocation15 + $0x64] sm:$0xf]
        %v11501 = vld [vmem:[#allocation15 + $0x68] sm:$0xf]
        %v11502 = vld [vmem:[#allocation15 + $0x6c] sm:$0xf]
        %v11503 = vld [vmem:[#allocation15 + $0x70] sm:$0xf]
        %v11504 = vld [vmem:[#allocation15 + $0x74] sm:$0xf]
        %v11505 = vld [vmem:[#allocation15 + $0x78] sm:$0xf]
        %v11506 = vld [vmem:[#allocation15 + $0x7c] sm:$0xf]
        %v11507 = vld [vmem:[#allocation15 + $0x80] sm:$0xf]
        %v11508 = vld [vmem:[#allocation15 + $0x84] sm:$0xf]
        %v11509 = vld [vmem:[#allocation15 + $0x88] sm:$0xf]
        %v11510 = vld [vmem:[#allocation15 + $0x8c] sm:$0xf]
        %v11511 = vld [vmem:[#allocation15 + $0x90] sm:$0xf]
        %v11512 = vld [vmem:[#allocation15 + $0x94] sm:$0xf]
        %v11513 = vld [vmem:[#allocation15 + $0x98] sm:$0xf]
        %v11514 = vld [vmem:[#allocation15 + $0x9c] sm:$0xf]
        %v11515 = vld [vmem:[#allocation15 + $0xa0] sm:$0xf]
        %v11516 = vld [vmem:[#allocation15 + $0xa4] sm:$0xf]
        %v11517 = vld [vmem:[#allocation15 + $0xa8] sm:$0xf]
        %v11518 = vld [vmem:[#allocation15 + $0xac] sm:$0xf]
        %v11519 = vld [vmem:[#allocation15 + $0xb0] sm:$0xf]
        %v11520 = vld [vmem:[#allocation15 + $0xb4] sm:$0xf]
        %v11521 = vld [vmem:[#allocation15 + $0xb8] sm:$0xf]
        %v11522 = vld [vmem:[#allocation15 + $0xbc] sm:$0xf]
        %v11523 = vld [vmem:[#allocation24] sm:$0x1]
        %v11572 = vunpack.c.l.b16 %v11475
        %v11573 = vunpack.c.l.b16 %v11476
        %v11574 = vunpack.c.l.b16 %v11477
        %v11575 = vunpack.c.l.b16 %v11478
        %v11576 = vunpack.c.l.b16 %v11479
        %v11577 = vunpack.c.l.b16 %v11480
        %v11578 = vunpack.c.l.b16 %v11481
        %v11579 = vunpack.c.l.b16 %v11482
        %v11580 = vunpack.c.l.b16 %v11483
        %v11581 = vunpack.c.l.b16 %v11484
        %v11582 = vunpack.c.l.b16 %v11485
        %v11583 = vunpack.c.l.b16 %v11486
        %v11584 = vunpack.c.l.b16 %v11487
        %v11585 = vunpack.c.l.b16 %v11488
        %v11586 = vunpack.c.l.b16 %v11489
        %v11587 = vunpack.c.l.b16 %v11490
        %v11588 = vunpack.c.l.b16 %v11491
        %v11589 = vunpack.c.l.b16 %v11492
        %v11590 = vunpack.c.l.b16 %v11493
        %v11591 = vunpack.c.l.b16 %v11494
        %v11592 = vunpack.c.l.b16 %v11495
        %v11593 = vunpack.c.l.b16 %v11496
        %v11594 = vunpack.c.l.b16 %v11497
        %v11595 = vunpack.c.l.b16 %v11498
        %v11596 = vunpack.c.l.b16 %v11499
        %v11597 = vunpack.c.l.b16 %v11500
        %v11598 = vunpack.c.l.b16 %v11501
        %v11599 = vunpack.c.l.b16 %v11502
        %v11600 = vunpack.c.l.b16 %v11503
        %v11601 = vunpack.c.l.b16 %v11504
        %v11602 = vunpack.c.l.b16 %v11505
        %v11603 = vunpack.c.l.b16 %v11506
        %v11604 = vunpack.c.l.b16 %v11507
        %v11605 = vunpack.c.l.b16 %v11508
        %v11606 = vunpack.c.l.b16 %v11509
        %v11607 = vunpack.c.l.b16 %v11510
        %v11608 = vunpack.c.l.b16 %v11511
        %v11609 = vunpack.c.l.b16 %v11512
        %v11610 = vunpack.c.l.b16 %v11513
        %v11611 = vunpack.c.l.b16 %v11514
        %v11612 = vunpack.c.l.b16 %v11515
        %v11613 = vunpack.c.l.b16 %v11516
        %v11614 = vunpack.c.l.b16 %v11517
        %v11615 = vunpack.c.l.b16 %v11518
        %v11616 = vunpack.c.l.b16 %v11519
        %v11617 = vunpack.c.l.b16 %v11520
        %v11618 = vunpack.c.l.b16 %v11521
        %v11619 = vunpack.c.l.b16 %v11522
        %v11620 = vpack.c.b16 %v11573, %v11572
        %v11621 = vpack.c.b16 %v11575, %v11574
        %v11622 = vpack.c.b16 %v11577, %v11576
        %v11623 = vpack.c.b16 %v11579, %v11578
        %v11624 = vpack.c.b16 %v11581, %v11580
        %v11625 = vpack.c.b16 %v11583, %v11582
        %v11626 = vpack.c.b16 %v11585, %v11584
        %v11627 = vpack.c.b16 %v11587, %v11586
        %v11628 = vpack.c.b16 %v11589, %v11588
        %v11629 = vpack.c.b16 %v11591, %v11590
        %v11630 = vpack.c.b16 %v11593, %v11592
        %v11631 = vpack.c.b16 %v11595, %v11594
        %v11632 = vpack.c.b16 %v11597, %v11596
        %v11633 = vpack.c.b16 %v11599, %v11598
        %v11634 = vpack.c.b16 %v11601, %v11600
        %v11635 = vpack.c.b16 %v11603, %v11602
        %v11636 = vpack.c.b16 %v11605, %v11604
        %v11637 = vpack.c.b16 %v11607, %v11606
        %v11638 = vpack.c.b16 %v11609, %v11608
        %v11639 = vpack.c.b16 %v11611, %v11610
        %v11640 = vpack.c.b16 %v11613, %v11612
        %v11641 = vpack.c.b16 %v11615, %v11614
        %v11642 = vpack.c.b16 %v11617, %v11616
        %v11643 = vpack.c.b16 %v11619, %v11618
        %11668 = vmatpush.bf16.msra.mxu0 %v11627
        %11669 = vmatpush.bf16.msra.mxu0 %v11626
        %11670 = vmatpush.bf16.msra.mxu0 %v11625
        %11671 = vmatpush.bf16.msra.mxu0 %v11624
        %11672 = vmatpush.bf16.msra.mxu0 %v11623
        %11673 = vmatpush.bf16.msra.mxu0 %v11622
        %11674 = vmatpush.bf16.msra.mxu0 %v11621
        %11675 = vmatpush.bf16.msra.mxu0 %v11620
        %11676 = vmatmul.bf16.gmra.mxu0 %v11470
        %v11677 = vpop.f32.mrf.mxu0
        %v11678 = vadd.f32 %v11523, %v11677
        %v11679 = vpop.f32.mrf.mxu0
        %11680 = vdwg.mxu0
        %11681 = vmatpush.bf16.msra.mxu0 %v11635
        %11682 = vmatpush.bf16.msra.mxu0 %v11634
        %11683 = vmatpush.bf16.msra.mxu0 %v11633
        %11684 = vmatpush.bf16.msra.mxu0 %v11632
        %11685 = vmatpush.bf16.msra.mxu0 %v11631
        %11686 = vmatpush.bf16.msra.mxu0 %v11630
        %11687 = vmatpush.bf16.msra.mxu0 %v11629
        %11688 = vmatpush.bf16.msra.mxu0 %v11628
        %11689 = vmatmul.bf16.gmra.mxu0 %v11472
        %v11690 = vpop.f32.mrf.mxu0
        %v11691 = vadd.f32 %v11678, %v11690
        %v11692 = vpop.f32.mrf.mxu0
        %11693 = vdwg.mxu0
        %11694 = vmatpush.bf16.msra.mxu0 %v11643
        %11695 = vmatpush.bf16.msra.mxu0 %v11642
        %11696 = vmatpush.bf16.msra.mxu0 %v11641
        %11697 = vmatpush.bf16.msra.mxu0 %v11640
        %11698 = vmatpush.bf16.msra.mxu0 %v11639
        %11699 = vmatpush.bf16.msra.mxu0 %v11638
        %11700 = vmatpush.bf16.msra.mxu0 %v11637
        %11701 = vmatpush.bf16.msra.mxu0 %v11636
        %11702 = vmatmul.bf16.gmra.mxu0 %v11474
        %v11703 = vpop.f32.mrf.mxu0
        %v11704 = vadd.f32 %v11691, %v11703
        %v11705 = vpop.f32.mrf.mxu0
        %11706 = vdwg.mxu0
        %v11707 = vmax.f32 %v11704, 0.0
        %11708 = vst [vmem:[#allocation6] sm:$0x1] %v11707
        %v11709 = vld [vmem:[#allocation6] sm:$0x1]
        %v11710 = vpack.c.bf16 %v11709, %v11709
        %v11711 = vld [vmem:[#allocation16] sm:$0xf]
        %v11712 = vld [vmem:[#allocation16 + $0x4] sm:$0xf]
        %v11713 = vld [vmem:[#allocation16 + $0x8] sm:$0xf]
        %v11714 = vld [vmem:[#allocation16 + $0xc] sm:$0xf]
        %v11715 = vld [vmem:[#allocation16 + $0x10] sm:$0xf]
        %v11716 = vld [vmem:[#allocation16 + $0x14] sm:$0xf]
        %v11717 = vld [vmem:[#allocation16 + $0x18] sm:$0xf]
        %v11718 = vld [vmem:[#allocation16 + $0x1c] sm:$0xf]
        %v11719 = vld [vmem:[#allocation16 + $0x20] sm:$0xf]
        %v11720 = vld [vmem:[#allocation16 + $0x24] sm:$0xf]
        %v11721 = vld [vmem:[#allocation16 + $0x28] sm:$0xf]
        %v11722 = vld [vmem:[#allocation16 + $0x2c] sm:$0xf]
        %v11723 = vld [vmem:[#allocation16 + $0x30] sm:$0xf]
        %v11724 = vld [vmem:[#allocation16 + $0x34] sm:$0xf]
        %v11725 = vld [vmem:[#allocation16 + $0x38] sm:$0xf]
        %v11726 = vld [vmem:[#allocation16 + $0x3c] sm:$0xf]
        %v11727 = vld [vmem:[#allocation25] sm:$0x1]
        %v11744 = vunpack.c.l.b16 %v11711
        %v11745 = vunpack.c.l.b16 %v11712
        %v11746 = vunpack.c.l.b16 %v11713
        %v11747 = vunpack.c.l.b16 %v11714
        %v11748 = vunpack.c.l.b16 %v11715
        %v11749 = vunpack.c.l.b16 %v11716
        %v11750 = vunpack.c.l.b16 %v11717
        %v11751 = vunpack.c.l.b16 %v11718
        %v11752 = vunpack.c.l.b16 %v11719
        %v11753 = vunpack.c.l.b16 %v11720
        %v11754 = vunpack.c.l.b16 %v11721
        %v11755 = vunpack.c.l.b16 %v11722
        %v11756 = vunpack.c.l.b16 %v11723
        %v11757 = vunpack.c.l.b16 %v11724
        %v11758 = vunpack.c.l.b16 %v11725
        %v11759 = vunpack.c.l.b16 %v11726
        %v11760 = vpack.c.b16 %v11745, %v11744
        %v11761 = vpack.c.b16 %v11747, %v11746
        %v11762 = vpack.c.b16 %v11749, %v11748
        %v11763 = vpack.c.b16 %v11751, %v11750
        %v11764 = vpack.c.b16 %v11753, %v11752
        %v11765 = vpack.c.b16 %v11755, %v11754
        %v11766 = vpack.c.b16 %v11757, %v11756
        %v11767 = vpack.c.b16 %v11759, %v11758
        %11776 = vmatpush.bf16.msra.mxu0 %v11767
        %11777 = vmatpush.bf16.msra.mxu0 %v11766
        %11778 = vmatpush.bf16.msra.mxu0 %v11765
        %11779 = vmatpush.bf16.msra.mxu0 %v11764
        %11780 = vmatpush.bf16.msra.mxu0 %v11763
        %11781 = vmatpush.bf16.msra.mxu0 %v11762
        %11782 = vmatpush.bf16.msra.mxu0 %v11761
        %11783 = vmatpush.bf16.msra.mxu0 %v11760
        %11784 = vmatmul.bf16.gmra.mxu0 %v11710
        %v11785 = vpop.f32.mrf.mxu0
        %v11786 = vadd.f32 %v11727, %v11785
        %v11787 = vpop.f32.mrf.mxu0
        %11788 = vdwg.mxu0
        %11789 = vst [vmem:[%s619] sm:$0x1] %v11786
        %s11790 = sand.u32 %s320, 1
        %s11791 = scalar_lea.sflag [#allocation9], %s11790
        %s11792 = sand.u32 %s320, 1
        %s11793 = scalar_lea.vmem [#allocation27], %s11792
        // Predicated region
        $region121: #{forward.1} parent=71 // pred_check
          %p11794 = pneg %p330
        $region122: #{forward.1} parent=71 // pred_check_branch
          %11796 = sbr.rel (%p11794) target = $region124
        $region123: #{forward.1} parent=71 // pred_region
          %11798 = vsyncadd %s11791, 0
          %s11799 = scalar_lea.hbm %s13, %s34
          %s11801 = sshll.u32 %s11793, 4
          %s11802 = int_to_ptr.vmem [resolvable:$true] %s11801
          %s11803 = sshll.u32 %s11799, 4
          %s11804 = int_to_ptr.hbm [resolvable:$true] %s11803
          %11806 = dma.vmem_to_hbm [thread:$0]  %s11802, 16, %s11804, %s11791
        $region124: #{forward.1} parent=71 // pred_fallthru
          _
      $region72: #{forward.1} parent=5 // pred_fallthru
        _
      %p11807 = scmp.le.s32.totalorder 2, %s29
      // Predicated region
      $region125: #{forward.1} parent=5 // pred_check
        %p11808 = pneg %p11807
      $region126: #{forward.1} parent=5 // pred_check_branch
        %11810 = sbr.rel (%p11808) target = $region128
      $region127: #{forward.1} parent=5 // pred_region
        %s11811 = ssub.s32 %s29, 2
        // Predicated region
        $region129: #{forward.1} parent=127 // pred_check
          %p11812 = pneg %p336
        $region130: #{forward.1} parent=127 // pred_check_branch
          %11814 = sbr.rel (%p11812) target = $region132
        $region131: #{forward.1} parent=127 // pred_region
          %s11815 = sand.u32 %s321, 1
          %s11816 = scalar_lea.sflag [#allocation9], %s11815
          %s11817 = sand.u32 %s321, 1
          %s11818 = scalar_lea.vmem [#allocation27], %s11817
          %11820 = dma.done %s11816, 16
        $region132: #{forward.1} parent=127 // pred_fallthru
          _
      $region128: #{forward.1} parent=5 // pred_fallthru
        _
    $region6: #{forward.1} parent=1 // loop_footer
      %s33 = sadd.s32 1, %s29
    $region7: #{forward.1} parent=1 // loop_footer_branch
      %28 = sbr.rel target = $region3
    $region8: #{forward.1} parent=1 // loop_exit
      _
    %11821 = vsyncpa [#allocation8], 1
    %s11822 = scalar_lea.sflag [#allocation8], 1
    %11823 = vsyncpa %s11822, 1
    %11824 = vsyncpa [#allocation11], 1
    %11825 = vsyncpa [#allocation14], 1
    %11826 = vsyncpa [#allocation17], 1
    %11827 = vsyncpa [#allocation20], 1
    %11828 = vsyncpa [#allocation23], 1
    %11829 = vsyncpa [#allocation26], 1
    %11830 = vsyncpa [#allocation9], 1
    %s11831 = scalar_lea.sflag [#allocation9], 1
    %11832 = vsyncpa %s11831, 1

</llo_original>
